<compile_context>
chip_gen: v6e
topology: v6e:2x2x1
jax: 0.10.0
libtpu: 0.0.40
codegen_flags: <defaults>
</compile_context>

<pallas_src>
import functools

import jax
import jax.numpy as jnp
from jax.experimental import pallas as pl
from jax.experimental.pallas import tpu as pltpu


def _round_up(x, m):
    return ((x + m - 1) // m) * m


def _vmem_limit_bytes():
    # v5e/v6e: 128 MiB physical VMEM -> ~96 MiB cap; v7x: 64 MiB/TC -> 48 MiB cap.
    try:
        cap = int(pltpu.get_tpu_info().vmem_capacity_bytes)
    except Exception:
        cap = 64 * 1024 * 1024  # assume the smallest (v7x per-core) if query fails
    return max(32 * 1024 * 1024, min(cap * 3 // 4, 100 * 1024 * 1024))


VMEM_LIMIT_BYTES = _vmem_limit_bytes()


def _pick_row_tile(M):
    """Largest useful row tile that avoids (or minimizes) row padding."""
    if M <= 512:
        return _round_up(M, 8)                 # single row tile, <=7 pad rows
    for t in (512, 256, 128, 64, 32, 16, 8):
        if M % t == 0:
            return t
    return min((512, 256, 128), key=lambda t: (_round_up(M, t) - M, -t))


# ----------------------------------------------------------------------------
# Fused (LayerNorm) + matmul + bias + activation + residual kernel
# ----------------------------------------------------------------------------

def _make_mm_kernel(act, use_ln, has_bias, has_res):
    def kernel(*refs):
        it = iter(refs)
        x_ref = next(it)
        w_ref = next(it)
        g_ref = b_ref = bias_ref = res_ref = None
        if use_ln:
            g_ref = next(it)
            b_ref = next(it)
        if has_bias:
            bias_ref = next(it)
        if has_res:
            res_ref = next(it)
        o_ref = next(it)

        if use_ln:
            ln_ref = next(it)
            # LayerNorm computed once per row tile (j == 0, j innermost/arbitrary)
            # and cached in VMEM; reused for every out-feature tile.
            @pl.when(pl.program_id(2) == 0)
            def _():
                xf = x_ref[...].astype(jnp.float32)      # bf16 in, f32 LN math
                mu = jnp.mean(xf, axis=-1, keepdims=True)
                var = jnp.mean((xf - mu) ** 2, axis=-1, keepdims=True)
                xn = (xf - mu) * jax.lax.rsqrt(var + 1e-5) * g_ref[...] + b_ref[...]
                ln_ref[...] = xn.astype(jnp.bfloat16)
            x = ln_ref[...]
        else:
            x = x_ref[...]

        # bf16 MXU inputs, f32 accumulation.
        y = jnp.dot(x, w_ref[...], preferred_element_type=jnp.float32)
        if has_bias:
            y = y + bias_ref[...]
        if act == "relu":
            y = jnp.maximum(y, 0.0)
        elif act == "gelu":
            # TODO(synk): PyTorch nn.GELU default is the exact erf form; tanh
            # approximation used here (~1e-3 level numeric difference).
            y = jax.nn.gelu(y, approximate=True)
        if has_res:
            y = y + res_ref[...].astype(jnp.float32)
        o_ref[...] = y.astype(o_ref.dtype)
    return kernel


def fused_matmul(a, w, bias=None, act="none", ln=None, residual=None,
                 out_dtype=jnp.bfloat16):
    """y = act(LN(a) @ w + bias) + residual, tiled over (branch, rows, out-feats).

    Expects weights/bias/LN params already prepared at init:
      a:    (M, K) or (BR, M, K), bf16 (f32 accepted, cast once here)
      w:    (K, Np) or (BR, K, Np), bf16, Np % 128 == 0 (lane-dense stores)
      bias: (BR, 1, Np) f32 / ln: ((BR,1,K),(BR,1,K)) f32 / residual: (BR, M, Np)
    Returns (BR, M, Np) (or (M, Np) for 2-D input) in out_dtype.
    """
    branched_in = a.ndim == 3
    if not branched_in:
        a = a[None]
    if w.ndim == 2:
        w = w[None]
    BR, M, K = a.shape
    BRw, K2, Np = w.shape
    assert K == K2 and BRw == BR and Np % 128 == 0

    if a.dtype != jnp.bfloat16:
        a = a.astype(jnp.bfloat16)

    use_ln = ln is not None
    has_bias = bias is not None
    has_res = residual is not None

    tm = _pick_row_tile(M)
    Mp = _round_up(M, tm)
    tn = 256 if (Np % 256 == 0 and Np >= 256) else 128
    gj = Np // tn
    # Guarantee >=2 grid steps so both v7x TensorCores get work.
    if BR * (Mp // tm) * gj == 1 and tm >= 16:
        tm = _round_up((tm + 1) // 2, 8)
        Mp = _round_up(M, tm)
    gi = Mp // tm

    if Mp != M:
        a = jnp.pad(a, ((0, 0), (0, Mp - M), (0, 0)))

    args = [a, w]
    in_specs = [
        pl.BlockSpec((None, tm, K), lambda br, i, j: (br, i, 0)),
        pl.BlockSpec((None, K, tn), lambda br, i, j: (br, 0, j)),
    ]
    if use_ln:
        g, b = ln                                            # (BR, 1, K) f32
        args += [g, b]
        in_specs += [pl.BlockSpec((None, 1, K), lambda br, i, j: (br, 0, 0)),
                     pl.BlockSpec((None, 1, K), lambda br, i, j: (br, 0, 0))]
    if has_bias:
        args.append(bias)                                    # (BR, 1, Np) f32
        in_specs.append(pl.BlockSpec((None, 1, tn), lambda br, i, j: (br, 0, j)))
    if has_res:
        r = residual if residual.ndim == 3 else residual[None]
        assert r.shape == (BR, M, Np), "residual stream must be lane-padded"
        if Mp != M:
            r = jnp.pad(r, ((0, 0), (0, Mp - M), (0, 0)))
        args.append(r)
        in_specs.append(pl.BlockSpec((None, tm, tn), lambda br, i, j: (br, i, j)))

    scratch = [pltpu.VMEM((tm, K), jnp.bfloat16)] if use_ln else []

    out = pl.pallas_call(
        _make_mm_kernel(act, use_ln, has_bias, has_res),
        grid=(BR, gi, gj),
        in_specs=in_specs,
        out_specs=pl.BlockSpec((None, tm, tn), lambda br, i, j: (br, i, j)),
        out_shape=jax.ShapeDtypeStruct((BR, Mp, Np), out_dtype),
        scratch_shapes=scratch,
        compiler_params=pltpu.CompilerParams(
            dimension_semantics=("parallel", "parallel", "arbitrary"),
            vmem_limit_bytes=VMEM_LIMIT_BYTES),
    )(*args)

    if Mp != M:
        out = out[:, :M]
    if not branched_in:
        out = out[0]
    return out


# ----------------------------------------------------------------------------
# Row-tiled, branch-stacked LayerNorm (final classifier norm)
# ----------------------------------------------------------------------------

def _ln_kernel(x_ref, g_ref, b_ref, o_ref):
    x = x_ref[...].astype(jnp.float32)
    mu = jnp.mean(x, axis=-1, keepdims=True)
    var = jnp.mean((x - mu) ** 2, axis=-1, keepdims=True)
    o_ref[...] = ((x - mu) * jax.lax.rsqrt(var + 1e-5) * g_ref[...]
                  + b_ref[...]).astype(o_ref.dtype)


def pallas_layernorm(x, gamma, beta, out_dtype=jnp.float32):
    """x: (BR, M, D) bf16; gamma/beta: (BR, 1, D) f32 (prepared at init)."""
    BR, M, D = x.shape
    tm = _pick_row_tile(M)
    Mp = _round_up(M, tm)
    if Mp != M:
        x = jnp.pad(x, ((0, 0), (0, Mp - M), (0, 0)))
    out = pl.pallas_call(
        _ln_kernel,
        grid=(BR, Mp // tm),
        in_specs=[pl.BlockSpec((None, tm, D), lambda br, i: (br, i, 0)),
                  pl.BlockSpec((None, 1, D), lambda br, i: (br, 0, 0)),
                  pl.BlockSpec((None, 1, D), lambda br, i: (br, 0, 0))],
        out_specs=pl.BlockSpec((None, tm, D), lambda br, i: (br, i, 0)),
        out_shape=jax.ShapeDtypeStruct((BR, Mp, D), out_dtype),
        compiler_params=pltpu.CompilerParams(
            dimension_semantics=("parallel", "parallel"),
            vmem_limit_bytes=VMEM_LIMIT_BYTES),
    )(x, gamma, beta)
    return out[:, :M] if Mp != M else out


# ----------------------------------------------------------------------------
# Multi-head self-attention, gridded over (branch*batch); heads in-kernel
# ----------------------------------------------------------------------------

def _attn_kernel(qkv_ref, o_ref, *, d_model, num_heads, d_pad):
    dh = d_model // num_heads
    qkv = qkv_ref[0]                       # (N, Cq) bf16; softmax scale already in W_q
    n_rows = qkv.shape[0]
    outs = []
    for h in range(num_heads):
        q = qkv[:, h * dh:(h + 1) * dh]
        k = qkv[:, d_model + h * dh:d_model + (h + 1) * dh]
        v = qkv[:, 2 * d_model + h * dh:2 * d_model + (h + 1) * dh]
        s = jax.lax.dot_general(q, k, (((1,), (1,)), ((), ())),
                                preferred_element_type=jnp.float32)
        s = s - jnp.max(s, axis=-1, keepdims=True)
        p = jnp.exp(s)
        # EUP reciprocal: rows sum to ~1 (approx), acceptable for inference.
        p = p * pl.reciprocal(jnp.sum(p, axis=-1, keepdims=True), approx=True)
        outs.append(jnp.dot(p.astype(jnp.bfloat16), v,
                            preferred_element_type=jnp.float32))
    if d_pad > d_model:
        outs.append(jnp.zeros((n_rows, d_pad - d_model), jnp.float32))
    # Single lane-dense (x128-padded) store of all heads.
    # TODO(synk): for large N / many heads, accumulate per-head into a VMEM
    # scratch and tile KV with an online softmax instead of full NxN scores.
    o_ref[0] = jnp.concatenate(outs, axis=-1).astype(o_ref.dtype)


def pallas_attention(qkv, d_model, num_heads, out_dtype=jnp.bfloat16):
    """qkv: (BR*B, N, Cq) bf16 with [Q|K|V] column layout. Returns (BR*B, N, Dp)."""
    BRB, N, Cq = qkv.shape
    d_pad = _round_up(d_model, 128)
    return pl.pallas_call(
        functools.partial(_attn_kernel, d_model=d_model,
                          num_heads=num_heads, d_pad=d_pad),
        grid=(BRB,),
        in_specs=[pl.BlockSpec((1, N, Cq), lambda b: (b, 0, 0))],
        out_specs=pl.BlockSpec((1, N, d_pad), lambda b: (b, 0, 0)),
        out_shape=jax.ShapeDtypeStruct((BRB, N, d_pad), out_dtype),
        compiler_params=pltpu.CompilerParams(
            dimension_semantics=("parallel",),
            vmem_limit_bytes=VMEM_LIMIT_BYTES),
    )(qkv)


# ----------------------------------------------------------------------------
# Glue: NHWC im2col + maxpool (plain JAX)
# ----------------------------------------------------------------------------

def im2col_nhwc(x_nhwc, kh, kw, stride, pad):
    B, H, W, C = x_nhwc.shape
    xp = jnp.pad(x_nhwc, ((0, 0), (pad, pad), (pad, pad), (0, 0)))
    Ho = (H + 2 * pad - kh) // stride + 1
    Wo = (W + 2 * pad - kw) // stride + 1
    cols = []
    for i in range(kh):
        for j in range(kw):
            cols.append(xp[:, i:i + (Ho - 1) * stride + 1:stride,
                           j:j + (Wo - 1) * stride + 1:stride, :])
    col = jnp.stack(cols, axis=3)                      # [B, Ho, Wo, kh*kw, C]
    return col.reshape(B * Ho * Wo, kh * kw * C), Ho, Wo


def maxpool3x3s2p1_nhwc(x):
    # TODO(synk): maxpool kept in XLA (reduce_window); minor vs conv/attention.
    return jax.lax.reduce_window(
        x, jnp.array(-jnp.inf, dtype=x.dtype), jax.lax.max,
        window_dimensions=(1, 3, 3, 1),
        window_strides=(1, 2, 2, 1),
        padding=((0, 0), (1, 1), (1, 1), (0, 0)))


# ----------------------------------------------------------------------------
# Model pieces (CCT-style tokenizer + stacked spatial/temporal transformers)
# ----------------------------------------------------------------------------

def tokenizer(x_nchw, conv1_w, conv2_w, conv1_out_ch):
    """CCT 7x2 tokenizer, NHWC throughout: (conv7x7/s2/p3 no-bias -> ReLU -> maxpool)x2."""
    # TODO(synk): im2col materializes a 49x-expanded slab in HBM; folding patch
    # extraction into the matmul via manual DMA would cut tokenizer traffic further.
    B = x_nchw.shape[0]
    x = jnp.transpose(x_nchw, (0, 2, 3, 1)).astype(jnp.bfloat16)   # one NCHW->NHWC

    col, Ho, Wo = im2col_nhwc(x, 7, 7, 2, 3)
    y = fused_matmul(col, conv1_w, act="relu")                     # (B*Ho*Wo, pad128)
    if y.shape[-1] != conv1_out_ch:
        y = y[:, :conv1_out_ch]
    y = y.reshape(B, Ho, Wo, conv1_out_ch)                         # stays NHWC
    y = maxpool3x3s2p1_nhwc(y)

    col2, Ho2, Wo2 = im2col_nhwc(y, 7, 7, 2, 3)
    y2 = fused_matmul(col2, conv2_w, act="relu")                   # (B*Ho2*Wo2, D)
    D = y2.shape[-1]
    y2 = maxpool3x3s2p1_nhwc(y2.reshape(B, Ho2, Wo2, D))
    B_, Hf, Wf, D_ = y2.shape
    # NHWC flatten == CCT's .flatten(2).transpose(1, 2)  -> [B, N, D]
    return y2.reshape(B_, Hf * Wf, D_)


def transformer_block(x2, p, num_heads, BR, B, N, D):
    """Pre-norm encoder layer on the stacked (BR, B*N, D) bf16 residual stream."""
    Dp = _round_up(D, 128)
    # LN1 fused into QKV; LN cached in VMEM across out-feature tiles.
    qkv = fused_matmul(x2, p["qkv_w"], p["qkv_b"], ln=(p["ln1_g"], p["ln1_b"]))
    attn = pallas_attention(qkv.reshape(BR * B, N, qkv.shape[-1]), D, num_heads)
    attn = attn.reshape(BR, B * N, Dp)
    # bias + residual fused into the projection epilogue; residual stream stays bf16.
    x2 = fused_matmul(attn, p["proj_w"], p["proj_b"], residual=x2)
    # LN2 fused into FC1 (+GELU); residual fused into FC2.
    h = fused_matmul(x2, p["fc1_w"], p["fc1_b"], act="gelu",
                     ln=(p["ln2_g"], p["ln2_b"]))
    x2 = fused_matmul(h, p["fc2_w"], p["fc2_b"], residual=x2)
    return x2


def classifier_stacked(patches, cls_params, num_heads):
    """Runs the spatial & temporal transformer stacks in lock-step on a leading
    size-2 'parallel' branch axis (half the launches; both v7x TCs busy)."""
    B, N, D = patches.shape
    assert D % 128 == 0, "residual stream must be lane-dense (pad D at init otherwise)"
    BR = 2
    x2 = jnp.broadcast_to(patches.reshape(1, B * N, D), (BR, B * N, D))
    for blk in cls_params["blocks"]:
        x2 = transformer_block(x2, blk, num_heads, BR, B, N, D)
    x2 = pallas_layernorm(x2, cls_params["norm_g"], cls_params["norm_b"])
    # TODO(synk): CCT's optional seq-pool / fc head omitted; SVPR consumes the
    # full token sequence downstream (SeqVLAD).
    return x2[0].reshape(B, N, D), x2[1].reshape(B, N, D)


def ste_encoder_forward(x, params, *, num_heads, conv1_out_ch):
    """Mirrors STEcoder.forward: patches -> (spatial classifier, temporal classifier)."""
    patches = tokenizer(x, params["conv1_w"], params["conv2_w"], conv1_out_ch)
    # TODO(synk): if trunc_te != trunc_te_t the branch stacking needs a per-branch
    # fallback for the extra blocks; temporal use_for_t frame-wise attention
    # re-arrangement and positional embedding / dropout are not modeled here.
    spatial_x, temporal_x = classifier_stacked(patches, params["cls"], num_heads)
    return spatial_x, temporal_x


# ----------------------------------------------------------------------------
# Parameters: synthetic init + one-time preparation (pad / cast / stack / fold)
# ----------------------------------------------------------------------------

def _pad_cols(x, mult=128):
    n = x.shape[-1]
    npad = _round_up(n, mult) - n
    if npad:
        pad = [(0, 0)] * (x.ndim - 1) + [(0, npad)]
        x = jnp.pad(x, pad)
    return x


def init_block_raw(key, D, mlp_dim):
    ks = jax.random.split(key, 4)
    s = 0.02
    return dict(
        ln1_g=jnp.ones((D,), jnp.float32), ln1_b=jnp.zeros((D,), jnp.float32),
        qkv_w=jax.random.normal(ks[0], (D, 3 * D), jnp.float32) * s,
        qkv_b=jnp.zeros((3 * D,), jnp.float32),
        proj_w=jax.random.normal(ks[1], (D, D), jnp.float32) * s,
        proj_b=jnp.zeros((D,), jnp.float32),
        ln2_g=jnp.ones((D,), jnp.float32), ln2_b=jnp.zeros((D,), jnp.float32),
        fc1_w=jax.random.normal(ks[2], (D, mlp_dim), jnp.float32) * s,
        fc1_b=jnp.zeros((mlp_dim,), jnp.float32),
        fc2_w=jax.random.normal(ks[3], (mlp_dim, D), jnp.float32) * s,
        fc2_b=jnp.zeros((D,), jnp.float32),
    )


def prepare_block(raw_s, raw_t, D, num_heads):
    """One-time prep: stack spatial/temporal on a branch axis, cast to bf16, pad
    out-features to x128, pad proj input rows for the lane-padded attention
    output, and fold the softmax scale into the Q columns of the QKV projection."""
    dh = D // num_heads
    scale = float(dh) ** -0.5
    Dp = _round_up(D, 128)

    def stack(name):
        return jnp.stack([raw_s[name], raw_t[name]], axis=0)

    qkv_w = stack("qkv_w")
    qkv_b = stack("qkv_b")
    qkv_w = qkv_w.at[:, :, :D].multiply(scale)     # fold softmax scale into Q
    qkv_b = qkv_b.at[:, :D].multiply(scale)

    proj_w = stack("proj_w")
    if Dp != D:                                    # zero rows eat attention padding
        proj_w = jnp.pad(proj_w, ((0, 0), (0, Dp - D), (0, 0)))

    def w_prep(w):                                 # (2, K, N) -> bf16, N padded x128
        return _pad_cols(w).astype(jnp.bfloat16)

    def b_prep(b):                                 # (2, N) -> (2, 1, Np) f32
        return _pad_cols(b)[:, None, :].astype(jnp.float32)

    def ln_prep(g):                                # (2, D) -> (2, 1, D) f32
        return g[:, None, :].astype(jnp.float32)

    return dict(
        ln1_g=ln_prep(stack("ln1_g")), ln1_b=ln_prep(stack("ln1_b")),
        qkv_w=w_prep(qkv_w), qkv_b=b_prep(qkv_b),
        proj_w=w_prep(proj_w), proj_b=b_prep(stack("proj_b")),
        ln2_g=ln_prep(stack("ln2_g")), ln2_b=ln_prep(stack("ln2_b")),
        fc1_w=w_prep(stack("fc1_w")), fc1_b=b_prep(stack("fc1_b")),
        fc2_w=w_prep(stack("fc2_w")), fc2_b=b_prep(stack("fc2_b")),
    )


def init_params(key, in_ch, conv_ch, D, mlp_dim, n_blocks, num_heads):
    keys = jax.random.split(key, 2 + 2 * n_blocks)
    s = 0.02
    # conv weights in im2col layout [kh*kw*C, out] == torch weight
    # [out, C, 7, 7].permute(2, 3, 1, 0).reshape(49*C, out); padded/cast once here.
    conv1_w = _pad_cols(jax.random.normal(keys[0], (49 * in_ch, conv_ch),
                                          jnp.float32) * s).astype(jnp.bfloat16)
    conv2_w = _pad_cols(jax.random.normal(keys[1], (49 * conv_ch, D),
                                          jnp.float32) * s).astype(jnp.bfloat16)
    blocks = []
    for i in range(n_blocks):
        raw_s = init_block_raw(keys[2 + 2 * i], D, mlp_dim)
        raw_t = init_block_raw(keys[3 + 2 * i], D, mlp_dim)
        blocks.append(prepare_block(raw_s, raw_t, D, num_heads))
    cls = dict(
        blocks=blocks,
        norm_g=jnp.ones((2, 1, D), jnp.float32),   # spatial/temporal final norms
        norm_b=jnp.zeros((2, 1, D), jnp.float32),
    )
    return dict(conv1_w=conv1_w, conv2_w=conv2_w, cls=cls)


# ----------------------------------------------------------------------------

if __name__ == "__main__":
    key = jax.random.PRNGKey(0)
    kx, kp = jax.random.split(key)

    # Small shapes: B=2, RGB 32x32 -> 2x2 feature map -> N=4 tokens, D=128.
    B, C, H, W = 2, 3, 32, 32
    conv_ch, D, mlp_dim, num_heads = 64, 128, 384, 4
    n_blocks = 2                     # emulates trunc_te == trunc_te_t == 2

    x = jax.random.normal(kx, (B, C, H, W), jnp.float32)
    params = init_params(kp, C, conv_ch, D, mlp_dim, n_blocks, num_heads)

    fwd = jax.jit(functools.partial(ste_encoder_forward,
                                    num_heads=num_heads, conv1_out_ch=conv_ch))
    spatial_x, temporal_x = fwd(x, params)
    jax.block_until_ready((spatial_x, temporal_x))

    assert spatial_x.shape == (B, 4, D), spatial_x.shape
    assert temporal_x.shape == (B, 4, D), temporal_x.shape
    print("KERNEL_OK")
</pallas_src>

<mosaic_0001>
module attributes {stable_mosaic.version = 11 : i64} {
  func.func @kernel(%arg0: i32, %arg1: i32, %arg2: i32, %arg3: memref<1x256x147xbf16, #tpu.memory_space<vmem>>, %arg4: memref<1x147x128xbf16, #tpu.memory_space<vmem>>, %arg5: memref<1x256x128xbf16, #tpu.memory_space<vmem>>) attributes {dimension_semantics = [#tpu.dimension_semantics<parallel>, #tpu.dimension_semantics<parallel>, #tpu.dimension_semantics<arbitrary>], iteration_bounds = array<i64: 1, 2, 1>, scalar_prefetch = 0 : i64, scratch_operands = 0 : i64, tpu.core_type = #tpu.core_type<tc>, window_params = [{transform_indices = @transform_0, window_bounds = array<i64: 1, 256, 147>}, {transform_indices = @transform_1, window_bounds = array<i64: 1, 147, 128>}, {transform_indices = @transform_2, window_bounds = array<i64: 1, 256, 128>}]} {
    %c0 = arith.constant 0 : index
    %c0_0 = arith.constant 0 : index
    %c0_1 = arith.constant 0 : index
    %0 = vector.load %arg3[%c0, %c0_0, %c0_1] : memref<1x256x147xbf16, #tpu.memory_space<vmem>>, vector<1x256x147xbf16>
    %1 = vector.shape_cast %0 : vector<1x256x147xbf16> to vector<256x147xbf16>
    %c0_2 = arith.constant 0 : index
    %c0_3 = arith.constant 0 : index
    %c0_4 = arith.constant 0 : index
    %2 = vector.load %arg4[%c0_2, %c0_3, %c0_4] : memref<1x147x128xbf16, #tpu.memory_space<vmem>>, vector<1x147x128xbf16>
    %3 = vector.shape_cast %2 : vector<1x147x128xbf16> to vector<147x128xbf16>
    %cst = arith.constant dense<0.000000e+00> : vector<256x128xf32>
    %4 = tpu.matmul %1, %3, %cst {dimension_numbers = #tpu.dot_dimension_numbers<[1], [0], [0], [1], [0, 0, 1, 1], [], []>} : vector<256x147xbf16>, vector<147x128xbf16>, vector<256x128xf32> -> vector<256x128xf32>
    %cst_5 = arith.constant 0.000000e+00 : f32
    %5 = vector.broadcast %cst_5 : f32 to vector<256x128xf32>
    %6 = arith.maximumf %4, %5 : vector<256x128xf32>
    %7 = arith.truncf %6 : vector<256x128xf32> to vector<256x128xbf16>
    %c0_6 = arith.constant 0 : index
    %c0_7 = arith.constant 0 : index
    %c0_8 = arith.constant 0 : index
    %8 = vector.load %arg5[%c0_6, %c0_7, %c0_8] : memref<1x256x128xbf16, #tpu.memory_space<vmem>>, vector<1x256x128xbf16>
    %9 = vector.shape_cast %8 : vector<1x256x128xbf16> to vector<256x128xbf16>
    %10 = vector.shape_cast %7 : vector<256x128xbf16> to vector<1x256x128xbf16>
    tpu.vector_store %arg5[%c0_6, %c0_7, %c0_8], %10 {strides = array<i32>} : memref<1x256x128xbf16, #tpu.memory_space<vmem>>, vector<1x256x128xbf16>,
    return
  }
  func.func @transform_0(%arg0: i32, %arg1: i32, %arg2: i32) -> (i32, i32, i32) {
    %c0_i32 = arith.constant 0 : i32
    %c0_i32_0 = arith.constant 0 : i32
    return %arg0, %arg1, %c0_i32 : i32, i32, i32
  }
  func.func @transform_1(%arg0: i32, %arg1: i32, %arg2: i32) -> (i32, i32, i32) {
    %c0_i32 = arith.constant 0 : i32
    %c0_i32_0 = arith.constant 0 : i32
    return %arg0, %c0_i32, %arg2 : i32, i32, i32
  }
  func.func @transform_2(%arg0: i32, %arg1: i32, %arg2: i32) -> (i32, i32, i32) {
    %c0_i32 = arith.constant 0 : i32
    return %arg0, %arg1, %arg2 : i32, i32, i32
  }
}

module attributes {stable_mosaic.version = 11 : i64} {
  func.func @kernel(%arg0: i32, %arg1: i32, %arg2: i32, %arg3: memref<1x16x3136xbf16, #tpu.memory_space<vmem>>, %arg4: memref<1x3136x128xbf16, #tpu.memory_space<vmem>>, %arg5: memref<1x16x128xbf16, #tpu.memory_space<vmem>>) attributes {dimension_semantics = [#tpu.dimension_semantics<parallel>, #tpu.dimension_semantics<parallel>, #tpu.dimension_semantics<arbitrary>], iteration_bounds = array<i64: 1, 2, 1>, scalar_prefetch = 0 : i64, scratch_operands = 0 : i64, tpu.core_type = #tpu.core_type<tc>, window_params = [{transform_indices = @transform_0, window_bounds = array<i64: 1, 16, 3136>}, {transform_indices = @transform_1, window_bounds = array<i64: 1, 3136, 128>}, {transform_indices = @transform_2, window_bounds = array<i64: 1, 16, 128>}]} {
    %c0 = arith.constant 0 : index
    %c0_0 = arith.constant 0 : index
    %c0_1 = arith.constant 0 : index
    %0 = vector.load %arg3[%c0, %c0_0, %c0_1] : memref<1x16x3136xbf16, #tpu.memory_space<vmem>>, vector<1x16x3136xbf16>
    %1 = vector.shape_cast %0 : vector<1x16x3136xbf16> to vector<16x3136xbf16>
    %c0_2 = arith.constant 0 : index
    %c0_3 = arith.constant 0 : index
    %c0_4 = arith.constant 0 : index
    %2 = vector.load %arg4[%c0_2, %c0_3, %c0_4] : memref<1x3136x128xbf16, #tpu.memory_space<vmem>>, vector<1x3136x128xbf16>
    %3 = vector.shape_cast %2 : vector<1x3136x128xbf16> to vector<3136x128xbf16>
    %cst = arith.constant dense<0.000000e+00> : vector<16x128xf32>
    %4 = tpu.matmul %1, %3, %cst {dimension_numbers = #tpu.dot_dimension_numbers<[1], [0], [0], [1], [0, 0, 1, 1], [], []>} : vector<16x3136xbf16>, vector<3136x128xbf16>, vector<16x128xf32> -> vector<16x128xf32>
    %cst_5 = arith.constant 0.000000e+00 : f32
    %5 = vector.broadcast %cst_5 : f32 to vector<16x128xf32>
    %6 = arith.maximumf %4, %5 : vector<16x128xf32>
    %7 = arith.truncf %6 : vector<16x128xf32> to vector<16x128xbf16>
    %c0_6 = arith.constant 0 : index
    %c0_7 = arith.constant 0 : index
    %c0_8 = arith.constant 0 : index
    %8 = vector.load %arg5[%c0_6, %c0_7, %c0_8] : memref<1x16x128xbf16, #tpu.memory_space<vmem>>, vector<1x16x128xbf16>
    %9 = vector.shape_cast %8 : vector<1x16x128xbf16> to vector<16x128xbf16>
    %10 = vector.shape_cast %7 : vector<16x128xbf16> to vector<1x16x128xbf16>
    tpu.vector_store %arg5[%c0_6, %c0_7, %c0_8], %10 {strides = array<i32>} : memref<1x16x128xbf16, #tpu.memory_space<vmem>>, vector<1x16x128xbf16>,
    return
  }
  func.func @transform_0(%arg0: i32, %arg1: i32, %arg2: i32) -> (i32, i32, i32) {
    %c0_i32 = arith.constant 0 : i32
    %c0_i32_0 = arith.constant 0 : i32
    return %arg0, %arg1, %c0_i32 : i32, i32, i32
  }
  func.func @transform_1(%arg0: i32, %arg1: i32, %arg2: i32) -> (i32, i32, i32) {
    %c0_i32 = arith.constant 0 : i32
    %c0_i32_0 = arith.constant 0 : i32
    return %arg0, %c0_i32, %arg2 : i32, i32, i32
  }
  func.func @transform_2(%arg0: i32, %arg1: i32, %arg2: i32) -> (i32, i32, i32) {
    %c0_i32 = arith.constant 0 : i32
    return %arg0, %arg1, %arg2 : i32, i32, i32
  }
}

module attributes {stable_mosaic.version = 11 : i64} {
  func.func @kernel(%arg0: i32, %arg1: i32, %arg2: i32, %arg3: memref<1x8x128xbf16, #tpu.memory_space<vmem>>, %arg4: memref<1x128x128xbf16, #tpu.memory_space<vmem>>, %arg5: memref<1x1x128xf32, #tpu.memory_space<vmem>>, %arg6: memref<1x1x128xf32, #tpu.memory_space<vmem>>, %arg7: memref<1x1x128xf32, #tpu.memory_space<vmem>>, %arg8: memref<1x8x128xbf16, #tpu.memory_space<vmem>>, %arg9: memref<8x128xbf16, #tpu.memory_space<vmem>>) attributes {dimension_semantics = [#tpu.dimension_semantics<parallel>, #tpu.dimension_semantics<parallel>, #tpu.dimension_semantics<arbitrary>], iteration_bounds = array<i64: 2, 1, 3>, scalar_prefetch = 0 : i64, scratch_operands = 1 : i64, tpu.core_type = #tpu.core_type<tc>, window_params = [{transform_indices = @transform_0, window_bounds = array<i64: 1, 8, 128>}, {transform_indices = @transform_1, window_bounds = array<i64: 1, 128, 128>}, {transform_indices = @transform_2, window_bounds = array<i64: 1, 1, 128>}, {transform_indices = @transform_3, window_bounds = array<i64: 1, 1, 128>}, {transform_indices = @transform_4, window_bounds = array<i64: 1, 1, 128>}, {transform_indices = @transform_5, window_bounds = array<i64: 1, 8, 128>}]} {
    %c0_i32 = arith.constant 0 : i32
    %0 = arith.cmpi eq, %arg2, %c0_i32 : i32
    %1 = arith.extui %0 : i1 to i32
    %c0_i32_0 = arith.constant 0 : i32
    %2 = arith.cmpi ne, %1, %c0_i32_0 : i32
    scf.if %2 {
      %c0_11 = arith.constant 0 : index
      %c0_12 = arith.constant 0 : index
      %c0_13 = arith.constant 0 : index
      %15 = vector.load %arg3[%c0_11, %c0_12, %c0_13] : memref<1x8x128xbf16, #tpu.memory_space<vmem>>, vector<1x8x128xbf16>
      %16 = vector.shape_cast %15 : vector<1x8x128xbf16> to vector<8x128xbf16>
      %17 = arith.extf %16 : vector<8x128xbf16> to vector<8x128xf32>
      %cst_14 = arith.constant dense<0.000000e+00> : vector<8xf32>
      %18 = vector.multi_reduction <add>, %17, %cst_14 [1] : vector<8x128xf32> to vector<8xf32>
      %19 = vector.shape_cast %18 : vector<8xf32> to vector<8x1xf32>
      %cst_15 = arith.constant 1.280000e+02 : f32
      %20 = vector.broadcast %cst_15 : f32 to vector<8x1xf32>
      %21 = arith.divf %19, %20 : vector<8x1xf32>
      %22 = vector.broadcast %21 : vector<8x1xf32> to vector<8x128xf32>
      %23 = arith.subf %17, %22 : vector<8x128xf32>
      %24 = arith.mulf %23, %23 : vector<8x128xf32>
      %cst_16 = arith.constant dense<0.000000e+00> : vector<8xf32>
      %25 = vector.multi_reduction <add>, %24, %cst_16 [1] : vector<8x128xf32> to vector<8xf32>
      %26 = vector.shape_cast %25 : vector<8xf32> to vector<8x1xf32>
      %cst_17 = arith.constant 1.280000e+02 : f32
      %27 = vector.broadcast %cst_17 : f32 to vector<8x1xf32>
      %28 = arith.divf %26, %27 : vector<8x1xf32>
      %29 = vector.broadcast %21 : vector<8x1xf32> to vector<8x128xf32>
      %30 = arith.subf %17, %29 : vector<8x128xf32>
      %cst_18 = arith.constant 9.99999974E-6 : f32
      %31 = vector.broadcast %cst_18 : f32 to vector<8x1xf32>
      %32 = arith.addf %28, %31 : vector<8x1xf32>
      %33 = math.rsqrt %32 : vector<8x1xf32>
      %34 = vector.broadcast %33 : vector<8x1xf32> to vector<8x128xf32>
      %35 = arith.mulf %30, %34 : vector<8x128xf32>
      %c0_19 = arith.constant 0 : index
      %c0_20 = arith.constant 0 : index
      %c0_21 = arith.constant 0 : index
      %36 = vector.load %arg5[%c0_19, %c0_20, %c0_21] : memref<1x1x128xf32, #tpu.memory_space<vmem>>, vector<1x1x128xf32>
      %37 = vector.shape_cast %36 : vector<1x1x128xf32> to vector<1x128xf32>
      %38 = vector.broadcast %37 : vector<1x128xf32> to vector<8x128xf32>
      %39 = arith.mulf %35, %38 : vector<8x128xf32>
      %c0_22 = arith.constant 0 : index
      %c0_23 = arith.constant 0 : index
      %c0_24 = arith.constant 0 : index
      %40 = vector.load %arg6[%c0_22, %c0_23, %c0_24] : memref<1x1x128xf32, #tpu.memory_space<vmem>>, vector<1x1x128xf32>
      %41 = vector.shape_cast %40 : vector<1x1x128xf32> to vector<1x128xf32>
      %42 = vector.broadcast %41 : vector<1x128xf32> to vector<8x128xf32>
      %43 = arith.addf %39, %42 : vector<8x128xf32>
      %44 = arith.truncf %43 : vector<8x128xf32> to vector<8x128xbf16>
      %c0_25 = arith.constant 0 : index
      %c0_26 = arith.constant 0 : index
      %45 = vector.load %arg9[%c0_25, %c0_26] : memref<8x128xbf16, #tpu.memory_space<vmem>>, vector<8x128xbf16>
      tpu.vector_store %arg9[%c0_25, %c0_26], %44 {strides = array<i32>} : memref<8x128xbf16, #tpu.memory_space<vmem>>, vector<8x128xbf16>,
    } else {
    }
    %c0 = arith.constant 0 : index
    %c0_1 = arith.constant 0 : index
    %3 = vector.load %arg9[%c0, %c0_1] : memref<8x128xbf16, #tpu.memory_space<vmem>>, vector<8x128xbf16>
    %c0_2 = arith.constant 0 : index
    %c0_3 = arith.constant 0 : index
    %c0_4 = arith.constant 0 : index
    %4 = vector.load %arg4[%c0_2, %c0_3, %c0_4] : memref<1x128x128xbf16, #tpu.memory_space<vmem>>, vector<1x128x128xbf16>
    %5 = vector.shape_cast %4 : vector<1x128x128xbf16> to vector<128x128xbf16>
    %cst = arith.constant dense<0.000000e+00> : vector<8x128xf32>
    %6 = tpu.matmul %3, %5, %cst {dimension_numbers = #tpu.dot_dimension_numbers<[1], [0], [0], [1], [0, 0, 1, 1], [], []>} : vector<8x128xbf16>, vector<128x128xbf16>, vector<8x128xf32> -> vector<8x128xf32>
    %c0_5 = arith.constant 0 : index
    %c0_6 = arith.constant 0 : index
    %c0_7 = arith.constant 0 : index
    %7 = vector.load %arg7[%c0_5, %c0_6, %c0_7] : memref<1x1x128xf32, #tpu.memory_space<vmem>>, vector<1x1x128xf32>
    %8 = vector.shape_cast %7 : vector<1x1x128xf32> to vector<1x128xf32>
    %9 = vector.broadcast %8 : vector<1x128xf32> to vector<8x128xf32>
    %10 = arith.addf %6, %9 : vector<8x128xf32>
    %11 = arith.truncf %10 : vector<8x128xf32> to vector<8x128xbf16>
    %c0_8 = arith.constant 0 : index
    %c0_9 = arith.constant 0 : index
    %c0_10 = arith.constant 0 : index
    %12 = vector.load %arg8[%c0_8, %c0_9, %c0_10] : memref<1x8x128xbf16, #tpu.memory_space<vmem>>, vector<1x8x128xbf16>
    %13 = vector.shape_cast %12 : vector<1x8x128xbf16> to vector<8x128xbf16>
    %14 = vector.shape_cast %11 : vector<8x128xbf16> to vector<1x8x128xbf16>
    tpu.vector_store %arg8[%c0_8, %c0_9, %c0_10], %14 {strides = array<i32>} : memref<1x8x128xbf16, #tpu.memory_space<vmem>>, vector<1x8x128xbf16>,
    return
  }
  func.func @transform_0(%arg0: i32, %arg1: i32, %arg2: i32) -> (i32, i32, i32) {
    %c0_i32 = arith.constant 0 : i32
    %c0_i32_0 = arith.constant 0 : i32
    return %arg0, %arg1, %c0_i32 : i32, i32, i32
  }
  func.func @transform_1(%arg0: i32, %arg1: i32, %arg2: i32) -> (i32, i32, i32) {
    %c0_i32 = arith.constant 0 : i32
    %c0_i32_0 = arith.constant 0 : i32
    return %arg0, %c0_i32, %arg2 : i32, i32, i32
  }
  func.func @transform_2(%arg0: i32, %arg1: i32, %arg2: i32) -> (i32, i32, i32) {
    %c0_i32 = arith.constant 0 : i32
    %c0_i32_0 = arith.constant 0 : i32
    %c0_i32_1 = arith.constant 0 : i32
    return %arg0, %c0_i32, %c0_i32_0 : i32, i32, i32
  }
  func.func @transform_3(%arg0: i32, %arg1: i32, %arg2: i32) -> (i32, i32, i32) {
    %c0_i32 = arith.constant 0 : i32
    %c0_i32_0 = arith.constant 0 : i32
    %c0_i32_1 = arith.constant 0 : i32
    return %arg0, %c0_i32, %c0_i32_0 : i32, i32, i32
  }
  func.func @transform_4(%arg0: i32, %arg1: i32, %arg2: i32) -> (i32, i32, i32) {
    %c0_i32 = arith.constant 0 : i32
    %c0_i32_0 = arith.constant 0 : i32
    return %arg0, %c0_i32, %arg2 : i32, i32, i32
  }
  func.func @transform_5(%arg0: i32, %arg1: i32, %arg2: i32) -> (i32, i32, i32) {
    %c0_i32 = arith.constant 0 : i32
    return %arg0, %arg1, %arg2 : i32, i32, i32
  }
}

module attributes {stable_mosaic.version = 11 : i64} {
  func.func @_attn_kernel(%arg0: i32, %arg1: memref<1x4x384xbf16, #tpu.memory_space<vmem>>, %arg2: memref<1x4x128xbf16, #tpu.memory_space<vmem>>) attributes {dimension_semantics = [#tpu.dimension_semantics<parallel>], iteration_bounds = array<i64: 4>, scalar_prefetch = 0 : i64, scratch_operands = 0 : i64, tpu.core_type = #tpu.core_type<tc>, window_params = [{transform_indices = @transform_0, window_bounds = array<i64: 1, 4, 384>}, {transform_indices = @transform_1, window_bounds = array<i64: 1, 4, 128>}]} {
    %c0 = arith.constant 0 : index
    %c0_0 = arith.constant 0 : index
    %c0_1 = arith.constant 0 : index
    %0 = vector.load %arg1[%c0, %c0_0, %c0_1] : memref<1x4x384xbf16, #tpu.memory_space<vmem>>, vector<1x4x384xbf16>
    %1 = vector.shape_cast %0 : vector<1x4x384xbf16> to vector<4x384xbf16>
    %2 = vector.extract_strided_slice %1 {offsets = [0, 0], sizes = [4, 32], strides = [1, 1]} : vector<4x384xbf16> to vector<4x32xbf16>
    %3 = vector.extract_strided_slice %1 {offsets = [0, 128], sizes = [4, 32], strides = [1, 1]} : vector<4x384xbf16> to vector<4x32xbf16>
    %4 = vector.extract_strided_slice %1 {offsets = [0, 256], sizes = [4, 32], strides = [1, 1]} : vector<4x384xbf16> to vector<4x32xbf16>
    %cst = arith.constant dense<0.000000e+00> : vector<4x4xf32>
    %5 = tpu.matmul %2, %3, %cst {dimension_numbers = #tpu.dot_dimension_numbers<[1], [1], [0], [0], [0, 0, 1, 0], [], []>} : vector<4x32xbf16>, vector<4x32xbf16>, vector<4x4xf32> -> vector<4x4xf32>
    %cst_2 = arith.constant dense<0xFF800000> : vector<4xf32>
    %6 = vector.multi_reduction <maximumf>, %5, %cst_2 [1] : vector<4x4xf32> to vector<4xf32>
    %7 = vector.shape_cast %6 : vector<4xf32> to vector<4x1xf32>
    %8 = vector.broadcast %7 : vector<4x1xf32> to vector<4x4xf32>
    %9 = arith.subf %5, %8 : vector<4x4xf32>
    %10 = math.exp %9 : vector<4x4xf32>
    %cst_3 = arith.constant dense<0.000000e+00> : vector<4xf32>
    %11 = vector.multi_reduction <add>, %10, %cst_3 [1] : vector<4x4xf32> to vector<4xf32>
    %12 = vector.shape_cast %11 : vector<4xf32> to vector<4x1xf32>
    %13 = tpu.reciprocal %12 {approx = true} : vector<4x1xf32> -> vector<4x1xf32>
    %14 = vector.broadcast %13 : vector<4x1xf32> to vector<4x4xf32>
    %15 = arith.mulf %10, %14 : vector<4x4xf32>
    %16 = arith.truncf %15 : vector<4x4xf32> to vector<4x4xbf16>
    %cst_4 = arith.constant dense<0.000000e+00> : vector<4x32xf32>
    %17 = tpu.matmul %16, %4, %cst_4 {dimension_numbers = #tpu.dot_dimension_numbers<[1], [0], [0], [1], [0, 0, 1, 1], [], []>} : vector<4x4xbf16>, vector<4x32xbf16>, vector<4x32xf32> -> vector<4x32xf32>
    %18 = vector.extract_strided_slice %1 {offsets = [0, 32], sizes = [4, 32], strides = [1, 1]} : vector<4x384xbf16> to vector<4x32xbf16>
    %19 = vector.extract_strided_slice %1 {offsets = [0, 160], sizes = [4, 32], strides = [1, 1]} : vector<4x384xbf16> to vector<4x32xbf16>
    %20 = vector.extract_strided_slice %1 {offsets = [0, 288], sizes = [4, 32], strides = [1, 1]} : vector<4x384xbf16> to vector<4x32xbf16>
    %cst_5 = arith.constant dense<0.000000e+00> : vector<4x4xf32>
    %21 = tpu.matmul %18, %19, %cst_5 {dimension_numbers = #tpu.dot_dimension_numbers<[1], [1], [0], [0], [0, 0, 1, 0], [], []>} : vector<4x32xbf16>, vector<4x32xbf16>, vector<4x4xf32> -> vector<4x4xf32>
    %cst_6 = arith.constant dense<0xFF800000> : vector<4xf32>
    %22 = vector.multi_reduction <maximumf>, %21, %cst_6 [1] : vector<4x4xf32> to vector<4xf32>
    %23 = vector.shape_cast %22 : vector<4xf32> to vector<4x1xf32>
    %24 = vector.broadcast %23 : vector<4x1xf32> to vector<4x4xf32>
    %25 = arith.subf %21, %24 : vector<4x4xf32>
    %26 = math.exp %25 : vector<4x4xf32>
    %cst_7 = arith.constant dense<0.000000e+00> : vector<4xf32>
    %27 = vector.multi_reduction <add>, %26, %cst_7 [1] : vector<4x4xf32> to vector<4xf32>
    %28 = vector.shape_cast %27 : vector<4xf32> to vector<4x1xf32>
    %29 = tpu.reciprocal %28 {approx = true} : vector<4x1xf32> -> vector<4x1xf32>
    %30 = vector.broadcast %29 : vector<4x1xf32> to vector<4x4xf32>
    %31 = arith.mulf %26, %30 : vector<4x4xf32>
    %32 = arith.truncf %31 : vector<4x4xf32> to vector<4x4xbf16>
    %cst_8 = arith.constant dense<0.000000e+00> : vector<4x32xf32>
    %33 = tpu.matmul %32, %20, %cst_8 {dimension_numbers = #tpu.dot_dimension_numbers<[1], [0], [0], [1], [0, 0, 1, 1], [], []>} : vector<4x4xbf16>, vector<4x32xbf16>, vector<4x32xf32> -> vector<4x32xf32>
    %34 = vector.extract_strided_slice %1 {offsets = [0, 64], sizes = [4, 32], strides = [1, 1]} : vector<4x384xbf16> to vector<4x32xbf16>
    %35 = vector.extract_strided_slice %1 {offsets = [0, 192], sizes = [4, 32], strides = [1, 1]} : vector<4x384xbf16> to vector<4x32xbf16>
    %36 = vector.extract_strided_slice %1 {offsets = [0, 320], sizes = [4, 32], strides = [1, 1]} : vector<4x384xbf16> to vector<4x32xbf16>
    %cst_9 = arith.constant dense<0.000000e+00> : vector<4x4xf32>
    %37 = tpu.matmul %34, %35, %cst_9 {dimension_numbers = #tpu.dot_dimension_numbers<[1], [1], [0], [0], [0, 0, 1, 0], [], []>} : vector<4x32xbf16>, vector<4x32xbf16>, vector<4x4xf32> -> vector<4x4xf32>
    %cst_10 = arith.constant dense<0xFF800000> : vector<4xf32>
    %38 = vector.multi_reduction <maximumf>, %37, %cst_10 [1] : vector<4x4xf32> to vector<4xf32>
    %39 = vector.shape_cast %38 : vector<4xf32> to vector<4x1xf32>
    %40 = vector.broadcast %39 : vector<4x1xf32> to vector<4x4xf32>
    %41 = arith.subf %37, %40 : vector<4x4xf32>
    %42 = math.exp %41 : vector<4x4xf32>
    %cst_11 = arith.constant dense<0.000000e+00> : vector<4xf32>
    %43 = vector.multi_reduction <add>, %42, %cst_11 [1] : vector<4x4xf32> to vector<4xf32>
    %44 = vector.shape_cast %43 : vector<4xf32> to vector<4x1xf32>
    %45 = tpu.reciprocal %44 {approx = true} : vector<4x1xf32> -> vector<4x1xf32>
    %46 = vector.broadcast %45 : vector<4x1xf32> to vector<4x4xf32>
    %47 = arith.mulf %42, %46 : vector<4x4xf32>
    %48 = arith.truncf %47 : vector<4x4xf32> to vector<4x4xbf16>
    %cst_12 = arith.constant dense<0.000000e+00> : vector<4x32xf32>
    %49 = tpu.matmul %48, %36, %cst_12 {dimension_numbers = #tpu.dot_dimension_numbers<[1], [0], [0], [1], [0, 0, 1, 1], [], []>} : vector<4x4xbf16>, vector<4x32xbf16>, vector<4x32xf32> -> vector<4x32xf32>
    %50 = vector.extract_strided_slice %1 {offsets = [0, 96], sizes = [4, 32], strides = [1, 1]} : vector<4x384xbf16> to vector<4x32xbf16>
    %51 = vector.extract_strided_slice %1 {offsets = [0, 224], sizes = [4, 32], strides = [1, 1]} : vector<4x384xbf16> to vector<4x32xbf16>
    %52 = vector.extract_strided_slice %1 {offsets = [0, 352], sizes = [4, 32], strides = [1, 1]} : vector<4x384xbf16> to vector<4x32xbf16>
    %cst_13 = arith.constant dense<0.000000e+00> : vector<4x4xf32>
    %53 = tpu.matmul %50, %51, %cst_13 {dimension_numbers = #tpu.dot_dimension_numbers<[1], [1], [0], [0], [0, 0, 1, 0], [], []>} : vector<4x32xbf16>, vector<4x32xbf16>, vector<4x4xf32> -> vector<4x4xf32>
    %cst_14 = arith.constant dense<0xFF800000> : vector<4xf32>
    %54 = vector.multi_reduction <maximumf>, %53, %cst_14 [1] : vector<4x4xf32> to vector<4xf32>
    %55 = vector.shape_cast %54 : vector<4xf32> to vector<4x1xf32>
    %56 = vector.broadcast %55 : vector<4x1xf32> to vector<4x4xf32>
    %57 = arith.subf %53, %56 : vector<4x4xf32>
    %58 = math.exp %57 : vector<4x4xf32>
    %cst_15 = arith.constant dense<0.000000e+00> : vector<4xf32>
    %59 = vector.multi_reduction <add>, %58, %cst_15 [1] : vector<4x4xf32> to vector<4xf32>
    %60 = vector.shape_cast %59 : vector<4xf32> to vector<4x1xf32>
    %61 = tpu.reciprocal %60 {approx = true} : vector<4x1xf32> -> vector<4x1xf32>
    %62 = vector.broadcast %61 : vector<4x1xf32> to vector<4x4xf32>
    %63 = arith.mulf %58, %62 : vector<4x4xf32>
    %64 = arith.truncf %63 : vector<4x4xf32> to vector<4x4xbf16>
    %cst_16 = arith.constant dense<0.000000e+00> : vector<4x32xf32>
    %65 = tpu.matmul %64, %52, %cst_16 {dimension_numbers = #tpu.dot_dimension_numbers<[1], [0], [0], [1], [0, 0, 1, 1], [], []>} : vector<4x4xbf16>, vector<4x32xbf16>, vector<4x32xf32> -> vector<4x32xf32>
    %66 = tpu.concatenate %17, %33, %49, %65 in 1 : vector<4x32xf32>, vector<4x32xf32>, vector<4x32xf32>, vector<4x32xf32> -> vector<4x128xf32>
    %67 = arith.truncf %66 : vector<4x128xf32> to vector<4x128xbf16>
    %c0_17 = arith.constant 0 : index
    %c0_18 = arith.constant 0 : index
    %c0_19 = arith.constant 0 : index
    %68 = vector.load %arg2[%c0_17, %c0_18, %c0_19] : memref<1x4x128xbf16, #tpu.memory_space<vmem>>, vector<1x4x128xbf16>
    %69 = vector.shape_cast %68 : vector<1x4x128xbf16> to vector<4x128xbf16>
    %70 = vector.shape_cast %67 : vector<4x128xbf16> to vector<1x4x128xbf16>
    tpu.vector_store %arg2[%c0_17, %c0_18, %c0_19], %70 {strides = array<i32>} : memref<1x4x128xbf16, #tpu.memory_space<vmem>>, vector<1x4x128xbf16>,
    return
  }
  func.func @transform_0(%arg0: i32) -> (i32, i32, i32) {
    %c0_i32 = arith.constant 0 : i32
    %c0_i32_0 = arith.constant 0 : i32
    %c0_i32_1 = arith.constant 0 : i32
    return %arg0, %c0_i32, %c0_i32_0 : i32, i32, i32
  }
  func.func @transform_1(%arg0: i32) -> (i32, i32, i32) {
    %c0_i32 = arith.constant 0 : i32
    %c0_i32_0 = arith.constant 0 : i32
    %c0_i32_1 = arith.constant 0 : i32
    return %arg0, %c0_i32, %c0_i32_0 : i32, i32, i32
  }
}

module attributes {stable_mosaic.version = 11 : i64} {
  func.func @kernel(%arg0: i32, %arg1: i32, %arg2: i32, %arg3: memref<1x8x128xbf16, #tpu.memory_space<vmem>>, %arg4: memref<1x128x128xbf16, #tpu.memory_space<vmem>>, %arg5: memref<1x1x128xf32, #tpu.memory_space<vmem>>, %arg6: memref<1x8x128xbf16, #tpu.memory_space<vmem>>, %arg7: memref<1x8x128xbf16, #tpu.memory_space<vmem>>) attributes {dimension_semantics = [#tpu.dimension_semantics<parallel>, #tpu.dimension_semantics<parallel>, #tpu.dimension_semantics<arbitrary>], iteration_bounds = array<i64: 2, 1, 1>, scalar_prefetch = 0 : i64, scratch_operands = 0 : i64, tpu.core_type = #tpu.core_type<tc>, window_params = [{transform_indices = @transform_0, window_bounds = array<i64: 1, 8, 128>}, {transform_indices = @transform_1, window_bounds = array<i64: 1, 128, 128>}, {transform_indices = @transform_2, window_bounds = array<i64: 1, 1, 128>}, {transform_indices = @transform_3, window_bounds = array<i64: 1, 8, 128>}, {transform_indices = @transform_4, window_bounds = array<i64: 1, 8, 128>}]} {
    %c0 = arith.constant 0 : index
    %c0_0 = arith.constant 0 : index
    %c0_1 = arith.constant 0 : index
    %0 = vector.load %arg3[%c0, %c0_0, %c0_1] : memref<1x8x128xbf16, #tpu.memory_space<vmem>>, vector<1x8x128xbf16>
    %1 = vector.shape_cast %0 : vector<1x8x128xbf16> to vector<8x128xbf16>
    %c0_2 = arith.constant 0 : index
    %c0_3 = arith.constant 0 : index
    %c0_4 = arith.constant 0 : index
    %2 = vector.load %arg4[%c0_2, %c0_3, %c0_4] : memref<1x128x128xbf16, #tpu.memory_space<vmem>>, vector<1x128x128xbf16>
    %3 = vector.shape_cast %2 : vector<1x128x128xbf16> to vector<128x128xbf16>
    %cst = arith.constant dense<0.000000e+00> : vector<8x128xf32>
    %4 = tpu.matmul %1, %3, %cst {dimension_numbers = #tpu.dot_dimension_numbers<[1], [0], [0], [1], [0, 0, 1, 1], [], []>} : vector<8x128xbf16>, vector<128x128xbf16>, vector<8x128xf32> -> vector<8x128xf32>
    %c0_5 = arith.constant 0 : index
    %c0_6 = arith.constant 0 : index
    %c0_7 = arith.constant 0 : index
    %5 = vector.load %arg5[%c0_5, %c0_6, %c0_7] : memref<1x1x128xf32, #tpu.memory_space<vmem>>, vector<1x1x128xf32>
    %6 = vector.shape_cast %5 : vector<1x1x128xf32> to vector<1x128xf32>
    %7 = vector.broadcast %6 : vector<1x128xf32> to vector<8x128xf32>
    %8 = arith.addf %4, %7 : vector<8x128xf32>
    %c0_8 = arith.constant 0 : index
    %c0_9 = arith.constant 0 : index
    %c0_10 = arith.constant 0 : index
    %9 = vector.load %arg6[%c0_8, %c0_9, %c0_10] : memref<1x8x128xbf16, #tpu.memory_space<vmem>>, vector<1x8x128xbf16>
    %10 = vector.shape_cast %9 : vector<1x8x128xbf16> to vector<8x128xbf16>
    %11 = arith.extf %10 : vector<8x128xbf16> to vector<8x128xf32>
    %12 = arith.addf %8, %11 : vector<8x128xf32>
    %13 = arith.truncf %12 : vector<8x128xf32> to vector<8x128xbf16>
    %c0_11 = arith.constant 0 : index
    %c0_12 = arith.constant 0 : index
    %c0_13 = arith.constant 0 : index
    %14 = vector.load %arg7[%c0_11, %c0_12, %c0_13] : memref<1x8x128xbf16, #tpu.memory_space<vmem>>, vector<1x8x128xbf16>
    %15 = vector.shape_cast %14 : vector<1x8x128xbf16> to vector<8x128xbf16>
    %16 = vector.shape_cast %13 : vector<8x128xbf16> to vector<1x8x128xbf16>
    tpu.vector_store %arg7[%c0_11, %c0_12, %c0_13], %16 {strides = array<i32>} : memref<1x8x128xbf16, #tpu.memory_space<vmem>>, vector<1x8x128xbf16>,
    return
  }
  func.func @transform_0(%arg0: i32, %arg1: i32, %arg2: i32) -> (i32, i32, i32) {
    %c0_i32 = arith.constant 0 : i32
    %c0_i32_0 = arith.constant 0 : i32
    return %arg0, %arg1, %c0_i32 : i32, i32, i32
  }
  func.func @transform_1(%arg0: i32, %arg1: i32, %arg2: i32) -> (i32, i32, i32) {
    %c0_i32 = arith.constant 0 : i32
    %c0_i32_0 = arith.constant 0 : i32
    return %arg0, %c0_i32, %arg2 : i32, i32, i32
  }
  func.func @transform_2(%arg0: i32, %arg1: i32, %arg2: i32) -> (i32, i32, i32) {
    %c0_i32 = arith.constant 0 : i32
    %c0_i32_0 = arith.constant 0 : i32
    return %arg0, %c0_i32, %arg2 : i32, i32, i32
  }
  func.func @transform_3(%arg0: i32, %arg1: i32, %arg2: i32) -> (i32, i32, i32) {
    %c0_i32 = arith.constant 0 : i32
    return %arg0, %arg1, %arg2 : i32, i32, i32
  }
  func.func @transform_4(%arg0: i32, %arg1: i32, %arg2: i32) -> (i32, i32, i32) {
    %c0_i32 = arith.constant 0 : i32
    return %arg0, %arg1, %arg2 : i32, i32, i32
  }
}

module attributes {stable_mosaic.version = 11 : i64} {
  func.func @kernel(%arg0: i32, %arg1: i32, %arg2: i32, %arg3: memref<1x8x128xbf16, #tpu.memory_space<vmem>>, %arg4: memref<1x128x128xbf16, #tpu.memory_space<vmem>>, %arg5: memref<1x1x128xf32, #tpu.memory_space<vmem>>, %arg6: memref<1x1x128xf32, #tpu.memory_space<vmem>>, %arg7: memref<1x1x128xf32, #tpu.memory_space<vmem>>, %arg8: memref<1x8x128xbf16, #tpu.memory_space<vmem>>, %arg9: memref<8x128xbf16, #tpu.memory_space<vmem>>) attributes {dimension_semantics = [#tpu.dimension_semantics<parallel>, #tpu.dimension_semantics<parallel>, #tpu.dimension_semantics<arbitrary>], iteration_bounds = array<i64: 2, 1, 3>, scalar_prefetch = 0 : i64, scratch_operands = 1 : i64, tpu.core_type = #tpu.core_type<tc>, window_params = [{transform_indices = @transform_0, window_bounds = array<i64: 1, 8, 128>}, {transform_indices = @transform_1, window_bounds = array<i64: 1, 128, 128>}, {transform_indices = @transform_2, window_bounds = array<i64: 1, 1, 128>}, {transform_indices = @transform_3, window_bounds = array<i64: 1, 1, 128>}, {transform_indices = @transform_4, window_bounds = array<i64: 1, 1, 128>}, {transform_indices = @transform_5, window_bounds = array<i64: 1, 8, 128>}]} {
    %c0_i32 = arith.constant 0 : i32
    %0 = arith.cmpi eq, %arg2, %c0_i32 : i32
    %1 = arith.extui %0 : i1 to i32
    %c0_i32_0 = arith.constant 0 : i32
    %2 = arith.cmpi ne, %1, %c0_i32_0 : i32
    scf.if %2 {
      %c0_15 = arith.constant 0 : index
      %c0_16 = arith.constant 0 : index
      %c0_17 = arith.constant 0 : index
      %28 = vector.load %arg3[%c0_15, %c0_16, %c0_17] : memref<1x8x128xbf16, #tpu.memory_space<vmem>>, vector<1x8x128xbf16>
      %29 = vector.shape_cast %28 : vector<1x8x128xbf16> to vector<8x128xbf16>
      %30 = arith.extf %29 : vector<8x128xbf16> to vector<8x128xf32>
      %cst_18 = arith.constant dense<0.000000e+00> : vector<8xf32>
      %31 = vector.multi_reduction <add>, %30, %cst_18 [1] : vector<8x128xf32> to vector<8xf32>
      %32 = vector.shape_cast %31 : vector<8xf32> to vector<8x1xf32>
      %cst_19 = arith.constant 1.280000e+02 : f32
      %33 = vector.broadcast %cst_19 : f32 to vector<8x1xf32>
      %34 = arith.divf %32, %33 : vector<8x1xf32>
      %35 = vector.broadcast %34 : vector<8x1xf32> to vector<8x128xf32>
      %36 = arith.subf %30, %35 : vector<8x128xf32>
      %37 = arith.mulf %36, %36 : vector<8x128xf32>
      %cst_20 = arith.constant dense<0.000000e+00> : vector<8xf32>
      %38 = vector.multi_reduction <add>, %37, %cst_20 [1] : vector<8x128xf32> to vector<8xf32>
      %39 = vector.shape_cast %38 : vector<8xf32> to vector<8x1xf32>
      %cst_21 = arith.constant 1.280000e+02 : f32
      %40 = vector.broadcast %cst_21 : f32 to vector<8x1xf32>
      %41 = arith.divf %39, %40 : vector<8x1xf32>
      %42 = vector.broadcast %34 : vector<8x1xf32> to vector<8x128xf32>
      %43 = arith.subf %30, %42 : vector<8x128xf32>
      %cst_22 = arith.constant 9.99999974E-6 : f32
      %44 = vector.broadcast %cst_22 : f32 to vector<8x1xf32>
      %45 = arith.addf %41, %44 : vector<8x1xf32>
      %46 = math.rsqrt %45 : vector<8x1xf32>
      %47 = vector.broadcast %46 : vector<8x1xf32> to vector<8x128xf32>
      %48 = arith.mulf %43, %47 : vector<8x128xf32>
      %c0_23 = arith.constant 0 : index
      %c0_24 = arith.constant 0 : index
      %c0_25 = arith.constant 0 : index
      %49 = vector.load %arg5[%c0_23, %c0_24, %c0_25] : memref<1x1x128xf32, #tpu.memory_space<vmem>>, vector<1x1x128xf32>
      %50 = vector.shape_cast %49 : vector<1x1x128xf32> to vector<1x128xf32>
      %51 = vector.broadcast %50 : vector<1x128xf32> to vector<8x128xf32>
      %52 = arith.mulf %48, %51 : vector<8x128xf32>
      %c0_26 = arith.constant 0 : index
      %c0_27 = arith.constant 0 : index
      %c0_28 = arith.constant 0 : index
      %53 = vector.load %arg6[%c0_26, %c0_27, %c0_28] : memref<1x1x128xf32, #tpu.memory_space<vmem>>, vector<1x1x128xf32>
      %54 = vector.shape_cast %53 : vector<1x1x128xf32> to vector<1x128xf32>
      %55 = vector.broadcast %54 : vector<1x128xf32> to vector<8x128xf32>
      %56 = arith.addf %52, %55 : vector<8x128xf32>
      %57 = arith.truncf %56 : vector<8x128xf32> to vector<8x128xbf16>
      %c0_29 = arith.constant 0 : index
      %c0_30 = arith.constant 0 : index
      %58 = vector.load %arg9[%c0_29, %c0_30] : memref<8x128xbf16, #tpu.memory_space<vmem>>, vector<8x128xbf16>
      tpu.vector_store %arg9[%c0_29, %c0_30], %57 {strides = array<i32>} : memref<8x128xbf16, #tpu.memory_space<vmem>>, vector<8x128xbf16>,
    } else {
    }
    %c0 = arith.constant 0 : index
    %c0_1 = arith.constant 0 : index
    %3 = vector.load %arg9[%c0, %c0_1] : memref<8x128xbf16, #tpu.memory_space<vmem>>, vector<8x128xbf16>
    %c0_2 = arith.constant 0 : index
    %c0_3 = arith.constant 0 : index
    %c0_4 = arith.constant 0 : index
    %4 = vector.load %arg4[%c0_2, %c0_3, %c0_4] : memref<1x128x128xbf16, #tpu.memory_space<vmem>>, vector<1x128x128xbf16>
    %5 = vector.shape_cast %4 : vector<1x128x128xbf16> to vector<128x128xbf16>
    %cst = arith.constant dense<0.000000e+00> : vector<8x128xf32>
    %6 = tpu.matmul %3, %5, %cst {dimension_numbers = #tpu.dot_dimension_numbers<[1], [0], [0], [1], [0, 0, 1, 1], [], []>} : vector<8x128xbf16>, vector<128x128xbf16>, vector<8x128xf32> -> vector<8x128xf32>
    %c0_5 = arith.constant 0 : index
    %c0_6 = arith.constant 0 : index
    %c0_7 = arith.constant 0 : index
    %7 = vector.load %arg7[%c0_5, %c0_6, %c0_7] : memref<1x1x128xf32, #tpu.memory_space<vmem>>, vector<1x1x128xf32>
    %8 = vector.shape_cast %7 : vector<1x1x128xf32> to vector<1x128xf32>
    %9 = vector.broadcast %8 : vector<1x128xf32> to vector<8x128xf32>
    %10 = arith.addf %6, %9 : vector<8x128xf32>
    %11 = arith.mulf %10, %10 : vector<8x128xf32>
    %12 = arith.mulf %10, %11 : vector<8x128xf32>
    %cst_8 = arith.constant 4.471500e-02 : f32
    %13 = vector.broadcast %cst_8 : f32 to vector<8x128xf32>
    %14 = arith.mulf %13, %12 : vector<8x128xf32>
    %15 = arith.addf %10, %14 : vector<8x128xf32>
    %cst_9 = arith.constant 0.797884583 : f32
    %16 = vector.broadcast %cst_9 : f32 to vector<8x128xf32>
    %17 = arith.mulf %16, %15 : vector<8x128xf32>
    %18 = math.tanh %17 : vector<8x128xf32>
    %cst_10 = arith.constant 1.000000e+00 : f32
    %19 = vector.broadcast %cst_10 : f32 to vector<8x128xf32>
    %20 = arith.addf %19, %18 : vector<8x128xf32>
    %cst_11 = arith.constant 5.000000e-01 : f32
    %21 = vector.broadcast %cst_11 : f32 to vector<8x128xf32>
    %22 = arith.mulf %21, %20 : vector<8x128xf32>
    %23 = arith.mulf %10, %22 : vector<8x128xf32>
    %24 = arith.truncf %23 : vector<8x128xf32> to vector<8x128xbf16>
    %c0_12 = arith.constant 0 : index
    %c0_13 = arith.constant 0 : index
    %c0_14 = arith.constant 0 : index
    %25 = vector.load %arg8[%c0_12, %c0_13, %c0_14] : memref<1x8x128xbf16, #tpu.memory_space<vmem>>, vector<1x8x128xbf16>
    %26 = vector.shape_cast %25 : vector<1x8x128xbf16> to vector<8x128xbf16>
    %27 = vector.shape_cast %24 : vector<8x128xbf16> to vector<1x8x128xbf16>
    tpu.vector_store %arg8[%c0_12, %c0_13, %c0_14], %27 {strides = array<i32>} : memref<1x8x128xbf16, #tpu.memory_space<vmem>>, vector<1x8x128xbf16>,
    return
  }
  func.func @transform_0(%arg0: i32, %arg1: i32, %arg2: i32) -> (i32, i32, i32) {
    %c0_i32 = arith.constant 0 : i32
    %c0_i32_0 = arith.constant 0 : i32
    return %arg0, %arg1, %c0_i32 : i32, i32, i32
  }
  func.func @transform_1(%arg0: i32, %arg1: i32, %arg2: i32) -> (i32, i32, i32) {
    %c0_i32 = arith.constant 0 : i32
    %c0_i32_0 = arith.constant 0 : i32
    return %arg0, %c0_i32, %arg2 : i32, i32, i32
  }
  func.func @transform_2(%arg0: i32, %arg1: i32, %arg2: i32) -> (i32, i32, i32) {
    %c0_i32 = arith.constant 0 : i32
    %c0_i32_0 = arith.constant 0 : i32
    %c0_i32_1 = arith.constant 0 : i32
    return %arg0, %c0_i32, %c0_i32_0 : i32, i32, i32
  }
  func.func @transform_3(%arg0: i32, %arg1: i32, %arg2: i32) -> (i32, i32, i32) {
    %c0_i32 = arith.constant 0 : i32
    %c0_i32_0 = arith.constant 0 : i32
    %c0_i32_1 = arith.constant 0 : i32
    return %arg0, %c0_i32, %c0_i32_0 : i32, i32, i32
  }
  func.func @transform_4(%arg0: i32, %arg1: i32, %arg2: i32) -> (i32, i32, i32) {
    %c0_i32 = arith.constant 0 : i32
    %c0_i32_0 = arith.constant 0 : i32
    return %arg0, %c0_i32, %arg2 : i32, i32, i32
  }
  func.func @transform_5(%arg0: i32, %arg1: i32, %arg2: i32) -> (i32, i32, i32) {
    %c0_i32 = arith.constant 0 : i32
    return %arg0, %arg1, %arg2 : i32, i32, i32
  }
}

module attributes {stable_mosaic.version = 11 : i64} {
  func.func @kernel(%arg0: i32, %arg1: i32, %arg2: i32, %arg3: memref<1x8x384xbf16, #tpu.memory_space<vmem>>, %arg4: memref<1x384x128xbf16, #tpu.memory_space<vmem>>, %arg5: memref<1x1x128xf32, #tpu.memory_space<vmem>>, %arg6: memref<1x8x128xbf16, #tpu.memory_space<vmem>>, %arg7: memref<1x8x128xbf16, #tpu.memory_space<vmem>>) attributes {dimension_semantics = [#tpu.dimension_semantics<parallel>, #tpu.dimension_semantics<parallel>, #tpu.dimension_semantics<arbitrary>], iteration_bounds = array<i64: 2, 1, 1>, scalar_prefetch = 0 : i64, scratch_operands = 0 : i64, tpu.core_type = #tpu.core_type<tc>, window_params = [{transform_indices = @transform_0, window_bounds = array<i64: 1, 8, 384>}, {transform_indices = @transform_1, window_bounds = array<i64: 1, 384, 128>}, {transform_indices = @transform_2, window_bounds = array<i64: 1, 1, 128>}, {transform_indices = @transform_3, window_bounds = array<i64: 1, 8, 128>}, {transform_indices = @transform_4, window_bounds = array<i64: 1, 8, 128>}]} {
    %c0 = arith.constant 0 : index
    %c0_0 = arith.constant 0 : index
    %c0_1 = arith.constant 0 : index
    %0 = vector.load %arg3[%c0, %c0_0, %c0_1] : memref<1x8x384xbf16, #tpu.memory_space<vmem>>, vector<1x8x384xbf16>
    %1 = vector.shape_cast %0 : vector<1x8x384xbf16> to vector<8x384xbf16>
    %c0_2 = arith.constant 0 : index
    %c0_3 = arith.constant 0 : index
    %c0_4 = arith.constant 0 : index
    %2 = vector.load %arg4[%c0_2, %c0_3, %c0_4] : memref<1x384x128xbf16, #tpu.memory_space<vmem>>, vector<1x384x128xbf16>
    %3 = vector.shape_cast %2 : vector<1x384x128xbf16> to vector<384x128xbf16>
    %cst = arith.constant dense<0.000000e+00> : vector<8x128xf32>
    %4 = tpu.matmul %1, %3, %cst {dimension_numbers = #tpu.dot_dimension_numbers<[1], [0], [0], [1], [0, 0, 1, 1], [], []>} : vector<8x384xbf16>, vector<384x128xbf16>, vector<8x128xf32> -> vector<8x128xf32>
    %c0_5 = arith.constant 0 : index
    %c0_6 = arith.constant 0 : index
    %c0_7 = arith.constant 0 : index
    %5 = vector.load %arg5[%c0_5, %c0_6, %c0_7] : memref<1x1x128xf32, #tpu.memory_space<vmem>>, vector<1x1x128xf32>
    %6 = vector.shape_cast %5 : vector<1x1x128xf32> to vector<1x128xf32>
    %7 = vector.broadcast %6 : vector<1x128xf32> to vector<8x128xf32>
    %8 = arith.addf %4, %7 : vector<8x128xf32>
    %c0_8 = arith.constant 0 : index
    %c0_9 = arith.constant 0 : index
    %c0_10 = arith.constant 0 : index
    %9 = vector.load %arg6[%c0_8, %c0_9, %c0_10] : memref<1x8x128xbf16, #tpu.memory_space<vmem>>, vector<1x8x128xbf16>
    %10 = vector.shape_cast %9 : vector<1x8x128xbf16> to vector<8x128xbf16>
    %11 = arith.extf %10 : vector<8x128xbf16> to vector<8x128xf32>
    %12 = arith.addf %8, %11 : vector<8x128xf32>
    %13 = arith.truncf %12 : vector<8x128xf32> to vector<8x128xbf16>
    %c0_11 = arith.constant 0 : index
    %c0_12 = arith.constant 0 : index
    %c0_13 = arith.constant 0 : index
    %14 = vector.load %arg7[%c0_11, %c0_12, %c0_13] : memref<1x8x128xbf16, #tpu.memory_space<vmem>>, vector<1x8x128xbf16>
    %15 = vector.shape_cast %14 : vector<1x8x128xbf16> to vector<8x128xbf16>
    %16 = vector.shape_cast %13 : vector<8x128xbf16> to vector<1x8x128xbf16>
    tpu.vector_store %arg7[%c0_11, %c0_12, %c0_13], %16 {strides = array<i32>} : memref<1x8x128xbf16, #tpu.memory_space<vmem>>, vector<1x8x128xbf16>,
    return
  }
  func.func @transform_0(%arg0: i32, %arg1: i32, %arg2: i32) -> (i32, i32, i32) {
    %c0_i32 = arith.constant 0 : i32
    %c0_i32_0 = arith.constant 0 : i32
    return %arg0, %arg1, %c0_i32 : i32, i32, i32
  }
  func.func @transform_1(%arg0: i32, %arg1: i32, %arg2: i32) -> (i32, i32, i32) {
    %c0_i32 = arith.constant 0 : i32
    %c0_i32_0 = arith.constant 0 : i32
    return %arg0, %c0_i32, %arg2 : i32, i32, i32
  }
  func.func @transform_2(%arg0: i32, %arg1: i32, %arg2: i32) -> (i32, i32, i32) {
    %c0_i32 = arith.constant 0 : i32
    %c0_i32_0 = arith.constant 0 : i32
    return %arg0, %c0_i32, %arg2 : i32, i32, i32
  }
  func.func @transform_3(%arg0: i32, %arg1: i32, %arg2: i32) -> (i32, i32, i32) {
    %c0_i32 = arith.constant 0 : i32
    return %arg0, %arg1, %arg2 : i32, i32, i32
  }
  func.func @transform_4(%arg0: i32, %arg1: i32, %arg2: i32) -> (i32, i32, i32) {
    %c0_i32 = arith.constant 0 : i32
    return %arg0, %arg1, %arg2 : i32, i32, i32
  }
}

module attributes {stable_mosaic.version = 11 : i64} {
  func.func @_ln_kernel(%arg0: i32, %arg1: i32, %arg2: memref<1x8x128xbf16, #tpu.memory_space<vmem>>, %arg3: memref<1x1x128xf32, #tpu.memory_space<vmem>>, %arg4: memref<1x1x128xf32, #tpu.memory_space<vmem>>, %arg5: memref<1x8x128xf32, #tpu.memory_space<vmem>>) attributes {dimension_semantics = [#tpu.dimension_semantics<parallel>, #tpu.dimension_semantics<parallel>], iteration_bounds = array<i64: 2, 1>, scalar_prefetch = 0 : i64, scratch_operands = 0 : i64, tpu.core_type = #tpu.core_type<tc>, window_params = [{transform_indices = @transform_0, window_bounds = array<i64: 1, 8, 128>}, {transform_indices = @transform_1, window_bounds = array<i64: 1, 1, 128>}, {transform_indices = @transform_2, window_bounds = array<i64: 1, 1, 128>}, {transform_indices = @transform_3, window_bounds = array<i64: 1, 8, 128>}]} {
    %c0 = arith.constant 0 : index
    %c0_0 = arith.constant 0 : index
    %c0_1 = arith.constant 0 : index
    %0 = vector.load %arg2[%c0, %c0_0, %c0_1] : memref<1x8x128xbf16, #tpu.memory_space<vmem>>, vector<1x8x128xbf16>
    %1 = vector.shape_cast %0 : vector<1x8x128xbf16> to vector<8x128xbf16>
    %2 = arith.extf %1 : vector<8x128xbf16> to vector<8x128xf32>
    %cst = arith.constant dense<0.000000e+00> : vector<8xf32>
    %3 = vector.multi_reduction <add>, %2, %cst [1] : vector<8x128xf32> to vector<8xf32>
    %4 = vector.shape_cast %3 : vector<8xf32> to vector<8x1xf32>
    %cst_2 = arith.constant 1.280000e+02 : f32
    %5 = vector.broadcast %cst_2 : f32 to vector<8x1xf32>
    %6 = arith.divf %4, %5 : vector<8x1xf32>
    %7 = vector.broadcast %6 : vector<8x1xf32> to vector<8x128xf32>
    %8 = arith.subf %2, %7 : vector<8x128xf32>
    %9 = arith.mulf %8, %8 : vector<8x128xf32>
    %cst_3 = arith.constant dense<0.000000e+00> : vector<8xf32>
    %10 = vector.multi_reduction <add>, %9, %cst_3 [1] : vector<8x128xf32> to vector<8xf32>
    %11 = vector.shape_cast %10 : vector<8xf32> to vector<8x1xf32>
    %cst_4 = arith.constant 1.280000e+02 : f32
    %12 = vector.broadcast %cst_4 : f32 to vector<8x1xf32>
    %13 = arith.divf %11, %12 : vector<8x1xf32>
    %14 = vector.broadcast %6 : vector<8x1xf32> to vector<8x128xf32>
    %15 = arith.subf %2, %14 : vector<8x128xf32>
    %cst_5 = arith.constant 9.99999974E-6 : f32
    %16 = vector.broadcast %cst_5 : f32 to vector<8x1xf32>
    %17 = arith.addf %13, %16 : vector<8x1xf32>
    %18 = math.rsqrt %17 : vector<8x1xf32>
    %19 = vector.broadcast %18 : vector<8x1xf32> to vector<8x128xf32>
    %20 = arith.mulf %15, %19 : vector<8x128xf32>
    %c0_6 = arith.constant 0 : index
    %c0_7 = arith.constant 0 : index
    %c0_8 = arith.constant 0 : index
    %21 = vector.load %arg3[%c0_6, %c0_7, %c0_8] : memref<1x1x128xf32, #tpu.memory_space<vmem>>, vector<1x1x128xf32>
    %22 = vector.shape_cast %21 : vector<1x1x128xf32> to vector<1x128xf32>
    %23 = vector.broadcast %22 : vector<1x128xf32> to vector<8x128xf32>
    %24 = arith.mulf %20, %23 : vector<8x128xf32>
    %c0_9 = arith.constant 0 : index
    %c0_10 = arith.constant 0 : index
    %c0_11 = arith.constant 0 : index
    %25 = vector.load %arg4[%c0_9, %c0_10, %c0_11] : memref<1x1x128xf32, #tpu.memory_space<vmem>>, vector<1x1x128xf32>
    %26 = vector.shape_cast %25 : vector<1x1x128xf32> to vector<1x128xf32>
    %27 = vector.broadcast %26 : vector<1x128xf32> to vector<8x128xf32>
    %28 = arith.addf %24, %27 : vector<8x128xf32>
    %c0_12 = arith.constant 0 : index
    %c0_13 = arith.constant 0 : index
    %c0_14 = arith.constant 0 : index
    %29 = vector.load %arg5[%c0_12, %c0_13, %c0_14] : memref<1x8x128xf32, #tpu.memory_space<vmem>>, vector<1x8x128xf32>
    %30 = vector.shape_cast %29 : vector<1x8x128xf32> to vector<8x128xf32>
    %31 = vector.shape_cast %28 : vector<8x128xf32> to vector<1x8x128xf32>
    tpu.vector_store %arg5[%c0_12, %c0_13, %c0_14], %31 {strides = array<i32>} : memref<1x8x128xf32, #tpu.memory_space<vmem>>, vector<1x8x128xf32>,
    return
  }
  func.func @transform_0(%arg0: i32, %arg1: i32) -> (i32, i32, i32) {
    %c0_i32 = arith.constant 0 : i32
    %c0_i32_0 = arith.constant 0 : i32
    return %arg0, %arg1, %c0_i32 : i32, i32, i32
  }
  func.func @transform_1(%arg0: i32, %arg1: i32) -> (i32, i32, i32) {
    %c0_i32 = arith.constant 0 : i32
    %c0_i32_0 = arith.constant 0 : i32
    %c0_i32_1 = arith.constant 0 : i32
    return %arg0, %c0_i32, %c0_i32_0 : i32, i32, i32
  }
  func.func @transform_2(%arg0: i32, %arg1: i32) -> (i32, i32, i32) {
    %c0_i32 = arith.constant 0 : i32
    %c0_i32_0 = arith.constant 0 : i32
    %c0_i32_1 = arith.constant 0 : i32
    return %arg0, %c0_i32, %c0_i32_0 : i32, i32, i32
  }
  func.func @transform_3(%arg0: i32, %arg1: i32) -> (i32, i32, i32) {
    %c0_i32 = arith.constant 0 : i32
    %c0_i32_0 = arith.constant 0 : i32
    return %arg0, %arg1, %c0_i32 : i32, i32, i32
  }
}

</mosaic_0001>

<llo_original>
// kernel: ste_encoder_forward.13
$region0: #{ste_encoder_forward.13}
  #allocation0 [shape = 'u32[]', space=smem, size = 0x4, offset = 0x4, fixed_abs, tag = 'smem constant byte address 0x4 - core index']
  #allocation1 [shape = 'u32[144,128]{1,0:T(1,128)}', space=vmem, size = 0x12000, scoped, tag = 'internal scratch']
  %s0 = inlined_call_operand.vmem [shape: bf16[1,512,147], index: 0, kind: input, shape index: {}]
  %s1 = inlined_call_operand.vmem [shape: bf16[1,147,128], index: 1, kind: input, shape index: {}]
  %s2 = inlined_call_operand.vmem [shape: bf16[1,512,128], index: 2, kind: output, shape index: {}]
  %s3 = sld [smem:[#allocation0]]
  $region41: #{ste_encoder_forward.13} parent=0
    _
  %s5 = ssub.s32 1, %s3
  %s6 = scalar_select 0, %s5, %s3
  loop: start=0, step=1, limit=4
  $region2: #{ste_encoder_forward.13} parent=0 // loop_pre_header
    _
  $region3: #{ste_encoder_forward.13} parent=0 // loop_header
    %s8 = sphi 0, %s12
    %p9 = scmp.ge.s32.totalorder %s8, 4
    %s15 = sphi 0, %s34
    %s16 = sphi 0, %s30
    %s17 = sphi 0, %s26
    %s18 = sphi 0, %s15
    %s19 = sphi 0, %s16
    %s20 = sphi 0, %s17
    %s21 = sphi 0, %s18
    %s22 = sphi 0, %s19
    %s23 = sphi 0, %s20
    %s39 = sphi 0, %s41
    %s42 = sphi 0, %s39
    %s43 = sphi 0, %s42
    %s59 = sphi 0, %s43
    %s67 = sphi 0, %s69
    %s70 = sphi 0, %s67
    %s71 = sphi 0, %s70
    %s87 = sphi 0, %s71
    %s97 = sphi 0, %s99
    %s100 = sphi 0, %s97
    %s101 = sphi 0, %s100
    %s117 = sphi 0, %s101
  $region4: #{ste_encoder_forward.13} parent=0 // loop_header_branch
    %11 = sbr.rel (%p9) target = $region8
  $region5: #{ste_encoder_forward.13} parent=0 // loop_body
    %s13 = ssub.s32 %s8, 1
    %s14 = ssub.s32 %s8, 2
    %s24 = sadd.s32 1, %s17
    %p25 = scmp.ge.s32.totalorder %s24, 1
    %s26 = scalar_select %p25, 0, %s24
    %s27 = sadd.s32 1, %s16
    %s28 = scalar_select %p25, %s27, %s16
    %p29 = scmp.ge.s32.totalorder %s28, 2
    %s30 = scalar_select %p29, 0, %s28
    %s31 = sadd.s32 1, %s15
    %s32 = scalar_select %p29, %s31, %s15
    %p33 = scmp.ge.s32.totalorder %s32, 1
    %s34 = scalar_select %p33, 0, %s32
    %s35 = ssub.s32 %s15, %s34
    %s36 = ssub.s32 %s16, %s30
    %s37 = sor.u32 %s35, %s36
    %p38 = scmp.eq.s32.totalorder %s37, 0
    %s40 = sadd.s32 %s39, 1
    %s41 = scalar_select %p38, %s39, %s40
    %p44 = pneg %p38
    %p45 = scmp.eq.s32.totalorder %s8, 1
    %p46 = por %p44, %p45
    %p47 = scmp.ne.s32.totalorder %s39, %s42
    %p48 = scmp.eq.s32.totalorder %s8, 0
    %p49 = por %p47, %p48
    %p50 = scmp.ne.s32.totalorder %s39, %s42
    %p51 = scmp.eq.s32.totalorder %s13, 1
    %p52 = por %p50, %p51
    %p53 = scmp.ne.s32.totalorder %s42, %s43
    %p54 = scmp.eq.s32.totalorder %s13, 0
    %p55 = por %p53, %p54
    %p56 = scmp.ne.s32.totalorder %s42, %s43
    %p57 = scmp.eq.s32.totalorder %s14, 1
    %p58 = por %p56, %p57
    %p60 = scmp.ne.s32.totalorder %s43, %s59
    %p61 = scmp.eq.s32.totalorder %s14, 0
    %p62 = por %p60, %p61
    %s63 = ssub.s32 %s15, %s34
    %s64 = ssub.s32 %s17, %s26
    %s65 = sor.u32 %s63, %s64
    %p66 = scmp.eq.s32.totalorder %s65, 0
    %s68 = sadd.s32 %s67, 1
    %s69 = scalar_select %p66, %s67, %s68
    %p72 = pneg %p66
    %p73 = scmp.eq.s32.totalorder %s8, 1
    %p74 = por %p72, %p73
    %p75 = scmp.ne.s32.totalorder %s67, %s70
    %p76 = scmp.eq.s32.totalorder %s8, 0
    %p77 = por %p75, %p76
    %p78 = scmp.ne.s32.totalorder %s67, %s70
    %p79 = scmp.eq.s32.totalorder %s13, 1
    %p80 = por %p78, %p79
    %p81 = scmp.ne.s32.totalorder %s70, %s71
    %p82 = scmp.eq.s32.totalorder %s13, 0
    %p83 = por %p81, %p82
    %p84 = scmp.ne.s32.totalorder %s70, %s71
    %p85 = scmp.eq.s32.totalorder %s14, 1
    %p86 = por %p84, %p85
    %p88 = scmp.ne.s32.totalorder %s71, %s87
    %p89 = scmp.eq.s32.totalorder %s14, 0
    %p90 = por %p88, %p89
    %s91 = ssub.s32 %s15, %s34
    %s92 = ssub.s32 %s16, %s30
    %s93 = sor.u32 %s91, %s92
    %s94 = ssub.s32 %s17, %s26
    %s95 = sor.u32 %s93, %s94
    %p96 = scmp.eq.s32.totalorder %s95, 0
    %s98 = sadd.s32 %s97, 1
    %s99 = scalar_select %p96, %s97, %s98
    %p102 = pneg %p96
    %p103 = scmp.eq.s32.totalorder %s8, 1
    %p104 = por %p102, %p103
    %p105 = scmp.ne.s32.totalorder %s97, %s100
    %p106 = scmp.eq.s32.totalorder %s8, 0
    %p107 = por %p105, %p106
    %p108 = scmp.ne.s32.totalorder %s97, %s100
    %p109 = scmp.eq.s32.totalorder %s13, 1
    %p110 = por %p108, %p109
    %p111 = scmp.ne.s32.totalorder %s100, %s101
    %p112 = scmp.eq.s32.totalorder %s13, 0
    %p113 = por %p111, %p112
    %p114 = scmp.ne.s32.totalorder %s100, %s101
    %p115 = scmp.eq.s32.totalorder %s14, 1
    %p116 = por %p114, %p115
    %p118 = scmp.ne.s32.totalorder %s101, %s117
    %p119 = scmp.eq.s32.totalorder %s14, 0
    %p120 = por %p118, %p119
    %p121 = scmp.le.s32.totalorder 1, %s8
    %p122 = scmp.lt.s32.totalorder %s8, 3
    %p123 = pnand %p121, %p122
    %p124 = pneg %p123
    // Predicated region
    $region9: #{ste_encoder_forward.13} parent=5 // pred_check
      _
    $region10: #{ste_encoder_forward.13} parent=5 // pred_check_branch
      %126 = sbr.rel (%p123) target = $region12
    $region11: #{ste_encoder_forward.13} parent=5 // pred_region
      %s127 = ssub.s32 %s8, 1
      // Predicated region
      $region13: #{ste_encoder_forward.13} parent=11 // pred_check
        %p128 = pneg %p83
      $region14: #{ste_encoder_forward.13} parent=11 // pred_check_branch
        %130 = sbr.rel (%p128) target = $region16
      $region15: #{ste_encoder_forward.13} parent=11 // pred_region
        %p131 = scmp.lt.s32.totalorder %s18, 0
        %s132 = scalar_select %p131, %s18, 0
        %p133 = scmp.lt.s32.totalorder %s20, 0
        %s134 = scalar_select %p133, %s20, 0
        %s135 = smul.addr %s132, 19
        %s136 = sadd.s32 %s134, %s135
        %s137 = smul.addr %s136, 4
        %s138 = scalar_lea.vmem %s1, %s137
      $region16: #{ste_encoder_forward.13} parent=11 // pred_fallthru
        _
    $region12: #{ste_encoder_forward.13} parent=5 // pred_fallthru
      _
    %p139 = scmp.lt.s32.totalorder %s8, 2
    // Predicated region
    $region17: #{ste_encoder_forward.13} parent=5 // pred_check
      %p140 = pneg %p139
    $region18: #{ste_encoder_forward.13} parent=5 // pred_check_branch
      %142 = sbr.rel (%p140) target = $region20
    $region19: #{ste_encoder_forward.13} parent=5 // pred_region
      // Predicated region
      $region21: #{ste_encoder_forward.13} parent=19 // pred_check
        %p143 = pneg %p49
      $region22: #{ste_encoder_forward.13} parent=19 // pred_check_branch
        %145 = sbr.rel (%p143) target = $region24
      $region23: #{ste_encoder_forward.13} parent=19 // pred_region
        %s146 = smul.u32 32, %s16
        %p147 = scmp.lt.s32.totalorder %s15, 0
        %s148 = scalar_select %p147, %s15, 0
        %p149 = scmp.lt.s32.totalorder %s146, 63
        %s150 = scalar_select %p149, %s146, 63
        %s151 = smul.addr %s150, 2
        %s152 = smul.addr %s148, 128
        %s153 = sadd.s32 %s151, %s152
        %s154 = smul.addr %s153, 4
        %s155 = scalar_lea.vmem %s0, %s154
        %s156 = smul.u32 32, %s16
      $region24: #{ste_encoder_forward.13} parent=19 // pred_fallthru
        _
    $region20: #{ste_encoder_forward.13} parent=5 // pred_fallthru
      _
    %p157 = scmp.le.s32.totalorder 1, %s8
    %p158 = scmp.lt.s32.totalorder %s8, 3
    %p159 = pnand %p157, %p158
    %p160 = pneg %p159
    // Predicated region
    $region25: #{ste_encoder_forward.13} parent=5 // pred_check
      _
    $region26: #{ste_encoder_forward.13} parent=5 // pred_check_branch
      %162 = sbr.rel (%p159) target = $region28
    $region27: #{ste_encoder_forward.13} parent=5 // pred_region
      %s163 = ssub.s32 %s8, 1
      %s164 = smul.u32 32, %s19
      %p165 = scmp.lt.s32.totalorder %s18, 0
      %s166 = scalar_select %p165, %s18, 0
      %p167 = scmp.lt.s32.totalorder %s164, 63
      %s168 = scalar_select %p167, %s164, 63
      %s169 = smul.addr %s168, 2
      %s170 = smul.addr %s166, 128
      %s171 = sadd.s32 %s169, %s170
      %s172 = smul.addr %s171, 4
      %s173 = scalar_lea.vmem %s0, %s172
      %p174 = pneg %p55
      %p175 = pneg %p52
      %p176 = scmp.lt.s32.totalorder %s18, 0
      %s177 = scalar_select %p176, %s18, 0
      %p178 = scmp.lt.s32.totalorder %s20, 0
      %s179 = scalar_select %p178, %s20, 0
      %s180 = smul.addr %s177, 19
      %s181 = sadd.s32 %s179, %s180
      %s182 = smul.addr %s181, 4
      %s183 = scalar_lea.vmem %s1, %s182
      %p184 = pneg %p83
      %p185 = pneg %p80
      %p186 = pneg %p113
      %p187 = pneg %p110
      %s188 = smul.u32 32, %s19
      %p189 = scmp.lt.s32.totalorder %s18, 0
      %s190 = scalar_select %p189, %s18, 0
      %p191 = scmp.lt.s32.totalorder %s188, 63
      %s192 = scalar_select %p191, %s188, 63
      %p193 = scmp.lt.s32.totalorder %s20, 0
      %s194 = scalar_select %p193, %s20, 0
      %s195 = sadd.s32 %s194, %s192
      %s196 = smul.addr %s190, 64
      %s197 = sadd.s32 %s195, %s196
      %s198 = smul.addr %s197, 4
      %s199 = scalar_lea.vmem %s2, %s198
      %s200 = smul.u32 32, %s19
      %p201 = scmp.lt.s32.totalorder %s18, 0
      %s202 = scalar_select %p201, %s18, 0
      %p203 = scmp.lt.s32.totalorder %s200, 63
      %s204 = scalar_select %p203, %s200, 63
      %s205 = smul.addr %s204, 2
      %s206 = smul.addr %s202, 128
      %s207 = sadd.s32 %s205, %s206
      %s208 = smul.addr %s207, 4
      %s209 = scalar_lea.vmem %s0, %s208
      %s210 = smul.u32 32, %s19
      %p211 = scmp.lt.s32.totalorder %s18, 0
      %s212 = scalar_select %p211, %s18, 0
      %p213 = scmp.lt.s32.totalorder %s20, 0
      %s214 = scalar_select %p213, %s20, 0
      %s215 = smul.addr %s212, 19
      %s216 = sadd.s32 %s214, %s215
      %s217 = smul.addr %s216, 4
      %s218 = scalar_lea.vmem %s1, %s217
      %s219 = smul.u32 32, %s19
      %p220 = scmp.lt.s32.totalorder %s18, 0
      %s221 = scalar_select %p220, %s18, 0
      %p222 = scmp.lt.s32.totalorder %s219, 63
      %s223 = scalar_select %p222, %s219, 63
      %p224 = scmp.lt.s32.totalorder %s20, 0
      %s225 = scalar_select %p224, %s20, 0
      %s226 = sadd.s32 %s225, %s223
      %s227 = smul.addr %s221, 64
      %s228 = sadd.s32 %s226, %s227
      %s229 = smul.addr %s228, 4
      %s230 = scalar_lea.vmem %s2, %s229
      %s231 = smul.u32 32, %s19
      %v233 = vld [vmem:[%s209] sm:$0xff]
      %v234 = vld [vmem:[%s209 + $0x8] sm:$0xff]
      %v235 = vld [vmem:[%s209 + $0x10] sm:$0xff]
      %v236 = vld [vmem:[%s209 + $0x18] sm:$0xff]
      %v237 = vld [vmem:[%s209 + $0x20] sm:$0xff]
      %v238 = vld [vmem:[%s209 + $0x28] sm:$0xff]
      %v239 = vld [vmem:[%s209 + $0x30] sm:$0xff]
      %v240 = vld [vmem:[%s209 + $0x38] sm:$0xff]
      %v241 = vld [vmem:[%s209 + $0x40] sm:$0xff]
      %v242 = vld [vmem:[%s209 + $0x48] sm:$0xff]
      %v243 = vld [vmem:[%s209 + $0x50] sm:$0xff]
      %v244 = vld [vmem:[%s209 + $0x58] sm:$0xff]
      %v245 = vld [vmem:[%s209 + $0x60] sm:$0xff]
      %v246 = vld [vmem:[%s209 + $0x68] sm:$0xff]
      %v247 = vld [vmem:[%s209 + $0x70] sm:$0xff]
      %v248 = vld [vmem:[%s209 + $0x78] sm:$0xff]
      %v249 = vld [vmem:[%s209 + $0x80] sm:$0xff]
      %v250 = vld [vmem:[%s209 + $0x88] sm:$0xff]
      %v251 = vld [vmem:[%s209 + $0x90] sm:$0xff]
      %v252 = vld [vmem:[%s209 + $0x98] sm:$0xff]
      %v253 = vld [vmem:[%s209 + $0xa0] sm:$0xff]
      %v254 = vld [vmem:[%s209 + $0xa8] sm:$0xff]
      %v255 = vld [vmem:[%s209 + $0xb0] sm:$0xff]
      %v256 = vld [vmem:[%s209 + $0xb8] sm:$0xff]
      %v257 = vld [vmem:[%s209 + $0xc0] sm:$0xff]
      %v258 = vld [vmem:[%s209 + $0xc8] sm:$0xff]
      %v259 = vld [vmem:[%s209 + $0xd0] sm:$0xff]
      %v260 = vld [vmem:[%s209 + $0xd8] sm:$0xff]
      %v261 = vld [vmem:[%s209 + $0xe0] sm:$0xff]
      %v262 = vld [vmem:[%s209 + $0xe8] sm:$0xff]
      %v263 = vld [vmem:[%s209 + $0xf0] sm:$0xff]
      %v264 = vld [vmem:[%s209 + $0xf8] sm:$0xff]
      %v265 = vld [vmem:[%s218] sm:$0xf]
      %v266 = vld [vmem:[%s218 + $0x4] sm:$0xf]
      %v267 = vld [vmem:[%s218 + $0x8] sm:$0xf]
      %v268 = vld [vmem:[%s218 + $0xc] sm:$0xf]
      %v269 = vld [vmem:[%s218 + $0x10] sm:$0xf]
      %v270 = vld [vmem:[%s218 + $0x14] sm:$0xf]
      %v271 = vld [vmem:[%s218 + $0x18] sm:$0xf]
      %v272 = vld [vmem:[%s218 + $0x1c] sm:$0xf]
      %v273 = vld [vmem:[%s218 + $0x20] sm:$0xf]
      %v274 = vld [vmem:[%s218 + $0x24] sm:$0xf]
      %v275 = vld [vmem:[%s218 + $0x28] sm:$0xf]
      %v276 = vld [vmem:[%s218 + $0x2c] sm:$0xf]
      %v277 = vld [vmem:[%s218 + $0x30] sm:$0xf]
      %v278 = vld [vmem:[%s218 + $0x34] sm:$0xf]
      %v279 = vld [vmem:[%s218 + $0x38] sm:$0xf]
      %v280 = vld [vmem:[%s218 + $0x3c] sm:$0xf]
      %v281 = vld [vmem:[%s218 + $0x40] sm:$0xf]
      %v282 = vld [vmem:[%s218 + $0x44] sm:$0xf]
      %v283 = vld [vmem:[%s218 + $0x48] sm:$0x3]
      %v316 = vunpack.c.l.b16 %v233
      %v317 = vunpack.c.h.b16 %v233
      %v318 = vunpack.c.l.b16 %v234
      %v319 = vunpack.c.h.b16 %v234
      %v320 = vunpack.c.l.b16 %v235
      %v321 = vunpack.c.h.b16 %v235
      %v322 = vunpack.c.l.b16 %v236
      %v323 = vunpack.c.h.b16 %v236
      %v324 = vunpack.c.l.b16 %v237
      %v325 = vunpack.c.h.b16 %v237
      %v326 = vunpack.c.l.b16 %v238
      %v327 = vunpack.c.h.b16 %v238
      %v328 = vunpack.c.l.b16 %v239
      %v329 = vunpack.c.h.b16 %v239
      %v330 = vunpack.c.l.b16 %v240
      %v331 = vunpack.c.h.b16 %v240
      %v332 = vunpack.c.l.b16 %v241
      %v333 = vunpack.c.h.b16 %v241
      %v334 = vunpack.c.l.b16 %v242
      %v335 = vunpack.c.h.b16 %v242
      %v336 = vunpack.c.l.b16 %v243
      %v337 = vunpack.c.h.b16 %v243
      %v338 = vunpack.c.l.b16 %v244
      %v339 = vunpack.c.h.b16 %v244
      %v340 = vunpack.c.l.b16 %v245
      %v341 = vunpack.c.h.b16 %v245
      %v342 = vunpack.c.l.b16 %v246
      %v343 = vunpack.c.h.b16 %v246
      %v344 = vunpack.c.l.b16 %v247
      %v345 = vunpack.c.h.b16 %v247
      %v346 = vunpack.c.l.b16 %v248
      %v347 = vunpack.c.h.b16 %v248
      %v348 = vunpack.c.l.b16 %v249
      %v349 = vunpack.c.h.b16 %v249
      %v350 = vunpack.c.l.b16 %v250
      %v351 = vunpack.c.h.b16 %v250
      %v352 = vunpack.c.l.b16 %v251
      %v353 = vunpack.c.h.b16 %v251
      %v354 = vunpack.c.l.b16 %v252
      %v355 = vunpack.c.h.b16 %v252
      %v356 = vunpack.c.l.b16 %v253
      %v357 = vunpack.c.h.b16 %v253
      %v358 = vunpack.c.l.b16 %v254
      %v359 = vunpack.c.h.b16 %v254
      %v360 = vunpack.c.l.b16 %v255
      %v361 = vunpack.c.h.b16 %v255
      %v362 = vunpack.c.l.b16 %v256
      %v363 = vunpack.c.h.b16 %v256
      %v364 = vunpack.c.l.b16 %v257
      %v365 = vunpack.c.h.b16 %v257
      %v366 = vunpack.c.l.b16 %v258
      %v367 = vunpack.c.h.b16 %v258
      %v368 = vunpack.c.l.b16 %v259
      %v369 = vunpack.c.h.b16 %v259
      %v370 = vunpack.c.l.b16 %v260
      %v371 = vunpack.c.h.b16 %v260
      %v372 = vunpack.c.l.b16 %v261
      %v373 = vunpack.c.h.b16 %v261
      %v374 = vunpack.c.l.b16 %v262
      %v375 = vunpack.c.h.b16 %v262
      %v376 = vunpack.c.l.b16 %v263
      %v377 = vunpack.c.h.b16 %v263
      %v378 = vunpack.c.l.b16 %v264
      %v379 = vunpack.c.h.b16 %v264
      %v380 = vpack.c.b16 %v318, %v316
      %v381 = vpack.c.b16 %v319, %v317
      %v382 = vpack.c.b16 %v322, %v320
      %v383 = vpack.c.b16 %v323, %v321
      %v384 = vpack.c.b16 %v326, %v324
      %v385 = vpack.c.b16 %v327, %v325
      %v386 = vpack.c.b16 %v330, %v328
      %v387 = vpack.c.b16 %v331, %v329
      %v388 = vpack.c.b16 %v334, %v332
      %v389 = vpack.c.b16 %v335, %v333
      %v390 = vpack.c.b16 %v338, %v336
      %v391 = vpack.c.b16 %v339, %v337
      %v392 = vpack.c.b16 %v342, %v340
      %v393 = vpack.c.b16 %v343, %v341
      %v394 = vpack.c.b16 %v346, %v344
      %v395 = vpack.c.b16 %v347, %v345
      %v396 = vpack.c.b16 %v350, %v348
      %v397 = vpack.c.b16 %v351, %v349
      %v398 = vpack.c.b16 %v354, %v352
      %v399 = vpack.c.b16 %v355, %v353
      %v400 = vpack.c.b16 %v358, %v356
      %v401 = vpack.c.b16 %v359, %v357
      %v402 = vpack.c.b16 %v362, %v360
      %v403 = vpack.c.b16 %v363, %v361
      %v404 = vpack.c.b16 %v366, %v364
      %v405 = vpack.c.b16 %v367, %v365
      %v406 = vpack.c.b16 %v370, %v368
      %v407 = vpack.c.b16 %v371, %v369
      %v408 = vpack.c.b16 %v374, %v372
      %v409 = vpack.c.b16 %v375, %v373
      %v410 = vpack.c.b16 %v378, %v376
      %v411 = vpack.c.b16 %v379, %v377
      %v447 = vunpack.c.l.b16 %v265
      %v448 = vunpack.c.l.b16 %v266
      %v449 = vunpack.c.l.b16 %v267
      %v450 = vunpack.c.l.b16 %v268
      %v451 = vunpack.c.l.b16 %v269
      %v452 = vunpack.c.l.b16 %v270
      %v453 = vunpack.c.l.b16 %v271
      %v454 = vunpack.c.l.b16 %v272
      %v455 = vunpack.c.l.b16 %v273
      %v456 = vunpack.c.l.b16 %v274
      %v457 = vunpack.c.l.b16 %v275
      %v458 = vunpack.c.l.b16 %v276
      %v459 = vunpack.c.l.b16 %v277
      %v460 = vunpack.c.l.b16 %v278
      %v461 = vunpack.c.l.b16 %v279
      %v462 = vunpack.c.l.b16 %v280
      %v463 = vunpack.c.l.b16 %v281
      %v464 = vunpack.c.l.b16 %v282
      %v465 = vunpack.c.l.b16 %v283
      %v466 = vpack.c.b16 %v448, %v447
      %v467 = vpack.c.b16 %v450, %v449
      %v468 = vpack.c.b16 %v452, %v451
      %v469 = vpack.c.b16 %v454, %v453
      %v470 = vpack.c.b16 %v456, %v455
      %v471 = vpack.c.b16 %v458, %v457
      %v472 = vpack.c.b16 %v460, %v459
      %v473 = vpack.c.b16 %v462, %v461
      %v474 = vpack.c.b16 %v464, %v463
      %v475 = vpack.c.b16 %v465, %v465
      %vm485 = vcmask 154624
      %v487 = vsel %vm485, %v381, 0
      %v490 = vsel %vm485, %v383, 0
      %v493 = vsel %vm485, %v385, 0
      %v496 = vsel %vm485, %v387, 0
      %v499 = vsel %vm485, %v389, 0
      %v502 = vsel %vm485, %v391, 0
      %v505 = vsel %vm485, %v393, 0
      %v508 = vsel %vm485, %v395, 0
      %v511 = vsel %vm485, %v397, 0
      %v514 = vsel %vm485, %v399, 0
      %v517 = vsel %vm485, %v401, 0
      %v520 = vsel %vm485, %v403, 0
      %v523 = vsel %vm485, %v405, 0
      %v526 = vsel %vm485, %v407, 0
      %v529 = vsel %vm485, %v409, 0
      %v532 = vsel %vm485, %v411, 0
      %vm534 = vcmask 1040384
      %vm535 = vcmask 1041408
      %v536 = vsel %vm534, 4294967295, 65535
      %v537 = vsel %vm535, %v536, 0
      %v539 = vand.u32 %v475, %v537
      %541 = vmatprep.subr.bf16.mxu0 0
      %542 = vmatpush1.bf16.msra.mxu0 %v473
      %543 = vmatprep.subr.bf16.mxu0 0
      %544 = vmatpush1.bf16.msra.mxu0 %v472
      %545 = vmatprep.subr.bf16.mxu0 0
      %546 = vmatpush1.bf16.msra.mxu0 %v471
      %547 = vmatprep.subr.bf16.mxu0 0
      %548 = vmatpush1.bf16.msra.mxu0 %v470
      %549 = vmatprep.subr.bf16.mxu0 0
      %550 = vmatpush1.bf16.msra.mxu0 %v469
      %551 = vmatprep.subr.bf16.mxu0 0
      %552 = vmatpush1.bf16.msra.mxu0 %v468
      %553 = vmatprep.subr.bf16.mxu0 0
      %554 = vmatpush1.bf16.msra.mxu0 %v467
      %555 = vmatprep.subr.bf16.mxu0 0
      %556 = vmatpush1.bf16.msra.mxu0 %v466
      %557 = vmatprep.subr.bf16.mxu0 0
      %558 = vmatpush2.bf16.msra.mxu0 0
      %559 = vmatprep.subr.bf16.mxu0 0
      %560 = vmatpush2.bf16.msra.mxu0 0
      %561 = vmatprep.subr.bf16.mxu0 0
      %562 = vmatpush2.bf16.msra.mxu0 0
      %563 = vmatprep.subr.bf16.mxu0 0
      %564 = vmatpush2.bf16.msra.mxu0 0
      %565 = vmatprep.subr.bf16.mxu0 0
      %566 = vmatpush2.bf16.msra.mxu0 0
      %567 = vmatprep.subr.bf16.mxu0 0
      %568 = vmatpush2.bf16.msra.mxu0 0
      %569 = vmatprep.subr.bf16.mxu0 0
      %570 = vmatpush2.bf16.msra.mxu0 %v539
      %571 = vmatprep.subr.bf16.mxu0 0
      %572 = vmatpush2.bf16.msra.mxu0 %v474
      %573 = vmatprep.mubr.bf16.mxu0 %v487
      %574 = vmatmul.mubr.bf16.gmra.mxu0 %v380
      %v575 = vpop.f32.mrf.mxu0
      %v576 = vadd.f32 0.0, %v575
      %v577 = vpop.f32.mrf.mxu0
      %v578 = vpop.f32.mrf.mxu0
      %v579 = vadd.f32 0.0, %v578
      %v580 = vpop.f32.mrf.mxu0
      %581 = vmatprep.mubr.bf16.mxu0 %v490
      %582 = vmatmul.mubr.bf16.gmra.mxu0 %v382
      %v583 = vpop.f32.mrf.mxu0
      %v584 = vadd.f32 0.0, %v583
      %v585 = vpop.f32.mrf.mxu0
      %v586 = vpop.f32.mrf.mxu0
      %v587 = vadd.f32 0.0, %v586
      %v588 = vpop.f32.mrf.mxu0
      %589 = vmatprep.mubr.bf16.mxu0 %v493
      %590 = vmatmul.mubr.bf16.gmra.mxu0 %v384
      %v591 = vpop.f32.mrf.mxu0
      %v592 = vadd.f32 0.0, %v591
      %v593 = vpop.f32.mrf.mxu0
      %v594 = vpop.f32.mrf.mxu0
      %v595 = vadd.f32 0.0, %v594
      %v596 = vpop.f32.mrf.mxu0
      %597 = vmatprep.mubr.bf16.mxu0 %v496
      %598 = vmatmul.mubr.bf16.gmra.mxu0 %v386
      %v599 = vpop.f32.mrf.mxu0
      %v600 = vadd.f32 0.0, %v599
      %v601 = vpop.f32.mrf.mxu0
      %v602 = vpop.f32.mrf.mxu0
      %v603 = vadd.f32 0.0, %v602
      %v604 = vpop.f32.mrf.mxu0
      %605 = vmatprep.mubr.bf16.mxu0 %v499
      %606 = vmatmul.mubr.bf16.gmra.mxu0 %v388
      %v607 = vpop.f32.mrf.mxu0
      %v608 = vadd.f32 0.0, %v607
      %v609 = vpop.f32.mrf.mxu0
      %v610 = vpop.f32.mrf.mxu0
      %v611 = vadd.f32 0.0, %v610
      %v612 = vpop.f32.mrf.mxu0
      %613 = vmatprep.mubr.bf16.mxu0 %v502
      %614 = vmatmul.mubr.bf16.gmra.mxu0 %v390
      %v615 = vpop.f32.mrf.mxu0
      %v616 = vadd.f32 0.0, %v615
      %v617 = vpop.f32.mrf.mxu0
      %v618 = vpop.f32.mrf.mxu0
      %v619 = vadd.f32 0.0, %v618
      %v620 = vpop.f32.mrf.mxu0
      %621 = vmatprep.mubr.bf16.mxu0 %v505
      %622 = vmatmul.mubr.bf16.gmra.mxu0 %v392
      %v623 = vpop.f32.mrf.mxu0
      %v624 = vadd.f32 0.0, %v623
      %v625 = vpop.f32.mrf.mxu0
      %v626 = vpop.f32.mrf.mxu0
      %v627 = vadd.f32 0.0, %v626
      %v628 = vpop.f32.mrf.mxu0
      %629 = vmatprep.mubr.bf16.mxu0 %v508
      %630 = vmatmul.mubr.bf16.gmra.mxu0 %v394
      %v631 = vpop.f32.mrf.mxu0
      %v632 = vadd.f32 0.0, %v631
      %v633 = vpop.f32.mrf.mxu0
      %v634 = vpop.f32.mrf.mxu0
      %v635 = vadd.f32 0.0, %v634
      %v636 = vpop.f32.mrf.mxu0
      %637 = vmatprep.mubr.bf16.mxu0 %v511
      %638 = vmatmul.mubr.bf16.gmra.mxu0 %v396
      %v639 = vpop.f32.mrf.mxu0
      %v640 = vadd.f32 0.0, %v639
      %v641 = vpop.f32.mrf.mxu0
      %v642 = vpop.f32.mrf.mxu0
      %v643 = vadd.f32 0.0, %v642
      %v644 = vpop.f32.mrf.mxu0
      %645 = vmatprep.mubr.bf16.mxu0 %v514
      %646 = vmatmul.mubr.bf16.gmra.mxu0 %v398
      %v647 = vpop.f32.mrf.mxu0
      %v648 = vadd.f32 0.0, %v647
      %v649 = vpop.f32.mrf.mxu0
      %v650 = vpop.f32.mrf.mxu0
      %v651 = vadd.f32 0.0, %v650
      %v652 = vpop.f32.mrf.mxu0
      %653 = vmatprep.mubr.bf16.mxu0 %v517
      %654 = vmatmul.mubr.bf16.gmra.mxu0 %v400
      %v655 = vpop.f32.mrf.mxu0
      %v656 = vadd.f32 0.0, %v655
      %v657 = vpop.f32.mrf.mxu0
      %v658 = vpop.f32.mrf.mxu0
      %v659 = vadd.f32 0.0, %v658
      %v660 = vpop.f32.mrf.mxu0
      %661 = vmatprep.mubr.bf16.mxu0 %v520
      %662 = vmatmul.mubr.bf16.gmra.mxu0 %v402
      %v663 = vpop.f32.mrf.mxu0
      %v664 = vadd.f32 0.0, %v663
      %v665 = vpop.f32.mrf.mxu0
      %v666 = vpop.f32.mrf.mxu0
      %v667 = vadd.f32 0.0, %v666
      %v668 = vpop.f32.mrf.mxu0
      %669 = vmatprep.mubr.bf16.mxu0 %v523
      %670 = vmatmul.mubr.bf16.gmra.mxu0 %v404
      %v671 = vpop.f32.mrf.mxu0
      %v672 = vadd.f32 0.0, %v671
      %v673 = vpop.f32.mrf.mxu0
      %v674 = vpop.f32.mrf.mxu0
      %v675 = vadd.f32 0.0, %v674
      %v676 = vpop.f32.mrf.mxu0
      %677 = vmatprep.mubr.bf16.mxu0 %v526
      %678 = vmatmul.mubr.bf16.gmra.mxu0 %v406
      %v679 = vpop.f32.mrf.mxu0
      %v680 = vadd.f32 0.0, %v679
      %v681 = vpop.f32.mrf.mxu0
      %v682 = vpop.f32.mrf.mxu0
      %v683 = vadd.f32 0.0, %v682
      %v684 = vpop.f32.mrf.mxu0
      %685 = vmatprep.mubr.bf16.mxu0 %v529
      %686 = vmatmul.mubr.bf16.gmra.mxu0 %v408
      %v687 = vpop.f32.mrf.mxu0
      %v688 = vadd.f32 0.0, %v687
      %v689 = vpop.f32.mrf.mxu0
      %v690 = vpop.f32.mrf.mxu0
      %v691 = vadd.f32 0.0, %v690
      %v692 = vpop.f32.mrf.mxu0
      %693 = vmatprep.mubr.bf16.mxu0 %v532
      %694 = vmatmul.mubr.bf16.gmra.mxu0 %v410
      %v695 = vpop.f32.mrf.mxu0
      %v696 = vadd.f32 0.0, %v695
      %v697 = vpop.f32.mrf.mxu0
      %v698 = vpop.f32.mrf.mxu0
      %v699 = vadd.f32 0.0, %v698
      %v700 = vpop.f32.mrf.mxu0
      %701 = vdwg.mxu0
      %v702 = vmax.f32 %v576, 0.0
      %v703 = vmax.f32 %v579, 0.0
      %v704 = vmax.f32 %v584, 0.0
      %v705 = vmax.f32 %v587, 0.0
      %v706 = vmax.f32 %v592, 0.0
      %v707 = vmax.f32 %v595, 0.0
      %v708 = vmax.f32 %v600, 0.0
      %v709 = vmax.f32 %v603, 0.0
      %v710 = vmax.f32 %v608, 0.0
      %v711 = vmax.f32 %v611, 0.0
      %v712 = vmax.f32 %v616, 0.0
      %v713 = vmax.f32 %v619, 0.0
      %v714 = vmax.f32 %v624, 0.0
      %v715 = vmax.f32 %v627, 0.0
      %v716 = vmax.f32 %v632, 0.0
      %v717 = vmax.f32 %v635, 0.0
      %v718 = vmax.f32 %v640, 0.0
      %v719 = vmax.f32 %v643, 0.0
      %v720 = vmax.f32 %v648, 0.0
      %v721 = vmax.f32 %v651, 0.0
      %v722 = vmax.f32 %v656, 0.0
      %v723 = vmax.f32 %v659, 0.0
      %v724 = vmax.f32 %v664, 0.0
      %v725 = vmax.f32 %v667, 0.0
      %v726 = vmax.f32 %v672, 0.0
      %v727 = vmax.f32 %v675, 0.0
      %v728 = vmax.f32 %v680, 0.0
      %v729 = vmax.f32 %v683, 0.0
      %v730 = vmax.f32 %v688, 0.0
      %v731 = vmax.f32 %v691, 0.0
      %v732 = vmax.f32 %v696, 0.0
      %v733 = vmax.f32 %v699, 0.0
      %v734 = vpack.c.bf16 %v703, %v702
      %v735 = vpack.c.bf16 %v705, %v704
      %v736 = vpack.c.bf16 %v707, %v706
      %v737 = vpack.c.bf16 %v709, %v708
      %v738 = vpack.c.bf16 %v711, %v710
      %v739 = vpack.c.bf16 %v713, %v712
      %v740 = vpack.c.bf16 %v715, %v714
      %v741 = vpack.c.bf16 %v717, %v716
      %v742 = vpack.c.bf16 %v719, %v718
      %v743 = vpack.c.bf16 %v721, %v720
      %v744 = vpack.c.bf16 %v723, %v722
      %v745 = vpack.c.bf16 %v725, %v724
      %v746 = vpack.c.bf16 %v727, %v726
      %v747 = vpack.c.bf16 %v729, %v728
      %v748 = vpack.c.bf16 %v731, %v730
      %v749 = vpack.c.bf16 %v733, %v732
      %v766 = vunpack.c.l.b16 %v734
      %v767 = vunpack.c.h.b16 %v734
      %v768 = vunpack.c.l.b16 %v735
      %v769 = vunpack.c.h.b16 %v735
      %v770 = vunpack.c.l.b16 %v736
      %v771 = vunpack.c.h.b16 %v736
      %v772 = vunpack.c.l.b16 %v737
      %v773 = vunpack.c.h.b16 %v737
      %v774 = vunpack.c.l.b16 %v738
      %v775 = vunpack.c.h.b16 %v738
      %v776 = vunpack.c.l.b16 %v739
      %v777 = vunpack.c.h.b16 %v739
      %v778 = vunpack.c.l.b16 %v740
      %v779 = vunpack.c.h.b16 %v740
      %v780 = vunpack.c.l.b16 %v741
      %v781 = vunpack.c.h.b16 %v741
      %v782 = vunpack.c.l.b16 %v742
      %v783 = vunpack.c.h.b16 %v742
      %v784 = vunpack.c.l.b16 %v743
      %v785 = vunpack.c.h.b16 %v743
      %v786 = vunpack.c.l.b16 %v744
      %v787 = vunpack.c.h.b16 %v744
      %v788 = vunpack.c.l.b16 %v745
      %v789 = vunpack.c.h.b16 %v745
      %v790 = vunpack.c.l.b16 %v746
      %v791 = vunpack.c.h.b16 %v746
      %v792 = vunpack.c.l.b16 %v747
      %v793 = vunpack.c.h.b16 %v747
      %v794 = vunpack.c.l.b16 %v748
      %v795 = vunpack.c.h.b16 %v748
      %v796 = vunpack.c.l.b16 %v749
      %v797 = vunpack.c.h.b16 %v749
      %v798 = vpack.c.b16 %v766, %v766
      %v799 = vpack.c.b16 %v767, %v767
      %v800 = vpack.c.b16 %v768, %v768
      %v801 = vpack.c.b16 %v769, %v769
      %v802 = vpack.c.b16 %v770, %v770
      %v803 = vpack.c.b16 %v771, %v771
      %v804 = vpack.c.b16 %v772, %v772
      %v805 = vpack.c.b16 %v773, %v773
      %v806 = vpack.c.b16 %v774, %v774
      %v807 = vpack.c.b16 %v775, %v775
      %v808 = vpack.c.b16 %v776, %v776
      %v809 = vpack.c.b16 %v777, %v777
      %v810 = vpack.c.b16 %v778, %v778
      %v811 = vpack.c.b16 %v779, %v779
      %v812 = vpack.c.b16 %v780, %v780
      %v813 = vpack.c.b16 %v781, %v781
      %v814 = vpack.c.b16 %v782, %v782
      %v815 = vpack.c.b16 %v783, %v783
      %v816 = vpack.c.b16 %v784, %v784
      %v817 = vpack.c.b16 %v785, %v785
      %v818 = vpack.c.b16 %v786, %v786
      %v819 = vpack.c.b16 %v787, %v787
      %v820 = vpack.c.b16 %v788, %v788
      %v821 = vpack.c.b16 %v789, %v789
      %v822 = vpack.c.b16 %v790, %v790
      %v823 = vpack.c.b16 %v791, %v791
      %v824 = vpack.c.b16 %v792, %v792
      %v825 = vpack.c.b16 %v793, %v793
      %v826 = vpack.c.b16 %v794, %v794
      %v827 = vpack.c.b16 %v795, %v795
      %v828 = vpack.c.b16 %v796, %v796
      %v829 = vpack.c.b16 %v797, %v797
      %862 = vst [vmem:[%s230] sm:$0xf] %v798
      %863 = vst [vmem:[%s230 + $0x4] sm:$0xf] %v799
      %864 = vst [vmem:[%s230 + $0x8] sm:$0xf] %v800
      %865 = vst [vmem:[%s230 + $0xc] sm:$0xf] %v801
      %866 = vst [vmem:[%s230 + $0x10] sm:$0xf] %v802
      %867 = vst [vmem:[%s230 + $0x14] sm:$0xf] %v803
      %868 = vst [vmem:[%s230 + $0x18] sm:$0xf] %v804
      %869 = vst [vmem:[%s230 + $0x1c] sm:$0xf] %v805
      %870 = vst [vmem:[%s230 + $0x20] sm:$0xf] %v806
      %871 = vst [vmem:[%s230 + $0x24] sm:$0xf] %v807
      %872 = vst [vmem:[%s230 + $0x28] sm:$0xf] %v808
      %873 = vst [vmem:[%s230 + $0x2c] sm:$0xf] %v809
      %874 = vst [vmem:[%s230 + $0x30] sm:$0xf] %v810
      %875 = vst [vmem:[%s230 + $0x34] sm:$0xf] %v811
      %876 = vst [vmem:[%s230 + $0x38] sm:$0xf] %v812
      %877 = vst [vmem:[%s230 + $0x3c] sm:$0xf] %v813
      %878 = vst [vmem:[%s230 + $0x40] sm:$0xf] %v814
      %879 = vst [vmem:[%s230 + $0x44] sm:$0xf] %v815
      %880 = vst [vmem:[%s230 + $0x48] sm:$0xf] %v816
      %881 = vst [vmem:[%s230 + $0x4c] sm:$0xf] %v817
      %882 = vst [vmem:[%s230 + $0x50] sm:$0xf] %v818
      %883 = vst [vmem:[%s230 + $0x54] sm:$0xf] %v819
      %884 = vst [vmem:[%s230 + $0x58] sm:$0xf] %v820
      %885 = vst [vmem:[%s230 + $0x5c] sm:$0xf] %v821
      %886 = vst [vmem:[%s230 + $0x60] sm:$0xf] %v822
      %887 = vst [vmem:[%s230 + $0x64] sm:$0xf] %v823
      %888 = vst [vmem:[%s230 + $0x68] sm:$0xf] %v824
      %889 = vst [vmem:[%s230 + $0x6c] sm:$0xf] %v825
      %890 = vst [vmem:[%s230 + $0x70] sm:$0xf] %v826
      %891 = vst [vmem:[%s230 + $0x74] sm:$0xf] %v827
      %892 = vst [vmem:[%s230 + $0x78] sm:$0xf] %v828
      %893 = vst [vmem:[%s230 + $0x7c] sm:$0xf] %v829
      %s894 = smul.u32 32, %s19
      %p895 = scmp.lt.s32.totalorder %s18, 0
      %s896 = scalar_select %p895, %s18, 0
      %p897 = scmp.lt.s32.totalorder %s894, 63
      %s898 = scalar_select %p897, %s894, 63
      %p899 = scmp.lt.s32.totalorder %s20, 0
      %s900 = scalar_select %p899, %s20, 0
      %s901 = sadd.s32 %s900, %s898
      %s902 = smul.addr %s896, 64
      %s903 = sadd.s32 %s901, %s902
      %s904 = smul.addr %s903, 4
      %s905 = scalar_lea.vmem %s2, %s904
      // Predicated region
      $region29: #{ste_encoder_forward.13} parent=27 // pred_check
        %p906 = pneg %p110
      $region30: #{ste_encoder_forward.13} parent=27 // pred_check_branch
        %908 = sbr.rel (%p906) target = $region32
      $region31: #{ste_encoder_forward.13} parent=27 // pred_region
        %s909 = smul.u32 32, %s19
      $region32: #{ste_encoder_forward.13} parent=27 // pred_fallthru
        _
    $region28: #{ste_encoder_forward.13} parent=5 // pred_fallthru
      _
    %p910 = scmp.le.s32.totalorder 2, %s8
    // Predicated region
    $region33: #{ste_encoder_forward.13} parent=5 // pred_check
      %p911 = pneg %p910
    $region34: #{ste_encoder_forward.13} parent=5 // pred_check_branch
      %913 = sbr.rel (%p911) target = $region36
    $region35: #{ste_encoder_forward.13} parent=5 // pred_region
      %s914 = ssub.s32 %s8, 2
      // Predicated region
      $region37: #{ste_encoder_forward.13} parent=35 // pred_check
        %p915 = pneg %p116
      $region38: #{ste_encoder_forward.13} parent=35 // pred_check_branch
        %917 = sbr.rel (%p915) target = $region40
      $region39: #{ste_encoder_forward.13} parent=35 // pred_region
        %s918 = smul.u32 32, %s22
        %p919 = scmp.lt.s32.totalorder %s21, 0
        %s920 = scalar_select %p919, %s21, 0
        %p921 = scmp.lt.s32.totalorder %s918, 63
        %s922 = scalar_select %p921, %s918, 63
        %p923 = scmp.lt.s32.totalorder %s23, 0
        %s924 = scalar_select %p923, %s23, 0
        %s925 = sadd.s32 %s924, %s922
        %s926 = smul.addr %s920, 64
        %s927 = sadd.s32 %s925, %s926
        %s928 = smul.addr %s927, 4
        %s929 = scalar_lea.vmem %s2, %s928
      $region40: #{ste_encoder_forward.13} parent=35 // pred_fallthru
        _
    $region36: #{ste_encoder_forward.13} parent=5 // pred_fallthru
      _
  $region6: #{ste_encoder_forward.13} parent=0 // loop_footer
    %s12 = sadd.s32 1, %s8
  $region7: #{ste_encoder_forward.13} parent=0 // loop_footer_branch
    %7 = sbr.rel target = $region3
  $region8: #{ste_encoder_forward.13} parent=0 // loop_exit
    _

// kernel: ste_encoder_forward.15
$region0: #{ste_encoder_forward.15}
  #allocation0 [shape = 'u32[]', space=smem, size = 0x4, offset = 0x4, fixed_abs, tag = 'smem constant byte address 0x4 - core index']
  #allocation1 [shape = 'u32[144,128]{1,0:T(1,128)}', space=vmem, size = 0x12000, scoped, tag = 'internal scratch']
  #allocation2 [shape = 'bf16[8,128]{1,0:T(8,128)(2,1)}', space=vmem, size = 0x800, scoped, tag = 'scratch operand']
  %s0 = inlined_call_operand.vmem [shape: bf16[2,8,128], index: 0, kind: input, shape index: {}]
  %s1 = inlined_call_operand.vmem [shape: bf16[2,128,384], index: 1, kind: input, shape index: {}]
  %s2 = inlined_call_operand.vmem [shape: f32[2,1,128], index: 2, kind: input, shape index: {}]
  %s3 = inlined_call_operand.vmem [shape: f32[2,1,128], index: 3, kind: input, shape index: {}]
  %s4 = inlined_call_operand.vmem [shape: f32[2,1,384], index: 4, kind: input, shape index: {}]
  %s5 = inlined_call_operand.vmem [shape: bf16[2,8,384], index: 5, kind: output, shape index: {}]
  %s6 = sld [smem:[#allocation0]]
  $region98: #{ste_encoder_forward.15} parent=0
    _
  %s8 = ssub.s32 1, %s6
  %s9 = scalar_select 0, %s8, %s6
  $region1: #{ste_encoder_forward.15} parent=0
    #allocation3 [shape = 'u8[65536]{0}', space=vmem, size = 0x10000, scoped, tag = 'input window, operand 1']
    loop: start=0, step=1, limit=8
    $region2: #{ste_encoder_forward.15} parent=1 // loop_pre_header
      _
    $region3: #{ste_encoder_forward.15} parent=1 // loop_header
      %s11 = sphi 0, %s15
      %p12 = scmp.ge.s32.totalorder %s11, 8
      %s18 = sphi 0, %s37
      %s19 = sphi 0, %s33
      %s20 = sphi 0, %s29
      %s21 = sphi 0, %s18
      %s22 = sphi 0, %s19
      %s23 = sphi 0, %s20
      %s24 = sphi 0, %s21
      %s25 = sphi 0, %s22
      %s26 = sphi 0, %s23
      %s42 = sphi 0, %s44
      %s45 = sphi 0, %s42
      %s46 = sphi 0, %s45
      %s62 = sphi 0, %s46
      %s70 = sphi 0, %s72
      %s73 = sphi 0, %s70
      %s74 = sphi 0, %s73
      %s90 = sphi 0, %s74
      %s96 = sphi 0, %s98
      %s99 = sphi 0, %s96
      %s100 = sphi 0, %s99
      %s116 = sphi 0, %s100
      %s122 = sphi 0, %s124
      %s125 = sphi 0, %s122
      %s126 = sphi 0, %s125
      %s142 = sphi 0, %s126
      %s150 = sphi 0, %s152
      %s153 = sphi 0, %s150
      %s154 = sphi 0, %s153
      %s170 = sphi 0, %s154
      %s180 = sphi 0, %s182
      %s183 = sphi 0, %s180
      %s184 = sphi 0, %s183
      %s200 = sphi 0, %s184
    $region4: #{ste_encoder_forward.15} parent=1 // loop_header_branch
      %14 = sbr.rel (%p12) target = $region8
    $region5: #{ste_encoder_forward.15} parent=1 // loop_body
      %s16 = ssub.s32 %s11, 1
      %s17 = ssub.s32 %s11, 2
      %s27 = sadd.s32 1, %s20
      %p28 = scmp.ge.s32.totalorder %s27, 3
      %s29 = scalar_select %p28, 0, %s27
      %s30 = sadd.s32 1, %s19
      %s31 = scalar_select %p28, %s30, %s19
      %p32 = scmp.ge.s32.totalorder %s31, 1
      %s33 = scalar_select %p32, 0, %s31
      %s34 = sadd.s32 1, %s18
      %s35 = scalar_select %p32, %s34, %s18
      %p36 = scmp.ge.s32.totalorder %s35, 2
      %s37 = scalar_select %p36, 0, %s35
      %s38 = ssub.s32 %s18, %s37
      %s39 = ssub.s32 %s19, %s33
      %s40 = sor.u32 %s38, %s39
      %p41 = scmp.eq.s32.totalorder %s40, 0
      %s43 = sadd.s32 %s42, 1
      %s44 = scalar_select %p41, %s42, %s43
      %p47 = pneg %p41
      %p48 = scmp.eq.s32.totalorder %s11, 5
      %p49 = por %p47, %p48
      %p50 = scmp.ne.s32.totalorder %s42, %s45
      %p51 = scmp.eq.s32.totalorder %s11, 0
      %p52 = por %p50, %p51
      %p53 = scmp.ne.s32.totalorder %s42, %s45
      %p54 = scmp.eq.s32.totalorder %s16, 5
      %p55 = por %p53, %p54
      %p56 = scmp.ne.s32.totalorder %s45, %s46
      %p57 = scmp.eq.s32.totalorder %s16, 0
      %p58 = por %p56, %p57
      %p59 = scmp.ne.s32.totalorder %s45, %s46
      %p60 = scmp.eq.s32.totalorder %s17, 5
      %p61 = por %p59, %p60
      %p63 = scmp.ne.s32.totalorder %s46, %s62
      %p64 = scmp.eq.s32.totalorder %s17, 0
      %p65 = por %p63, %p64
      %s66 = ssub.s32 %s18, %s37
      %s67 = ssub.s32 %s20, %s29
      %s68 = sor.u32 %s66, %s67
      %p69 = scmp.eq.s32.totalorder %s68, 0
      %s71 = sadd.s32 %s70, 1
      %s72 = scalar_select %p69, %s70, %s71
      %p75 = pneg %p69
      %p76 = scmp.eq.s32.totalorder %s11, 5
      %p77 = por %p75, %p76
      %p78 = scmp.ne.s32.totalorder %s70, %s73
      %p79 = scmp.eq.s32.totalorder %s11, 0
      %p80 = por %p78, %p79
      %p81 = scmp.ne.s32.totalorder %s70, %s73
      %p82 = scmp.eq.s32.totalorder %s16, 5
      %p83 = por %p81, %p82
      %p84 = scmp.ne.s32.totalorder %s73, %s74
      %p85 = scmp.eq.s32.totalorder %s16, 0
      %p86 = por %p84, %p85
      %p87 = scmp.ne.s32.totalorder %s73, %s74
      %p88 = scmp.eq.s32.totalorder %s17, 5
      %p89 = por %p87, %p88
      %p91 = scmp.ne.s32.totalorder %s74, %s90
      %p92 = scmp.eq.s32.totalorder %s17, 0
      %p93 = por %p91, %p92
      %s94 = ssub.s32 %s18, %s37
      %p95 = scmp.eq.s32.totalorder %s94, 0
      %s97 = sadd.s32 %s96, 1
      %s98 = scalar_select %p95, %s96, %s97
      %p101 = pneg %p95
      %p102 = scmp.eq.s32.totalorder %s11, 5
      %p103 = por %p101, %p102
      %p104 = scmp.ne.s32.totalorder %s96, %s99
      %p105 = scmp.eq.s32.totalorder %s11, 0
      %p106 = por %p104, %p105
      %p107 = scmp.ne.s32.totalorder %s96, %s99
      %p108 = scmp.eq.s32.totalorder %s16, 5
      %p109 = por %p107, %p108
      %p110 = scmp.ne.s32.totalorder %s99, %s100
      %p111 = scmp.eq.s32.totalorder %s16, 0
      %p112 = por %p110, %p111
      %p113 = scmp.ne.s32.totalorder %s99, %s100
      %p114 = scmp.eq.s32.totalorder %s17, 5
      %p115 = por %p113, %p114
      %p117 = scmp.ne.s32.totalorder %s100, %s116
      %p118 = scmp.eq.s32.totalorder %s17, 0
      %p119 = por %p117, %p118
      %s120 = ssub.s32 %s18, %s37
      %p121 = scmp.eq.s32.totalorder %s120, 0
      %s123 = sadd.s32 %s122, 1
      %s124 = scalar_select %p121, %s122, %s123
      %p127 = pneg %p121
      %p128 = scmp.eq.s32.totalorder %s11, 5
      %p129 = por %p127, %p128
      %p130 = scmp.ne.s32.totalorder %s122, %s125
      %p131 = scmp.eq.s32.totalorder %s11, 0
      %p132 = por %p130, %p131
      %p133 = scmp.ne.s32.totalorder %s122, %s125
      %p134 = scmp.eq.s32.totalorder %s16, 5
      %p135 = por %p133, %p134
      %p136 = scmp.ne.s32.totalorder %s125, %s126
      %p137 = scmp.eq.s32.totalorder %s16, 0
      %p138 = por %p136, %p137
      %p139 = scmp.ne.s32.totalorder %s125, %s126
      %p140 = scmp.eq.s32.totalorder %s17, 5
      %p141 = por %p139, %p140
      %p143 = scmp.ne.s32.totalorder %s126, %s142
      %p144 = scmp.eq.s32.totalorder %s17, 0
      %p145 = por %p143, %p144
      %s146 = ssub.s32 %s18, %s37
      %s147 = ssub.s32 %s20, %s29
      %s148 = sor.u32 %s146, %s147
      %p149 = scmp.eq.s32.totalorder %s148, 0
      %s151 = sadd.s32 %s150, 1
      %s152 = scalar_select %p149, %s150, %s151
      %p155 = pneg %p149
      %p156 = scmp.eq.s32.totalorder %s11, 5
      %p157 = por %p155, %p156
      %p158 = scmp.ne.s32.totalorder %s150, %s153
      %p159 = scmp.eq.s32.totalorder %s11, 0
      %p160 = por %p158, %p159
      %p161 = scmp.ne.s32.totalorder %s150, %s153
      %p162 = scmp.eq.s32.totalorder %s16, 5
      %p163 = por %p161, %p162
      %p164 = scmp.ne.s32.totalorder %s153, %s154
      %p165 = scmp.eq.s32.totalorder %s16, 0
      %p166 = por %p164, %p165
      %p167 = scmp.ne.s32.totalorder %s153, %s154
      %p168 = scmp.eq.s32.totalorder %s17, 5
      %p169 = por %p167, %p168
      %p171 = scmp.ne.s32.totalorder %s154, %s170
      %p172 = scmp.eq.s32.totalorder %s17, 0
      %p173 = por %p171, %p172
      %s174 = ssub.s32 %s18, %s37
      %s175 = ssub.s32 %s19, %s33
      %s176 = sor.u32 %s174, %s175
      %s177 = ssub.s32 %s20, %s29
      %s178 = sor.u32 %s176, %s177
      %p179 = scmp.eq.s32.totalorder %s178, 0
      %s181 = sadd.s32 %s180, 1
      %s182 = scalar_select %p179, %s180, %s181
      %p185 = pneg %p179
      %p186 = scmp.eq.s32.totalorder %s11, 5
      %p187 = por %p185, %p186
      %p188 = scmp.ne.s32.totalorder %s180, %s183
      %p189 = scmp.eq.s32.totalorder %s11, 0
      %p190 = por %p188, %p189
      %p191 = scmp.ne.s32.totalorder %s180, %s183
      %p192 = scmp.eq.s32.totalorder %s16, 5
      %p193 = por %p191, %p192
      %p194 = scmp.ne.s32.totalorder %s183, %s184
      %p195 = scmp.eq.s32.totalorder %s16, 0
      %p196 = por %p194, %p195
      %p197 = scmp.ne.s32.totalorder %s183, %s184
      %p198 = scmp.eq.s32.totalorder %s17, 5
      %p199 = por %p197, %p198
      %p201 = scmp.ne.s32.totalorder %s184, %s200
      %p202 = scmp.eq.s32.totalorder %s17, 0
      %p203 = por %p201, %p202
      %p204 = scmp.le.s32.totalorder 1, %s11
      %p205 = scmp.lt.s32.totalorder %s11, 7
      %p206 = pnand %p204, %p205
      %p207 = pneg %p206
      // Predicated region
      $region9: #{ste_encoder_forward.15} parent=5 // pred_check
        _
      $region10: #{ste_encoder_forward.15} parent=5 // pred_check_branch
        %209 = sbr.rel (%p206) target = $region12
      $region11: #{ste_encoder_forward.15} parent=5 // pred_region
        %s210 = ssub.s32 %s11, 1
      $region12: #{ste_encoder_forward.15} parent=5 // pred_fallthru
        _
      %p211 = scmp.lt.s32.totalorder %s11, 6
      // Predicated region
      $region13: #{ste_encoder_forward.15} parent=5 // pred_check
        %p212 = pneg %p211
      $region14: #{ste_encoder_forward.15} parent=5 // pred_check_branch
        %214 = sbr.rel (%p212) target = $region16
      $region15: #{ste_encoder_forward.15} parent=5 // pred_region
        // Predicated region
        $region17: #{ste_encoder_forward.15} parent=15 // pred_check
          %p215 = pneg %p52
        $region18: #{ste_encoder_forward.15} parent=15 // pred_check_branch
          %217 = sbr.rel (%p215) target = $region20
        $region19: #{ste_encoder_forward.15} parent=15 // pred_region
          %p218 = scmp.lt.s32.totalorder %s18, 1
          %s219 = scalar_select %p218, %s18, 1
          %p220 = scmp.lt.s32.totalorder %s19, 0
          %s221 = scalar_select %p220, %s19, 0
          %s222 = sadd.s32 %s221, %s219
          %s223 = smul.addr %s222, 4
          %s224 = scalar_lea.vmem %s0, %s223
        $region20: #{ste_encoder_forward.15} parent=15 // pred_fallthru
          _
        // Predicated region
        $region21: #{ste_encoder_forward.15} parent=15 // pred_check
          %p225 = pneg %p80
        $region22: #{ste_encoder_forward.15} parent=15 // pred_check_branch
          %227 = sbr.rel (%p225) target = $region24
        $region23: #{ste_encoder_forward.15} parent=15 // pred_region
          %s228 = sand.u32 %s70, 1
          %s229 = sand.u32 %s70, 1
          %s230 = smul.addr %s229, 64
          %s231 = scalar_lea.vmem [#allocation3], %s230
          %s232 = smul.addr %s18, 48
          %s233 = sadd.s32 %s20, %s232
          %s234 = smul.addr %s233, 4
          %s235 = scalar_lea.vmem %s1, %s234
          // Predicated region
          $region25: #{ste_encoder_forward.15} parent=23 // pred_check
            _
          $region26: #{ste_encoder_forward.15} parent=23 // pred_check_branch
            %237 = sbr.rel (0) target = $region28
          $region27: #{ste_encoder_forward.15} parent=23 // pred_region
            // Predicated region
            $region29: #{ste_encoder_forward.15} parent=27 // pred_check
              _
            $region30: #{ste_encoder_forward.15} parent=27 // pred_check_branch
              %239 = sbr.rel target = $region32
            $region31: #{ste_encoder_forward.15} parent=27 // pred_region
              // Predicated region
              $region44: #{ste_encoder_forward.15} parent=31 // pred_check
                _
              $region45: #{ste_encoder_forward.15} parent=31 // pred_check_branch
                %285 = sbr.rel (0) target = $region47
              $region46: #{ste_encoder_forward.15} parent=31 // pred_region
                loop: start=0, step=1, limit=1
                $region48: #{ste_encoder_forward.15} parent=46 // loop_pre_header
                  _
                $region49: #{ste_encoder_forward.15} parent=46 // loop_header
                  %s287 = sphi 0, %s291
                  %p288 = scmp.ge.s32.totalorder %s287, 1
                  %s292 = sphi %s235, %s235
                  %s293 = sphi %s231, %s231
                $region50: #{ste_encoder_forward.15} parent=46 // loop_header_branch
                  %290 = sbr.rel (%p288) target = $region54
                $region51: #{ste_encoder_forward.15} parent=46 // loop_body
                  _
                $region52: #{ste_encoder_forward.15} parent=46 // loop_footer
                  %s291 = sadd.s32 1, %s287
                $region53: #{ste_encoder_forward.15} parent=46 // loop_footer_branch
                  %286 = sbr.rel target = $region49
                $region54: #{ste_encoder_forward.15} parent=46 // loop_exit
                  _
                %s295 = ssub.s32 16, 1
                loop: start=0, step=1, limit=1
                $region55: #{ste_encoder_forward.15} parent=46 // loop_pre_header
                  _
                $region56: #{ste_encoder_forward.15} parent=46 // loop_header
                  %s297 = sphi 0, %s301
                  %p298 = scmp.ge.s32.totalorder %s297, 1
                  %s302 = sphi %s235, %s235
                  %s303 = sphi %s231, %s231
                $region57: #{ste_encoder_forward.15} parent=46 // loop_header_branch
                  %300 = sbr.rel (%p298) target = $region61
                $region58: #{ste_encoder_forward.15} parent=46 // loop_body
                  %v304 = vld [vmem:[%s302] sm:%s295]
                  %305 = vst [vmem:[%s303] sm:%s295] %v304
                  %v306 = vld [vmem:[%s302 + $0xc] sm:%s295]
                  %307 = vst [vmem:[%s303 + $0x4] sm:%s295] %v306
                  %v308 = vld [vmem:[%s302 + $0x18] sm:%s295]
                  %309 = vst [vmem:[%s303 + $0x8] sm:%s295] %v308
                  %v310 = vld [vmem:[%s302 + $0x24] sm:%s295]
                  %311 = vst [vmem:[%s303 + $0xc] sm:%s295] %v310
                  %v312 = vld [vmem:[%s302 + $0x30] sm:%s295]
                  %313 = vst [vmem:[%s303 + $0x10] sm:%s295] %v312
                  %v314 = vld [vmem:[%s302 + $0x3c] sm:%s295]
                  %315 = vst [vmem:[%s303 + $0x14] sm:%s295] %v314
                  %v316 = vld [vmem:[%s302 + $0x48] sm:%s295]
                  %317 = vst [vmem:[%s303 + $0x18] sm:%s295] %v316
                  %v318 = vld [vmem:[%s302 + $0x54] sm:%s295]
                  %319 = vst [vmem:[%s303 + $0x1c] sm:%s295] %v318
                  %v320 = vld [vmem:[%s302 + $0x60] sm:%s295]
                  %321 = vst [vmem:[%s303 + $0x20] sm:%s295] %v320
                  %v322 = vld [vmem:[%s302 + $0x6c] sm:%s295]
                  %323 = vst [vmem:[%s303 + $0x24] sm:%s295] %v322
                  %v324 = vld [vmem:[%s302 + $0x78] sm:%s295]
                  %325 = vst [vmem:[%s303 + $0x28] sm:%s295] %v324
                  %v326 = vld [vmem:[%s302 + $0x84] sm:%s295]
                  %327 = vst [vmem:[%s303 + $0x2c] sm:%s295] %v326
                  %v328 = vld [vmem:[%s302 + $0x90] sm:%s295]
                  %329 = vst [vmem:[%s303 + $0x30] sm:%s295] %v328
                  %v330 = vld [vmem:[%s302 + $0x9c] sm:%s295]
                  %331 = vst [vmem:[%s303 + $0x34] sm:%s295] %v330
                  %v332 = vld [vmem:[%s302 + $0xa8] sm:%s295]
                  %333 = vst [vmem:[%s303 + $0x38] sm:%s295] %v332
                  %v334 = vld [vmem:[%s302 + $0xb4] sm:%s295]
                  %335 = vst [vmem:[%s303 + $0x3c] sm:%s295] %v334
                $region59: #{ste_encoder_forward.15} parent=46 // loop_footer
                  %s301 = sadd.s32 1, %s297
                $region60: #{ste_encoder_forward.15} parent=46 // loop_footer_branch
                  %296 = sbr.rel target = $region56
                $region61: #{ste_encoder_forward.15} parent=46 // loop_exit
                  _
              $region47: #{ste_encoder_forward.15} parent=31 // pred_fallthru
                _
            $region32: #{ste_encoder_forward.15} parent=27 // pred_fallthru
              _
            // Predicated region
            $region33: #{ste_encoder_forward.15} parent=27 // pred_check
              _
            $region34: #{ste_encoder_forward.15} parent=27 // pred_check_branch
              %241 = sbr.rel (0) target = $region36
            $region35: #{ste_encoder_forward.15} parent=27 // pred_region
              %s243 = ssub.s32 16, 1
              loop: start=0, step=1, limit=1
              $region37: #{ste_encoder_forward.15} parent=35 // loop_pre_header
                _
              $region38: #{ste_encoder_forward.15} parent=35 // loop_header
                %s245 = sphi 0, %s249
                %p246 = scmp.ge.s32.totalorder %s245, 1
                %s250 = sphi %s235, %s235
                %s251 = sphi %s231, %s231
              $region39: #{ste_encoder_forward.15} parent=35 // loop_header_branch
                %248 = sbr.rel (%p246) target = $region43
              $region40: #{ste_encoder_forward.15} parent=35 // loop_body
                %v252 = vld [vmem:[%s250] sm:%s243]
                %253 = vst [vmem:[%s251] sm:%s243] %v252
                %v254 = vld [vmem:[%s250 + $0xc] sm:%s243]
                %255 = vst [vmem:[%s251 + $0x4] sm:%s243] %v254
                %v256 = vld [vmem:[%s250 + $0x18] sm:%s243]
                %257 = vst [vmem:[%s251 + $0x8] sm:%s243] %v256
                %v258 = vld [vmem:[%s250 + $0x24] sm:%s243]
                %259 = vst [vmem:[%s251 + $0xc] sm:%s243] %v258
                %v260 = vld [vmem:[%s250 + $0x30] sm:%s243]
                %261 = vst [vmem:[%s251 + $0x10] sm:%s243] %v260
                %v262 = vld [vmem:[%s250 + $0x3c] sm:%s243]
                %263 = vst [vmem:[%s251 + $0x14] sm:%s243] %v262
                %v264 = vld [vmem:[%s250 + $0x48] sm:%s243]
                %265 = vst [vmem:[%s251 + $0x18] sm:%s243] %v264
                %v266 = vld [vmem:[%s250 + $0x54] sm:%s243]
                %267 = vst [vmem:[%s251 + $0x1c] sm:%s243] %v266
                %v268 = vld [vmem:[%s250 + $0x60] sm:%s243]
                %269 = vst [vmem:[%s251 + $0x20] sm:%s243] %v268
                %v270 = vld [vmem:[%s250 + $0x6c] sm:%s243]
                %271 = vst [vmem:[%s251 + $0x24] sm:%s243] %v270
                %v272 = vld [vmem:[%s250 + $0x78] sm:%s243]
                %273 = vst [vmem:[%s251 + $0x28] sm:%s243] %v272
                %v274 = vld [vmem:[%s250 + $0x84] sm:%s243]
                %275 = vst [vmem:[%s251 + $0x2c] sm:%s243] %v274
                %v276 = vld [vmem:[%s250 + $0x90] sm:%s243]
                %277 = vst [vmem:[%s251 + $0x30] sm:%s243] %v276
                %v278 = vld [vmem:[%s250 + $0x9c] sm:%s243]
                %279 = vst [vmem:[%s251 + $0x34] sm:%s243] %v278
                %v280 = vld [vmem:[%s250 + $0xa8] sm:%s243]
                %281 = vst [vmem:[%s251 + $0x38] sm:%s243] %v280
                %v282 = vld [vmem:[%s250 + $0xb4] sm:%s243]
                %283 = vst [vmem:[%s251 + $0x3c] sm:%s243] %v282
              $region41: #{ste_encoder_forward.15} parent=35 // loop_footer
                %s249 = sadd.s32 1, %s245
              $region42: #{ste_encoder_forward.15} parent=35 // loop_footer_branch
                %244 = sbr.rel target = $region38
              $region43: #{ste_encoder_forward.15} parent=35 // loop_exit
                _
            $region36: #{ste_encoder_forward.15} parent=27 // pred_fallthru
              _
          $region28: #{ste_encoder_forward.15} parent=23 // pred_fallthru
            _
          %336 = vnop
        $region24: #{ste_encoder_forward.15} parent=15 // pred_fallthru
          _
        // Predicated region
        $region62: #{ste_encoder_forward.15} parent=15 // pred_check
          %p337 = pneg %p106
        $region63: #{ste_encoder_forward.15} parent=15 // pred_check_branch
          %339 = sbr.rel (%p337) target = $region65
        $region64: #{ste_encoder_forward.15} parent=15 // pred_region
          %p340 = scmp.lt.s32.totalorder %s18, 1
          %s341 = scalar_select %p340, %s18, 1
          %s342 = scalar_lea.vmem %s2, %s341
        $region65: #{ste_encoder_forward.15} parent=15 // pred_fallthru
          _
        // Predicated region
        $region66: #{ste_encoder_forward.15} parent=15 // pred_check
          %p343 = pneg %p132
        $region67: #{ste_encoder_forward.15} parent=15 // pred_check_branch
          %345 = sbr.rel (%p343) target = $region69
        $region68: #{ste_encoder_forward.15} parent=15 // pred_region
          %p346 = scmp.lt.s32.totalorder %s18, 1
          %s347 = scalar_select %p346, %s18, 1
          %s348 = scalar_lea.vmem %s3, %s347
        $region69: #{ste_encoder_forward.15} parent=15 // pred_fallthru
          _
        // Predicated region
        $region70: #{ste_encoder_forward.15} parent=15 // pred_check
          %p349 = pneg %p160
        $region71: #{ste_encoder_forward.15} parent=15 // pred_check_branch
          %351 = sbr.rel (%p349) target = $region73
        $region72: #{ste_encoder_forward.15} parent=15 // pred_region
          %p352 = scmp.lt.s32.totalorder %s18, 1
          %s353 = scalar_select %p352, %s18, 1
          %p354 = scmp.lt.s32.totalorder %s20, 2
          %s355 = scalar_select %p354, %s20, 2
          %s356 = smul.addr %s353, 3
          %s357 = sadd.s32 %s355, %s356
          %s358 = scalar_lea.vmem %s4, %s357
        $region73: #{ste_encoder_forward.15} parent=15 // pred_fallthru
          _
      $region16: #{ste_encoder_forward.15} parent=5 // pred_fallthru
        _
      %p359 = scmp.le.s32.totalorder 1, %s11
      %p360 = scmp.lt.s32.totalorder %s11, 7
      %p361 = pnand %p359, %p360
      %p362 = pneg %p361
      // Predicated region
      $region74: #{ste_encoder_forward.15} parent=5 // pred_check
        _
      $region75: #{ste_encoder_forward.15} parent=5 // pred_check_branch
        %364 = sbr.rel (%p361) target = $region77
      $region76: #{ste_encoder_forward.15} parent=5 // pred_region
        %s365 = ssub.s32 %s11, 1
        %s366 = sand.u32 %s73, 1
        %s367 = sand.u32 %s73, 1
        %s368 = smul.addr %s367, 64
        %s369 = scalar_lea.vmem [#allocation3], %s368
        // Predicated region
        $region78: #{ste_encoder_forward.15} parent=76 // pred_check
          %p370 = pneg %p86
        $region79: #{ste_encoder_forward.15} parent=76 // pred_check_branch
          %372 = sbr.rel (%p370) target = $region81
        $region80: #{ste_encoder_forward.15} parent=76 // pred_region
          _
        $region81: #{ste_encoder_forward.15} parent=76 // pred_fallthru
          _
        %p373 = scmp.lt.s32.totalorder %s21, 1
        %s374 = scalar_select %p373, %s21, 1
        %p375 = scmp.lt.s32.totalorder %s22, 0
        %s376 = scalar_select %p375, %s22, 0
        %s377 = sadd.s32 %s376, %s374
        %s378 = smul.addr %s377, 4
        %s379 = scalar_lea.vmem %s0, %s378
        %p380 = pneg %p58
        %p381 = pneg %p55
        %s382 = sand.u32 %s73, 1
        %s383 = sand.u32 %s73, 1
        %s384 = smul.addr %s383, 64
        %s385 = scalar_lea.vmem [#allocation3], %s384
        %p386 = pneg %p86
        %p387 = pneg %p83
        %p388 = scmp.lt.s32.totalorder %s21, 1
        %s389 = scalar_select %p388, %s21, 1
        %s390 = scalar_lea.vmem %s2, %s389
        %p391 = pneg %p112
        %p392 = pneg %p109
        %p393 = scmp.lt.s32.totalorder %s21, 1
        %s394 = scalar_select %p393, %s21, 1
        %s395 = scalar_lea.vmem %s3, %s394
        %p396 = pneg %p138
        %p397 = pneg %p135
        %p398 = scmp.lt.s32.totalorder %s21, 1
        %s399 = scalar_select %p398, %s21, 1
        %p400 = scmp.lt.s32.totalorder %s23, 2
        %s401 = scalar_select %p400, %s23, 2
        %s402 = smul.addr %s399, 3
        %s403 = sadd.s32 %s401, %s402
        %s404 = scalar_lea.vmem %s4, %s403
        %p405 = pneg %p166
        %p406 = pneg %p163
        %p407 = pneg %p196
        %p408 = pneg %p193
        %p409 = scmp.lt.s32.totalorder %s21, 1
        %s410 = scalar_select %p409, %s21, 1
        %p411 = scmp.lt.s32.totalorder %s22, 0
        %s412 = scalar_select %p411, %s22, 0
        %p413 = scmp.lt.s32.totalorder %s23, 2
        %s414 = scalar_select %p413, %s23, 2
        %s415 = smul.addr %s412, 3
        %s416 = sadd.s32 %s414, %s415
        %s417 = smul.addr %s410, 3
        %s418 = sadd.s32 %s416, %s417
        %s419 = smul.addr %s418, 4
        %s420 = scalar_lea.vmem %s5, %s419
        %p421 = scmp.lt.s32.totalorder %s21, 1
        %s422 = scalar_select %p421, %s21, 1
        %p423 = scmp.lt.s32.totalorder %s22, 0
        %s424 = scalar_select %p423, %s22, 0
        %s425 = sadd.s32 %s424, %s422
        %s426 = smul.addr %s425, 4
        %s427 = scalar_lea.vmem %s0, %s426
        %p428 = scmp.lt.s32.totalorder %s21, 1
        %s429 = scalar_select %p428, %s21, 1
        %s430 = scalar_lea.vmem %s2, %s429
        %p431 = scmp.lt.s32.totalorder %s21, 1
        %s432 = scalar_select %p431, %s21, 1
        %s433 = scalar_lea.vmem %s3, %s432
        %p434 = scmp.lt.s32.totalorder %s21, 1
        %s435 = scalar_select %p434, %s21, 1
        %p436 = scmp.lt.s32.totalorder %s23, 2
        %s437 = scalar_select %p436, %s23, 2
        %s438 = smul.addr %s435, 3
        %s439 = sadd.s32 %s437, %s438
        %s440 = scalar_lea.vmem %s4, %s439
        %p441 = scmp.lt.s32.totalorder %s21, 1
        %s442 = scalar_select %p441, %s21, 1
        %p443 = scmp.lt.s32.totalorder %s22, 0
        %s444 = scalar_select %p443, %s22, 0
        %p445 = scmp.lt.s32.totalorder %s23, 2
        %s446 = scalar_select %p445, %s23, 2
        %s447 = smul.addr %s444, 3
        %s448 = sadd.s32 %s446, %s447
        %s449 = smul.addr %s442, 3
        %s450 = sadd.s32 %s448, %s449
        %s451 = smul.addr %s450, 4
        %s452 = scalar_lea.vmem %s5, %s451
        %p454 = scmp.eq.s32.totalorder %s23, 0
        // Predicated region
        $region82: #{ste_encoder_forward.15} parent=76 // pred_check
          %p455 = pneg %p454
        $region83: #{ste_encoder_forward.15} parent=76 // pred_check_branch
          %457 = sbr.rel (%p455) target = $region85
        $region84: #{ste_encoder_forward.15} parent=76 // pred_region
          %v458 = vld [vmem:[%s427] sm:$0xf]
          %v459 = vunpack.c.l.bf16 %v458
          %460 = vadd.xlane.f32.xlu0 %v459
          %v461 = vpop.xlane.xlu0 %460
          %v462 = vrcp.pop 128.0
          %v463 = vmul.f32 %v461, %v462
          %v464 = vsub.f32 %v459, %v463
          %v465 = vmul.f32 %v464, %v464
          %466 = vadd.xlane.f32.xlu0 %v465
          %v467 = vpop.xlane.xlu0 %466
          %v468 = vmul.f32 %v467, %v462
          %v469 = vadd.f32 %v468, 1e-05
          %v470 = vrsqrt.pop %v469
          %v471 = vmul.f32 %v464, %v470
          %v472 = vld [vmem:[%s430] sm:$0x1]
          %v474 = vlaneseq
          %v475 = vshrl.u32 %v474, 7
          %v476 = vsub.s32 0, %v475
          %v477 = vrot.slane %v472, %v476
          %v479 = vmul.f32 %v471, %v477
          %v480 = vld [vmem:[%s433] sm:$0x1]
          %v482 = vlaneseq
          %v483 = vshrl.u32 %v482, 7
          %v484 = vsub.s32 0, %v483
          %v485 = vrot.slane %v480, %v484
          %v487 = vadd.f32 %v479, %v485
          %v488 = vpack.c.bf16 %v487, %v487
          %489 = vst [vmem:[#allocation2] sm:$0xf] %v488
        $region85: #{ste_encoder_forward.15} parent=76 // pred_fallthru
          _
        %v490 = vld [vmem:[#allocation2] sm:$0xf]
        %v491 = vld [vmem:[%s369] sm:$0xf]
        %v492 = vld [vmem:[%s369 + $0x4] sm:$0xf]
        %v493 = vld [vmem:[%s369 + $0x8] sm:$0xf]
        %v494 = vld [vmem:[%s369 + $0xc] sm:$0xf]
        %v495 = vld [vmem:[%s369 + $0x10] sm:$0xf]
        %v496 = vld [vmem:[%s369 + $0x14] sm:$0xf]
        %v497 = vld [vmem:[%s369 + $0x18] sm:$0xf]
        %v498 = vld [vmem:[%s369 + $0x1c] sm:$0xf]
        %v499 = vld [vmem:[%s369 + $0x20] sm:$0xf]
        %v500 = vld [vmem:[%s369 + $0x24] sm:$0xf]
        %v501 = vld [vmem:[%s369 + $0x28] sm:$0xf]
        %v502 = vld [vmem:[%s369 + $0x2c] sm:$0xf]
        %v503 = vld [vmem:[%s369 + $0x30] sm:$0xf]
        %v504 = vld [vmem:[%s369 + $0x34] sm:$0xf]
        %v505 = vld [vmem:[%s369 + $0x38] sm:$0xf]
        %v506 = vld [vmem:[%s369 + $0x3c] sm:$0xf]
        %v507 = vld [vmem:[%s440] sm:$0x1]
        %v509 = vlaneseq
        %v510 = vshrl.u32 %v509, 7
        %v511 = vsub.s32 0, %v510
        %v512 = vrot.slane %v507, %v511
        %v530 = vunpack.c.l.b16 %v491
        %v531 = vunpack.c.l.b16 %v492
        %v532 = vunpack.c.l.b16 %v493
        %v533 = vunpack.c.l.b16 %v494
        %v534 = vunpack.c.l.b16 %v495
        %v535 = vunpack.c.l.b16 %v496
        %v536 = vunpack.c.l.b16 %v497
        %v537 = vunpack.c.l.b16 %v498
        %v538 = vunpack.c.l.b16 %v499
        %v539 = vunpack.c.l.b16 %v500
        %v540 = vunpack.c.l.b16 %v501
        %v541 = vunpack.c.l.b16 %v502
        %v542 = vunpack.c.l.b16 %v503
        %v543 = vunpack.c.l.b16 %v504
        %v544 = vunpack.c.l.b16 %v505
        %v545 = vunpack.c.l.b16 %v506
        %v546 = vpack.c.b16 %v531, %v530
        %v547 = vpack.c.b16 %v533, %v532
        %v548 = vpack.c.b16 %v535, %v534
        %v549 = vpack.c.b16 %v537, %v536
        %v550 = vpack.c.b16 %v539, %v538
        %v551 = vpack.c.b16 %v541, %v540
        %v552 = vpack.c.b16 %v543, %v542
        %v553 = vpack.c.b16 %v545, %v544
        %562 = vmatprep.subr.bf16.mxu0 0
        %563 = vmatpush1.bf16.msra.mxu0 %v553
        %564 = vmatprep.subr.bf16.mxu0 0
        %565 = vmatpush1.bf16.msra.mxu0 %v552
        %566 = vmatprep.subr.bf16.mxu0 0
        %567 = vmatpush1.bf16.msra.mxu0 %v551
        %568 = vmatprep.subr.bf16.mxu0 0
        %569 = vmatpush1.bf16.msra.mxu0 %v550
        %570 = vmatprep.subr.bf16.mxu0 0
        %571 = vmatpush1.bf16.msra.mxu0 %v549
        %572 = vmatprep.subr.bf16.mxu0 0
        %573 = vmatpush1.bf16.msra.mxu0 %v548
        %574 = vmatprep.subr.bf16.mxu0 0
        %575 = vmatpush1.bf16.msra.mxu0 %v547
        %576 = vmatprep.subr.bf16.mxu0 0
        %577 = vmatpush1.bf16.msra.mxu0 %v546
        %578 = vmatprep.subr.bf16.mxu0 0
        %579 = vmatpush2.bf16.msra.mxu0 0
        %580 = vmatprep.subr.bf16.mxu0 0
        %581 = vmatpush2.bf16.msra.mxu0 0
        %582 = vmatprep.subr.bf16.mxu0 0
        %583 = vmatpush2.bf16.msra.mxu0 0
        %584 = vmatprep.subr.bf16.mxu0 0
        %585 = vmatpush2.bf16.msra.mxu0 0
        %586 = vmatprep.subr.bf16.mxu0 0
        %587 = vmatpush2.bf16.msra.mxu0 0
        %588 = vmatprep.subr.bf16.mxu0 0
        %589 = vmatpush2.bf16.msra.mxu0 0
        %590 = vmatprep.subr.bf16.mxu0 0
        %591 = vmatpush2.bf16.msra.mxu0 0
        %592 = vmatprep.subr.bf16.mxu0 0
        %593 = vmatpush2.bf16.msra.mxu0 0
        %594 = vmatprep.mubr.bf16.mxu0 0
        %595 = vmatmul.mubr.bf16.gmra.mxu0 %v490
        %v596 = vpop.f32.mrf.mxu0
        %v597 = vadd.f32 %v512, %v596
        %v598 = vpop.f32.mrf.mxu0
        %v599 = vpop.f32.mrf.mxu0
        %v600 = vpop.f32.mrf.mxu0
        %601 = vdwg.mxu0
        %v602 = vpack.c.bf16 %v597, %v597
        %603 = vst [vmem:[%s452] sm:$0xf] %v602
        %p604 = scmp.lt.s32.totalorder %s21, 1
        %s605 = scalar_select %p604, %s21, 1
        %p606 = scmp.lt.s32.totalorder %s22, 0
        %s607 = scalar_select %p606, %s22, 0
        %p608 = scmp.lt.s32.totalorder %s23, 2
        %s609 = scalar_select %p608, %s23, 2
        %s610 = smul.addr %s607, 3
        %s611 = sadd.s32 %s609, %s610
        %s612 = smul.addr %s605, 3
        %s613 = sadd.s32 %s611, %s612
        %s614 = smul.addr %s613, 4
        %s615 = scalar_lea.vmem %s5, %s614
        // Predicated region
        $region86: #{ste_encoder_forward.15} parent=76 // pred_check
          %p616 = pneg %p193
        $region87: #{ste_encoder_forward.15} parent=76 // pred_check_branch
          %618 = sbr.rel (%p616) target = $region89
        $region88: #{ste_encoder_forward.15} parent=76 // pred_region
          _
        $region89: #{ste_encoder_forward.15} parent=76 // pred_fallthru
          _
      $region77: #{ste_encoder_forward.15} parent=5 // pred_fallthru
        _
      %p619 = scmp.le.s32.totalorder 2, %s11
      // Predicated region
      $region90: #{ste_encoder_forward.15} parent=5 // pred_check
        %p620 = pneg %p619
      $region91: #{ste_encoder_forward.15} parent=5 // pred_check_branch
        %622 = sbr.rel (%p620) target = $region93
      $region92: #{ste_encoder_forward.15} parent=5 // pred_region
        %s623 = ssub.s32 %s11, 2
        // Predicated region
        $region94: #{ste_encoder_forward.15} parent=92 // pred_check
          %p624 = pneg %p199
        $region95: #{ste_encoder_forward.15} parent=92 // pred_check_branch
          %626 = sbr.rel (%p624) target = $region97
        $region96: #{ste_encoder_forward.15} parent=92 // pred_region
          %p627 = scmp.lt.s32.totalorder %s24, 1
          %s628 = scalar_select %p627, %s24, 1
          %p629 = scmp.lt.s32.totalorder %s25, 0
          %s630 = scalar_select %p629, %s25, 0
          %p631 = scmp.lt.s32.totalorder %s26, 2
          %s632 = scalar_select %p631, %s26, 2
          %s633 = smul.addr %s630, 3
          %s634 = sadd.s32 %s632, %s633
          %s635 = smul.addr %s628, 3
          %s636 = sadd.s32 %s634, %s635
          %s637 = smul.addr %s636, 4
          %s638 = scalar_lea.vmem %s5, %s637
        $region97: #{ste_encoder_forward.15} parent=92 // pred_fallthru
          _
      $region93: #{ste_encoder_forward.15} parent=5 // pred_fallthru
        _
    $region6: #{ste_encoder_forward.15} parent=1 // loop_footer
      %s15 = sadd.s32 1, %s11
    $region7: #{ste_encoder_forward.15} parent=1 // loop_footer_branch
      %10 = sbr.rel target = $region3
    $region8: #{ste_encoder_forward.15} parent=1 // loop_exit
      _

// kernel: ste_encoder_forward.14
$region0: #{ste_encoder_forward.14}
  #allocation0 [shape = 'u32[]', space=smem, size = 0x4, offset = 0x4, fixed_abs, tag = 'smem constant byte address 0x4 - core index']
  #allocation1 [shape = 'u32[144,128]{1,0:T(1,128)}', space=vmem, size = 0x12000, scoped, tag = 'internal scratch']
  %s0 = inlined_call_operand.vmem [shape: bf16[1,32,3136], index: 0, kind: input, shape index: {}]
  %s1 = inlined_call_operand.vmem [shape: bf16[1,3136,128], index: 1, kind: input, shape index: {}]
  %s2 = inlined_call_operand.vmem [shape: bf16[1,32,128], index: 2, kind: output, shape index: {}]
  %s3 = sld [smem:[#allocation0]]
  $region41: #{ste_encoder_forward.14} parent=0
    _
  %s5 = ssub.s32 1, %s3
  %s6 = scalar_select 0, %s5, %s3
  loop: start=0, step=1, limit=4
  $region2: #{ste_encoder_forward.14} parent=0 // loop_pre_header
    _
  $region3: #{ste_encoder_forward.14} parent=0 // loop_header
    %s8 = sphi 0, %s12
    %p9 = scmp.ge.s32.totalorder %s8, 4
    %s15 = sphi 0, %s34
    %s16 = sphi 0, %s30
    %s17 = sphi 0, %s26
    %s18 = sphi 0, %s15
    %s19 = sphi 0, %s16
    %s20 = sphi 0, %s17
    %s21 = sphi 0, %s18
    %s22 = sphi 0, %s19
    %s23 = sphi 0, %s20
    %s39 = sphi 0, %s41
    %s42 = sphi 0, %s39
    %s43 = sphi 0, %s42
    %s59 = sphi 0, %s43
    %s67 = sphi 0, %s69
    %s70 = sphi 0, %s67
    %s71 = sphi 0, %s70
    %s87 = sphi 0, %s71
    %s97 = sphi 0, %s99
    %s100 = sphi 0, %s97
    %s101 = sphi 0, %s100
    %s117 = sphi 0, %s101
  $region4: #{ste_encoder_forward.14} parent=0 // loop_header_branch
    %11 = sbr.rel (%p9) target = $region8
  $region5: #{ste_encoder_forward.14} parent=0 // loop_body
    %s13 = ssub.s32 %s8, 1
    %s14 = ssub.s32 %s8, 2
    %s24 = sadd.s32 1, %s17
    %p25 = scmp.ge.s32.totalorder %s24, 1
    %s26 = scalar_select %p25, 0, %s24
    %s27 = sadd.s32 1, %s16
    %s28 = scalar_select %p25, %s27, %s16
    %p29 = scmp.ge.s32.totalorder %s28, 2
    %s30 = scalar_select %p29, 0, %s28
    %s31 = sadd.s32 1, %s15
    %s32 = scalar_select %p29, %s31, %s15
    %p33 = scmp.ge.s32.totalorder %s32, 1
    %s34 = scalar_select %p33, 0, %s32
    %s35 = ssub.s32 %s15, %s34
    %s36 = ssub.s32 %s16, %s30
    %s37 = sor.u32 %s35, %s36
    %p38 = scmp.eq.s32.totalorder %s37, 0
    %s40 = sadd.s32 %s39, 1
    %s41 = scalar_select %p38, %s39, %s40
    %p44 = pneg %p38
    %p45 = scmp.eq.s32.totalorder %s8, 1
    %p46 = por %p44, %p45
    %p47 = scmp.ne.s32.totalorder %s39, %s42
    %p48 = scmp.eq.s32.totalorder %s8, 0
    %p49 = por %p47, %p48
    %p50 = scmp.ne.s32.totalorder %s39, %s42
    %p51 = scmp.eq.s32.totalorder %s13, 1
    %p52 = por %p50, %p51
    %p53 = scmp.ne.s32.totalorder %s42, %s43
    %p54 = scmp.eq.s32.totalorder %s13, 0
    %p55 = por %p53, %p54
    %p56 = scmp.ne.s32.totalorder %s42, %s43
    %p57 = scmp.eq.s32.totalorder %s14, 1
    %p58 = por %p56, %p57
    %p60 = scmp.ne.s32.totalorder %s43, %s59
    %p61 = scmp.eq.s32.totalorder %s14, 0
    %p62 = por %p60, %p61
    %s63 = ssub.s32 %s15, %s34
    %s64 = ssub.s32 %s17, %s26
    %s65 = sor.u32 %s63, %s64
    %p66 = scmp.eq.s32.totalorder %s65, 0
    %s68 = sadd.s32 %s67, 1
    %s69 = scalar_select %p66, %s67, %s68
    %p72 = pneg %p66
    %p73 = scmp.eq.s32.totalorder %s8, 1
    %p74 = por %p72, %p73
    %p75 = scmp.ne.s32.totalorder %s67, %s70
    %p76 = scmp.eq.s32.totalorder %s8, 0
    %p77 = por %p75, %p76
    %p78 = scmp.ne.s32.totalorder %s67, %s70
    %p79 = scmp.eq.s32.totalorder %s13, 1
    %p80 = por %p78, %p79
    %p81 = scmp.ne.s32.totalorder %s70, %s71
    %p82 = scmp.eq.s32.totalorder %s13, 0
    %p83 = por %p81, %p82
    %p84 = scmp.ne.s32.totalorder %s70, %s71
    %p85 = scmp.eq.s32.totalorder %s14, 1
    %p86 = por %p84, %p85
    %p88 = scmp.ne.s32.totalorder %s71, %s87
    %p89 = scmp.eq.s32.totalorder %s14, 0
    %p90 = por %p88, %p89
    %s91 = ssub.s32 %s15, %s34
    %s92 = ssub.s32 %s16, %s30
    %s93 = sor.u32 %s91, %s92
    %s94 = ssub.s32 %s17, %s26
    %s95 = sor.u32 %s93, %s94
    %p96 = scmp.eq.s32.totalorder %s95, 0
    %s98 = sadd.s32 %s97, 1
    %s99 = scalar_select %p96, %s97, %s98
    %p102 = pneg %p96
    %p103 = scmp.eq.s32.totalorder %s8, 1
    %p104 = por %p102, %p103
    %p105 = scmp.ne.s32.totalorder %s97, %s100
    %p106 = scmp.eq.s32.totalorder %s8, 0
    %p107 = por %p105, %p106
    %p108 = scmp.ne.s32.totalorder %s97, %s100
    %p109 = scmp.eq.s32.totalorder %s13, 1
    %p110 = por %p108, %p109
    %p111 = scmp.ne.s32.totalorder %s100, %s101
    %p112 = scmp.eq.s32.totalorder %s13, 0
    %p113 = por %p111, %p112
    %p114 = scmp.ne.s32.totalorder %s100, %s101
    %p115 = scmp.eq.s32.totalorder %s14, 1
    %p116 = por %p114, %p115
    %p118 = scmp.ne.s32.totalorder %s101, %s117
    %p119 = scmp.eq.s32.totalorder %s14, 0
    %p120 = por %p118, %p119
    %p121 = scmp.le.s32.totalorder 1, %s8
    %p122 = scmp.lt.s32.totalorder %s8, 3
    %p123 = pnand %p121, %p122
    %p124 = pneg %p123
    // Predicated region
    $region9: #{ste_encoder_forward.14} parent=5 // pred_check
      _
    $region10: #{ste_encoder_forward.14} parent=5 // pred_check_branch
      %126 = sbr.rel (%p123) target = $region12
    $region11: #{ste_encoder_forward.14} parent=5 // pred_region
      %s127 = ssub.s32 %s8, 1
      // Predicated region
      $region13: #{ste_encoder_forward.14} parent=11 // pred_check
        %p128 = pneg %p83
      $region14: #{ste_encoder_forward.14} parent=11 // pred_check_branch
        %130 = sbr.rel (%p128) target = $region16
      $region15: #{ste_encoder_forward.14} parent=11 // pred_region
        %p131 = scmp.lt.s32.totalorder %s18, 0
        %s132 = scalar_select %p131, %s18, 0
        %p133 = scmp.lt.s32.totalorder %s20, 0
        %s134 = scalar_select %p133, %s20, 0
        %s135 = smul.addr %s132, 392
        %s136 = sadd.s32 %s134, %s135
        %s137 = smul.addr %s136, 4
        %s138 = scalar_lea.vmem %s1, %s137
      $region16: #{ste_encoder_forward.14} parent=11 // pred_fallthru
        _
    $region12: #{ste_encoder_forward.14} parent=5 // pred_fallthru
      _
    %p139 = scmp.lt.s32.totalorder %s8, 2
    // Predicated region
    $region17: #{ste_encoder_forward.14} parent=5 // pred_check
      %p140 = pneg %p139
    $region18: #{ste_encoder_forward.14} parent=5 // pred_check_branch
      %142 = sbr.rel (%p140) target = $region20
    $region19: #{ste_encoder_forward.14} parent=5 // pred_region
      // Predicated region
      $region21: #{ste_encoder_forward.14} parent=19 // pred_check
        %p143 = pneg %p49
      $region22: #{ste_encoder_forward.14} parent=19 // pred_check_branch
        %145 = sbr.rel (%p143) target = $region24
      $region23: #{ste_encoder_forward.14} parent=19 // pred_region
        %s146 = smul.u32 2, %s16
        %p147 = scmp.lt.s32.totalorder %s15, 0
        %s148 = scalar_select %p147, %s15, 0
        %p149 = scmp.lt.s32.totalorder %s146, 3
        %s150 = scalar_select %p149, %s146, 3
        %s151 = smul.addr %s150, 25
        %s152 = smul.addr %s148, 100
        %s153 = sadd.s32 %s151, %s152
        %s154 = smul.addr %s153, 4
        %s155 = scalar_lea.vmem %s0, %s154
        %s156 = smul.u32 2, %s16
      $region24: #{ste_encoder_forward.14} parent=19 // pred_fallthru
        _
    $region20: #{ste_encoder_forward.14} parent=5 // pred_fallthru
      _
    %p157 = scmp.le.s32.totalorder 1, %s8
    %p158 = scmp.lt.s32.totalorder %s8, 3
    %p159 = pnand %p157, %p158
    %p160 = pneg %p159
    // Predicated region
    $region25: #{ste_encoder_forward.14} parent=5 // pred_check
      _
    $region26: #{ste_encoder_forward.14} parent=5 // pred_check_branch
      %162 = sbr.rel (%p159) target = $region28
    $region27: #{ste_encoder_forward.14} parent=5 // pred_region
      %s163 = ssub.s32 %s8, 1
      %s164 = smul.u32 2, %s19
      %p165 = scmp.lt.s32.totalorder %s18, 0
      %s166 = scalar_select %p165, %s18, 0
      %p167 = scmp.lt.s32.totalorder %s164, 3
      %s168 = scalar_select %p167, %s164, 3
      %s169 = smul.addr %s168, 25
      %s170 = smul.addr %s166, 100
      %s171 = sadd.s32 %s169, %s170
      %s172 = smul.addr %s171, 4
      %s173 = scalar_lea.vmem %s0, %s172
      %p174 = pneg %p55
      %p175 = pneg %p52
      %p176 = scmp.lt.s32.totalorder %s18, 0
      %s177 = scalar_select %p176, %s18, 0
      %p178 = scmp.lt.s32.totalorder %s20, 0
      %s179 = scalar_select %p178, %s20, 0
      %s180 = smul.addr %s177, 392
      %s181 = sadd.s32 %s179, %s180
      %s182 = smul.addr %s181, 4
      %s183 = scalar_lea.vmem %s1, %s182
      %p184 = pneg %p83
      %p185 = pneg %p80
      %p186 = pneg %p113
      %p187 = pneg %p110
      %s188 = smul.u32 2, %s19
      %p189 = scmp.lt.s32.totalorder %s18, 0
      %s190 = scalar_select %p189, %s18, 0
      %p191 = scmp.lt.s32.totalorder %s188, 3
      %s192 = scalar_select %p191, %s188, 3
      %p193 = scmp.lt.s32.totalorder %s20, 0
      %s194 = scalar_select %p193, %s20, 0
      %s195 = sadd.s32 %s194, %s192
      %s196 = smul.addr %s190, 4
      %s197 = sadd.s32 %s195, %s196
      %s198 = smul.addr %s197, 4
      %s199 = scalar_lea.vmem %s2, %s198
      %s200 = smul.u32 2, %s19
      %p201 = scmp.lt.s32.totalorder %s18, 0
      %s202 = scalar_select %p201, %s18, 0
      %p203 = scmp.lt.s32.totalorder %s200, 3
      %s204 = scalar_select %p203, %s200, 3
      %s205 = smul.addr %s204, 25
      %s206 = smul.addr %s202, 100
      %s207 = sadd.s32 %s205, %s206
      %s208 = smul.addr %s207, 4
      %s209 = scalar_lea.vmem %s0, %s208
      %s210 = smul.u32 2, %s19
      %p211 = scmp.lt.s32.totalorder %s18, 0
      %s212 = scalar_select %p211, %s18, 0
      %p213 = scmp.lt.s32.totalorder %s20, 0
      %s214 = scalar_select %p213, %s20, 0
      %s215 = smul.addr %s212, 392
      %s216 = sadd.s32 %s214, %s215
      %s217 = smul.addr %s216, 4
      %s218 = scalar_lea.vmem %s1, %s217
      %s219 = smul.u32 2, %s19
      %p220 = scmp.lt.s32.totalorder %s18, 0
      %s221 = scalar_select %p220, %s18, 0
      %p222 = scmp.lt.s32.totalorder %s219, 3
      %s223 = scalar_select %p222, %s219, 3
      %p224 = scmp.lt.s32.totalorder %s20, 0
      %s225 = scalar_select %p224, %s20, 0
      %s226 = sadd.s32 %s225, %s223
      %s227 = smul.addr %s221, 4
      %s228 = sadd.s32 %s226, %s227
      %s229 = smul.addr %s228, 4
      %s230 = scalar_lea.vmem %s2, %s229
      %s231 = smul.u32 2, %s19
      %v233 = vld [vmem:[%s209] sm:$0xff]
      %v234 = vld [vmem:[%s209 + $0x8] sm:$0xff]
      %v235 = vld [vmem:[%s209 + $0x10] sm:$0xff]
      %v236 = vld [vmem:[%s209 + $0x18] sm:$0xff]
      %v237 = vld [vmem:[%s209 + $0x20] sm:$0xff]
      %v238 = vld [vmem:[%s209 + $0x28] sm:$0xff]
      %v239 = vld [vmem:[%s209 + $0x30] sm:$0xff]
      %v240 = vld [vmem:[%s209 + $0x38] sm:$0xff]
      %v241 = vld [vmem:[%s209 + $0x40] sm:$0xff]
      %v242 = vld [vmem:[%s209 + $0x48] sm:$0xff]
      %v243 = vld [vmem:[%s209 + $0x50] sm:$0xff]
      %v244 = vld [vmem:[%s209 + $0x58] sm:$0xff]
      %v245 = vld [vmem:[%s209 + $0x60] sm:$0xf]
      %v246 = vld [vmem:[%s209 + $0x64] sm:$0xff]
      %v247 = vld [vmem:[%s209 + $0x6c] sm:$0xff]
      %v248 = vld [vmem:[%s209 + $0x74] sm:$0xff]
      %v249 = vld [vmem:[%s209 + $0x7c] sm:$0xff]
      %v250 = vld [vmem:[%s209 + $0x84] sm:$0xff]
      %v251 = vld [vmem:[%s209 + $0x8c] sm:$0xff]
      %v252 = vld [vmem:[%s209 + $0x94] sm:$0xff]
      %v253 = vld [vmem:[%s209 + $0x9c] sm:$0xff]
      %v254 = vld [vmem:[%s209 + $0xa4] sm:$0xff]
      %v255 = vld [vmem:[%s209 + $0xac] sm:$0xff]
      %v256 = vld [vmem:[%s209 + $0xb4] sm:$0xff]
      %v257 = vld [vmem:[%s209 + $0xbc] sm:$0xff]
      %v258 = vld [vmem:[%s209 + $0xc4] sm:$0xf]
      %v259 = vld [vmem:[%s218] sm:$0xf]
      %v260 = vld [vmem:[%s218 + $0x4] sm:$0xf]
      %v261 = vld [vmem:[%s218 + $0x8] sm:$0xf]
      %v262 = vld [vmem:[%s218 + $0xc] sm:$0xf]
      %v263 = vld [vmem:[%s218 + $0x10] sm:$0xf]
      %v264 = vld [vmem:[%s218 + $0x14] sm:$0xf]
      %v265 = vld [vmem:[%s218 + $0x18] sm:$0xf]
      %v266 = vld [vmem:[%s218 + $0x1c] sm:$0xf]
      %v267 = vld [vmem:[%s218 + $0x20] sm:$0xf]
      %v268 = vld [vmem:[%s218 + $0x24] sm:$0xf]
      %v269 = vld [vmem:[%s218 + $0x28] sm:$0xf]
      %v270 = vld [vmem:[%s218 + $0x2c] sm:$0xf]
      %v271 = vld [vmem:[%s218 + $0x30] sm:$0xf]
      %v272 = vld [vmem:[%s218 + $0x34] sm:$0xf]
      %v273 = vld [vmem:[%s218 + $0x38] sm:$0xf]
      %v274 = vld [vmem:[%s218 + $0x3c] sm:$0xf]
      %v275 = vld [vmem:[%s218 + $0x40] sm:$0xf]
      %v276 = vld [vmem:[%s218 + $0x44] sm:$0xf]
      %v277 = vld [vmem:[%s218 + $0x48] sm:$0xf]
      %v278 = vld [vmem:[%s218 + $0x4c] sm:$0xf]
      %v279 = vld [vmem:[%s218 + $0x50] sm:$0xf]
      %v280 = vld [vmem:[%s218 + $0x54] sm:$0xf]
      %v281 = vld [vmem:[%s218 + $0x58] sm:$0xf]
      %v282 = vld [vmem:[%s218 + $0x5c] sm:$0xf]
      %v283 = vld [vmem:[%s218 + $0x60] sm:$0xf]
      %v284 = vld [vmem:[%s218 + $0x64] sm:$0xf]
      %v285 = vld [vmem:[%s218 + $0x68] sm:$0xf]
      %v286 = vld [vmem:[%s218 + $0x6c] sm:$0xf]
      %v287 = vld [vmem:[%s218 + $0x70] sm:$0xf]
      %v288 = vld [vmem:[%s218 + $0x74] sm:$0xf]
      %v289 = vld [vmem:[%s218 + $0x78] sm:$0xf]
      %v290 = vld [vmem:[%s218 + $0x7c] sm:$0xf]
      %v291 = vld [vmem:[%s218 + $0x80] sm:$0xf]
      %v292 = vld [vmem:[%s218 + $0x84] sm:$0xf]
      %v293 = vld [vmem:[%s218 + $0x88] sm:$0xf]
      %v294 = vld [vmem:[%s218 + $0x8c] sm:$0xf]
      %v295 = vld [vmem:[%s218 + $0x90] sm:$0xf]
      %v296 = vld [vmem:[%s218 + $0x94] sm:$0xf]
      %v297 = vld [vmem:[%s218 + $0x98] sm:$0xf]
      %v298 = vld [vmem:[%s218 + $0x9c] sm:$0xf]
      %v299 = vld [vmem:[%s218 + $0xa0] sm:$0xf]
      %v300 = vld [vmem:[%s218 + $0xa4] sm:$0xf]
      %v301 = vld [vmem:[%s218 + $0xa8] sm:$0xf]
      %v302 = vld [vmem:[%s218 + $0xac] sm:$0xf]
      %v303 = vld [vmem:[%s218 + $0xb0] sm:$0xf]
      %v304 = vld [vmem:[%s218 + $0xb4] sm:$0xf]
      %v305 = vld [vmem:[%s218 + $0xb8] sm:$0xf]
      %v306 = vld [vmem:[%s218 + $0xbc] sm:$0xf]
      %v307 = vld [vmem:[%s218 + $0xc0] sm:$0xf]
      %v308 = vld [vmem:[%s218 + $0xc4] sm:$0xf]
      %v309 = vld [vmem:[%s218 + $0xc8] sm:$0xf]
      %v310 = vld [vmem:[%s218 + $0xcc] sm:$0xf]
      %v311 = vld [vmem:[%s218 + $0xd0] sm:$0xf]
      %v312 = vld [vmem:[%s218 + $0xd4] sm:$0xf]
      %v313 = vld [vmem:[%s218 + $0xd8] sm:$0xf]
      %v314 = vld [vmem:[%s218 + $0xdc] sm:$0xf]
      %v315 = vld [vmem:[%s218 + $0xe0] sm:$0xf]
      %v316 = vld [vmem:[%s218 + $0xe4] sm:$0xf]
      %v317 = vld [vmem:[%s218 + $0xe8] sm:$0xf]
      %v318 = vld [vmem:[%s218 + $0xec] sm:$0xf]
      %v319 = vld [vmem:[%s218 + $0xf0] sm:$0xf]
      %v320 = vld [vmem:[%s218 + $0xf4] sm:$0xf]
      %v321 = vld [vmem:[%s218 + $0xf8] sm:$0xf]
      %v322 = vld [vmem:[%s218 + $0xfc] sm:$0xf]
      %v323 = vld [vmem:[%s218 + $0x100] sm:$0xf]
      %v324 = vld [vmem:[%s218 + $0x104] sm:$0xf]
      %v325 = vld [vmem:[%s218 + $0x108] sm:$0xf]
      %v326 = vld [vmem:[%s218 + $0x10c] sm:$0xf]
      %v327 = vld [vmem:[%s218 + $0x110] sm:$0xf]
      %v328 = vld [vmem:[%s218 + $0x114] sm:$0xf]
      %v329 = vld [vmem:[%s218 + $0x118] sm:$0xf]
      %v330 = vld [vmem:[%s218 + $0x11c] sm:$0xf]
      %v331 = vld [vmem:[%s218 + $0x120] sm:$0xf]
      %v332 = vld [vmem:[%s218 + $0x124] sm:$0xf]
      %v333 = vld [vmem:[%s218 + $0x128] sm:$0xf]
      %v334 = vld [vmem:[%s218 + $0x12c] sm:$0xf]
      %v335 = vld [vmem:[%s218 + $0x130] sm:$0xf]
      %v336 = vld [vmem:[%s218 + $0x134] sm:$0xf]
      %v337 = vld [vmem:[%s218 + $0x138] sm:$0xf]
      %v338 = vld [vmem:[%s218 + $0x13c] sm:$0xf]
      %v339 = vld [vmem:[%s218 + $0x140] sm:$0xf]
      %v340 = vld [vmem:[%s218 + $0x144] sm:$0xf]
      %v341 = vld [vmem:[%s218 + $0x148] sm:$0xf]
      %v342 = vld [vmem:[%s218 + $0x14c] sm:$0xf]
      %v343 = vld [vmem:[%s218 + $0x150] sm:$0xf]
      %v344 = vld [vmem:[%s218 + $0x154] sm:$0xf]
      %v345 = vld [vmem:[%s218 + $0x158] sm:$0xf]
      %v346 = vld [vmem:[%s218 + $0x15c] sm:$0xf]
      %v347 = vld [vmem:[%s218 + $0x160] sm:$0xf]
      %v348 = vld [vmem:[%s218 + $0x164] sm:$0xf]
      %v349 = vld [vmem:[%s218 + $0x168] sm:$0xf]
      %v350 = vld [vmem:[%s218 + $0x16c] sm:$0xf]
      %v351 = vld [vmem:[%s218 + $0x170] sm:$0xf]
      %v352 = vld [vmem:[%s218 + $0x174] sm:$0xf]
      %v353 = vld [vmem:[%s218 + $0x178] sm:$0xf]
      %v354 = vld [vmem:[%s218 + $0x17c] sm:$0xf]
      %v355 = vld [vmem:[%s218 + $0x180] sm:$0xf]
      %v356 = vld [vmem:[%s218 + $0x184] sm:$0xf]
      %v357 = vld [vmem:[%s218 + $0x188] sm:$0xf]
      %v358 = vld [vmem:[%s218 + $0x18c] sm:$0xf]
      %v359 = vld [vmem:[%s218 + $0x190] sm:$0xf]
      %v360 = vld [vmem:[%s218 + $0x194] sm:$0xf]
      %v361 = vld [vmem:[%s218 + $0x198] sm:$0xf]
      %v362 = vld [vmem:[%s218 + $0x19c] sm:$0xf]
      %v363 = vld [vmem:[%s218 + $0x1a0] sm:$0xf]
      %v364 = vld [vmem:[%s218 + $0x1a4] sm:$0xf]
      %v365 = vld [vmem:[%s218 + $0x1a8] sm:$0xf]
      %v366 = vld [vmem:[%s218 + $0x1ac] sm:$0xf]
      %v367 = vld [vmem:[%s218 + $0x1b0] sm:$0xf]
      %v368 = vld [vmem:[%s218 + $0x1b4] sm:$0xf]
      %v369 = vld [vmem:[%s218 + $0x1b8] sm:$0xf]
      %v370 = vld [vmem:[%s218 + $0x1bc] sm:$0xf]
      %v371 = vld [vmem:[%s218 + $0x1c0] sm:$0xf]
      %v372 = vld [vmem:[%s218 + $0x1c4] sm:$0xf]
      %v373 = vld [vmem:[%s218 + $0x1c8] sm:$0xf]
      %v374 = vld [vmem:[%s218 + $0x1cc] sm:$0xf]
      %v375 = vld [vmem:[%s218 + $0x1d0] sm:$0xf]
      %v376 = vld [vmem:[%s218 + $0x1d4] sm:$0xf]
      %v377 = vld [vmem:[%s218 + $0x1d8] sm:$0xf]
      %v378 = vld [vmem:[%s218 + $0x1dc] sm:$0xf]
      %v379 = vld [vmem:[%s218 + $0x1e0] sm:$0xf]
      %v380 = vld [vmem:[%s218 + $0x1e4] sm:$0xf]
      %v381 = vld [vmem:[%s218 + $0x1e8] sm:$0xf]
      %v382 = vld [vmem:[%s218 + $0x1ec] sm:$0xf]
      %v383 = vld [vmem:[%s218 + $0x1f0] sm:$0xf]
      %v384 = vld [vmem:[%s218 + $0x1f4] sm:$0xf]
      %v385 = vld [vmem:[%s218 + $0x1f8] sm:$0xf]
      %v386 = vld [vmem:[%s218 + $0x1fc] sm:$0xf]
      %v387 = vld [vmem:[%s218 + $0x200] sm:$0xf]
      %v388 = vld [vmem:[%s218 + $0x204] sm:$0xf]
      %v389 = vld [vmem:[%s218 + $0x208] sm:$0xf]
      %v390 = vld [vmem:[%s218 + $0x20c] sm:$0xf]
      %v391 = vld [vmem:[%s218 + $0x210] sm:$0xf]
      %v392 = vld [vmem:[%s218 + $0x214] sm:$0xf]
      %v393 = vld [vmem:[%s218 + $0x218] sm:$0xf]
      %v394 = vld [vmem:[%s218 + $0x21c] sm:$0xf]
      %v395 = vld [vmem:[%s218 + $0x220] sm:$0xf]
      %v396 = vld [vmem:[%s218 + $0x224] sm:$0xf]
      %v397 = vld [vmem:[%s218 + $0x228] sm:$0xf]
      %v398 = vld [vmem:[%s218 + $0x22c] sm:$0xf]
      %v399 = vld [vmem:[%s218 + $0x230] sm:$0xf]
      %v400 = vld [vmem:[%s218 + $0x234] sm:$0xf]
      %v401 = vld [vmem:[%s218 + $0x238] sm:$0xf]
      %v402 = vld [vmem:[%s218 + $0x23c] sm:$0xf]
      %v403 = vld [vmem:[%s218 + $0x240] sm:$0xf]
      %v404 = vld [vmem:[%s218 + $0x244] sm:$0xf]
      %v405 = vld [vmem:[%s218 + $0x248] sm:$0xf]
      %v406 = vld [vmem:[%s218 + $0x24c] sm:$0xf]
      %v407 = vld [vmem:[%s218 + $0x250] sm:$0xf]
      %v408 = vld [vmem:[%s218 + $0x254] sm:$0xf]
      %v409 = vld [vmem:[%s218 + $0x258] sm:$0xf]
      %v410 = vld [vmem:[%s218 + $0x25c] sm:$0xf]
      %v411 = vld [vmem:[%s218 + $0x260] sm:$0xf]
      %v412 = vld [vmem:[%s218 + $0x264] sm:$0xf]
      %v413 = vld [vmem:[%s218 + $0x268] sm:$0xf]
      %v414 = vld [vmem:[%s218 + $0x26c] sm:$0xf]
      %v415 = vld [vmem:[%s218 + $0x270] sm:$0xf]
      %v416 = vld [vmem:[%s218 + $0x274] sm:$0xf]
      %v417 = vld [vmem:[%s218 + $0x278] sm:$0xf]
      %v418 = vld [vmem:[%s218 + $0x27c] sm:$0xf]
      %v419 = vld [vmem:[%s218 + $0x280] sm:$0xf]
      %v420 = vld [vmem:[%s218 + $0x284] sm:$0xf]
      %v421 = vld [vmem:[%s218 + $0x288] sm:$0xf]
      %v422 = vld [vmem:[%s218 + $0x28c] sm:$0xf]
      %v423 = vld [vmem:[%s218 + $0x290] sm:$0xf]
      %v424 = vld [vmem:[%s218 + $0x294] sm:$0xf]
      %v425 = vld [vmem:[%s218 + $0x298] sm:$0xf]
      %v426 = vld [vmem:[%s218 + $0x29c] sm:$0xf]
      %v427 = vld [vmem:[%s218 + $0x2a0] sm:$0xf]
      %v428 = vld [vmem:[%s218 + $0x2a4] sm:$0xf]
      %v429 = vld [vmem:[%s218 + $0x2a8] sm:$0xf]
      %v430 = vld [vmem:[%s218 + $0x2ac] sm:$0xf]
      %v431 = vld [vmem:[%s218 + $0x2b0] sm:$0xf]
      %v432 = vld [vmem:[%s218 + $0x2b4] sm:$0xf]
      %v433 = vld [vmem:[%s218 + $0x2b8] sm:$0xf]
      %v434 = vld [vmem:[%s218 + $0x2bc] sm:$0xf]
      %v435 = vld [vmem:[%s218 + $0x2c0] sm:$0xf]
      %v436 = vld [vmem:[%s218 + $0x2c4] sm:$0xf]
      %v437 = vld [vmem:[%s218 + $0x2c8] sm:$0xf]
      %v438 = vld [vmem:[%s218 + $0x2cc] sm:$0xf]
      %v439 = vld [vmem:[%s218 + $0x2d0] sm:$0xf]
      %v440 = vld [vmem:[%s218 + $0x2d4] sm:$0xf]
      %v441 = vld [vmem:[%s218 + $0x2d8] sm:$0xf]
      %v442 = vld [vmem:[%s218 + $0x2dc] sm:$0xf]
      %v443 = vld [vmem:[%s218 + $0x2e0] sm:$0xf]
      %v444 = vld [vmem:[%s218 + $0x2e4] sm:$0xf]
      %v445 = vld [vmem:[%s218 + $0x2e8] sm:$0xf]
      %v446 = vld [vmem:[%s218 + $0x2ec] sm:$0xf]
      %v447 = vld [vmem:[%s218 + $0x2f0] sm:$0xf]
      %v448 = vld [vmem:[%s218 + $0x2f4] sm:$0xf]
      %v449 = vld [vmem:[%s218 + $0x2f8] sm:$0xf]
      %v450 = vld [vmem:[%s218 + $0x2fc] sm:$0xf]
      %v451 = vld [vmem:[%s218 + $0x300] sm:$0xf]
      %v452 = vld [vmem:[%s218 + $0x304] sm:$0xf]
      %v453 = vld [vmem:[%s218 + $0x308] sm:$0xf]
      %v454 = vld [vmem:[%s218 + $0x30c] sm:$0xf]
      %v455 = vld [vmem:[%s218 + $0x310] sm:$0xf]
      %v456 = vld [vmem:[%s218 + $0x314] sm:$0xf]
      %v457 = vld [vmem:[%s218 + $0x318] sm:$0xf]
      %v458 = vld [vmem:[%s218 + $0x31c] sm:$0xf]
      %v459 = vld [vmem:[%s218 + $0x320] sm:$0xf]
      %v460 = vld [vmem:[%s218 + $0x324] sm:$0xf]
      %v461 = vld [vmem:[%s218 + $0x328] sm:$0xf]
      %v462 = vld [vmem:[%s218 + $0x32c] sm:$0xf]
      %v463 = vld [vmem:[%s218 + $0x330] sm:$0xf]
      %v464 = vld [vmem:[%s218 + $0x334] sm:$0xf]
      %v465 = vld [vmem:[%s218 + $0x338] sm:$0xf]
      %v466 = vld [vmem:[%s218 + $0x33c] sm:$0xf]
      %v467 = vld [vmem:[%s218 + $0x340] sm:$0xf]
      %v468 = vld [vmem:[%s218 + $0x344] sm:$0xf]
      %v469 = vld [vmem:[%s218 + $0x348] sm:$0xf]
      %v470 = vld [vmem:[%s218 + $0x34c] sm:$0xf]
      %v471 = vld [vmem:[%s218 + $0x350] sm:$0xf]
      %v472 = vld [vmem:[%s218 + $0x354] sm:$0xf]
      %v473 = vld [vmem:[%s218 + $0x358] sm:$0xf]
      %v474 = vld [vmem:[%s218 + $0x35c] sm:$0xf]
      %v475 = vld [vmem:[%s218 + $0x360] sm:$0xf]
      %v476 = vld [vmem:[%s218 + $0x364] sm:$0xf]
      %v477 = vld [vmem:[%s218 + $0x368] sm:$0xf]
      %v478 = vld [vmem:[%s218 + $0x36c] sm:$0xf]
      %v479 = vld [vmem:[%s218 + $0x370] sm:$0xf]
      %v480 = vld [vmem:[%s218 + $0x374] sm:$0xf]
      %v481 = vld [vmem:[%s218 + $0x378] sm:$0xf]
      %v482 = vld [vmem:[%s218 + $0x37c] sm:$0xf]
      %v483 = vld [vmem:[%s218 + $0x380] sm:$0xf]
      %v484 = vld [vmem:[%s218 + $0x384] sm:$0xf]
      %v485 = vld [vmem:[%s218 + $0x388] sm:$0xf]
      %v486 = vld [vmem:[%s218 + $0x38c] sm:$0xf]
      %v487 = vld [vmem:[%s218 + $0x390] sm:$0xf]
      %v488 = vld [vmem:[%s218 + $0x394] sm:$0xf]
      %v489 = vld [vmem:[%s218 + $0x398] sm:$0xf]
      %v490 = vld [vmem:[%s218 + $0x39c] sm:$0xf]
      %v491 = vld [vmem:[%s218 + $0x3a0] sm:$0xf]
      %v492 = vld [vmem:[%s218 + $0x3a4] sm:$0xf]
      %v493 = vld [vmem:[%s218 + $0x3a8] sm:$0xf]
      %v494 = vld [vmem:[%s218 + $0x3ac] sm:$0xf]
      %v495 = vld [vmem:[%s218 + $0x3b0] sm:$0xf]
      %v496 = vld [vmem:[%s218 + $0x3b4] sm:$0xf]
      %v497 = vld [vmem:[%s218 + $0x3b8] sm:$0xf]
      %v498 = vld [vmem:[%s218 + $0x3bc] sm:$0xf]
      %v499 = vld [vmem:[%s218 + $0x3c0] sm:$0xf]
      %v500 = vld [vmem:[%s218 + $0x3c4] sm:$0xf]
      %v501 = vld [vmem:[%s218 + $0x3c8] sm:$0xf]
      %v502 = vld [vmem:[%s218 + $0x3cc] sm:$0xf]
      %v503 = vld [vmem:[%s218 + $0x3d0] sm:$0xf]
      %v504 = vld [vmem:[%s218 + $0x3d4] sm:$0xf]
      %v505 = vld [vmem:[%s218 + $0x3d8] sm:$0xf]
      %v506 = vld [vmem:[%s218 + $0x3dc] sm:$0xf]
      %v507 = vld [vmem:[%s218 + $0x3e0] sm:$0xf]
      %v508 = vld [vmem:[%s218 + $0x3e4] sm:$0xf]
      %v509 = vld [vmem:[%s218 + $0x3e8] sm:$0xf]
      %v510 = vld [vmem:[%s218 + $0x3ec] sm:$0xf]
      %v511 = vld [vmem:[%s218 + $0x3f0] sm:$0xf]
      %v512 = vld [vmem:[%s218 + $0x3f4] sm:$0xf]
      %v513 = vld [vmem:[%s218 + $0x3f8] sm:$0xf]
      %v514 = vld [vmem:[%s218 + $0x3fc] sm:$0xf]
      %v515 = vld [vmem:[%s218 + $0x400] sm:$0xf]
      %v516 = vld [vmem:[%s218 + $0x404] sm:$0xf]
      %v517 = vld [vmem:[%s218 + $0x408] sm:$0xf]
      %v518 = vld [vmem:[%s218 + $0x40c] sm:$0xf]
      %v519 = vld [vmem:[%s218 + $0x410] sm:$0xf]
      %v520 = vld [vmem:[%s218 + $0x414] sm:$0xf]
      %v521 = vld [vmem:[%s218 + $0x418] sm:$0xf]
      %v522 = vld [vmem:[%s218 + $0x41c] sm:$0xf]
      %v523 = vld [vmem:[%s218 + $0x420] sm:$0xf]
      %v524 = vld [vmem:[%s218 + $0x424] sm:$0xf]
      %v525 = vld [vmem:[%s218 + $0x428] sm:$0xf]
      %v526 = vld [vmem:[%s218 + $0x42c] sm:$0xf]
      %v527 = vld [vmem:[%s218 + $0x430] sm:$0xf]
      %v528 = vld [vmem:[%s218 + $0x434] sm:$0xf]
      %v529 = vld [vmem:[%s218 + $0x438] sm:$0xf]
      %v530 = vld [vmem:[%s218 + $0x43c] sm:$0xf]
      %v531 = vld [vmem:[%s218 + $0x440] sm:$0xf]
      %v532 = vld [vmem:[%s218 + $0x444] sm:$0xf]
      %v533 = vld [vmem:[%s218 + $0x448] sm:$0xf]
      %v534 = vld [vmem:[%s218 + $0x44c] sm:$0xf]
      %v535 = vld [vmem:[%s218 + $0x450] sm:$0xf]
      %v536 = vld [vmem:[%s218 + $0x454] sm:$0xf]
      %v537 = vld [vmem:[%s218 + $0x458] sm:$0xf]
      %v538 = vld [vmem:[%s218 + $0x45c] sm:$0xf]
      %v539 = vld [vmem:[%s218 + $0x460] sm:$0xf]
      %v540 = vld [vmem:[%s218 + $0x464] sm:$0xf]
      %v541 = vld [vmem:[%s218 + $0x468] sm:$0xf]
      %v542 = vld [vmem:[%s218 + $0x46c] sm:$0xf]
      %v543 = vld [vmem:[%s218 + $0x470] sm:$0xf]
      %v544 = vld [vmem:[%s218 + $0x474] sm:$0xf]
      %v545 = vld [vmem:[%s218 + $0x478] sm:$0xf]
      %v546 = vld [vmem:[%s218 + $0x47c] sm:$0xf]
      %v547 = vld [vmem:[%s218 + $0x480] sm:$0xf]
      %v548 = vld [vmem:[%s218 + $0x484] sm:$0xf]
      %v549 = vld [vmem:[%s218 + $0x488] sm:$0xf]
      %v550 = vld [vmem:[%s218 + $0x48c] sm:$0xf]
      %v551 = vld [vmem:[%s218 + $0x490] sm:$0xf]
      %v552 = vld [vmem:[%s218 + $0x494] sm:$0xf]
      %v553 = vld [vmem:[%s218 + $0x498] sm:$0xf]
      %v554 = vld [vmem:[%s218 + $0x49c] sm:$0xf]
      %v555 = vld [vmem:[%s218 + $0x4a0] sm:$0xf]
      %v556 = vld [vmem:[%s218 + $0x4a4] sm:$0xf]
      %v557 = vld [vmem:[%s218 + $0x4a8] sm:$0xf]
      %v558 = vld [vmem:[%s218 + $0x4ac] sm:$0xf]
      %v559 = vld [vmem:[%s218 + $0x4b0] sm:$0xf]
      %v560 = vld [vmem:[%s218 + $0x4b4] sm:$0xf]
      %v561 = vld [vmem:[%s218 + $0x4b8] sm:$0xf]
      %v562 = vld [vmem:[%s218 + $0x4bc] sm:$0xf]
      %v563 = vld [vmem:[%s218 + $0x4c0] sm:$0xf]
      %v564 = vld [vmem:[%s218 + $0x4c4] sm:$0xf]
      %v565 = vld [vmem:[%s218 + $0x4c8] sm:$0xf]
      %v566 = vld [vmem:[%s218 + $0x4cc] sm:$0xf]
      %v567 = vld [vmem:[%s218 + $0x4d0] sm:$0xf]
      %v568 = vld [vmem:[%s218 + $0x4d4] sm:$0xf]
      %v569 = vld [vmem:[%s218 + $0x4d8] sm:$0xf]
      %v570 = vld [vmem:[%s218 + $0x4dc] sm:$0xf]
      %v571 = vld [vmem:[%s218 + $0x4e0] sm:$0xf]
      %v572 = vld [vmem:[%s218 + $0x4e4] sm:$0xf]
      %v573 = vld [vmem:[%s218 + $0x4e8] sm:$0xf]
      %v574 = vld [vmem:[%s218 + $0x4ec] sm:$0xf]
      %v575 = vld [vmem:[%s218 + $0x4f0] sm:$0xf]
      %v576 = vld [vmem:[%s218 + $0x4f4] sm:$0xf]
      %v577 = vld [vmem:[%s218 + $0x4f8] sm:$0xf]
      %v578 = vld [vmem:[%s218 + $0x4fc] sm:$0xf]
      %v579 = vld [vmem:[%s218 + $0x500] sm:$0xf]
      %v580 = vld [vmem:[%s218 + $0x504] sm:$0xf]
      %v581 = vld [vmem:[%s218 + $0x508] sm:$0xf]
      %v582 = vld [vmem:[%s218 + $0x50c] sm:$0xf]
      %v583 = vld [vmem:[%s218 + $0x510] sm:$0xf]
      %v584 = vld [vmem:[%s218 + $0x514] sm:$0xf]
      %v585 = vld [vmem:[%s218 + $0x518] sm:$0xf]
      %v586 = vld [vmem:[%s218 + $0x51c] sm:$0xf]
      %v587 = vld [vmem:[%s218 + $0x520] sm:$0xf]
      %v588 = vld [vmem:[%s218 + $0x524] sm:$0xf]
      %v589 = vld [vmem:[%s218 + $0x528] sm:$0xf]
      %v590 = vld [vmem:[%s218 + $0x52c] sm:$0xf]
      %v591 = vld [vmem:[%s218 + $0x530] sm:$0xf]
      %v592 = vld [vmem:[%s218 + $0x534] sm:$0xf]
      %v593 = vld [vmem:[%s218 + $0x538] sm:$0xf]
      %v594 = vld [vmem:[%s218 + $0x53c] sm:$0xf]
      %v595 = vld [vmem:[%s218 + $0x540] sm:$0xf]
      %v596 = vld [vmem:[%s218 + $0x544] sm:$0xf]
      %v597 = vld [vmem:[%s218 + $0x548] sm:$0xf]
      %v598 = vld [vmem:[%s218 + $0x54c] sm:$0xf]
      %v599 = vld [vmem:[%s218 + $0x550] sm:$0xf]
      %v600 = vld [vmem:[%s218 + $0x554] sm:$0xf]
      %v601 = vld [vmem:[%s218 + $0x558] sm:$0xf]
      %v602 = vld [vmem:[%s218 + $0x55c] sm:$0xf]
      %v603 = vld [vmem:[%s218 + $0x560] sm:$0xf]
      %v604 = vld [vmem:[%s218 + $0x564] sm:$0xf]
      %v605 = vld [vmem:[%s218 + $0x568] sm:$0xf]
      %v606 = vld [vmem:[%s218 + $0x56c] sm:$0xf]
      %v607 = vld [vmem:[%s218 + $0x570] sm:$0xf]
      %v608 = vld [vmem:[%s218 + $0x574] sm:$0xf]
      %v609 = vld [vmem:[%s218 + $0x578] sm:$0xf]
      %v610 = vld [vmem:[%s218 + $0x57c] sm:$0xf]
      %v611 = vld [vmem:[%s218 + $0x580] sm:$0xf]
      %v612 = vld [vmem:[%s218 + $0x584] sm:$0xf]
      %v613 = vld [vmem:[%s218 + $0x588] sm:$0xf]
      %v614 = vld [vmem:[%s218 + $0x58c] sm:$0xf]
      %v615 = vld [vmem:[%s218 + $0x590] sm:$0xf]
      %v616 = vld [vmem:[%s218 + $0x594] sm:$0xf]
      %v617 = vld [vmem:[%s218 + $0x598] sm:$0xf]
      %v618 = vld [vmem:[%s218 + $0x59c] sm:$0xf]
      %v619 = vld [vmem:[%s218 + $0x5a0] sm:$0xf]
      %v620 = vld [vmem:[%s218 + $0x5a4] sm:$0xf]
      %v621 = vld [vmem:[%s218 + $0x5a8] sm:$0xf]
      %v622 = vld [vmem:[%s218 + $0x5ac] sm:$0xf]
      %v623 = vld [vmem:[%s218 + $0x5b0] sm:$0xf]
      %v624 = vld [vmem:[%s218 + $0x5b4] sm:$0xf]
      %v625 = vld [vmem:[%s218 + $0x5b8] sm:$0xf]
      %v626 = vld [vmem:[%s218 + $0x5bc] sm:$0xf]
      %v627 = vld [vmem:[%s218 + $0x5c0] sm:$0xf]
      %v628 = vld [vmem:[%s218 + $0x5c4] sm:$0xf]
      %v629 = vld [vmem:[%s218 + $0x5c8] sm:$0xf]
      %v630 = vld [vmem:[%s218 + $0x5cc] sm:$0xf]
      %v631 = vld [vmem:[%s218 + $0x5d0] sm:$0xf]
      %v632 = vld [vmem:[%s218 + $0x5d4] sm:$0xf]
      %v633 = vld [vmem:[%s218 + $0x5d8] sm:$0xf]
      %v634 = vld [vmem:[%s218 + $0x5dc] sm:$0xf]
      %v635 = vld [vmem:[%s218 + $0x5e0] sm:$0xf]
      %v636 = vld [vmem:[%s218 + $0x5e4] sm:$0xf]
      %v637 = vld [vmem:[%s218 + $0x5e8] sm:$0xf]
      %v638 = vld [vmem:[%s218 + $0x5ec] sm:$0xf]
      %v639 = vld [vmem:[%s218 + $0x5f0] sm:$0xf]
      %v640 = vld [vmem:[%s218 + $0x5f4] sm:$0xf]
      %v641 = vld [vmem:[%s218 + $0x5f8] sm:$0xf]
      %v642 = vld [vmem:[%s218 + $0x5fc] sm:$0xf]
      %v643 = vld [vmem:[%s218 + $0x600] sm:$0xf]
      %v644 = vld [vmem:[%s218 + $0x604] sm:$0xf]
      %v645 = vld [vmem:[%s218 + $0x608] sm:$0xf]
      %v646 = vld [vmem:[%s218 + $0x60c] sm:$0xf]
      %v647 = vld [vmem:[%s218 + $0x610] sm:$0xf]
      %v648 = vld [vmem:[%s218 + $0x614] sm:$0xf]
      %v649 = vld [vmem:[%s218 + $0x618] sm:$0xf]
      %v650 = vld [vmem:[%s218 + $0x61c] sm:$0xf]
      %v677 = vunpack.c.l.b16 %v233
      %v678 = vunpack.c.h.b16 %v233
      %v679 = vunpack.c.l.b16 %v234
      %v680 = vunpack.c.h.b16 %v234
      %v681 = vunpack.c.l.b16 %v235
      %v682 = vunpack.c.h.b16 %v235
      %v683 = vunpack.c.l.b16 %v236
      %v684 = vunpack.c.h.b16 %v236
      %v685 = vunpack.c.l.b16 %v237
      %v686 = vunpack.c.h.b16 %v237
      %v687 = vunpack.c.l.b16 %v238
      %v688 = vunpack.c.h.b16 %v238
      %v689 = vunpack.c.l.b16 %v239
      %v690 = vunpack.c.h.b16 %v239
      %v691 = vunpack.c.l.b16 %v240
      %v692 = vunpack.c.h.b16 %v240
      %v693 = vunpack.c.l.b16 %v241
      %v694 = vunpack.c.h.b16 %v241
      %v695 = vunpack.c.l.b16 %v242
      %v696 = vunpack.c.h.b16 %v242
      %v697 = vunpack.c.l.b16 %v243
      %v698 = vunpack.c.h.b16 %v243
      %v699 = vunpack.c.l.b16 %v244
      %v700 = vunpack.c.h.b16 %v244
      %v701 = vunpack.c.l.b16 %v245
      %v702 = vunpack.c.l.b16 %v246
      %v703 = vunpack.c.h.b16 %v246
      %v704 = vunpack.c.l.b16 %v247
      %v705 = vunpack.c.h.b16 %v247
      %v706 = vunpack.c.l.b16 %v248
      %v707 = vunpack.c.h.b16 %v248
      %v708 = vunpack.c.l.b16 %v249
      %v709 = vunpack.c.h.b16 %v249
      %v710 = vunpack.c.l.b16 %v250
      %v711 = vunpack.c.h.b16 %v250
      %v712 = vunpack.c.l.b16 %v251
      %v713 = vunpack.c.h.b16 %v251
      %v714 = vunpack.c.l.b16 %v252
      %v715 = vunpack.c.h.b16 %v252
      %v716 = vunpack.c.l.b16 %v253
      %v717 = vunpack.c.h.b16 %v253
      %v718 = vunpack.c.l.b16 %v254
      %v719 = vunpack.c.h.b16 %v254
      %v720 = vunpack.c.l.b16 %v255
      %v721 = vunpack.c.h.b16 %v255
      %v722 = vunpack.c.l.b16 %v256
      %v723 = vunpack.c.h.b16 %v256
      %v724 = vunpack.c.l.b16 %v257
      %v725 = vunpack.c.h.b16 %v257
      %v726 = vunpack.c.l.b16 %v258
      %v727 = vpack.c.b16 %v702, %v677
      %v728 = vpack.c.b16 %v703, %v678
      %v729 = vpack.c.b16 %v704, %v679
      %v730 = vpack.c.b16 %v705, %v680
      %v731 = vpack.c.b16 %v706, %v681
      %v732 = vpack.c.b16 %v707, %v682
      %v733 = vpack.c.b16 %v708, %v683
      %v734 = vpack.c.b16 %v709, %v684
      %v735 = vpack.c.b16 %v710, %v685
      %v736 = vpack.c.b16 %v711, %v686
      %v737 = vpack.c.b16 %v712, %v687
      %v738 = vpack.c.b16 %v713, %v688
      %v739 = vpack.c.b16 %v714, %v689
      %v740 = vpack.c.b16 %v715, %v690
      %v741 = vpack.c.b16 %v716, %v691
      %v742 = vpack.c.b16 %v717, %v692
      %v743 = vpack.c.b16 %v718, %v693
      %v744 = vpack.c.b16 %v719, %v694
      %v745 = vpack.c.b16 %v720, %v695
      %v746 = vpack.c.b16 %v721, %v696
      %v747 = vpack.c.b16 %v722, %v697
      %v748 = vpack.c.b16 %v723, %v698
      %v749 = vpack.c.b16 %v724, %v699
      %v750 = vpack.c.b16 %v725, %v700
      %v751 = vpack.c.b16 %v726, %v701
      %v1168 = vunpack.c.l.b16 %v259
      %v1169 = vunpack.c.l.b16 %v260
      %v1170 = vunpack.c.l.b16 %v261
      %v1171 = vunpack.c.l.b16 %v262
      %v1172 = vunpack.c.l.b16 %v263
      %v1173 = vunpack.c.l.b16 %v264
      %v1174 = vunpack.c.l.b16 %v265
      %v1175 = vunpack.c.l.b16 %v266
      %v1176 = vunpack.c.l.b16 %v267
      %v1177 = vunpack.c.l.b16 %v268
      %v1178 = vunpack.c.l.b16 %v269
      %v1179 = vunpack.c.l.b16 %v270
      %v1180 = vunpack.c.l.b16 %v271
      %v1181 = vunpack.c.l.b16 %v272
      %v1182 = vunpack.c.l.b16 %v273
      %v1183 = vunpack.c.l.b16 %v274
      %v1184 = vunpack.c.l.b16 %v275
      %v1185 = vunpack.c.l.b16 %v276
      %v1186 = vunpack.c.l.b16 %v277
      %v1187 = vunpack.c.l.b16 %v278
      %v1188 = vunpack.c.l.b16 %v279
      %v1189 = vunpack.c.l.b16 %v280
      %v1190 = vunpack.c.l.b16 %v281
      %v1191 = vunpack.c.l.b16 %v282
      %v1192 = vunpack.c.l.b16 %v283
      %v1193 = vunpack.c.l.b16 %v284
      %v1194 = vunpack.c.l.b16 %v285
      %v1195 = vunpack.c.l.b16 %v286
      %v1196 = vunpack.c.l.b16 %v287
      %v1197 = vunpack.c.l.b16 %v288
      %v1198 = vunpack.c.l.b16 %v289
      %v1199 = vunpack.c.l.b16 %v290
      %v1200 = vunpack.c.l.b16 %v291
      %v1201 = vunpack.c.l.b16 %v292
      %v1202 = vunpack.c.l.b16 %v293
      %v1203 = vunpack.c.l.b16 %v294
      %v1204 = vunpack.c.l.b16 %v295
      %v1205 = vunpack.c.l.b16 %v296
      %v1206 = vunpack.c.l.b16 %v297
      %v1207 = vunpack.c.l.b16 %v298
      %v1208 = vunpack.c.l.b16 %v299
      %v1209 = vunpack.c.l.b16 %v300
      %v1210 = vunpack.c.l.b16 %v301
      %v1211 = vunpack.c.l.b16 %v302
      %v1212 = vunpack.c.l.b16 %v303
      %v1213 = vunpack.c.l.b16 %v304
      %v1214 = vunpack.c.l.b16 %v305
      %v1215 = vunpack.c.l.b16 %v306
      %v1216 = vunpack.c.l.b16 %v307
      %v1217 = vunpack.c.l.b16 %v308
      %v1218 = vunpack.c.l.b16 %v309
      %v1219 = vunpack.c.l.b16 %v310
      %v1220 = vunpack.c.l.b16 %v311
      %v1221 = vunpack.c.l.b16 %v312
      %v1222 = vunpack.c.l.b16 %v313
      %v1223 = vunpack.c.l.b16 %v314
      %v1224 = vunpack.c.l.b16 %v315
      %v1225 = vunpack.c.l.b16 %v316
      %v1226 = vunpack.c.l.b16 %v317
      %v1227 = vunpack.c.l.b16 %v318
      %v1228 = vunpack.c.l.b16 %v319
      %v1229 = vunpack.c.l.b16 %v320
      %v1230 = vunpack.c.l.b16 %v321
      %v1231 = vunpack.c.l.b16 %v322
      %v1232 = vunpack.c.l.b16 %v323
      %v1233 = vunpack.c.l.b16 %v324
      %v1234 = vunpack.c.l.b16 %v325
      %v1235 = vunpack.c.l.b16 %v326
      %v1236 = vunpack.c.l.b16 %v327
      %v1237 = vunpack.c.l.b16 %v328
      %v1238 = vunpack.c.l.b16 %v329
      %v1239 = vunpack.c.l.b16 %v330
      %v1240 = vunpack.c.l.b16 %v331
      %v1241 = vunpack.c.l.b16 %v332
      %v1242 = vunpack.c.l.b16 %v333
      %v1243 = vunpack.c.l.b16 %v334
      %v1244 = vunpack.c.l.b16 %v335
      %v1245 = vunpack.c.l.b16 %v336
      %v1246 = vunpack.c.l.b16 %v337
      %v1247 = vunpack.c.l.b16 %v338
      %v1248 = vunpack.c.l.b16 %v339
      %v1249 = vunpack.c.l.b16 %v340
      %v1250 = vunpack.c.l.b16 %v341
      %v1251 = vunpack.c.l.b16 %v342
      %v1252 = vunpack.c.l.b16 %v343
      %v1253 = vunpack.c.l.b16 %v344
      %v1254 = vunpack.c.l.b16 %v345
      %v1255 = vunpack.c.l.b16 %v346
      %v1256 = vunpack.c.l.b16 %v347
      %v1257 = vunpack.c.l.b16 %v348
      %v1258 = vunpack.c.l.b16 %v349
      %v1259 = vunpack.c.l.b16 %v350
      %v1260 = vunpack.c.l.b16 %v351
      %v1261 = vunpack.c.l.b16 %v352
      %v1262 = vunpack.c.l.b16 %v353
      %v1263 = vunpack.c.l.b16 %v354
      %v1264 = vunpack.c.l.b16 %v355
      %v1265 = vunpack.c.l.b16 %v356
      %v1266 = vunpack.c.l.b16 %v357
      %v1267 = vunpack.c.l.b16 %v358
      %v1268 = vunpack.c.l.b16 %v359
      %v1269 = vunpack.c.l.b16 %v360
      %v1270 = vunpack.c.l.b16 %v361
      %v1271 = vunpack.c.l.b16 %v362
      %v1272 = vunpack.c.l.b16 %v363
      %v1273 = vunpack.c.l.b16 %v364
      %v1274 = vunpack.c.l.b16 %v365
      %v1275 = vunpack.c.l.b16 %v366
      %v1276 = vunpack.c.l.b16 %v367
      %v1277 = vunpack.c.l.b16 %v368
      %v1278 = vunpack.c.l.b16 %v369
      %v1279 = vunpack.c.l.b16 %v370
      %v1280 = vunpack.c.l.b16 %v371
      %v1281 = vunpack.c.l.b16 %v372
      %v1282 = vunpack.c.l.b16 %v373
      %v1283 = vunpack.c.l.b16 %v374
      %v1284 = vunpack.c.l.b16 %v375
      %v1285 = vunpack.c.l.b16 %v376
      %v1286 = vunpack.c.l.b16 %v377
      %v1287 = vunpack.c.l.b16 %v378
      %v1288 = vunpack.c.l.b16 %v379
      %v1289 = vunpack.c.l.b16 %v380
      %v1290 = vunpack.c.l.b16 %v381
      %v1291 = vunpack.c.l.b16 %v382
      %v1292 = vunpack.c.l.b16 %v383
      %v1293 = vunpack.c.l.b16 %v384
      %v1294 = vunpack.c.l.b16 %v385
      %v1295 = vunpack.c.l.b16 %v386
      %v1296 = vunpack.c.l.b16 %v387
      %v1297 = vunpack.c.l.b16 %v388
      %v1298 = vunpack.c.l.b16 %v389
      %v1299 = vunpack.c.l.b16 %v390
      %v1300 = vunpack.c.l.b16 %v391
      %v1301 = vunpack.c.l.b16 %v392
      %v1302 = vunpack.c.l.b16 %v393
      %v1303 = vunpack.c.l.b16 %v394
      %v1304 = vunpack.c.l.b16 %v395
      %v1305 = vunpack.c.l.b16 %v396
      %v1306 = vunpack.c.l.b16 %v397
      %v1307 = vunpack.c.l.b16 %v398
      %v1308 = vunpack.c.l.b16 %v399
      %v1309 = vunpack.c.l.b16 %v400
      %v1310 = vunpack.c.l.b16 %v401
      %v1311 = vunpack.c.l.b16 %v402
      %v1312 = vunpack.c.l.b16 %v403
      %v1313 = vunpack.c.l.b16 %v404
      %v1314 = vunpack.c.l.b16 %v405
      %v1315 = vunpack.c.l.b16 %v406
      %v1316 = vunpack.c.l.b16 %v407
      %v1317 = vunpack.c.l.b16 %v408
      %v1318 = vunpack.c.l.b16 %v409
      %v1319 = vunpack.c.l.b16 %v410
      %v1320 = vunpack.c.l.b16 %v411
      %v1321 = vunpack.c.l.b16 %v412
      %v1322 = vunpack.c.l.b16 %v413
      %v1323 = vunpack.c.l.b16 %v414
      %v1324 = vunpack.c.l.b16 %v415
      %v1325 = vunpack.c.l.b16 %v416
      %v1326 = vunpack.c.l.b16 %v417
      %v1327 = vunpack.c.l.b16 %v418
      %v1328 = vunpack.c.l.b16 %v419
      %v1329 = vunpack.c.l.b16 %v420
      %v1330 = vunpack.c.l.b16 %v421
      %v1331 = vunpack.c.l.b16 %v422
      %v1332 = vunpack.c.l.b16 %v423
      %v1333 = vunpack.c.l.b16 %v424
      %v1334 = vunpack.c.l.b16 %v425
      %v1335 = vunpack.c.l.b16 %v426
      %v1336 = vunpack.c.l.b16 %v427
      %v1337 = vunpack.c.l.b16 %v428
      %v1338 = vunpack.c.l.b16 %v429
      %v1339 = vunpack.c.l.b16 %v430
      %v1340 = vunpack.c.l.b16 %v431
      %v1341 = vunpack.c.l.b16 %v432
      %v1342 = vunpack.c.l.b16 %v433
      %v1343 = vunpack.c.l.b16 %v434
      %v1344 = vunpack.c.l.b16 %v435
      %v1345 = vunpack.c.l.b16 %v436
      %v1346 = vunpack.c.l.b16 %v437
      %v1347 = vunpack.c.l.b16 %v438
      %v1348 = vunpack.c.l.b16 %v439
      %v1349 = vunpack.c.l.b16 %v440
      %v1350 = vunpack.c.l.b16 %v441
      %v1351 = vunpack.c.l.b16 %v442
      %v1352 = vunpack.c.l.b16 %v443
      %v1353 = vunpack.c.l.b16 %v444
      %v1354 = vunpack.c.l.b16 %v445
      %v1355 = vunpack.c.l.b16 %v446
      %v1356 = vunpack.c.l.b16 %v447
      %v1357 = vunpack.c.l.b16 %v448
      %v1358 = vunpack.c.l.b16 %v449
      %v1359 = vunpack.c.l.b16 %v450
      %v1360 = vunpack.c.l.b16 %v451
      %v1361 = vunpack.c.l.b16 %v452
      %v1362 = vunpack.c.l.b16 %v453
      %v1363 = vunpack.c.l.b16 %v454
      %v1364 = vunpack.c.l.b16 %v455
      %v1365 = vunpack.c.l.b16 %v456
      %v1366 = vunpack.c.l.b16 %v457
      %v1367 = vunpack.c.l.b16 %v458
      %v1368 = vunpack.c.l.b16 %v459
      %v1369 = vunpack.c.l.b16 %v460
      %v1370 = vunpack.c.l.b16 %v461
      %v1371 = vunpack.c.l.b16 %v462
      %v1372 = vunpack.c.l.b16 %v463
      %v1373 = vunpack.c.l.b16 %v464
      %v1374 = vunpack.c.l.b16 %v465
      %v1375 = vunpack.c.l.b16 %v466
      %v1376 = vunpack.c.l.b16 %v467
      %v1377 = vunpack.c.l.b16 %v468
      %v1378 = vunpack.c.l.b16 %v469
      %v1379 = vunpack.c.l.b16 %v470
      %v1380 = vunpack.c.l.b16 %v471
      %v1381 = vunpack.c.l.b16 %v472
      %v1382 = vunpack.c.l.b16 %v473
      %v1383 = vunpack.c.l.b16 %v474
      %v1384 = vunpack.c.l.b16 %v475
      %v1385 = vunpack.c.l.b16 %v476
      %v1386 = vunpack.c.l.b16 %v477
      %v1387 = vunpack.c.l.b16 %v478
      %v1388 = vunpack.c.l.b16 %v479
      %v1389 = vunpack.c.l.b16 %v480
      %v1390 = vunpack.c.l.b16 %v481
      %v1391 = vunpack.c.l.b16 %v482
      %v1392 = vunpack.c.l.b16 %v483
      %v1393 = vunpack.c.l.b16 %v484
      %v1394 = vunpack.c.l.b16 %v485
      %v1395 = vunpack.c.l.b16 %v486
      %v1396 = vunpack.c.l.b16 %v487
      %v1397 = vunpack.c.l.b16 %v488
      %v1398 = vunpack.c.l.b16 %v489
      %v1399 = vunpack.c.l.b16 %v490
      %v1400 = vunpack.c.l.b16 %v491
      %v1401 = vunpack.c.l.b16 %v492
      %v1402 = vunpack.c.l.b16 %v493
      %v1403 = vunpack.c.l.b16 %v494
      %v1404 = vunpack.c.l.b16 %v495
      %v1405 = vunpack.c.l.b16 %v496
      %v1406 = vunpack.c.l.b16 %v497
      %v1407 = vunpack.c.l.b16 %v498
      %v1408 = vunpack.c.l.b16 %v499
      %v1409 = vunpack.c.l.b16 %v500
      %v1410 = vunpack.c.l.b16 %v501
      %v1411 = vunpack.c.l.b16 %v502
      %v1412 = vunpack.c.l.b16 %v503
      %v1413 = vunpack.c.l.b16 %v504
      %v1414 = vunpack.c.l.b16 %v505
      %v1415 = vunpack.c.l.b16 %v506
      %v1416 = vunpack.c.l.b16 %v507
      %v1417 = vunpack.c.l.b16 %v508
      %v1418 = vunpack.c.l.b16 %v509
      %v1419 = vunpack.c.l.b16 %v510
      %v1420 = vunpack.c.l.b16 %v511
      %v1421 = vunpack.c.l.b16 %v512
      %v1422 = vunpack.c.l.b16 %v513
      %v1423 = vunpack.c.l.b16 %v514
      %v1424 = vunpack.c.l.b16 %v515
      %v1425 = vunpack.c.l.b16 %v516
      %v1426 = vunpack.c.l.b16 %v517
      %v1427 = vunpack.c.l.b16 %v518
      %v1428 = vunpack.c.l.b16 %v519
      %v1429 = vunpack.c.l.b16 %v520
      %v1430 = vunpack.c.l.b16 %v521
      %v1431 = vunpack.c.l.b16 %v522
      %v1432 = vunpack.c.l.b16 %v523
      %v1433 = vunpack.c.l.b16 %v524
      %v1434 = vunpack.c.l.b16 %v525
      %v1435 = vunpack.c.l.b16 %v526
      %v1436 = vunpack.c.l.b16 %v527
      %v1437 = vunpack.c.l.b16 %v528
      %v1438 = vunpack.c.l.b16 %v529
      %v1439 = vunpack.c.l.b16 %v530
      %v1440 = vunpack.c.l.b16 %v531
      %v1441 = vunpack.c.l.b16 %v532
      %v1442 = vunpack.c.l.b16 %v533
      %v1443 = vunpack.c.l.b16 %v534
      %v1444 = vunpack.c.l.b16 %v535
      %v1445 = vunpack.c.l.b16 %v536
      %v1446 = vunpack.c.l.b16 %v537
      %v1447 = vunpack.c.l.b16 %v538
      %v1448 = vunpack.c.l.b16 %v539
      %v1449 = vunpack.c.l.b16 %v540
      %v1450 = vunpack.c.l.b16 %v541
      %v1451 = vunpack.c.l.b16 %v542
      %v1452 = vunpack.c.l.b16 %v543
      %v1453 = vunpack.c.l.b16 %v544
      %v1454 = vunpack.c.l.b16 %v545
      %v1455 = vunpack.c.l.b16 %v546
      %v1456 = vunpack.c.l.b16 %v547
      %v1457 = vunpack.c.l.b16 %v548
      %v1458 = vunpack.c.l.b16 %v549
      %v1459 = vunpack.c.l.b16 %v550
      %v1460 = vunpack.c.l.b16 %v551
      %v1461 = vunpack.c.l.b16 %v552
      %v1462 = vunpack.c.l.b16 %v553
      %v1463 = vunpack.c.l.b16 %v554
      %v1464 = vunpack.c.l.b16 %v555
      %v1465 = vunpack.c.l.b16 %v556
      %v1466 = vunpack.c.l.b16 %v557
      %v1467 = vunpack.c.l.b16 %v558
      %v1468 = vunpack.c.l.b16 %v559
      %v1469 = vunpack.c.l.b16 %v560
      %v1470 = vunpack.c.l.b16 %v561
      %v1471 = vunpack.c.l.b16 %v562
      %v1472 = vunpack.c.l.b16 %v563
      %v1473 = vunpack.c.l.b16 %v564
      %v1474 = vunpack.c.l.b16 %v565
      %v1475 = vunpack.c.l.b16 %v566
      %v1476 = vunpack.c.l.b16 %v567
      %v1477 = vunpack.c.l.b16 %v568
      %v1478 = vunpack.c.l.b16 %v569
      %v1479 = vunpack.c.l.b16 %v570
      %v1480 = vunpack.c.l.b16 %v571
      %v1481 = vunpack.c.l.b16 %v572
      %v1482 = vunpack.c.l.b16 %v573
      %v1483 = vunpack.c.l.b16 %v574
      %v1484 = vunpack.c.l.b16 %v575
      %v1485 = vunpack.c.l.b16 %v576
      %v1486 = vunpack.c.l.b16 %v577
      %v1487 = vunpack.c.l.b16 %v578
      %v1488 = vunpack.c.l.b16 %v579
      %v1489 = vunpack.c.l.b16 %v580
      %v1490 = vunpack.c.l.b16 %v581
      %v1491 = vunpack.c.l.b16 %v582
      %v1492 = vunpack.c.l.b16 %v583
      %v1493 = vunpack.c.l.b16 %v584
      %v1494 = vunpack.c.l.b16 %v585
      %v1495 = vunpack.c.l.b16 %v586
      %v1496 = vunpack.c.l.b16 %v587
      %v1497 = vunpack.c.l.b16 %v588
      %v1498 = vunpack.c.l.b16 %v589
      %v1499 = vunpack.c.l.b16 %v590
      %v1500 = vunpack.c.l.b16 %v591
      %v1501 = vunpack.c.l.b16 %v592
      %v1502 = vunpack.c.l.b16 %v593
      %v1503 = vunpack.c.l.b16 %v594
      %v1504 = vunpack.c.l.b16 %v595
      %v1505 = vunpack.c.l.b16 %v596
      %v1506 = vunpack.c.l.b16 %v597
      %v1507 = vunpack.c.l.b16 %v598
      %v1508 = vunpack.c.l.b16 %v599
      %v1509 = vunpack.c.l.b16 %v600
      %v1510 = vunpack.c.l.b16 %v601
      %v1511 = vunpack.c.l.b16 %v602
      %v1512 = vunpack.c.l.b16 %v603
      %v1513 = vunpack.c.l.b16 %v604
      %v1514 = vunpack.c.l.b16 %v605
      %v1515 = vunpack.c.l.b16 %v606
      %v1516 = vunpack.c.l.b16 %v607
      %v1517 = vunpack.c.l.b16 %v608
      %v1518 = vunpack.c.l.b16 %v609
      %v1519 = vunpack.c.l.b16 %v610
      %v1520 = vunpack.c.l.b16 %v611
      %v1521 = vunpack.c.l.b16 %v612
      %v1522 = vunpack.c.l.b16 %v613
      %v1523 = vunpack.c.l.b16 %v614
      %v1524 = vunpack.c.l.b16 %v615
      %v1525 = vunpack.c.l.b16 %v616
      %v1526 = vunpack.c.l.b16 %v617
      %v1527 = vunpack.c.l.b16 %v618
      %v1528 = vunpack.c.l.b16 %v619
      %v1529 = vunpack.c.l.b16 %v620
      %v1530 = vunpack.c.l.b16 %v621
      %v1531 = vunpack.c.l.b16 %v622
      %v1532 = vunpack.c.l.b16 %v623
      %v1533 = vunpack.c.l.b16 %v624
      %v1534 = vunpack.c.l.b16 %v625
      %v1535 = vunpack.c.l.b16 %v626
      %v1536 = vunpack.c.l.b16 %v627
      %v1537 = vunpack.c.l.b16 %v628
      %v1538 = vunpack.c.l.b16 %v629
      %v1539 = vunpack.c.l.b16 %v630
      %v1540 = vunpack.c.l.b16 %v631
      %v1541 = vunpack.c.l.b16 %v632
      %v1542 = vunpack.c.l.b16 %v633
      %v1543 = vunpack.c.l.b16 %v634
      %v1544 = vunpack.c.l.b16 %v635
      %v1545 = vunpack.c.l.b16 %v636
      %v1546 = vunpack.c.l.b16 %v637
      %v1547 = vunpack.c.l.b16 %v638
      %v1548 = vunpack.c.l.b16 %v639
      %v1549 = vunpack.c.l.b16 %v640
      %v1550 = vunpack.c.l.b16 %v641
      %v1551 = vunpack.c.l.b16 %v642
      %v1552 = vunpack.c.l.b16 %v643
      %v1553 = vunpack.c.l.b16 %v644
      %v1554 = vunpack.c.l.b16 %v645
      %v1555 = vunpack.c.l.b16 %v646
      %v1556 = vunpack.c.l.b16 %v647
      %v1557 = vunpack.c.l.b16 %v648
      %v1558 = vunpack.c.l.b16 %v649
      %v1559 = vunpack.c.l.b16 %v650
      %v1560 = vpack.c.b16 %v1169, %v1168
      %v1561 = vpack.c.b16 %v1171, %v1170
      %v1562 = vpack.c.b16 %v1173, %v1172
      %v1563 = vpack.c.b16 %v1175, %v1174
      %v1564 = vpack.c.b16 %v1177, %v1176
      %v1565 = vpack.c.b16 %v1179, %v1178
      %v1566 = vpack.c.b16 %v1181, %v1180
      %v1567 = vpack.c.b16 %v1183, %v1182
      %v1568 = vpack.c.b16 %v1185, %v1184
      %v1569 = vpack.c.b16 %v1187, %v1186
      %v1570 = vpack.c.b16 %v1189, %v1188
      %v1571 = vpack.c.b16 %v1191, %v1190
      %v1572 = vpack.c.b16 %v1193, %v1192
      %v1573 = vpack.c.b16 %v1195, %v1194
      %v1574 = vpack.c.b16 %v1197, %v1196
      %v1575 = vpack.c.b16 %v1199, %v1198
      %v1576 = vpack.c.b16 %v1201, %v1200
      %v1577 = vpack.c.b16 %v1203, %v1202
      %v1578 = vpack.c.b16 %v1205, %v1204
      %v1579 = vpack.c.b16 %v1207, %v1206
      %v1580 = vpack.c.b16 %v1209, %v1208
      %v1581 = vpack.c.b16 %v1211, %v1210
      %v1582 = vpack.c.b16 %v1213, %v1212
      %v1583 = vpack.c.b16 %v1215, %v1214
      %v1584 = vpack.c.b16 %v1217, %v1216
      %v1585 = vpack.c.b16 %v1219, %v1218
      %v1586 = vpack.c.b16 %v1221, %v1220
      %v1587 = vpack.c.b16 %v1223, %v1222
      %v1588 = vpack.c.b16 %v1225, %v1224
      %v1589 = vpack.c.b16 %v1227, %v1226
      %v1590 = vpack.c.b16 %v1229, %v1228
      %v1591 = vpack.c.b16 %v1231, %v1230
      %v1592 = vpack.c.b16 %v1233, %v1232
      %v1593 = vpack.c.b16 %v1235, %v1234
      %v1594 = vpack.c.b16 %v1237, %v1236
      %v1595 = vpack.c.b16 %v1239, %v1238
      %v1596 = vpack.c.b16 %v1241, %v1240
      %v1597 = vpack.c.b16 %v1243, %v1242
      %v1598 = vpack.c.b16 %v1245, %v1244
      %v1599 = vpack.c.b16 %v1247, %v1246
      %v1600 = vpack.c.b16 %v1249, %v1248
      %v1601 = vpack.c.b16 %v1251, %v1250
      %v1602 = vpack.c.b16 %v1253, %v1252
      %v1603 = vpack.c.b16 %v1255, %v1254
      %v1604 = vpack.c.b16 %v1257, %v1256
      %v1605 = vpack.c.b16 %v1259, %v1258
      %v1606 = vpack.c.b16 %v1261, %v1260
      %v1607 = vpack.c.b16 %v1263, %v1262
      %v1608 = vpack.c.b16 %v1265, %v1264
      %v1609 = vpack.c.b16 %v1267, %v1266
      %v1610 = vpack.c.b16 %v1269, %v1268
      %v1611 = vpack.c.b16 %v1271, %v1270
      %v1612 = vpack.c.b16 %v1273, %v1272
      %v1613 = vpack.c.b16 %v1275, %v1274
      %v1614 = vpack.c.b16 %v1277, %v1276
      %v1615 = vpack.c.b16 %v1279, %v1278
      %v1616 = vpack.c.b16 %v1281, %v1280
      %v1617 = vpack.c.b16 %v1283, %v1282
      %v1618 = vpack.c.b16 %v1285, %v1284
      %v1619 = vpack.c.b16 %v1287, %v1286
      %v1620 = vpack.c.b16 %v1289, %v1288
      %v1621 = vpack.c.b16 %v1291, %v1290
      %v1622 = vpack.c.b16 %v1293, %v1292
      %v1623 = vpack.c.b16 %v1295, %v1294
      %v1624 = vpack.c.b16 %v1297, %v1296
      %v1625 = vpack.c.b16 %v1299, %v1298
      %v1626 = vpack.c.b16 %v1301, %v1300
      %v1627 = vpack.c.b16 %v1303, %v1302
      %v1628 = vpack.c.b16 %v1305, %v1304
      %v1629 = vpack.c.b16 %v1307, %v1306
      %v1630 = vpack.c.b16 %v1309, %v1308
      %v1631 = vpack.c.b16 %v1311, %v1310
      %v1632 = vpack.c.b16 %v1313, %v1312
      %v1633 = vpack.c.b16 %v1315, %v1314
      %v1634 = vpack.c.b16 %v1317, %v1316
      %v1635 = vpack.c.b16 %v1319, %v1318
      %v1636 = vpack.c.b16 %v1321, %v1320
      %v1637 = vpack.c.b16 %v1323, %v1322
      %v1638 = vpack.c.b16 %v1325, %v1324
      %v1639 = vpack.c.b16 %v1327, %v1326
      %v1640 = vpack.c.b16 %v1329, %v1328
      %v1641 = vpack.c.b16 %v1331, %v1330
      %v1642 = vpack.c.b16 %v1333, %v1332
      %v1643 = vpack.c.b16 %v1335, %v1334
      %v1644 = vpack.c.b16 %v1337, %v1336
      %v1645 = vpack.c.b16 %v1339, %v1338
      %v1646 = vpack.c.b16 %v1341, %v1340
      %v1647 = vpack.c.b16 %v1343, %v1342
      %v1648 = vpack.c.b16 %v1345, %v1344
      %v1649 = vpack.c.b16 %v1347, %v1346
      %v1650 = vpack.c.b16 %v1349, %v1348
      %v1651 = vpack.c.b16 %v1351, %v1350
      %v1652 = vpack.c.b16 %v1353, %v1352
      %v1653 = vpack.c.b16 %v1355, %v1354
      %v1654 = vpack.c.b16 %v1357, %v1356
      %v1655 = vpack.c.b16 %v1359, %v1358
      %v1656 = vpack.c.b16 %v1361, %v1360
      %v1657 = vpack.c.b16 %v1363, %v1362
      %v1658 = vpack.c.b16 %v1365, %v1364
      %v1659 = vpack.c.b16 %v1367, %v1366
      %v1660 = vpack.c.b16 %v1369, %v1368
      %v1661 = vpack.c.b16 %v1371, %v1370
      %v1662 = vpack.c.b16 %v1373, %v1372
      %v1663 = vpack.c.b16 %v1375, %v1374
      %v1664 = vpack.c.b16 %v1377, %v1376
      %v1665 = vpack.c.b16 %v1379, %v1378
      %v1666 = vpack.c.b16 %v1381, %v1380
      %v1667 = vpack.c.b16 %v1383, %v1382
      %v1668 = vpack.c.b16 %v1385, %v1384
      %v1669 = vpack.c.b16 %v1387, %v1386
      %v1670 = vpack.c.b16 %v1389, %v1388
      %v1671 = vpack.c.b16 %v1391, %v1390
      %v1672 = vpack.c.b16 %v1393, %v1392
      %v1673 = vpack.c.b16 %v1395, %v1394
      %v1674 = vpack.c.b16 %v1397, %v1396
      %v1675 = vpack.c.b16 %v1399, %v1398
      %v1676 = vpack.c.b16 %v1401, %v1400
      %v1677 = vpack.c.b16 %v1403, %v1402
      %v1678 = vpack.c.b16 %v1405, %v1404
      %v1679 = vpack.c.b16 %v1407, %v1406
      %v1680 = vpack.c.b16 %v1409, %v1408
      %v1681 = vpack.c.b16 %v1411, %v1410
      %v1682 = vpack.c.b16 %v1413, %v1412
      %v1683 = vpack.c.b16 %v1415, %v1414
      %v1684 = vpack.c.b16 %v1417, %v1416
      %v1685 = vpack.c.b16 %v1419, %v1418
      %v1686 = vpack.c.b16 %v1421, %v1420
      %v1687 = vpack.c.b16 %v1423, %v1422
      %v1688 = vpack.c.b16 %v1425, %v1424
      %v1689 = vpack.c.b16 %v1427, %v1426
      %v1690 = vpack.c.b16 %v1429, %v1428
      %v1691 = vpack.c.b16 %v1431, %v1430
      %v1692 = vpack.c.b16 %v1433, %v1432
      %v1693 = vpack.c.b16 %v1435, %v1434
      %v1694 = vpack.c.b16 %v1437, %v1436
      %v1695 = vpack.c.b16 %v1439, %v1438
      %v1696 = vpack.c.b16 %v1441, %v1440
      %v1697 = vpack.c.b16 %v1443, %v1442
      %v1698 = vpack.c.b16 %v1445, %v1444
      %v1699 = vpack.c.b16 %v1447, %v1446
      %v1700 = vpack.c.b16 %v1449, %v1448
      %v1701 = vpack.c.b16 %v1451, %v1450
      %v1702 = vpack.c.b16 %v1453, %v1452
      %v1703 = vpack.c.b16 %v1455, %v1454
      %v1704 = vpack.c.b16 %v1457, %v1456
      %v1705 = vpack.c.b16 %v1459, %v1458
      %v1706 = vpack.c.b16 %v1461, %v1460
      %v1707 = vpack.c.b16 %v1463, %v1462
      %v1708 = vpack.c.b16 %v1465, %v1464
      %v1709 = vpack.c.b16 %v1467, %v1466
      %v1710 = vpack.c.b16 %v1469, %v1468
      %v1711 = vpack.c.b16 %v1471, %v1470
      %v1712 = vpack.c.b16 %v1473, %v1472
      %v1713 = vpack.c.b16 %v1475, %v1474
      %v1714 = vpack.c.b16 %v1477, %v1476
      %v1715 = vpack.c.b16 %v1479, %v1478
      %v1716 = vpack.c.b16 %v1481, %v1480
      %v1717 = vpack.c.b16 %v1483, %v1482
      %v1718 = vpack.c.b16 %v1485, %v1484
      %v1719 = vpack.c.b16 %v1487, %v1486
      %v1720 = vpack.c.b16 %v1489, %v1488
      %v1721 = vpack.c.b16 %v1491, %v1490
      %v1722 = vpack.c.b16 %v1493, %v1492
      %v1723 = vpack.c.b16 %v1495, %v1494
      %v1724 = vpack.c.b16 %v1497, %v1496
      %v1725 = vpack.c.b16 %v1499, %v1498
      %v1726 = vpack.c.b16 %v1501, %v1500
      %v1727 = vpack.c.b16 %v1503, %v1502
      %v1728 = vpack.c.b16 %v1505, %v1504
      %v1729 = vpack.c.b16 %v1507, %v1506
      %v1730 = vpack.c.b16 %v1509, %v1508
      %v1731 = vpack.c.b16 %v1511, %v1510
      %v1732 = vpack.c.b16 %v1513, %v1512
      %v1733 = vpack.c.b16 %v1515, %v1514
      %v1734 = vpack.c.b16 %v1517, %v1516
      %v1735 = vpack.c.b16 %v1519, %v1518
      %v1736 = vpack.c.b16 %v1521, %v1520
      %v1737 = vpack.c.b16 %v1523, %v1522
      %v1738 = vpack.c.b16 %v1525, %v1524
      %v1739 = vpack.c.b16 %v1527, %v1526
      %v1740 = vpack.c.b16 %v1529, %v1528
      %v1741 = vpack.c.b16 %v1531, %v1530
      %v1742 = vpack.c.b16 %v1533, %v1532
      %v1743 = vpack.c.b16 %v1535, %v1534
      %v1744 = vpack.c.b16 %v1537, %v1536
      %v1745 = vpack.c.b16 %v1539, %v1538
      %v1746 = vpack.c.b16 %v1541, %v1540
      %v1747 = vpack.c.b16 %v1543, %v1542
      %v1748 = vpack.c.b16 %v1545, %v1544
      %v1749 = vpack.c.b16 %v1547, %v1546
      %v1750 = vpack.c.b16 %v1549, %v1548
      %v1751 = vpack.c.b16 %v1551, %v1550
      %v1752 = vpack.c.b16 %v1553, %v1552
      %v1753 = vpack.c.b16 %v1555, %v1554
      %v1754 = vpack.c.b16 %v1557, %v1556
      %v1755 = vpack.c.b16 %v1559, %v1558
      %vm1952 = vcmask 523264
      %v1954 = vsel %vm1952, %v751, 0
      %1956 = vmatprep.subr.bf16.mxu0 0
      %1957 = vmatpush1.bf16.msra.mxu0 %v1567
      %1958 = vmatprep.subr.bf16.mxu0 0
      %1959 = vmatpush1.bf16.msra.mxu0 %v1566
      %1960 = vmatprep.subr.bf16.mxu0 0
      %1961 = vmatpush1.bf16.msra.mxu0 %v1565
      %1962 = vmatprep.subr.bf16.mxu0 0
      %1963 = vmatpush1.bf16.msra.mxu0 %v1564
      %1964 = vmatprep.subr.bf16.mxu0 0
      %1965 = vmatpush1.bf16.msra.mxu0 %v1563
      %1966 = vmatprep.subr.bf16.mxu0 0
      %1967 = vmatpush1.bf16.msra.mxu0 %v1562
      %1968 = vmatprep.subr.bf16.mxu0 0
      %1969 = vmatpush1.bf16.msra.mxu0 %v1561
      %1970 = vmatprep.subr.bf16.mxu0 0
      %1971 = vmatpush1.bf16.msra.mxu0 %v1560
      %1972 = vmatprep.subr.bf16.mxu0 0
      %1973 = vmatpush2.bf16.msra.mxu0 %v1575
      %1974 = vmatprep.subr.bf16.mxu0 0
      %1975 = vmatpush2.bf16.msra.mxu0 %v1574
      %1976 = vmatprep.subr.bf16.mxu0 0
      %1977 = vmatpush2.bf16.msra.mxu0 %v1573
      %1978 = vmatprep.subr.bf16.mxu0 0
      %1979 = vmatpush2.bf16.msra.mxu0 %v1572
      %1980 = vmatprep.subr.bf16.mxu0 0
      %1981 = vmatpush2.bf16.msra.mxu0 %v1571
      %1982 = vmatprep.subr.bf16.mxu0 0
      %1983 = vmatpush2.bf16.msra.mxu0 %v1570
      %1984 = vmatprep.subr.bf16.mxu0 0
      %1985 = vmatpush2.bf16.msra.mxu0 %v1569
      %1986 = vmatprep.subr.bf16.mxu0 0
      %1987 = vmatpush2.bf16.msra.mxu0 %v1568
      %1988 = vmatprep.mubr.bf16.mxu0 %v728
      %1989 = vmatmul.mubr.bf16.gmra.mxu0 %v727
      %v1990 = vpop.f32.mrf.mxu0
      %v1991 = vadd.f32 0.0, %v1990
      %v1992 = vpop.f32.mrf.mxu0
      %v1993 = vpop.f32.mrf.mxu0
      %v1994 = vadd.f32 0.0, %v1993
      %v1995 = vpop.f32.mrf.mxu0
      %1996 = vdwg.mxu0
      %1997 = vmatprep.subr.bf16.mxu0 0
      %1998 = vmatpush1.bf16.msra.mxu0 %v1583
      %1999 = vmatprep.subr.bf16.mxu0 0
      %2000 = vmatpush1.bf16.msra.mxu0 %v1582
      %2001 = vmatprep.subr.bf16.mxu0 0
      %2002 = vmatpush1.bf16.msra.mxu0 %v1581
      %2003 = vmatprep.subr.bf16.mxu0 0
      %2004 = vmatpush1.bf16.msra.mxu0 %v1580
      %2005 = vmatprep.subr.bf16.mxu0 0
      %2006 = vmatpush1.bf16.msra.mxu0 %v1579
      %2007 = vmatprep.subr.bf16.mxu0 0
      %2008 = vmatpush1.bf16.msra.mxu0 %v1578
      %2009 = vmatprep.subr.bf16.mxu0 0
      %2010 = vmatpush1.bf16.msra.mxu0 %v1577
      %2011 = vmatprep.subr.bf16.mxu0 0
      %2012 = vmatpush1.bf16.msra.mxu0 %v1576
      %2013 = vmatprep.subr.bf16.mxu0 0
      %2014 = vmatpush2.bf16.msra.mxu0 %v1591
      %2015 = vmatprep.subr.bf16.mxu0 0
      %2016 = vmatpush2.bf16.msra.mxu0 %v1590
      %2017 = vmatprep.subr.bf16.mxu0 0
      %2018 = vmatpush2.bf16.msra.mxu0 %v1589
      %2019 = vmatprep.subr.bf16.mxu0 0
      %2020 = vmatpush2.bf16.msra.mxu0 %v1588
      %2021 = vmatprep.subr.bf16.mxu0 0
      %2022 = vmatpush2.bf16.msra.mxu0 %v1587
      %2023 = vmatprep.subr.bf16.mxu0 0
      %2024 = vmatpush2.bf16.msra.mxu0 %v1586
      %2025 = vmatprep.subr.bf16.mxu0 0
      %2026 = vmatpush2.bf16.msra.mxu0 %v1585
      %2027 = vmatprep.subr.bf16.mxu0 0
      %2028 = vmatpush2.bf16.msra.mxu0 %v1584
      %2029 = vmatprep.mubr.bf16.mxu0 %v730
      %2030 = vmatmul.mubr.bf16.gmra.mxu0 %v729
      %v2031 = vpop.f32.mrf.mxu0
      %v2032 = vadd.f32 %v1991, %v2031
      %v2033 = vpop.f32.mrf.mxu0
      %v2034 = vpop.f32.mrf.mxu0
      %v2035 = vadd.f32 %v1994, %v2034
      %v2036 = vpop.f32.mrf.mxu0
      %2037 = vdwg.mxu0
      %2038 = vmatprep.subr.bf16.mxu0 0
      %2039 = vmatpush1.bf16.msra.mxu0 %v1599
      %2040 = vmatprep.subr.bf16.mxu0 0
      %2041 = vmatpush1.bf16.msra.mxu0 %v1598
      %2042 = vmatprep.subr.bf16.mxu0 0
      %2043 = vmatpush1.bf16.msra.mxu0 %v1597
      %2044 = vmatprep.subr.bf16.mxu0 0
      %2045 = vmatpush1.bf16.msra.mxu0 %v1596
      %2046 = vmatprep.subr.bf16.mxu0 0
      %2047 = vmatpush1.bf16.msra.mxu0 %v1595
      %2048 = vmatprep.subr.bf16.mxu0 0
      %2049 = vmatpush1.bf16.msra.mxu0 %v1594
      %2050 = vmatprep.subr.bf16.mxu0 0
      %2051 = vmatpush1.bf16.msra.mxu0 %v1593
      %2052 = vmatprep.subr.bf16.mxu0 0
      %2053 = vmatpush1.bf16.msra.mxu0 %v1592
      %2054 = vmatprep.subr.bf16.mxu0 0
      %2055 = vmatpush2.bf16.msra.mxu0 %v1607
      %2056 = vmatprep.subr.bf16.mxu0 0
      %2057 = vmatpush2.bf16.msra.mxu0 %v1606
      %2058 = vmatprep.subr.bf16.mxu0 0
      %2059 = vmatpush2.bf16.msra.mxu0 %v1605
      %2060 = vmatprep.subr.bf16.mxu0 0
      %2061 = vmatpush2.bf16.msra.mxu0 %v1604
      %2062 = vmatprep.subr.bf16.mxu0 0
      %2063 = vmatpush2.bf16.msra.mxu0 %v1603
      %2064 = vmatprep.subr.bf16.mxu0 0
      %2065 = vmatpush2.bf16.msra.mxu0 %v1602
      %2066 = vmatprep.subr.bf16.mxu0 0
      %2067 = vmatpush2.bf16.msra.mxu0 %v1601
      %2068 = vmatprep.subr.bf16.mxu0 0
      %2069 = vmatpush2.bf16.msra.mxu0 %v1600
      %2070 = vmatprep.mubr.bf16.mxu0 %v732
      %2071 = vmatmul.mubr.bf16.gmra.mxu0 %v731
      %v2072 = vpop.f32.mrf.mxu0
      %v2073 = vadd.f32 %v2032, %v2072
      %v2074 = vpop.f32.mrf.mxu0
      %v2075 = vpop.f32.mrf.mxu0
      %v2076 = vadd.f32 %v2035, %v2075
      %v2077 = vpop.f32.mrf.mxu0
      %2078 = vdwg.mxu0
      %2079 = vmatprep.subr.bf16.mxu0 0
      %2080 = vmatpush1.bf16.msra.mxu0 %v1615
      %2081 = vmatprep.subr.bf16.mxu0 0
      %2082 = vmatpush1.bf16.msra.mxu0 %v1614
      %2083 = vmatprep.subr.bf16.mxu0 0
      %2084 = vmatpush1.bf16.msra.mxu0 %v1613
      %2085 = vmatprep.subr.bf16.mxu0 0
      %2086 = vmatpush1.bf16.msra.mxu0 %v1612
      %2087 = vmatprep.subr.bf16.mxu0 0
      %2088 = vmatpush1.bf16.msra.mxu0 %v1611
      %2089 = vmatprep.subr.bf16.mxu0 0
      %2090 = vmatpush1.bf16.msra.mxu0 %v1610
      %2091 = vmatprep.subr.bf16.mxu0 0
      %2092 = vmatpush1.bf16.msra.mxu0 %v1609
      %2093 = vmatprep.subr.bf16.mxu0 0
      %2094 = vmatpush1.bf16.msra.mxu0 %v1608
      %2095 = vmatprep.subr.bf16.mxu0 0
      %2096 = vmatpush2.bf16.msra.mxu0 %v1623
      %2097 = vmatprep.subr.bf16.mxu0 0
      %2098 = vmatpush2.bf16.msra.mxu0 %v1622
      %2099 = vmatprep.subr.bf16.mxu0 0
      %2100 = vmatpush2.bf16.msra.mxu0 %v1621
      %2101 = vmatprep.subr.bf16.mxu0 0
      %2102 = vmatpush2.bf16.msra.mxu0 %v1620
      %2103 = vmatprep.subr.bf16.mxu0 0
      %2104 = vmatpush2.bf16.msra.mxu0 %v1619
      %2105 = vmatprep.subr.bf16.mxu0 0
      %2106 = vmatpush2.bf16.msra.mxu0 %v1618
      %2107 = vmatprep.subr.bf16.mxu0 0
      %2108 = vmatpush2.bf16.msra.mxu0 %v1617
      %2109 = vmatprep.subr.bf16.mxu0 0
      %2110 = vmatpush2.bf16.msra.mxu0 %v1616
      %2111 = vmatprep.mubr.bf16.mxu0 %v734
      %2112 = vmatmul.mubr.bf16.gmra.mxu0 %v733
      %v2113 = vpop.f32.mrf.mxu0
      %v2114 = vadd.f32 %v2073, %v2113
      %v2115 = vpop.f32.mrf.mxu0
      %v2116 = vpop.f32.mrf.mxu0
      %v2117 = vadd.f32 %v2076, %v2116
      %v2118 = vpop.f32.mrf.mxu0
      %2119 = vdwg.mxu0
      %2120 = vmatprep.subr.bf16.mxu0 0
      %2121 = vmatpush1.bf16.msra.mxu0 %v1631
      %2122 = vmatprep.subr.bf16.mxu0 0
      %2123 = vmatpush1.bf16.msra.mxu0 %v1630
      %2124 = vmatprep.subr.bf16.mxu0 0
      %2125 = vmatpush1.bf16.msra.mxu0 %v1629
      %2126 = vmatprep.subr.bf16.mxu0 0
      %2127 = vmatpush1.bf16.msra.mxu0 %v1628
      %2128 = vmatprep.subr.bf16.mxu0 0
      %2129 = vmatpush1.bf16.msra.mxu0 %v1627
      %2130 = vmatprep.subr.bf16.mxu0 0
      %2131 = vmatpush1.bf16.msra.mxu0 %v1626
      %2132 = vmatprep.subr.bf16.mxu0 0
      %2133 = vmatpush1.bf16.msra.mxu0 %v1625
      %2134 = vmatprep.subr.bf16.mxu0 0
      %2135 = vmatpush1.bf16.msra.mxu0 %v1624
      %2136 = vmatprep.subr.bf16.mxu0 0
      %2137 = vmatpush2.bf16.msra.mxu0 %v1639
      %2138 = vmatprep.subr.bf16.mxu0 0
      %2139 = vmatpush2.bf16.msra.mxu0 %v1638
      %2140 = vmatprep.subr.bf16.mxu0 0
      %2141 = vmatpush2.bf16.msra.mxu0 %v1637
      %2142 = vmatprep.subr.bf16.mxu0 0
      %2143 = vmatpush2.bf16.msra.mxu0 %v1636
      %2144 = vmatprep.subr.bf16.mxu0 0
      %2145 = vmatpush2.bf16.msra.mxu0 %v1635
      %2146 = vmatprep.subr.bf16.mxu0 0
      %2147 = vmatpush2.bf16.msra.mxu0 %v1634
      %2148 = vmatprep.subr.bf16.mxu0 0
      %2149 = vmatpush2.bf16.msra.mxu0 %v1633
      %2150 = vmatprep.subr.bf16.mxu0 0
      %2151 = vmatpush2.bf16.msra.mxu0 %v1632
      %2152 = vmatprep.mubr.bf16.mxu0 %v736
      %2153 = vmatmul.mubr.bf16.gmra.mxu0 %v735
      %v2154 = vpop.f32.mrf.mxu0
      %v2155 = vadd.f32 %v2114, %v2154
      %v2156 = vpop.f32.mrf.mxu0
      %v2157 = vpop.f32.mrf.mxu0
      %v2158 = vadd.f32 %v2117, %v2157
      %v2159 = vpop.f32.mrf.mxu0
      %2160 = vdwg.mxu0
      %2161 = vmatprep.subr.bf16.mxu0 0
      %2162 = vmatpush1.bf16.msra.mxu0 %v1647
      %2163 = vmatprep.subr.bf16.mxu0 0
      %2164 = vmatpush1.bf16.msra.mxu0 %v1646
      %2165 = vmatprep.subr.bf16.mxu0 0
      %2166 = vmatpush1.bf16.msra.mxu0 %v1645
      %2167 = vmatprep.subr.bf16.mxu0 0
      %2168 = vmatpush1.bf16.msra.mxu0 %v1644
      %2169 = vmatprep.subr.bf16.mxu0 0
      %2170 = vmatpush1.bf16.msra.mxu0 %v1643
      %2171 = vmatprep.subr.bf16.mxu0 0
      %2172 = vmatpush1.bf16.msra.mxu0 %v1642
      %2173 = vmatprep.subr.bf16.mxu0 0
      %2174 = vmatpush1.bf16.msra.mxu0 %v1641
      %2175 = vmatprep.subr.bf16.mxu0 0
      %2176 = vmatpush1.bf16.msra.mxu0 %v1640
      %2177 = vmatprep.subr.bf16.mxu0 0
      %2178 = vmatpush2.bf16.msra.mxu0 %v1655
      %2179 = vmatprep.subr.bf16.mxu0 0
      %2180 = vmatpush2.bf16.msra.mxu0 %v1654
      %2181 = vmatprep.subr.bf16.mxu0 0
      %2182 = vmatpush2.bf16.msra.mxu0 %v1653
      %2183 = vmatprep.subr.bf16.mxu0 0
      %2184 = vmatpush2.bf16.msra.mxu0 %v1652
      %2185 = vmatprep.subr.bf16.mxu0 0
      %2186 = vmatpush2.bf16.msra.mxu0 %v1651
      %2187 = vmatprep.subr.bf16.mxu0 0
      %2188 = vmatpush2.bf16.msra.mxu0 %v1650
      %2189 = vmatprep.subr.bf16.mxu0 0
      %2190 = vmatpush2.bf16.msra.mxu0 %v1649
      %2191 = vmatprep.subr.bf16.mxu0 0
      %2192 = vmatpush2.bf16.msra.mxu0 %v1648
      %2193 = vmatprep.mubr.bf16.mxu0 %v738
      %2194 = vmatmul.mubr.bf16.gmra.mxu0 %v737
      %v2195 = vpop.f32.mrf.mxu0
      %v2196 = vadd.f32 %v2155, %v2195
      %v2197 = vpop.f32.mrf.mxu0
      %v2198 = vpop.f32.mrf.mxu0
      %v2199 = vadd.f32 %v2158, %v2198
      %v2200 = vpop.f32.mrf.mxu0
      %2201 = vdwg.mxu0
      %2202 = vmatprep.subr.bf16.mxu0 0
      %2203 = vmatpush1.bf16.msra.mxu0 %v1663
      %2204 = vmatprep.subr.bf16.mxu0 0
      %2205 = vmatpush1.bf16.msra.mxu0 %v1662
      %2206 = vmatprep.subr.bf16.mxu0 0
      %2207 = vmatpush1.bf16.msra.mxu0 %v1661
      %2208 = vmatprep.subr.bf16.mxu0 0
      %2209 = vmatpush1.bf16.msra.mxu0 %v1660
      %2210 = vmatprep.subr.bf16.mxu0 0
      %2211 = vmatpush1.bf16.msra.mxu0 %v1659
      %2212 = vmatprep.subr.bf16.mxu0 0
      %2213 = vmatpush1.bf16.msra.mxu0 %v1658
      %2214 = vmatprep.subr.bf16.mxu0 0
      %2215 = vmatpush1.bf16.msra.mxu0 %v1657
      %2216 = vmatprep.subr.bf16.mxu0 0
      %2217 = vmatpush1.bf16.msra.mxu0 %v1656
      %2218 = vmatprep.subr.bf16.mxu0 0
      %2219 = vmatpush2.bf16.msra.mxu0 %v1671
      %2220 = vmatprep.subr.bf16.mxu0 0
      %2221 = vmatpush2.bf16.msra.mxu0 %v1670
      %2222 = vmatprep.subr.bf16.mxu0 0
      %2223 = vmatpush2.bf16.msra.mxu0 %v1669
      %2224 = vmatprep.subr.bf16.mxu0 0
      %2225 = vmatpush2.bf16.msra.mxu0 %v1668
      %2226 = vmatprep.subr.bf16.mxu0 0
      %2227 = vmatpush2.bf16.msra.mxu0 %v1667
      %2228 = vmatprep.subr.bf16.mxu0 0
      %2229 = vmatpush2.bf16.msra.mxu0 %v1666
      %2230 = vmatprep.subr.bf16.mxu0 0
      %2231 = vmatpush2.bf16.msra.mxu0 %v1665
      %2232 = vmatprep.subr.bf16.mxu0 0
      %2233 = vmatpush2.bf16.msra.mxu0 %v1664
      %2234 = vmatprep.mubr.bf16.mxu0 %v740
      %2235 = vmatmul.mubr.bf16.gmra.mxu0 %v739
      %v2236 = vpop.f32.mrf.mxu0
      %v2237 = vadd.f32 %v2196, %v2236
      %v2238 = vpop.f32.mrf.mxu0
      %v2239 = vpop.f32.mrf.mxu0
      %v2240 = vadd.f32 %v2199, %v2239
      %v2241 = vpop.f32.mrf.mxu0
      %2242 = vdwg.mxu0
      %2243 = vmatprep.subr.bf16.mxu0 0
      %2244 = vmatpush1.bf16.msra.mxu0 %v1679
      %2245 = vmatprep.subr.bf16.mxu0 0
      %2246 = vmatpush1.bf16.msra.mxu0 %v1678
      %2247 = vmatprep.subr.bf16.mxu0 0
      %2248 = vmatpush1.bf16.msra.mxu0 %v1677
      %2249 = vmatprep.subr.bf16.mxu0 0
      %2250 = vmatpush1.bf16.msra.mxu0 %v1676
      %2251 = vmatprep.subr.bf16.mxu0 0
      %2252 = vmatpush1.bf16.msra.mxu0 %v1675
      %2253 = vmatprep.subr.bf16.mxu0 0
      %2254 = vmatpush1.bf16.msra.mxu0 %v1674
      %2255 = vmatprep.subr.bf16.mxu0 0
      %2256 = vmatpush1.bf16.msra.mxu0 %v1673
      %2257 = vmatprep.subr.bf16.mxu0 0
      %2258 = vmatpush1.bf16.msra.mxu0 %v1672
      %2259 = vmatprep.subr.bf16.mxu0 0
      %2260 = vmatpush2.bf16.msra.mxu0 %v1687
      %2261 = vmatprep.subr.bf16.mxu0 0
      %2262 = vmatpush2.bf16.msra.mxu0 %v1686
      %2263 = vmatprep.subr.bf16.mxu0 0
      %2264 = vmatpush2.bf16.msra.mxu0 %v1685
      %2265 = vmatprep.subr.bf16.mxu0 0
      %2266 = vmatpush2.bf16.msra.mxu0 %v1684
      %2267 = vmatprep.subr.bf16.mxu0 0
      %2268 = vmatpush2.bf16.msra.mxu0 %v1683
      %2269 = vmatprep.subr.bf16.mxu0 0
      %2270 = vmatpush2.bf16.msra.mxu0 %v1682
      %2271 = vmatprep.subr.bf16.mxu0 0
      %2272 = vmatpush2.bf16.msra.mxu0 %v1681
      %2273 = vmatprep.subr.bf16.mxu0 0
      %2274 = vmatpush2.bf16.msra.mxu0 %v1680
      %2275 = vmatprep.mubr.bf16.mxu0 %v742
      %2276 = vmatmul.mubr.bf16.gmra.mxu0 %v741
      %v2277 = vpop.f32.mrf.mxu0
      %v2278 = vadd.f32 %v2237, %v2277
      %v2279 = vpop.f32.mrf.mxu0
      %v2280 = vpop.f32.mrf.mxu0
      %v2281 = vadd.f32 %v2240, %v2280
      %v2282 = vpop.f32.mrf.mxu0
      %2283 = vdwg.mxu0
      %2284 = vmatprep.subr.bf16.mxu0 0
      %2285 = vmatpush1.bf16.msra.mxu0 %v1695
      %2286 = vmatprep.subr.bf16.mxu0 0
      %2287 = vmatpush1.bf16.msra.mxu0 %v1694
      %2288 = vmatprep.subr.bf16.mxu0 0
      %2289 = vmatpush1.bf16.msra.mxu0 %v1693
      %2290 = vmatprep.subr.bf16.mxu0 0
      %2291 = vmatpush1.bf16.msra.mxu0 %v1692
      %2292 = vmatprep.subr.bf16.mxu0 0
      %2293 = vmatpush1.bf16.msra.mxu0 %v1691
      %2294 = vmatprep.subr.bf16.mxu0 0
      %2295 = vmatpush1.bf16.msra.mxu0 %v1690
      %2296 = vmatprep.subr.bf16.mxu0 0
      %2297 = vmatpush1.bf16.msra.mxu0 %v1689
      %2298 = vmatprep.subr.bf16.mxu0 0
      %2299 = vmatpush1.bf16.msra.mxu0 %v1688
      %2300 = vmatprep.subr.bf16.mxu0 0
      %2301 = vmatpush2.bf16.msra.mxu0 %v1703
      %2302 = vmatprep.subr.bf16.mxu0 0
      %2303 = vmatpush2.bf16.msra.mxu0 %v1702
      %2304 = vmatprep.subr.bf16.mxu0 0
      %2305 = vmatpush2.bf16.msra.mxu0 %v1701
      %2306 = vmatprep.subr.bf16.mxu0 0
      %2307 = vmatpush2.bf16.msra.mxu0 %v1700
      %2308 = vmatprep.subr.bf16.mxu0 0
      %2309 = vmatpush2.bf16.msra.mxu0 %v1699
      %2310 = vmatprep.subr.bf16.mxu0 0
      %2311 = vmatpush2.bf16.msra.mxu0 %v1698
      %2312 = vmatprep.subr.bf16.mxu0 0
      %2313 = vmatpush2.bf16.msra.mxu0 %v1697
      %2314 = vmatprep.subr.bf16.mxu0 0
      %2315 = vmatpush2.bf16.msra.mxu0 %v1696
      %2316 = vmatprep.mubr.bf16.mxu0 %v744
      %2317 = vmatmul.mubr.bf16.gmra.mxu0 %v743
      %v2318 = vpop.f32.mrf.mxu0
      %v2319 = vadd.f32 %v2278, %v2318
      %v2320 = vpop.f32.mrf.mxu0
      %v2321 = vpop.f32.mrf.mxu0
      %v2322 = vadd.f32 %v2281, %v2321
      %v2323 = vpop.f32.mrf.mxu0
      %2324 = vdwg.mxu0
      %2325 = vmatprep.subr.bf16.mxu0 0
      %2326 = vmatpush1.bf16.msra.mxu0 %v1711
      %2327 = vmatprep.subr.bf16.mxu0 0
      %2328 = vmatpush1.bf16.msra.mxu0 %v1710
      %2329 = vmatprep.subr.bf16.mxu0 0
      %2330 = vmatpush1.bf16.msra.mxu0 %v1709
      %2331 = vmatprep.subr.bf16.mxu0 0
      %2332 = vmatpush1.bf16.msra.mxu0 %v1708
      %2333 = vmatprep.subr.bf16.mxu0 0
      %2334 = vmatpush1.bf16.msra.mxu0 %v1707
      %2335 = vmatprep.subr.bf16.mxu0 0
      %2336 = vmatpush1.bf16.msra.mxu0 %v1706
      %2337 = vmatprep.subr.bf16.mxu0 0
      %2338 = vmatpush1.bf16.msra.mxu0 %v1705
      %2339 = vmatprep.subr.bf16.mxu0 0
      %2340 = vmatpush1.bf16.msra.mxu0 %v1704
      %2341 = vmatprep.subr.bf16.mxu0 0
      %2342 = vmatpush2.bf16.msra.mxu0 %v1719
      %2343 = vmatprep.subr.bf16.mxu0 0
      %2344 = vmatpush2.bf16.msra.mxu0 %v1718
      %2345 = vmatprep.subr.bf16.mxu0 0
      %2346 = vmatpush2.bf16.msra.mxu0 %v1717
      %2347 = vmatprep.subr.bf16.mxu0 0
      %2348 = vmatpush2.bf16.msra.mxu0 %v1716
      %2349 = vmatprep.subr.bf16.mxu0 0
      %2350 = vmatpush2.bf16.msra.mxu0 %v1715
      %2351 = vmatprep.subr.bf16.mxu0 0
      %2352 = vmatpush2.bf16.msra.mxu0 %v1714
      %2353 = vmatprep.subr.bf16.mxu0 0
      %2354 = vmatpush2.bf16.msra.mxu0 %v1713
      %2355 = vmatprep.subr.bf16.mxu0 0
      %2356 = vmatpush2.bf16.msra.mxu0 %v1712
      %2357 = vmatprep.mubr.bf16.mxu0 %v746
      %2358 = vmatmul.mubr.bf16.gmra.mxu0 %v745
      %v2359 = vpop.f32.mrf.mxu0
      %v2360 = vadd.f32 %v2319, %v2359
      %v2361 = vpop.f32.mrf.mxu0
      %v2362 = vpop.f32.mrf.mxu0
      %v2363 = vadd.f32 %v2322, %v2362
      %v2364 = vpop.f32.mrf.mxu0
      %2365 = vdwg.mxu0
      %2366 = vmatprep.subr.bf16.mxu0 0
      %2367 = vmatpush1.bf16.msra.mxu0 %v1727
      %2368 = vmatprep.subr.bf16.mxu0 0
      %2369 = vmatpush1.bf16.msra.mxu0 %v1726
      %2370 = vmatprep.subr.bf16.mxu0 0
      %2371 = vmatpush1.bf16.msra.mxu0 %v1725
      %2372 = vmatprep.subr.bf16.mxu0 0
      %2373 = vmatpush1.bf16.msra.mxu0 %v1724
      %2374 = vmatprep.subr.bf16.mxu0 0
      %2375 = vmatpush1.bf16.msra.mxu0 %v1723
      %2376 = vmatprep.subr.bf16.mxu0 0
      %2377 = vmatpush1.bf16.msra.mxu0 %v1722
      %2378 = vmatprep.subr.bf16.mxu0 0
      %2379 = vmatpush1.bf16.msra.mxu0 %v1721
      %2380 = vmatprep.subr.bf16.mxu0 0
      %2381 = vmatpush1.bf16.msra.mxu0 %v1720
      %2382 = vmatprep.subr.bf16.mxu0 0
      %2383 = vmatpush2.bf16.msra.mxu0 %v1735
      %2384 = vmatprep.subr.bf16.mxu0 0
      %2385 = vmatpush2.bf16.msra.mxu0 %v1734
      %2386 = vmatprep.subr.bf16.mxu0 0
      %2387 = vmatpush2.bf16.msra.mxu0 %v1733
      %2388 = vmatprep.subr.bf16.mxu0 0
      %2389 = vmatpush2.bf16.msra.mxu0 %v1732
      %2390 = vmatprep.subr.bf16.mxu0 0
      %2391 = vmatpush2.bf16.msra.mxu0 %v1731
      %2392 = vmatprep.subr.bf16.mxu0 0
      %2393 = vmatpush2.bf16.msra.mxu0 %v1730
      %2394 = vmatprep.subr.bf16.mxu0 0
      %2395 = vmatpush2.bf16.msra.mxu0 %v1729
      %2396 = vmatprep.subr.bf16.mxu0 0
      %2397 = vmatpush2.bf16.msra.mxu0 %v1728
      %2398 = vmatprep.mubr.bf16.mxu0 %v748
      %2399 = vmatmul.mubr.bf16.gmra.mxu0 %v747
      %v2400 = vpop.f32.mrf.mxu0
      %v2401 = vadd.f32 %v2360, %v2400
      %v2402 = vpop.f32.mrf.mxu0
      %v2403 = vpop.f32.mrf.mxu0
      %v2404 = vadd.f32 %v2363, %v2403
      %v2405 = vpop.f32.mrf.mxu0
      %2406 = vdwg.mxu0
      %2407 = vmatprep.subr.bf16.mxu0 0
      %2408 = vmatpush1.bf16.msra.mxu0 %v1743
      %2409 = vmatprep.subr.bf16.mxu0 0
      %2410 = vmatpush1.bf16.msra.mxu0 %v1742
      %2411 = vmatprep.subr.bf16.mxu0 0
      %2412 = vmatpush1.bf16.msra.mxu0 %v1741
      %2413 = vmatprep.subr.bf16.mxu0 0
      %2414 = vmatpush1.bf16.msra.mxu0 %v1740
      %2415 = vmatprep.subr.bf16.mxu0 0
      %2416 = vmatpush1.bf16.msra.mxu0 %v1739
      %2417 = vmatprep.subr.bf16.mxu0 0
      %2418 = vmatpush1.bf16.msra.mxu0 %v1738
      %2419 = vmatprep.subr.bf16.mxu0 0
      %2420 = vmatpush1.bf16.msra.mxu0 %v1737
      %2421 = vmatprep.subr.bf16.mxu0 0
      %2422 = vmatpush1.bf16.msra.mxu0 %v1736
      %2423 = vmatprep.subr.bf16.mxu0 0
      %2424 = vmatpush2.bf16.msra.mxu0 %v1751
      %2425 = vmatprep.subr.bf16.mxu0 0
      %2426 = vmatpush2.bf16.msra.mxu0 %v1750
      %2427 = vmatprep.subr.bf16.mxu0 0
      %2428 = vmatpush2.bf16.msra.mxu0 %v1749
      %2429 = vmatprep.subr.bf16.mxu0 0
      %2430 = vmatpush2.bf16.msra.mxu0 %v1748
      %2431 = vmatprep.subr.bf16.mxu0 0
      %2432 = vmatpush2.bf16.msra.mxu0 %v1747
      %2433 = vmatprep.subr.bf16.mxu0 0
      %2434 = vmatpush2.bf16.msra.mxu0 %v1746
      %2435 = vmatprep.subr.bf16.mxu0 0
      %2436 = vmatpush2.bf16.msra.mxu0 %v1745
      %2437 = vmatprep.subr.bf16.mxu0 0
      %2438 = vmatpush2.bf16.msra.mxu0 %v1744
      %2439 = vmatprep.mubr.bf16.mxu0 %v750
      %2440 = vmatmul.mubr.bf16.gmra.mxu0 %v749
      %v2441 = vpop.f32.mrf.mxu0
      %v2442 = vadd.f32 %v2401, %v2441
      %v2443 = vpop.f32.mrf.mxu0
      %v2444 = vpop.f32.mrf.mxu0
      %v2445 = vadd.f32 %v2404, %v2444
      %v2446 = vpop.f32.mrf.mxu0
      %2447 = vdwg.mxu0
      %2448 = vmatprep.subr.bf16.mxu0 0
      %2449 = vmatpush1.bf16.msra.mxu0 0
      %2450 = vmatprep.subr.bf16.mxu0 0
      %2451 = vmatpush1.bf16.msra.mxu0 0
      %2452 = vmatprep.subr.bf16.mxu0 0
      %2453 = vmatpush1.bf16.msra.mxu0 0
      %2454 = vmatprep.subr.bf16.mxu0 0
      %2455 = vmatpush1.bf16.msra.mxu0 0
      %2456 = vmatprep.subr.bf16.mxu0 0
      %2457 = vmatpush1.bf16.msra.mxu0 %v1755
      %2458 = vmatprep.subr.bf16.mxu0 0
      %2459 = vmatpush1.bf16.msra.mxu0 %v1754
      %2460 = vmatprep.subr.bf16.mxu0 0
      %2461 = vmatpush1.bf16.msra.mxu0 %v1753
      %2462 = vmatprep.subr.bf16.mxu0 0
      %2463 = vmatpush1.bf16.msra.mxu0 %v1752
      %2464 = vmatprep.subr.bf16.mxu0 0
      %2465 = vmatpush2.bf16.msra.mxu0 0
      %2466 = vmatprep.subr.bf16.mxu0 0
      %2467 = vmatpush2.bf16.msra.mxu0 0
      %2468 = vmatprep.subr.bf16.mxu0 0
      %2469 = vmatpush2.bf16.msra.mxu0 0
      %2470 = vmatprep.subr.bf16.mxu0 0
      %2471 = vmatpush2.bf16.msra.mxu0 0
      %2472 = vmatprep.subr.bf16.mxu0 0
      %2473 = vmatpush2.bf16.msra.mxu0 0
      %2474 = vmatprep.subr.bf16.mxu0 0
      %2475 = vmatpush2.bf16.msra.mxu0 0
      %2476 = vmatprep.subr.bf16.mxu0 0
      %2477 = vmatpush2.bf16.msra.mxu0 0
      %2478 = vmatprep.subr.bf16.mxu0 0
      %2479 = vmatpush2.bf16.msra.mxu0 0
      %2480 = vmatprep.mubr.bf16.mxu0 0
      %2481 = vmatmul.mubr.bf16.gmra.mxu0 %v1954
      %v2482 = vpop.f32.mrf.mxu0
      %v2483 = vadd.f32 %v2442, %v2482
      %v2484 = vpop.f32.mrf.mxu0
      %v2485 = vpop.f32.mrf.mxu0
      %v2486 = vadd.f32 %v2445, %v2485
      %v2487 = vpop.f32.mrf.mxu0
      %2488 = vdwg.mxu0
      %v2489 = vmax.f32 %v2483, 0.0
      %v2490 = vmax.f32 %v2486, 0.0
      %v2491 = vpack.c.bf16 %v2490, %v2489
      %v2493 = vunpack.c.l.b16 %v2491
      %v2494 = vunpack.c.h.b16 %v2491
      %v2495 = vpack.c.b16 %v2493, %v2493
      %v2496 = vpack.c.b16 %v2494, %v2494
      %2499 = vst [vmem:[%s230] sm:$0xf] %v2495
      %2500 = vst [vmem:[%s230 + $0x4] sm:$0xf] %v2496
      %s2501 = smul.u32 2, %s19
      %p2502 = scmp.lt.s32.totalorder %s18, 0
      %s2503 = scalar_select %p2502, %s18, 0
      %p2504 = scmp.lt.s32.totalorder %s2501, 3
      %s2505 = scalar_select %p2504, %s2501, 3
      %p2506 = scmp.lt.s32.totalorder %s20, 0
      %s2507 = scalar_select %p2506, %s20, 0
      %s2508 = sadd.s32 %s2507, %s2505
      %s2509 = smul.addr %s2503, 4
      %s2510 = sadd.s32 %s2508, %s2509
      %s2511 = smul.addr %s2510, 4
      %s2512 = scalar_lea.vmem %s2, %s2511
      // Predicated region
      $region29: #{ste_encoder_forward.14} parent=27 // pred_check
        %p2513 = pneg %p110
      $region30: #{ste_encoder_forward.14} parent=27 // pred_check_branch
        %2515 = sbr.rel (%p2513) target = $region32
      $region31: #{ste_encoder_forward.14} parent=27 // pred_region
        %s2516 = smul.u32 2, %s19
      $region32: #{ste_encoder_forward.14} parent=27 // pred_fallthru
        _
    $region28: #{ste_encoder_forward.14} parent=5 // pred_fallthru
      _
    %p2517 = scmp.le.s32.totalorder 2, %s8
    // Predicated region
    $region33: #{ste_encoder_forward.14} parent=5 // pred_check
      %p2518 = pneg %p2517
    $region34: #{ste_encoder_forward.14} parent=5 // pred_check_branch
      %2520 = sbr.rel (%p2518) target = $region36
    $region35: #{ste_encoder_forward.14} parent=5 // pred_region
      %s2521 = ssub.s32 %s8, 2
      // Predicated region
      $region37: #{ste_encoder_forward.14} parent=35 // pred_check
        %p2522 = pneg %p116
      $region38: #{ste_encoder_forward.14} parent=35 // pred_check_branch
        %2524 = sbr.rel (%p2522) target = $region40
      $region39: #{ste_encoder_forward.14} parent=35 // pred_region
        %s2525 = smul.u32 2, %s22
        %p2526 = scmp.lt.s32.totalorder %s21, 0
        %s2527 = scalar_select %p2526, %s21, 0
        %p2528 = scmp.lt.s32.totalorder %s2525, 3
        %s2529 = scalar_select %p2528, %s2525, 3
        %p2530 = scmp.lt.s32.totalorder %s23, 0
        %s2531 = scalar_select %p2530, %s23, 0
        %s2532 = sadd.s32 %s2531, %s2529
        %s2533 = smul.addr %s2527, 4
        %s2534 = sadd.s32 %s2532, %s2533
        %s2535 = smul.addr %s2534, 4
        %s2536 = scalar_lea.vmem %s2, %s2535
      $region40: #{ste_encoder_forward.14} parent=35 // pred_fallthru
        _
    $region36: #{ste_encoder_forward.14} parent=5 // pred_fallthru
      _
  $region6: #{ste_encoder_forward.14} parent=0 // loop_footer
    %s12 = sadd.s32 1, %s8
  $region7: #{ste_encoder_forward.14} parent=0 // loop_footer_branch
    %7 = sbr.rel target = $region3
  $region8: #{ste_encoder_forward.14} parent=0 // loop_exit
    _

// kernel: ste_encoder_forward.16
$region0: #{ste_encoder_forward.16}
  #allocation0 [shape = 'u32[]', space=smem, size = 0x4, offset = 0x4, fixed_abs, tag = 'smem constant byte address 0x4 - core index']
  #allocation1 [shape = 'u32[144,128]{1,0:T(1,128)}', space=vmem, size = 0x12000, scoped, tag = 'internal scratch']
  %s0 = inlined_call_operand.vmem [shape: bf16[4,4,384], index: 0, kind: input, shape index: {}]
  %s1 = inlined_call_operand.vmem [shape: bf16[4,4,128], index: 1, kind: output, shape index: {}]
  %s2 = sld [smem:[#allocation0]]
  $region37: #{ste_encoder_forward.16} parent=0
    _
  %s4 = ssub.s32 1, %s2
  %s5 = scalar_select 0, %s4, %s2
  loop: start=0, step=1, limit=6
  $region2: #{ste_encoder_forward.16} parent=0 // loop_pre_header
    _
  $region3: #{ste_encoder_forward.16} parent=0 // loop_header
    %s7 = sphi 0, %s11
    %p8 = scmp.ge.s32.totalorder %s7, 6
    %s17 = sphi 0, %s19
    %s20 = sphi 0, %s17
    %s21 = sphi 0, %s20
    %s37 = sphi 0, %s21
    %s43 = sphi 0, %s45
    %s46 = sphi 0, %s43
    %s47 = sphi 0, %s46
    %s63 = sphi 0, %s47
  $region4: #{ste_encoder_forward.16} parent=0 // loop_header_branch
    %10 = sbr.rel (%p8) target = $region8
  $region5: #{ste_encoder_forward.16} parent=0 // loop_body
    %s12 = ssub.s32 %s7, 1
    %s13 = ssub.s32 %s7, 2
    %s14 = sadd.s32 %s7, 1
    %s15 = ssub.s32 %s7, %s14
    %p16 = scmp.eq.s32.totalorder %s15, 0
    %s18 = sadd.s32 %s17, 1
    %s19 = scalar_select %p16, %s17, %s18
    %p22 = pneg %p16
    %p23 = scmp.eq.s32.totalorder %s7, 3
    %p24 = por %p22, %p23
    %p25 = scmp.ne.s32.totalorder %s17, %s20
    %p26 = scmp.eq.s32.totalorder %s7, 0
    %p27 = por %p25, %p26
    %p28 = scmp.ne.s32.totalorder %s17, %s20
    %p29 = scmp.eq.s32.totalorder %s12, 3
    %p30 = por %p28, %p29
    %p31 = scmp.ne.s32.totalorder %s20, %s21
    %p32 = scmp.eq.s32.totalorder %s12, 0
    %p33 = por %p31, %p32
    %p34 = scmp.ne.s32.totalorder %s20, %s21
    %p35 = scmp.eq.s32.totalorder %s13, 3
    %p36 = por %p34, %p35
    %p38 = scmp.ne.s32.totalorder %s21, %s37
    %p39 = scmp.eq.s32.totalorder %s13, 0
    %p40 = por %p38, %p39
    %s41 = ssub.s32 %s7, %s14
    %p42 = scmp.eq.s32.totalorder %s41, 0
    %s44 = sadd.s32 %s43, 1
    %s45 = scalar_select %p42, %s43, %s44
    %p48 = pneg %p42
    %p49 = scmp.eq.s32.totalorder %s7, 3
    %p50 = por %p48, %p49
    %p51 = scmp.ne.s32.totalorder %s43, %s46
    %p52 = scmp.eq.s32.totalorder %s7, 0
    %p53 = por %p51, %p52
    %p54 = scmp.ne.s32.totalorder %s43, %s46
    %p55 = scmp.eq.s32.totalorder %s12, 3
    %p56 = por %p54, %p55
    %p57 = scmp.ne.s32.totalorder %s46, %s47
    %p58 = scmp.eq.s32.totalorder %s12, 0
    %p59 = por %p57, %p58
    %p60 = scmp.ne.s32.totalorder %s46, %s47
    %p61 = scmp.eq.s32.totalorder %s13, 3
    %p62 = por %p60, %p61
    %p64 = scmp.ne.s32.totalorder %s47, %s63
    %p65 = scmp.eq.s32.totalorder %s13, 0
    %p66 = por %p64, %p65
    %p67 = scmp.le.s32.totalorder 1, %s7
    %p68 = scmp.lt.s32.totalorder %s7, 5
    %p69 = pnand %p67, %p68
    %p70 = pneg %p69
    // Predicated region
    $region9: #{ste_encoder_forward.16} parent=5 // pred_check
      _
    $region10: #{ste_encoder_forward.16} parent=5 // pred_check_branch
      %72 = sbr.rel (%p69) target = $region12
    $region11: #{ste_encoder_forward.16} parent=5 // pred_region
      %s73 = ssub.s32 %s7, 1
    $region12: #{ste_encoder_forward.16} parent=5 // pred_fallthru
      _
    %p74 = scmp.lt.s32.totalorder %s7, 4
    // Predicated region
    $region13: #{ste_encoder_forward.16} parent=5 // pred_check
      %p75 = pneg %p74
    $region14: #{ste_encoder_forward.16} parent=5 // pred_check_branch
      %77 = sbr.rel (%p75) target = $region16
    $region15: #{ste_encoder_forward.16} parent=5 // pred_region
      // Predicated region
      $region17: #{ste_encoder_forward.16} parent=15 // pred_check
        %p78 = pneg %p27
      $region18: #{ste_encoder_forward.16} parent=15 // pred_check_branch
        %80 = sbr.rel (%p78) target = $region20
      $region19: #{ste_encoder_forward.16} parent=15 // pred_region
        %p81 = scmp.lt.s32.totalorder %s7, 3
        %s82 = scalar_select %p81, %s7, 3
        %s83 = smul.addr %s82, 3
        %s84 = smul.addr %s83, 2
        %s85 = scalar_lea.vmem %s0, %s84
      $region20: #{ste_encoder_forward.16} parent=15 // pred_fallthru
        _
    $region16: #{ste_encoder_forward.16} parent=5 // pred_fallthru
      _
    %p86 = scmp.le.s32.totalorder 1, %s7
    %p87 = scmp.lt.s32.totalorder %s7, 5
    %p88 = pnand %p86, %p87
    %p89 = pneg %p88
    // Predicated region
    $region21: #{ste_encoder_forward.16} parent=5 // pred_check
      _
    $region22: #{ste_encoder_forward.16} parent=5 // pred_check_branch
      %91 = sbr.rel (%p88) target = $region24
    $region23: #{ste_encoder_forward.16} parent=5 // pred_region
      %s92 = ssub.s32 %s7, 1
      %p93 = scmp.lt.s32.totalorder %s12, 3
      %s94 = scalar_select %p93, %s12, 3
      %s95 = smul.addr %s94, 3
      %s96 = smul.addr %s95, 2
      %s97 = scalar_lea.vmem %s0, %s96
      %p98 = pneg %p33
      %p99 = pneg %p30
      %p100 = pneg %p59
      %p101 = pneg %p56
      %p102 = scmp.lt.s32.totalorder %s12, 3
      %s103 = scalar_select %p102, %s12, 3
      %s104 = smul.addr %s103, 2
      %s105 = scalar_lea.vmem %s1, %s104
      %p106 = scmp.lt.s32.totalorder %s12, 3
      %s107 = scalar_select %p106, %s12, 3
      %s108 = smul.addr %s107, 3
      %s109 = smul.addr %s108, 2
      %s110 = scalar_lea.vmem %s0, %s109
      %p111 = scmp.lt.s32.totalorder %s12, 3
      %s112 = scalar_select %p111, %s12, 3
      %s113 = smul.addr %s112, 2
      %s114 = scalar_lea.vmem %s1, %s113
      %v116 = vld [vmem:[%s110] sm:$0x3f]
      %v119 = vunpack.c.l.s4 1983009808
      %v120 = vunpack.c.0.s8 %v119
      %v121 = vlaneseq
      %v122 = vshrl.u32 %v121, 7
      %v123 = vsub.s32 %v120, %v122
      %v124 = vrot.slane %v116, %v123
      %v125 = vcombine.high %v124, %v124
      %vm126 = vcmask 261120
      %v128 = vsel %vm126, %v116, 0
      %v131 = vsel %vm126, %v125, 0
      %133 = vmatprep.subr.bf16.mxu0 0
      %134 = vmatpush1.bf16.xpose.msra.mxu0 0
      %135 = vmatprep.subr.bf16.mxu0 0
      %136 = vmatpush1.bf16.xpose.msra.mxu0 0
      %137 = vmatprep.subr.bf16.mxu0 0
      %138 = vmatpush1.bf16.xpose.msra.mxu0 0
      %139 = vmatprep.subr.bf16.mxu0 0
      %140 = vmatpush1.bf16.xpose.msra.mxu0 0
      %141 = vmatprep.subr.bf16.mxu0 0
      %142 = vmatpush1.bf16.xpose.msra.mxu0 0
      %143 = vmatprep.subr.bf16.mxu0 0
      %144 = vmatpush1.bf16.xpose.msra.mxu0 0
      %145 = vmatprep.subr.bf16.mxu0 0
      %146 = vmatpush1.bf16.xpose.msra.mxu0 0
      %147 = vmatprep.subr.bf16.mxu0 0
      %148 = vmatpush1.bf16.xpose.msra.mxu0 %v131
      %149 = vmatprep.subr.bf16.mxu0 0
      %150 = vmatpush2.bf16.xpose.msra.mxu0 0
      %151 = vmatprep.subr.bf16.mxu0 0
      %152 = vmatpush2.bf16.xpose.msra.mxu0 0
      %153 = vmatprep.subr.bf16.mxu0 0
      %154 = vmatpush2.bf16.xpose.msra.mxu0 0
      %155 = vmatprep.subr.bf16.mxu0 0
      %156 = vmatpush2.bf16.xpose.msra.mxu0 0
      %157 = vmatprep.subr.bf16.mxu0 0
      %158 = vmatpush2.bf16.xpose.msra.mxu0 0
      %159 = vmatprep.subr.bf16.mxu0 0
      %160 = vmatpush2.bf16.xpose.msra.mxu0 0
      %161 = vmatprep.subr.bf16.mxu0 0
      %162 = vmatpush2.bf16.xpose.msra.mxu0 0
      %163 = vmatprep.subr.bf16.mxu0 0
      %164 = vmatpush2.bf16.xpose.msra.mxu0 0
      %165 = vmatprep.mubr.bf16.mxu0 0
      %166 = vmatmul.mubr.bf16.gmra.mxu0 %v128
      %v167 = vpop.f32.mrf.mxu0
      %v168 = vadd.f32 0.0, %v167
      %v169 = vpop.f32.mrf.mxu0
      %v170 = vpop.f32.mrf.mxu0
      %v171 = vpop.f32.mrf.mxu0
      %172 = vdwg.mxu0
      %vm173 = vcmask 27648
      %v174 = vsel %vm173, %v168, -inf
      %175 = vmax.xlane.f32.xlu0 %v174
      %v176 = vpop.xlane.xlu0 %175
      %v177 = vsub.f32 %v168, %v176
      %v178 = vmul.f32 %v177, 1.442695
      %v179 = vpow.pop %v178
      %v180 = vsel %vm173, %v179, 0.0
      %181 = vadd.xlane.f32.xlu0 %v180
      %v182 = vpop.xlane.xlu0 %181
      %v183 = vrcp.pop %v182
      %v184 = vmul.f32 %v179, %v183
      %v185 = vpack.c.bf16 %v184, %v184
      %v186 = vcombine.high %v116, %v116
      %v188 = vunpack.c.l.s4 1983009808
      %v189 = vunpack.c.0.s8 %v188
      %v190 = vlaneseq
      %v191 = vshrl.u32 %v190, 7
      %v192 = vsub.s32 %v189, %v191
      %v193 = vrot.slane %v186, %v192
      %vm194 = vcmask 31744
      %v196 = vsel %vm194, %v185, 0
      %vm198 = vcmask 1041408
      %v200 = vsel %vm198, %v193, 0
      %202 = vmatprep.subr.bf16.mxu0 0
      %203 = vmatpush1.bf16.msra.mxu0 0
      %204 = vmatprep.subr.bf16.mxu0 0
      %205 = vmatpush1.bf16.msra.mxu0 0
      %206 = vmatprep.subr.bf16.mxu0 0
      %207 = vmatpush1.bf16.msra.mxu0 0
      %208 = vmatprep.subr.bf16.mxu0 0
      %209 = vmatpush1.bf16.msra.mxu0 0
      %210 = vmatprep.subr.bf16.mxu0 0
      %211 = vmatpush1.bf16.msra.mxu0 0
      %212 = vmatprep.subr.bf16.mxu0 0
      %213 = vmatpush1.bf16.msra.mxu0 0
      %214 = vmatprep.subr.bf16.mxu0 0
      %215 = vmatpush1.bf16.msra.mxu0 0
      %216 = vmatprep.subr.bf16.mxu0 0
      %217 = vmatpush1.bf16.msra.mxu0 %v200
      %218 = vmatprep.subr.bf16.mxu0 0
      %219 = vmatpush2.bf16.msra.mxu0 0
      %220 = vmatprep.subr.bf16.mxu0 0
      %221 = vmatpush2.bf16.msra.mxu0 0
      %222 = vmatprep.subr.bf16.mxu0 0
      %223 = vmatpush2.bf16.msra.mxu0 0
      %224 = vmatprep.subr.bf16.mxu0 0
      %225 = vmatpush2.bf16.msra.mxu0 0
      %226 = vmatprep.subr.bf16.mxu0 0
      %227 = vmatpush2.bf16.msra.mxu0 0
      %228 = vmatprep.subr.bf16.mxu0 0
      %229 = vmatpush2.bf16.msra.mxu0 0
      %230 = vmatprep.subr.bf16.mxu0 0
      %231 = vmatpush2.bf16.msra.mxu0 0
      %232 = vmatprep.subr.bf16.mxu0 0
      %233 = vmatpush2.bf16.msra.mxu0 0
      %234 = vmatprep.mubr.bf16.mxu0 0
      %235 = vmatmul.mubr.bf16.gmra.mxu0 %v196
      %v236 = vpop.f32.mrf.mxu0
      %v237 = vadd.f32 0.0, %v236
      %v238 = vpop.f32.mrf.mxu0
      %v239 = vpop.f32.mrf.mxu0
      %v240 = vpop.f32.mrf.mxu0
      %241 = vdwg.mxu0
      %242 = vrot.lane.b32.xlu0 %v124, 96
      %v243 = vpop.permute.xlu0 %242
      %244 = vrot.lane.b32.xlu0 %v125, 96
      %v245 = vpop.permute.xlu0 %244
      %v247 = vsel %vm126, %v243, 0
      %v250 = vsel %vm126, %v245, 0
      %252 = vmatprep.subr.bf16.mxu0 0
      %253 = vmatpush1.bf16.xpose.msra.mxu0 0
      %254 = vmatprep.subr.bf16.mxu0 0
      %255 = vmatpush1.bf16.xpose.msra.mxu0 0
      %256 = vmatprep.subr.bf16.mxu0 0
      %257 = vmatpush1.bf16.xpose.msra.mxu0 0
      %258 = vmatprep.subr.bf16.mxu0 0
      %259 = vmatpush1.bf16.xpose.msra.mxu0 0
      %260 = vmatprep.subr.bf16.mxu0 0
      %261 = vmatpush1.bf16.xpose.msra.mxu0 0
      %262 = vmatprep.subr.bf16.mxu0 0
      %263 = vmatpush1.bf16.xpose.msra.mxu0 0
      %264 = vmatprep.subr.bf16.mxu0 0
      %265 = vmatpush1.bf16.xpose.msra.mxu0 0
      %266 = vmatprep.subr.bf16.mxu0 0
      %267 = vmatpush1.bf16.xpose.msra.mxu0 %v250
      %268 = vmatprep.subr.bf16.mxu0 0
      %269 = vmatpush2.bf16.xpose.msra.mxu0 0
      %270 = vmatprep.subr.bf16.mxu0 0
      %271 = vmatpush2.bf16.xpose.msra.mxu0 0
      %272 = vmatprep.subr.bf16.mxu0 0
      %273 = vmatpush2.bf16.xpose.msra.mxu0 0
      %274 = vmatprep.subr.bf16.mxu0 0
      %275 = vmatpush2.bf16.xpose.msra.mxu0 0
      %276 = vmatprep.subr.bf16.mxu0 0
      %277 = vmatpush2.bf16.xpose.msra.mxu0 0
      %278 = vmatprep.subr.bf16.mxu0 0
      %279 = vmatpush2.bf16.xpose.msra.mxu0 0
      %280 = vmatprep.subr.bf16.mxu0 0
      %281 = vmatpush2.bf16.xpose.msra.mxu0 0
      %282 = vmatprep.subr.bf16.mxu0 0
      %283 = vmatpush2.bf16.xpose.msra.mxu0 0
      %284 = vmatprep.mubr.bf16.mxu0 0
      %285 = vmatmul.mubr.bf16.gmra.mxu0 %v247
      %v286 = vpop.f32.mrf.mxu0
      %v287 = vadd.f32 0.0, %v286
      %v288 = vpop.f32.mrf.mxu0
      %v289 = vpop.f32.mrf.mxu0
      %v290 = vpop.f32.mrf.mxu0
      %291 = vdwg.mxu0
      %v292 = vsel %vm173, %v287, -inf
      %293 = vmax.xlane.f32.xlu0 %v292
      %v294 = vpop.xlane.xlu0 %293
      %v295 = vsub.f32 %v287, %v294
      %v296 = vmul.f32 %v295, 1.442695
      %v297 = vpow.pop %v296
      %v298 = vsel %vm173, %v297, 0.0
      %299 = vadd.xlane.f32.xlu0 %v298
      %v300 = vpop.xlane.xlu0 %299
      %v301 = vrcp.pop %v300
      %v302 = vmul.f32 %v297, %v301
      %v303 = vpack.c.bf16 %v302, %v302
      %304 = vrot.lane.b32.xlu0 %v193, 96
      %v305 = vpop.permute.xlu0 %304
      %v307 = vsel %vm194, %v303, 0
      %v310 = vsel %vm198, %v305, 0
      %312 = vmatprep.subr.bf16.mxu0 0
      %313 = vmatpush1.bf16.msra.mxu0 0
      %314 = vmatprep.subr.bf16.mxu0 0
      %315 = vmatpush1.bf16.msra.mxu0 0
      %316 = vmatprep.subr.bf16.mxu0 0
      %317 = vmatpush1.bf16.msra.mxu0 0
      %318 = vmatprep.subr.bf16.mxu0 0
      %319 = vmatpush1.bf16.msra.mxu0 0
      %320 = vmatprep.subr.bf16.mxu0 0
      %321 = vmatpush1.bf16.msra.mxu0 0
      %322 = vmatprep.subr.bf16.mxu0 0
      %323 = vmatpush1.bf16.msra.mxu0 0
      %324 = vmatprep.subr.bf16.mxu0 0
      %325 = vmatpush1.bf16.msra.mxu0 0
      %326 = vmatprep.subr.bf16.mxu0 0
      %327 = vmatpush1.bf16.msra.mxu0 %v310
      %328 = vmatprep.subr.bf16.mxu0 0
      %329 = vmatpush2.bf16.msra.mxu0 0
      %330 = vmatprep.subr.bf16.mxu0 0
      %331 = vmatpush2.bf16.msra.mxu0 0
      %332 = vmatprep.subr.bf16.mxu0 0
      %333 = vmatpush2.bf16.msra.mxu0 0
      %334 = vmatprep.subr.bf16.mxu0 0
      %335 = vmatpush2.bf16.msra.mxu0 0
      %336 = vmatprep.subr.bf16.mxu0 0
      %337 = vmatpush2.bf16.msra.mxu0 0
      %338 = vmatprep.subr.bf16.mxu0 0
      %339 = vmatpush2.bf16.msra.mxu0 0
      %340 = vmatprep.subr.bf16.mxu0 0
      %341 = vmatpush2.bf16.msra.mxu0 0
      %342 = vmatprep.subr.bf16.mxu0 0
      %343 = vmatpush2.bf16.msra.mxu0 0
      %344 = vmatprep.mubr.bf16.mxu0 0
      %345 = vmatmul.mubr.bf16.gmra.mxu0 %v307
      %v346 = vpop.f32.mrf.mxu0
      %v347 = vadd.f32 0.0, %v346
      %v348 = vpop.f32.mrf.mxu0
      %v349 = vpop.f32.mrf.mxu0
      %v350 = vpop.f32.mrf.mxu0
      %351 = vdwg.mxu0
      %352 = vrot.lane.b32.xlu0 %v124, 64
      %v353 = vpop.permute.xlu0 %352
      %354 = vrot.lane.b32.xlu0 %v125, 64
      %v355 = vpop.permute.xlu0 %354
      %v357 = vsel %vm126, %v353, 0
      %v360 = vsel %vm126, %v355, 0
      %362 = vmatprep.subr.bf16.mxu0 0
      %363 = vmatpush1.bf16.xpose.msra.mxu0 0
      %364 = vmatprep.subr.bf16.mxu0 0
      %365 = vmatpush1.bf16.xpose.msra.mxu0 0
      %366 = vmatprep.subr.bf16.mxu0 0
      %367 = vmatpush1.bf16.xpose.msra.mxu0 0
      %368 = vmatprep.subr.bf16.mxu0 0
      %369 = vmatpush1.bf16.xpose.msra.mxu0 0
      %370 = vmatprep.subr.bf16.mxu0 0
      %371 = vmatpush1.bf16.xpose.msra.mxu0 0
      %372 = vmatprep.subr.bf16.mxu0 0
      %373 = vmatpush1.bf16.xpose.msra.mxu0 0
      %374 = vmatprep.subr.bf16.mxu0 0
      %375 = vmatpush1.bf16.xpose.msra.mxu0 0
      %376 = vmatprep.subr.bf16.mxu0 0
      %377 = vmatpush1.bf16.xpose.msra.mxu0 %v360
      %378 = vmatprep.subr.bf16.mxu0 0
      %379 = vmatpush2.bf16.xpose.msra.mxu0 0
      %380 = vmatprep.subr.bf16.mxu0 0
      %381 = vmatpush2.bf16.xpose.msra.mxu0 0
      %382 = vmatprep.subr.bf16.mxu0 0
      %383 = vmatpush2.bf16.xpose.msra.mxu0 0
      %384 = vmatprep.subr.bf16.mxu0 0
      %385 = vmatpush2.bf16.xpose.msra.mxu0 0
      %386 = vmatprep.subr.bf16.mxu0 0
      %387 = vmatpush2.bf16.xpose.msra.mxu0 0
      %388 = vmatprep.subr.bf16.mxu0 0
      %389 = vmatpush2.bf16.xpose.msra.mxu0 0
      %390 = vmatprep.subr.bf16.mxu0 0
      %391 = vmatpush2.bf16.xpose.msra.mxu0 0
      %392 = vmatprep.subr.bf16.mxu0 0
      %393 = vmatpush2.bf16.xpose.msra.mxu0 0
      %394 = vmatprep.mubr.bf16.mxu0 0
      %395 = vmatmul.mubr.bf16.gmra.mxu0 %v357
      %v396 = vpop.f32.mrf.mxu0
      %v397 = vadd.f32 0.0, %v396
      %v398 = vpop.f32.mrf.mxu0
      %v399 = vpop.f32.mrf.mxu0
      %v400 = vpop.f32.mrf.mxu0
      %401 = vdwg.mxu0
      %v402 = vsel %vm173, %v397, -inf
      %403 = vmax.xlane.f32.xlu0 %v402
      %v404 = vpop.xlane.xlu0 %403
      %v405 = vsub.f32 %v397, %v404
      %v406 = vmul.f32 %v405, 1.442695
      %v407 = vpow.pop %v406
      %v408 = vsel %vm173, %v407, 0.0
      %409 = vadd.xlane.f32.xlu0 %v408
      %v410 = vpop.xlane.xlu0 %409
      %v411 = vrcp.pop %v410
      %v412 = vmul.f32 %v407, %v411
      %v413 = vpack.c.bf16 %v412, %v412
      %414 = vrot.lane.b32.xlu0 %v193, 64
      %v415 = vpop.permute.xlu0 %414
      %v417 = vsel %vm194, %v413, 0
      %v420 = vsel %vm198, %v415, 0
      %422 = vmatprep.subr.bf16.mxu0 0
      %423 = vmatpush1.bf16.msra.mxu0 0
      %424 = vmatprep.subr.bf16.mxu0 0
      %425 = vmatpush1.bf16.msra.mxu0 0
      %426 = vmatprep.subr.bf16.mxu0 0
      %427 = vmatpush1.bf16.msra.mxu0 0
      %428 = vmatprep.subr.bf16.mxu0 0
      %429 = vmatpush1.bf16.msra.mxu0 0
      %430 = vmatprep.subr.bf16.mxu0 0
      %431 = vmatpush1.bf16.msra.mxu0 0
      %432 = vmatprep.subr.bf16.mxu0 0
      %433 = vmatpush1.bf16.msra.mxu0 0
      %434 = vmatprep.subr.bf16.mxu0 0
      %435 = vmatpush1.bf16.msra.mxu0 0
      %436 = vmatprep.subr.bf16.mxu0 0
      %437 = vmatpush1.bf16.msra.mxu0 %v420
      %438 = vmatprep.subr.bf16.mxu0 0
      %439 = vmatpush2.bf16.msra.mxu0 0
      %440 = vmatprep.subr.bf16.mxu0 0
      %441 = vmatpush2.bf16.msra.mxu0 0
      %442 = vmatprep.subr.bf16.mxu0 0
      %443 = vmatpush2.bf16.msra.mxu0 0
      %444 = vmatprep.subr.bf16.mxu0 0
      %445 = vmatpush2.bf16.msra.mxu0 0
      %446 = vmatprep.subr.bf16.mxu0 0
      %447 = vmatpush2.bf16.msra.mxu0 0
      %448 = vmatprep.subr.bf16.mxu0 0
      %449 = vmatpush2.bf16.msra.mxu0 0
      %450 = vmatprep.subr.bf16.mxu0 0
      %451 = vmatpush2.bf16.msra.mxu0 0
      %452 = vmatprep.subr.bf16.mxu0 0
      %453 = vmatpush2.bf16.msra.mxu0 0
      %454 = vmatprep.mubr.bf16.mxu0 0
      %455 = vmatmul.mubr.bf16.gmra.mxu0 %v417
      %v456 = vpop.f32.mrf.mxu0
      %v457 = vadd.f32 0.0, %v456
      %v458 = vpop.f32.mrf.mxu0
      %v459 = vpop.f32.mrf.mxu0
      %v460 = vpop.f32.mrf.mxu0
      %461 = vdwg.mxu0
      %462 = vrot.lane.b32.xlu0 %v124, 32
      %v463 = vpop.permute.xlu0 %462
      %464 = vrot.lane.b32.xlu0 %v125, 32
      %v465 = vpop.permute.xlu0 %464
      %v467 = vsel %vm126, %v463, 0
      %v470 = vsel %vm126, %v465, 0
      %472 = vmatprep.subr.bf16.mxu0 0
      %473 = vmatpush1.bf16.xpose.msra.mxu0 0
      %474 = vmatprep.subr.bf16.mxu0 0
      %475 = vmatpush1.bf16.xpose.msra.mxu0 0
      %476 = vmatprep.subr.bf16.mxu0 0
      %477 = vmatpush1.bf16.xpose.msra.mxu0 0
      %478 = vmatprep.subr.bf16.mxu0 0
      %479 = vmatpush1.bf16.xpose.msra.mxu0 0
      %480 = vmatprep.subr.bf16.mxu0 0
      %481 = vmatpush1.bf16.xpose.msra.mxu0 0
      %482 = vmatprep.subr.bf16.mxu0 0
      %483 = vmatpush1.bf16.xpose.msra.mxu0 0
      %484 = vmatprep.subr.bf16.mxu0 0
      %485 = vmatpush1.bf16.xpose.msra.mxu0 0
      %486 = vmatprep.subr.bf16.mxu0 0
      %487 = vmatpush1.bf16.xpose.msra.mxu0 %v470
      %488 = vmatprep.subr.bf16.mxu0 0
      %489 = vmatpush2.bf16.xpose.msra.mxu0 0
      %490 = vmatprep.subr.bf16.mxu0 0
      %491 = vmatpush2.bf16.xpose.msra.mxu0 0
      %492 = vmatprep.subr.bf16.mxu0 0
      %493 = vmatpush2.bf16.xpose.msra.mxu0 0
      %494 = vmatprep.subr.bf16.mxu0 0
      %495 = vmatpush2.bf16.xpose.msra.mxu0 0
      %496 = vmatprep.subr.bf16.mxu0 0
      %497 = vmatpush2.bf16.xpose.msra.mxu0 0
      %498 = vmatprep.subr.bf16.mxu0 0
      %499 = vmatpush2.bf16.xpose.msra.mxu0 0
      %500 = vmatprep.subr.bf16.mxu0 0
      %501 = vmatpush2.bf16.xpose.msra.mxu0 0
      %502 = vmatprep.subr.bf16.mxu0 0
      %503 = vmatpush2.bf16.xpose.msra.mxu0 0
      %504 = vmatprep.mubr.bf16.mxu0 0
      %505 = vmatmul.mubr.bf16.gmra.mxu0 %v467
      %v506 = vpop.f32.mrf.mxu0
      %v507 = vadd.f32 0.0, %v506
      %v508 = vpop.f32.mrf.mxu0
      %v509 = vpop.f32.mrf.mxu0
      %v510 = vpop.f32.mrf.mxu0
      %511 = vdwg.mxu0
      %v512 = vsel %vm173, %v507, -inf
      %513 = vmax.xlane.f32.xlu0 %v512
      %v514 = vpop.xlane.xlu0 %513
      %v515 = vsub.f32 %v507, %v514
      %v516 = vmul.f32 %v515, 1.442695
      %v517 = vpow.pop %v516
      %v518 = vsel %vm173, %v517, 0.0
      %519 = vadd.xlane.f32.xlu0 %v518
      %v520 = vpop.xlane.xlu0 %519
      %v521 = vrcp.pop %v520
      %v522 = vmul.f32 %v517, %v521
      %v523 = vpack.c.bf16 %v522, %v522
      %524 = vrot.lane.b32.xlu0 %v193, 32
      %v525 = vpop.permute.xlu0 %524
      %v527 = vsel %vm194, %v523, 0
      %v530 = vsel %vm198, %v525, 0
      %532 = vmatprep.subr.bf16.mxu0 0
      %533 = vmatpush1.bf16.msra.mxu0 0
      %534 = vmatprep.subr.bf16.mxu0 0
      %535 = vmatpush1.bf16.msra.mxu0 0
      %536 = vmatprep.subr.bf16.mxu0 0
      %537 = vmatpush1.bf16.msra.mxu0 0
      %538 = vmatprep.subr.bf16.mxu0 0
      %539 = vmatpush1.bf16.msra.mxu0 0
      %540 = vmatprep.subr.bf16.mxu0 0
      %541 = vmatpush1.bf16.msra.mxu0 0
      %542 = vmatprep.subr.bf16.mxu0 0
      %543 = vmatpush1.bf16.msra.mxu0 0
      %544 = vmatprep.subr.bf16.mxu0 0
      %545 = vmatpush1.bf16.msra.mxu0 0
      %546 = vmatprep.subr.bf16.mxu0 0
      %547 = vmatpush1.bf16.msra.mxu0 %v530
      %548 = vmatprep.subr.bf16.mxu0 0
      %549 = vmatpush2.bf16.msra.mxu0 0
      %550 = vmatprep.subr.bf16.mxu0 0
      %551 = vmatpush2.bf16.msra.mxu0 0
      %552 = vmatprep.subr.bf16.mxu0 0
      %553 = vmatpush2.bf16.msra.mxu0 0
      %554 = vmatprep.subr.bf16.mxu0 0
      %555 = vmatpush2.bf16.msra.mxu0 0
      %556 = vmatprep.subr.bf16.mxu0 0
      %557 = vmatpush2.bf16.msra.mxu0 0
      %558 = vmatprep.subr.bf16.mxu0 0
      %559 = vmatpush2.bf16.msra.mxu0 0
      %560 = vmatprep.subr.bf16.mxu0 0
      %561 = vmatpush2.bf16.msra.mxu0 0
      %562 = vmatprep.subr.bf16.mxu0 0
      %563 = vmatpush2.bf16.msra.mxu0 0
      %564 = vmatprep.mubr.bf16.mxu0 0
      %565 = vmatmul.mubr.bf16.gmra.mxu0 %v527
      %v566 = vpop.f32.mrf.mxu0
      %v567 = vadd.f32 0.0, %v566
      %v568 = vpop.f32.mrf.mxu0
      %v569 = vpop.f32.mrf.mxu0
      %v570 = vpop.f32.mrf.mxu0
      %571 = vdwg.mxu0
      %573 = vrot.lane.b32.xlu0 %v347, 32
      %v574 = vpop.permute.xlu0 %573
      %577 = vrot.lane.b32.xlu0 %v457, 64
      %v578 = vpop.permute.xlu0 %577
      %581 = vrot.lane.b32.xlu0 %v567, 96
      %v582 = vpop.permute.xlu0 %581
      %v584 = vsel %vm126, %v237, %v574
      %vm585 = vcmask 523264
      %v586 = vsel %vm585, %v584, %v578
      %vm587 = vcmask 785408
      %v588 = vsel %vm587, %v586, %v582
      %v589 = vpack.c.bf16 %v588, %v588
      %590 = vst [vmem:[%s114] sm:$0x3] %v589
      %p591 = scmp.lt.s32.totalorder %s12, 3
      %s592 = scalar_select %p591, %s12, 3
      %s593 = smul.addr %s592, 2
      %s594 = scalar_lea.vmem %s1, %s593
      // Predicated region
      $region25: #{ste_encoder_forward.16} parent=23 // pred_check
        %p595 = pneg %p56
      $region26: #{ste_encoder_forward.16} parent=23 // pred_check_branch
        %597 = sbr.rel (%p595) target = $region28
      $region27: #{ste_encoder_forward.16} parent=23 // pred_region
        _
      $region28: #{ste_encoder_forward.16} parent=23 // pred_fallthru
        _
    $region24: #{ste_encoder_forward.16} parent=5 // pred_fallthru
      _
    %p598 = scmp.le.s32.totalorder 2, %s7
    // Predicated region
    $region29: #{ste_encoder_forward.16} parent=5 // pred_check
      %p599 = pneg %p598
    $region30: #{ste_encoder_forward.16} parent=5 // pred_check_branch
      %601 = sbr.rel (%p599) target = $region32
    $region31: #{ste_encoder_forward.16} parent=5 // pred_region
      %s602 = ssub.s32 %s7, 2
      // Predicated region
      $region33: #{ste_encoder_forward.16} parent=31 // pred_check
        %p603 = pneg %p62
      $region34: #{ste_encoder_forward.16} parent=31 // pred_check_branch
        %605 = sbr.rel (%p603) target = $region36
      $region35: #{ste_encoder_forward.16} parent=31 // pred_region
        %p606 = scmp.lt.s32.totalorder %s13, 3
        %s607 = scalar_select %p606, %s13, 3
        %s608 = smul.addr %s607, 2
        %s609 = scalar_lea.vmem %s1, %s608
      $region36: #{ste_encoder_forward.16} parent=31 // pred_fallthru
        _
    $region32: #{ste_encoder_forward.16} parent=5 // pred_fallthru
      _
  $region6: #{ste_encoder_forward.16} parent=0 // loop_footer
    %s11 = sadd.s32 1, %s7
  $region7: #{ste_encoder_forward.16} parent=0 // loop_footer_branch
    %6 = sbr.rel target = $region3
  $region8: #{ste_encoder_forward.16} parent=0 // loop_exit
    _

// kernel: ste_encoder_forward.17
$region0: #{ste_encoder_forward.17}
  #allocation0 [shape = 'u32[]', space=smem, size = 0x4, offset = 0x4, fixed_abs, tag = 'smem constant byte address 0x4 - core index']
  #allocation1 [shape = 'u32[144,128]{1,0:T(1,128)}', space=vmem, size = 0x12000, scoped, tag = 'internal scratch']
  %s0 = inlined_call_operand.vmem [shape: bf16[2,8,128], index: 0, kind: input, shape index: {}]
  %s1 = inlined_call_operand.vmem [shape: bf16[2,128,128], index: 1, kind: input, shape index: {}]
  %s2 = inlined_call_operand.vmem [shape: f32[2,1,128], index: 2, kind: input, shape index: {}]
  %s3 = inlined_call_operand.vmem [shape: bf16[2,8,128], index: 3, kind: input, shape index: {}]
  %s4 = inlined_call_operand.vmem [shape: bf16[2,8,128], index: 4, kind: output, shape index: {}]
  %s5 = sld [smem:[#allocation0]]
  $region49: #{ste_encoder_forward.17} parent=0
    _
  %s7 = ssub.s32 1, %s5
  %s8 = scalar_select 0, %s7, %s5
  loop: start=0, step=1, limit=4
  $region2: #{ste_encoder_forward.17} parent=0 // loop_pre_header
    _
  $region3: #{ste_encoder_forward.17} parent=0 // loop_header
    %s10 = sphi 0, %s14
    %p11 = scmp.ge.s32.totalorder %s10, 4
    %s17 = sphi 0, %s36
    %s18 = sphi 0, %s32
    %s19 = sphi 0, %s28
    %s20 = sphi 0, %s17
    %s21 = sphi 0, %s18
    %s22 = sphi 0, %s19
    %s23 = sphi 0, %s20
    %s24 = sphi 0, %s21
    %s25 = sphi 0, %s22
    %s41 = sphi 0, %s43
    %s44 = sphi 0, %s41
    %s45 = sphi 0, %s44
    %s61 = sphi 0, %s45
    %s69 = sphi 0, %s71
    %s72 = sphi 0, %s69
    %s73 = sphi 0, %s72
    %s89 = sphi 0, %s73
    %s97 = sphi 0, %s99
    %s100 = sphi 0, %s97
    %s101 = sphi 0, %s100
    %s117 = sphi 0, %s101
    %s127 = sphi 0, %s129
    %s130 = sphi 0, %s127
    %s131 = sphi 0, %s130
    %s147 = sphi 0, %s131
    %s157 = sphi 0, %s159
    %s160 = sphi 0, %s157
    %s161 = sphi 0, %s160
    %s177 = sphi 0, %s161
  $region4: #{ste_encoder_forward.17} parent=0 // loop_header_branch
    %13 = sbr.rel (%p11) target = $region8
  $region5: #{ste_encoder_forward.17} parent=0 // loop_body
    %s15 = ssub.s32 %s10, 1
    %s16 = ssub.s32 %s10, 2
    %s26 = sadd.s32 1, %s19
    %p27 = scmp.ge.s32.totalorder %s26, 1
    %s28 = scalar_select %p27, 0, %s26
    %s29 = sadd.s32 1, %s18
    %s30 = scalar_select %p27, %s29, %s18
    %p31 = scmp.ge.s32.totalorder %s30, 1
    %s32 = scalar_select %p31, 0, %s30
    %s33 = sadd.s32 1, %s17
    %s34 = scalar_select %p31, %s33, %s17
    %p35 = scmp.ge.s32.totalorder %s34, 2
    %s36 = scalar_select %p35, 0, %s34
    %s37 = ssub.s32 %s17, %s36
    %s38 = ssub.s32 %s18, %s32
    %s39 = sor.u32 %s37, %s38
    %p40 = scmp.eq.s32.totalorder %s39, 0
    %s42 = sadd.s32 %s41, 1
    %s43 = scalar_select %p40, %s41, %s42
    %p46 = pneg %p40
    %p47 = scmp.eq.s32.totalorder %s10, 1
    %p48 = por %p46, %p47
    %p49 = scmp.ne.s32.totalorder %s41, %s44
    %p50 = scmp.eq.s32.totalorder %s10, 0
    %p51 = por %p49, %p50
    %p52 = scmp.ne.s32.totalorder %s41, %s44
    %p53 = scmp.eq.s32.totalorder %s15, 1
    %p54 = por %p52, %p53
    %p55 = scmp.ne.s32.totalorder %s44, %s45
    %p56 = scmp.eq.s32.totalorder %s15, 0
    %p57 = por %p55, %p56
    %p58 = scmp.ne.s32.totalorder %s44, %s45
    %p59 = scmp.eq.s32.totalorder %s16, 1
    %p60 = por %p58, %p59
    %p62 = scmp.ne.s32.totalorder %s45, %s61
    %p63 = scmp.eq.s32.totalorder %s16, 0
    %p64 = por %p62, %p63
    %s65 = ssub.s32 %s17, %s36
    %s66 = ssub.s32 %s19, %s28
    %s67 = sor.u32 %s65, %s66
    %p68 = scmp.eq.s32.totalorder %s67, 0
    %s70 = sadd.s32 %s69, 1
    %s71 = scalar_select %p68, %s69, %s70
    %p74 = pneg %p68
    %p75 = scmp.eq.s32.totalorder %s10, 1
    %p76 = por %p74, %p75
    %p77 = scmp.ne.s32.totalorder %s69, %s72
    %p78 = scmp.eq.s32.totalorder %s10, 0
    %p79 = por %p77, %p78
    %p80 = scmp.ne.s32.totalorder %s69, %s72
    %p81 = scmp.eq.s32.totalorder %s15, 1
    %p82 = por %p80, %p81
    %p83 = scmp.ne.s32.totalorder %s72, %s73
    %p84 = scmp.eq.s32.totalorder %s15, 0
    %p85 = por %p83, %p84
    %p86 = scmp.ne.s32.totalorder %s72, %s73
    %p87 = scmp.eq.s32.totalorder %s16, 1
    %p88 = por %p86, %p87
    %p90 = scmp.ne.s32.totalorder %s73, %s89
    %p91 = scmp.eq.s32.totalorder %s16, 0
    %p92 = por %p90, %p91
    %s93 = ssub.s32 %s17, %s36
    %s94 = ssub.s32 %s19, %s28
    %s95 = sor.u32 %s93, %s94
    %p96 = scmp.eq.s32.totalorder %s95, 0
    %s98 = sadd.s32 %s97, 1
    %s99 = scalar_select %p96, %s97, %s98
    %p102 = pneg %p96
    %p103 = scmp.eq.s32.totalorder %s10, 1
    %p104 = por %p102, %p103
    %p105 = scmp.ne.s32.totalorder %s97, %s100
    %p106 = scmp.eq.s32.totalorder %s10, 0
    %p107 = por %p105, %p106
    %p108 = scmp.ne.s32.totalorder %s97, %s100
    %p109 = scmp.eq.s32.totalorder %s15, 1
    %p110 = por %p108, %p109
    %p111 = scmp.ne.s32.totalorder %s100, %s101
    %p112 = scmp.eq.s32.totalorder %s15, 0
    %p113 = por %p111, %p112
    %p114 = scmp.ne.s32.totalorder %s100, %s101
    %p115 = scmp.eq.s32.totalorder %s16, 1
    %p116 = por %p114, %p115
    %p118 = scmp.ne.s32.totalorder %s101, %s117
    %p119 = scmp.eq.s32.totalorder %s16, 0
    %p120 = por %p118, %p119
    %s121 = ssub.s32 %s17, %s36
    %s122 = ssub.s32 %s18, %s32
    %s123 = sor.u32 %s121, %s122
    %s124 = ssub.s32 %s19, %s28
    %s125 = sor.u32 %s123, %s124
    %p126 = scmp.eq.s32.totalorder %s125, 0
    %s128 = sadd.s32 %s127, 1
    %s129 = scalar_select %p126, %s127, %s128
    %p132 = pneg %p126
    %p133 = scmp.eq.s32.totalorder %s10, 1
    %p134 = por %p132, %p133
    %p135 = scmp.ne.s32.totalorder %s127, %s130
    %p136 = scmp.eq.s32.totalorder %s10, 0
    %p137 = por %p135, %p136
    %p138 = scmp.ne.s32.totalorder %s127, %s130
    %p139 = scmp.eq.s32.totalorder %s15, 1
    %p140 = por %p138, %p139
    %p141 = scmp.ne.s32.totalorder %s130, %s131
    %p142 = scmp.eq.s32.totalorder %s15, 0
    %p143 = por %p141, %p142
    %p144 = scmp.ne.s32.totalorder %s130, %s131
    %p145 = scmp.eq.s32.totalorder %s16, 1
    %p146 = por %p144, %p145
    %p148 = scmp.ne.s32.totalorder %s131, %s147
    %p149 = scmp.eq.s32.totalorder %s16, 0
    %p150 = por %p148, %p149
    %s151 = ssub.s32 %s17, %s36
    %s152 = ssub.s32 %s18, %s32
    %s153 = sor.u32 %s151, %s152
    %s154 = ssub.s32 %s19, %s28
    %s155 = sor.u32 %s153, %s154
    %p156 = scmp.eq.s32.totalorder %s155, 0
    %s158 = sadd.s32 %s157, 1
    %s159 = scalar_select %p156, %s157, %s158
    %p162 = pneg %p156
    %p163 = scmp.eq.s32.totalorder %s10, 1
    %p164 = por %p162, %p163
    %p165 = scmp.ne.s32.totalorder %s157, %s160
    %p166 = scmp.eq.s32.totalorder %s10, 0
    %p167 = por %p165, %p166
    %p168 = scmp.ne.s32.totalorder %s157, %s160
    %p169 = scmp.eq.s32.totalorder %s15, 1
    %p170 = por %p168, %p169
    %p171 = scmp.ne.s32.totalorder %s160, %s161
    %p172 = scmp.eq.s32.totalorder %s15, 0
    %p173 = por %p171, %p172
    %p174 = scmp.ne.s32.totalorder %s160, %s161
    %p175 = scmp.eq.s32.totalorder %s16, 1
    %p176 = por %p174, %p175
    %p178 = scmp.ne.s32.totalorder %s161, %s177
    %p179 = scmp.eq.s32.totalorder %s16, 0
    %p180 = por %p178, %p179
    %p181 = scmp.le.s32.totalorder 1, %s10
    %p182 = scmp.lt.s32.totalorder %s10, 3
    %p183 = pnand %p181, %p182
    %p184 = pneg %p183
    // Predicated region
    $region9: #{ste_encoder_forward.17} parent=5 // pred_check
      _
    $region10: #{ste_encoder_forward.17} parent=5 // pred_check_branch
      %186 = sbr.rel (%p183) target = $region12
    $region11: #{ste_encoder_forward.17} parent=5 // pred_region
      %s187 = ssub.s32 %s10, 1
    $region12: #{ste_encoder_forward.17} parent=5 // pred_fallthru
      _
    %p188 = scmp.lt.s32.totalorder %s10, 2
    // Predicated region
    $region13: #{ste_encoder_forward.17} parent=5 // pred_check
      %p189 = pneg %p188
    $region14: #{ste_encoder_forward.17} parent=5 // pred_check_branch
      %191 = sbr.rel (%p189) target = $region16
    $region15: #{ste_encoder_forward.17} parent=5 // pred_region
      // Predicated region
      $region17: #{ste_encoder_forward.17} parent=15 // pred_check
        %p192 = pneg %p51
      $region18: #{ste_encoder_forward.17} parent=15 // pred_check_branch
        %194 = sbr.rel (%p192) target = $region20
      $region19: #{ste_encoder_forward.17} parent=15 // pred_region
        %p195 = scmp.lt.s32.totalorder %s17, 1
        %s196 = scalar_select %p195, %s17, 1
        %p197 = scmp.lt.s32.totalorder %s18, 0
        %s198 = scalar_select %p197, %s18, 0
        %s199 = sadd.s32 %s198, %s196
        %s200 = smul.addr %s199, 4
        %s201 = scalar_lea.vmem %s0, %s200
      $region20: #{ste_encoder_forward.17} parent=15 // pred_fallthru
        _
      // Predicated region
      $region21: #{ste_encoder_forward.17} parent=15 // pred_check
        %p202 = pneg %p79
      $region22: #{ste_encoder_forward.17} parent=15 // pred_check_branch
        %204 = sbr.rel (%p202) target = $region24
      $region23: #{ste_encoder_forward.17} parent=15 // pred_region
        %p205 = scmp.lt.s32.totalorder %s17, 1
        %s206 = scalar_select %p205, %s17, 1
        %p207 = scmp.lt.s32.totalorder %s19, 0
        %s208 = scalar_select %p207, %s19, 0
        %s209 = smul.addr %s206, 16
        %s210 = sadd.s32 %s208, %s209
        %s211 = smul.addr %s210, 4
        %s212 = scalar_lea.vmem %s1, %s211
      $region24: #{ste_encoder_forward.17} parent=15 // pred_fallthru
        _
      // Predicated region
      $region25: #{ste_encoder_forward.17} parent=15 // pred_check
        %p213 = pneg %p107
      $region26: #{ste_encoder_forward.17} parent=15 // pred_check_branch
        %215 = sbr.rel (%p213) target = $region28
      $region27: #{ste_encoder_forward.17} parent=15 // pred_region
        %p216 = scmp.lt.s32.totalorder %s17, 1
        %s217 = scalar_select %p216, %s17, 1
        %p218 = scmp.lt.s32.totalorder %s19, 0
        %s219 = scalar_select %p218, %s19, 0
        %s220 = sadd.s32 %s219, %s217
        %s221 = scalar_lea.vmem %s2, %s220
      $region28: #{ste_encoder_forward.17} parent=15 // pred_fallthru
        _
      // Predicated region
      $region29: #{ste_encoder_forward.17} parent=15 // pred_check
        %p222 = pneg %p137
      $region30: #{ste_encoder_forward.17} parent=15 // pred_check_branch
        %224 = sbr.rel (%p222) target = $region32
      $region31: #{ste_encoder_forward.17} parent=15 // pred_region
        %p225 = scmp.lt.s32.totalorder %s17, 1
        %s226 = scalar_select %p225, %s17, 1
        %p227 = scmp.lt.s32.totalorder %s18, 0
        %s228 = scalar_select %p227, %s18, 0
        %p229 = scmp.lt.s32.totalorder %s19, 0
        %s230 = scalar_select %p229, %s19, 0
        %s231 = sadd.s32 %s230, %s228
        %s232 = sadd.s32 %s231, %s226
        %s233 = smul.addr %s232, 4
        %s234 = scalar_lea.vmem %s3, %s233
      $region32: #{ste_encoder_forward.17} parent=15 // pred_fallthru
        _
    $region16: #{ste_encoder_forward.17} parent=5 // pred_fallthru
      _
    %p235 = scmp.le.s32.totalorder 1, %s10
    %p236 = scmp.lt.s32.totalorder %s10, 3
    %p237 = pnand %p235, %p236
    %p238 = pneg %p237
    // Predicated region
    $region33: #{ste_encoder_forward.17} parent=5 // pred_check
      _
    $region34: #{ste_encoder_forward.17} parent=5 // pred_check_branch
      %240 = sbr.rel (%p237) target = $region36
    $region35: #{ste_encoder_forward.17} parent=5 // pred_region
      %s241 = ssub.s32 %s10, 1
      %p242 = scmp.lt.s32.totalorder %s20, 1
      %s243 = scalar_select %p242, %s20, 1
      %p244 = scmp.lt.s32.totalorder %s21, 0
      %s245 = scalar_select %p244, %s21, 0
      %s246 = sadd.s32 %s245, %s243
      %s247 = smul.addr %s246, 4
      %s248 = scalar_lea.vmem %s0, %s247
      %p249 = pneg %p57
      %p250 = pneg %p54
      %p251 = scmp.lt.s32.totalorder %s20, 1
      %s252 = scalar_select %p251, %s20, 1
      %p253 = scmp.lt.s32.totalorder %s22, 0
      %s254 = scalar_select %p253, %s22, 0
      %s255 = smul.addr %s252, 16
      %s256 = sadd.s32 %s254, %s255
      %s257 = smul.addr %s256, 4
      %s258 = scalar_lea.vmem %s1, %s257
      %p259 = pneg %p85
      %p260 = pneg %p82
      %p261 = scmp.lt.s32.totalorder %s20, 1
      %s262 = scalar_select %p261, %s20, 1
      %p263 = scmp.lt.s32.totalorder %s22, 0
      %s264 = scalar_select %p263, %s22, 0
      %s265 = sadd.s32 %s264, %s262
      %s266 = scalar_lea.vmem %s2, %s265
      %p267 = pneg %p113
      %p268 = pneg %p110
      %p269 = scmp.lt.s32.totalorder %s20, 1
      %s270 = scalar_select %p269, %s20, 1
      %p271 = scmp.lt.s32.totalorder %s21, 0
      %s272 = scalar_select %p271, %s21, 0
      %p273 = scmp.lt.s32.totalorder %s22, 0
      %s274 = scalar_select %p273, %s22, 0
      %s275 = sadd.s32 %s274, %s272
      %s276 = sadd.s32 %s275, %s270
      %s277 = smul.addr %s276, 4
      %s278 = scalar_lea.vmem %s3, %s277
      %p279 = pneg %p143
      %p280 = pneg %p140
      %p281 = pneg %p173
      %p282 = pneg %p170
      %p283 = scmp.lt.s32.totalorder %s20, 1
      %s284 = scalar_select %p283, %s20, 1
      %p285 = scmp.lt.s32.totalorder %s21, 0
      %s286 = scalar_select %p285, %s21, 0
      %p287 = scmp.lt.s32.totalorder %s22, 0
      %s288 = scalar_select %p287, %s22, 0
      %s289 = sadd.s32 %s288, %s286
      %s290 = sadd.s32 %s289, %s284
      %s291 = smul.addr %s290, 4
      %s292 = scalar_lea.vmem %s4, %s291
      %p293 = scmp.lt.s32.totalorder %s20, 1
      %s294 = scalar_select %p293, %s20, 1
      %p295 = scmp.lt.s32.totalorder %s21, 0
      %s296 = scalar_select %p295, %s21, 0
      %s297 = sadd.s32 %s296, %s294
      %s298 = smul.addr %s297, 4
      %s299 = scalar_lea.vmem %s0, %s298
      %p300 = scmp.lt.s32.totalorder %s20, 1
      %s301 = scalar_select %p300, %s20, 1
      %p302 = scmp.lt.s32.totalorder %s22, 0
      %s303 = scalar_select %p302, %s22, 0
      %s304 = smul.addr %s301, 16
      %s305 = sadd.s32 %s303, %s304
      %s306 = smul.addr %s305, 4
      %s307 = scalar_lea.vmem %s1, %s306
      %p308 = scmp.lt.s32.totalorder %s20, 1
      %s309 = scalar_select %p308, %s20, 1
      %p310 = scmp.lt.s32.totalorder %s22, 0
      %s311 = scalar_select %p310, %s22, 0
      %s312 = sadd.s32 %s311, %s309
      %s313 = scalar_lea.vmem %s2, %s312
      %p314 = scmp.lt.s32.totalorder %s20, 1
      %s315 = scalar_select %p314, %s20, 1
      %p316 = scmp.lt.s32.totalorder %s21, 0
      %s317 = scalar_select %p316, %s21, 0
      %p318 = scmp.lt.s32.totalorder %s22, 0
      %s319 = scalar_select %p318, %s22, 0
      %s320 = sadd.s32 %s319, %s317
      %s321 = sadd.s32 %s320, %s315
      %s322 = smul.addr %s321, 4
      %s323 = scalar_lea.vmem %s3, %s322
      %p324 = scmp.lt.s32.totalorder %s20, 1
      %s325 = scalar_select %p324, %s20, 1
      %p326 = scmp.lt.s32.totalorder %s21, 0
      %s327 = scalar_select %p326, %s21, 0
      %p328 = scmp.lt.s32.totalorder %s22, 0
      %s329 = scalar_select %p328, %s22, 0
      %s330 = sadd.s32 %s329, %s327
      %s331 = sadd.s32 %s330, %s325
      %s332 = smul.addr %s331, 4
      %s333 = scalar_lea.vmem %s4, %s332
      %v335 = vld [vmem:[%s299] sm:$0xf]
      %v336 = vld [vmem:[%s307] sm:$0xf]
      %v337 = vld [vmem:[%s307 + $0x4] sm:$0xf]
      %v338 = vld [vmem:[%s307 + $0x8] sm:$0xf]
      %v339 = vld [vmem:[%s307 + $0xc] sm:$0xf]
      %v340 = vld [vmem:[%s307 + $0x10] sm:$0xf]
      %v341 = vld [vmem:[%s307 + $0x14] sm:$0xf]
      %v342 = vld [vmem:[%s307 + $0x18] sm:$0xf]
      %v343 = vld [vmem:[%s307 + $0x1c] sm:$0xf]
      %v344 = vld [vmem:[%s307 + $0x20] sm:$0xf]
      %v345 = vld [vmem:[%s307 + $0x24] sm:$0xf]
      %v346 = vld [vmem:[%s307 + $0x28] sm:$0xf]
      %v347 = vld [vmem:[%s307 + $0x2c] sm:$0xf]
      %v348 = vld [vmem:[%s307 + $0x30] sm:$0xf]
      %v349 = vld [vmem:[%s307 + $0x34] sm:$0xf]
      %v350 = vld [vmem:[%s307 + $0x38] sm:$0xf]
      %v351 = vld [vmem:[%s307 + $0x3c] sm:$0xf]
      %v352 = vld [vmem:[%s313] sm:$0x1]
      %v354 = vlaneseq
      %v355 = vshrl.u32 %v354, 7
      %v356 = vsub.s32 0, %v355
      %v357 = vrot.slane %v352, %v356
      %v375 = vunpack.c.l.b16 %v336
      %v376 = vunpack.c.l.b16 %v337
      %v377 = vunpack.c.l.b16 %v338
      %v378 = vunpack.c.l.b16 %v339
      %v379 = vunpack.c.l.b16 %v340
      %v380 = vunpack.c.l.b16 %v341
      %v381 = vunpack.c.l.b16 %v342
      %v382 = vunpack.c.l.b16 %v343
      %v383 = vunpack.c.l.b16 %v344
      %v384 = vunpack.c.l.b16 %v345
      %v385 = vunpack.c.l.b16 %v346
      %v386 = vunpack.c.l.b16 %v347
      %v387 = vunpack.c.l.b16 %v348
      %v388 = vunpack.c.l.b16 %v349
      %v389 = vunpack.c.l.b16 %v350
      %v390 = vunpack.c.l.b16 %v351
      %v391 = vpack.c.b16 %v376, %v375
      %v392 = vpack.c.b16 %v378, %v377
      %v393 = vpack.c.b16 %v380, %v379
      %v394 = vpack.c.b16 %v382, %v381
      %v395 = vpack.c.b16 %v384, %v383
      %v396 = vpack.c.b16 %v386, %v385
      %v397 = vpack.c.b16 %v388, %v387
      %v398 = vpack.c.b16 %v390, %v389
      %407 = vmatprep.subr.bf16.mxu0 0
      %408 = vmatpush1.bf16.msra.mxu0 %v398
      %409 = vmatprep.subr.bf16.mxu0 0
      %410 = vmatpush1.bf16.msra.mxu0 %v397
      %411 = vmatprep.subr.bf16.mxu0 0
      %412 = vmatpush1.bf16.msra.mxu0 %v396
      %413 = vmatprep.subr.bf16.mxu0 0
      %414 = vmatpush1.bf16.msra.mxu0 %v395
      %415 = vmatprep.subr.bf16.mxu0 0
      %416 = vmatpush1.bf16.msra.mxu0 %v394
      %417 = vmatprep.subr.bf16.mxu0 0
      %418 = vmatpush1.bf16.msra.mxu0 %v393
      %419 = vmatprep.subr.bf16.mxu0 0
      %420 = vmatpush1.bf16.msra.mxu0 %v392
      %421 = vmatprep.subr.bf16.mxu0 0
      %422 = vmatpush1.bf16.msra.mxu0 %v391
      %423 = vmatprep.subr.bf16.mxu0 0
      %424 = vmatpush2.bf16.msra.mxu0 0
      %425 = vmatprep.subr.bf16.mxu0 0
      %426 = vmatpush2.bf16.msra.mxu0 0
      %427 = vmatprep.subr.bf16.mxu0 0
      %428 = vmatpush2.bf16.msra.mxu0 0
      %429 = vmatprep.subr.bf16.mxu0 0
      %430 = vmatpush2.bf16.msra.mxu0 0
      %431 = vmatprep.subr.bf16.mxu0 0
      %432 = vmatpush2.bf16.msra.mxu0 0
      %433 = vmatprep.subr.bf16.mxu0 0
      %434 = vmatpush2.bf16.msra.mxu0 0
      %435 = vmatprep.subr.bf16.mxu0 0
      %436 = vmatpush2.bf16.msra.mxu0 0
      %437 = vmatprep.subr.bf16.mxu0 0
      %438 = vmatpush2.bf16.msra.mxu0 0
      %439 = vmatprep.mubr.bf16.mxu0 0
      %440 = vmatmul.mubr.bf16.gmra.mxu0 %v335
      %v441 = vpop.f32.mrf.mxu0
      %v442 = vadd.f32 %v357, %v441
      %v443 = vpop.f32.mrf.mxu0
      %v444 = vpop.f32.mrf.mxu0
      %v445 = vpop.f32.mrf.mxu0
      %446 = vdwg.mxu0
      %v447 = vld [vmem:[%s323] sm:$0xf]
      %v448 = vunpack.c.l.bf16 %v447
      %v449 = vadd.f32 %v442, %v448
      %v450 = vpack.c.bf16 %v449, %v449
      %451 = vst [vmem:[%s333] sm:$0xf] %v450
      %p452 = scmp.lt.s32.totalorder %s20, 1
      %s453 = scalar_select %p452, %s20, 1
      %p454 = scmp.lt.s32.totalorder %s21, 0
      %s455 = scalar_select %p454, %s21, 0
      %p456 = scmp.lt.s32.totalorder %s22, 0
      %s457 = scalar_select %p456, %s22, 0
      %s458 = sadd.s32 %s457, %s455
      %s459 = sadd.s32 %s458, %s453
      %s460 = smul.addr %s459, 4
      %s461 = scalar_lea.vmem %s4, %s460
      // Predicated region
      $region37: #{ste_encoder_forward.17} parent=35 // pred_check
        %p462 = pneg %p170
      $region38: #{ste_encoder_forward.17} parent=35 // pred_check_branch
        %464 = sbr.rel (%p462) target = $region40
      $region39: #{ste_encoder_forward.17} parent=35 // pred_region
        _
      $region40: #{ste_encoder_forward.17} parent=35 // pred_fallthru
        _
    $region36: #{ste_encoder_forward.17} parent=5 // pred_fallthru
      _
    %p465 = scmp.le.s32.totalorder 2, %s10
    // Predicated region
    $region41: #{ste_encoder_forward.17} parent=5 // pred_check
      %p466 = pneg %p465
    $region42: #{ste_encoder_forward.17} parent=5 // pred_check_branch
      %468 = sbr.rel (%p466) target = $region44
    $region43: #{ste_encoder_forward.17} parent=5 // pred_region
      %s469 = ssub.s32 %s10, 2
      // Predicated region
      $region45: #{ste_encoder_forward.17} parent=43 // pred_check
        %p470 = pneg %p176
      $region46: #{ste_encoder_forward.17} parent=43 // pred_check_branch
        %472 = sbr.rel (%p470) target = $region48
      $region47: #{ste_encoder_forward.17} parent=43 // pred_region
        %p473 = scmp.lt.s32.totalorder %s23, 1
        %s474 = scalar_select %p473, %s23, 1
        %p475 = scmp.lt.s32.totalorder %s24, 0
        %s476 = scalar_select %p475, %s24, 0
        %p477 = scmp.lt.s32.totalorder %s25, 0
        %s478 = scalar_select %p477, %s25, 0
        %s479 = sadd.s32 %s478, %s476
        %s480 = sadd.s32 %s479, %s474
        %s481 = smul.addr %s480, 4
        %s482 = scalar_lea.vmem %s4, %s481
      $region48: #{ste_encoder_forward.17} parent=43 // pred_fallthru
        _
    $region44: #{ste_encoder_forward.17} parent=5 // pred_fallthru
      _
  $region6: #{ste_encoder_forward.17} parent=0 // loop_footer
    %s14 = sadd.s32 1, %s10
  $region7: #{ste_encoder_forward.17} parent=0 // loop_footer_branch
    %9 = sbr.rel target = $region3
  $region8: #{ste_encoder_forward.17} parent=0 // loop_exit
    _

// kernel: ste_encoder_forward.18
$region0: #{ste_encoder_forward.18}
  #allocation0 [shape = 'u32[]', space=smem, size = 0x4, offset = 0x4, fixed_abs, tag = 'smem constant byte address 0x4 - core index']
  #allocation1 [shape = 'u32[144,128]{1,0:T(1,128)}', space=vmem, size = 0x12000, scoped, tag = 'internal scratch']
  #allocation2 [shape = 'bf16[8,128]{1,0:T(8,128)(2,1)}', space=vmem, size = 0x800, scoped, tag = 'scratch operand']
  %s0 = inlined_call_operand.vmem [shape: bf16[2,8,128], index: 0, kind: input, shape index: {}]
  %s1 = inlined_call_operand.vmem [shape: bf16[2,128,384], index: 1, kind: input, shape index: {}]
  %s2 = inlined_call_operand.vmem [shape: f32[2,1,128], index: 2, kind: input, shape index: {}]
  %s3 = inlined_call_operand.vmem [shape: f32[2,1,128], index: 3, kind: input, shape index: {}]
  %s4 = inlined_call_operand.vmem [shape: f32[2,1,384], index: 4, kind: input, shape index: {}]
  %s5 = inlined_call_operand.vmem [shape: bf16[2,8,384], index: 5, kind: output, shape index: {}]
  %s6 = sld [smem:[#allocation0]]
  $region98: #{ste_encoder_forward.18} parent=0
    _
  %s8 = ssub.s32 1, %s6
  %s9 = scalar_select 0, %s8, %s6
  $region1: #{ste_encoder_forward.18} parent=0
    #allocation3 [shape = 'u8[65536]{0}', space=vmem, size = 0x10000, scoped, tag = 'input window, operand 1']
    loop: start=0, step=1, limit=8
    $region2: #{ste_encoder_forward.18} parent=1 // loop_pre_header
      _
    $region3: #{ste_encoder_forward.18} parent=1 // loop_header
      %s11 = sphi 0, %s15
      %p12 = scmp.ge.s32.totalorder %s11, 8
      %s18 = sphi 0, %s37
      %s19 = sphi 0, %s33
      %s20 = sphi 0, %s29
      %s21 = sphi 0, %s18
      %s22 = sphi 0, %s19
      %s23 = sphi 0, %s20
      %s24 = sphi 0, %s21
      %s25 = sphi 0, %s22
      %s26 = sphi 0, %s23
      %s42 = sphi 0, %s44
      %s45 = sphi 0, %s42
      %s46 = sphi 0, %s45
      %s62 = sphi 0, %s46
      %s70 = sphi 0, %s72
      %s73 = sphi 0, %s70
      %s74 = sphi 0, %s73
      %s90 = sphi 0, %s74
      %s96 = sphi 0, %s98
      %s99 = sphi 0, %s96
      %s100 = sphi 0, %s99
      %s116 = sphi 0, %s100
      %s122 = sphi 0, %s124
      %s125 = sphi 0, %s122
      %s126 = sphi 0, %s125
      %s142 = sphi 0, %s126
      %s150 = sphi 0, %s152
      %s153 = sphi 0, %s150
      %s154 = sphi 0, %s153
      %s170 = sphi 0, %s154
      %s180 = sphi 0, %s182
      %s183 = sphi 0, %s180
      %s184 = sphi 0, %s183
      %s200 = sphi 0, %s184
    $region4: #{ste_encoder_forward.18} parent=1 // loop_header_branch
      %14 = sbr.rel (%p12) target = $region8
    $region5: #{ste_encoder_forward.18} parent=1 // loop_body
      %s16 = ssub.s32 %s11, 1
      %s17 = ssub.s32 %s11, 2
      %s27 = sadd.s32 1, %s20
      %p28 = scmp.ge.s32.totalorder %s27, 3
      %s29 = scalar_select %p28, 0, %s27
      %s30 = sadd.s32 1, %s19
      %s31 = scalar_select %p28, %s30, %s19
      %p32 = scmp.ge.s32.totalorder %s31, 1
      %s33 = scalar_select %p32, 0, %s31
      %s34 = sadd.s32 1, %s18
      %s35 = scalar_select %p32, %s34, %s18
      %p36 = scmp.ge.s32.totalorder %s35, 2
      %s37 = scalar_select %p36, 0, %s35
      %s38 = ssub.s32 %s18, %s37
      %s39 = ssub.s32 %s19, %s33
      %s40 = sor.u32 %s38, %s39
      %p41 = scmp.eq.s32.totalorder %s40, 0
      %s43 = sadd.s32 %s42, 1
      %s44 = scalar_select %p41, %s42, %s43
      %p47 = pneg %p41
      %p48 = scmp.eq.s32.totalorder %s11, 5
      %p49 = por %p47, %p48
      %p50 = scmp.ne.s32.totalorder %s42, %s45
      %p51 = scmp.eq.s32.totalorder %s11, 0
      %p52 = por %p50, %p51
      %p53 = scmp.ne.s32.totalorder %s42, %s45
      %p54 = scmp.eq.s32.totalorder %s16, 5
      %p55 = por %p53, %p54
      %p56 = scmp.ne.s32.totalorder %s45, %s46
      %p57 = scmp.eq.s32.totalorder %s16, 0
      %p58 = por %p56, %p57
      %p59 = scmp.ne.s32.totalorder %s45, %s46
      %p60 = scmp.eq.s32.totalorder %s17, 5
      %p61 = por %p59, %p60
      %p63 = scmp.ne.s32.totalorder %s46, %s62
      %p64 = scmp.eq.s32.totalorder %s17, 0
      %p65 = por %p63, %p64
      %s66 = ssub.s32 %s18, %s37
      %s67 = ssub.s32 %s20, %s29
      %s68 = sor.u32 %s66, %s67
      %p69 = scmp.eq.s32.totalorder %s68, 0
      %s71 = sadd.s32 %s70, 1
      %s72 = scalar_select %p69, %s70, %s71
      %p75 = pneg %p69
      %p76 = scmp.eq.s32.totalorder %s11, 5
      %p77 = por %p75, %p76
      %p78 = scmp.ne.s32.totalorder %s70, %s73
      %p79 = scmp.eq.s32.totalorder %s11, 0
      %p80 = por %p78, %p79
      %p81 = scmp.ne.s32.totalorder %s70, %s73
      %p82 = scmp.eq.s32.totalorder %s16, 5
      %p83 = por %p81, %p82
      %p84 = scmp.ne.s32.totalorder %s73, %s74
      %p85 = scmp.eq.s32.totalorder %s16, 0
      %p86 = por %p84, %p85
      %p87 = scmp.ne.s32.totalorder %s73, %s74
      %p88 = scmp.eq.s32.totalorder %s17, 5
      %p89 = por %p87, %p88
      %p91 = scmp.ne.s32.totalorder %s74, %s90
      %p92 = scmp.eq.s32.totalorder %s17, 0
      %p93 = por %p91, %p92
      %s94 = ssub.s32 %s18, %s37
      %p95 = scmp.eq.s32.totalorder %s94, 0
      %s97 = sadd.s32 %s96, 1
      %s98 = scalar_select %p95, %s96, %s97
      %p101 = pneg %p95
      %p102 = scmp.eq.s32.totalorder %s11, 5
      %p103 = por %p101, %p102
      %p104 = scmp.ne.s32.totalorder %s96, %s99
      %p105 = scmp.eq.s32.totalorder %s11, 0
      %p106 = por %p104, %p105
      %p107 = scmp.ne.s32.totalorder %s96, %s99
      %p108 = scmp.eq.s32.totalorder %s16, 5
      %p109 = por %p107, %p108
      %p110 = scmp.ne.s32.totalorder %s99, %s100
      %p111 = scmp.eq.s32.totalorder %s16, 0
      %p112 = por %p110, %p111
      %p113 = scmp.ne.s32.totalorder %s99, %s100
      %p114 = scmp.eq.s32.totalorder %s17, 5
      %p115 = por %p113, %p114
      %p117 = scmp.ne.s32.totalorder %s100, %s116
      %p118 = scmp.eq.s32.totalorder %s17, 0
      %p119 = por %p117, %p118
      %s120 = ssub.s32 %s18, %s37
      %p121 = scmp.eq.s32.totalorder %s120, 0
      %s123 = sadd.s32 %s122, 1
      %s124 = scalar_select %p121, %s122, %s123
      %p127 = pneg %p121
      %p128 = scmp.eq.s32.totalorder %s11, 5
      %p129 = por %p127, %p128
      %p130 = scmp.ne.s32.totalorder %s122, %s125
      %p131 = scmp.eq.s32.totalorder %s11, 0
      %p132 = por %p130, %p131
      %p133 = scmp.ne.s32.totalorder %s122, %s125
      %p134 = scmp.eq.s32.totalorder %s16, 5
      %p135 = por %p133, %p134
      %p136 = scmp.ne.s32.totalorder %s125, %s126
      %p137 = scmp.eq.s32.totalorder %s16, 0
      %p138 = por %p136, %p137
      %p139 = scmp.ne.s32.totalorder %s125, %s126
      %p140 = scmp.eq.s32.totalorder %s17, 5
      %p141 = por %p139, %p140
      %p143 = scmp.ne.s32.totalorder %s126, %s142
      %p144 = scmp.eq.s32.totalorder %s17, 0
      %p145 = por %p143, %p144
      %s146 = ssub.s32 %s18, %s37
      %s147 = ssub.s32 %s20, %s29
      %s148 = sor.u32 %s146, %s147
      %p149 = scmp.eq.s32.totalorder %s148, 0
      %s151 = sadd.s32 %s150, 1
      %s152 = scalar_select %p149, %s150, %s151
      %p155 = pneg %p149
      %p156 = scmp.eq.s32.totalorder %s11, 5
      %p157 = por %p155, %p156
      %p158 = scmp.ne.s32.totalorder %s150, %s153
      %p159 = scmp.eq.s32.totalorder %s11, 0
      %p160 = por %p158, %p159
      %p161 = scmp.ne.s32.totalorder %s150, %s153
      %p162 = scmp.eq.s32.totalorder %s16, 5
      %p163 = por %p161, %p162
      %p164 = scmp.ne.s32.totalorder %s153, %s154
      %p165 = scmp.eq.s32.totalorder %s16, 0
      %p166 = por %p164, %p165
      %p167 = scmp.ne.s32.totalorder %s153, %s154
      %p168 = scmp.eq.s32.totalorder %s17, 5
      %p169 = por %p167, %p168
      %p171 = scmp.ne.s32.totalorder %s154, %s170
      %p172 = scmp.eq.s32.totalorder %s17, 0
      %p173 = por %p171, %p172
      %s174 = ssub.s32 %s18, %s37
      %s175 = ssub.s32 %s19, %s33
      %s176 = sor.u32 %s174, %s175
      %s177 = ssub.s32 %s20, %s29
      %s178 = sor.u32 %s176, %s177
      %p179 = scmp.eq.s32.totalorder %s178, 0
      %s181 = sadd.s32 %s180, 1
      %s182 = scalar_select %p179, %s180, %s181
      %p185 = pneg %p179
      %p186 = scmp.eq.s32.totalorder %s11, 5
      %p187 = por %p185, %p186
      %p188 = scmp.ne.s32.totalorder %s180, %s183
      %p189 = scmp.eq.s32.totalorder %s11, 0
      %p190 = por %p188, %p189
      %p191 = scmp.ne.s32.totalorder %s180, %s183
      %p192 = scmp.eq.s32.totalorder %s16, 5
      %p193 = por %p191, %p192
      %p194 = scmp.ne.s32.totalorder %s183, %s184
      %p195 = scmp.eq.s32.totalorder %s16, 0
      %p196 = por %p194, %p195
      %p197 = scmp.ne.s32.totalorder %s183, %s184
      %p198 = scmp.eq.s32.totalorder %s17, 5
      %p199 = por %p197, %p198
      %p201 = scmp.ne.s32.totalorder %s184, %s200
      %p202 = scmp.eq.s32.totalorder %s17, 0
      %p203 = por %p201, %p202
      %p204 = scmp.le.s32.totalorder 1, %s11
      %p205 = scmp.lt.s32.totalorder %s11, 7
      %p206 = pnand %p204, %p205
      %p207 = pneg %p206
      // Predicated region
      $region9: #{ste_encoder_forward.18} parent=5 // pred_check
        _
      $region10: #{ste_encoder_forward.18} parent=5 // pred_check_branch
        %209 = sbr.rel (%p206) target = $region12
      $region11: #{ste_encoder_forward.18} parent=5 // pred_region
        %s210 = ssub.s32 %s11, 1
      $region12: #{ste_encoder_forward.18} parent=5 // pred_fallthru
        _
      %p211 = scmp.lt.s32.totalorder %s11, 6
      // Predicated region
      $region13: #{ste_encoder_forward.18} parent=5 // pred_check
        %p212 = pneg %p211
      $region14: #{ste_encoder_forward.18} parent=5 // pred_check_branch
        %214 = sbr.rel (%p212) target = $region16
      $region15: #{ste_encoder_forward.18} parent=5 // pred_region
        // Predicated region
        $region17: #{ste_encoder_forward.18} parent=15 // pred_check
          %p215 = pneg %p52
        $region18: #{ste_encoder_forward.18} parent=15 // pred_check_branch
          %217 = sbr.rel (%p215) target = $region20
        $region19: #{ste_encoder_forward.18} parent=15 // pred_region
          %p218 = scmp.lt.s32.totalorder %s18, 1
          %s219 = scalar_select %p218, %s18, 1
          %p220 = scmp.lt.s32.totalorder %s19, 0
          %s221 = scalar_select %p220, %s19, 0
          %s222 = sadd.s32 %s221, %s219
          %s223 = smul.addr %s222, 4
          %s224 = scalar_lea.vmem %s0, %s223
        $region20: #{ste_encoder_forward.18} parent=15 // pred_fallthru
          _
        // Predicated region
        $region21: #{ste_encoder_forward.18} parent=15 // pred_check
          %p225 = pneg %p80
        $region22: #{ste_encoder_forward.18} parent=15 // pred_check_branch
          %227 = sbr.rel (%p225) target = $region24
        $region23: #{ste_encoder_forward.18} parent=15 // pred_region
          %s228 = sand.u32 %s70, 1
          %s229 = sand.u32 %s70, 1
          %s230 = smul.addr %s229, 64
          %s231 = scalar_lea.vmem [#allocation3], %s230
          %s232 = smul.addr %s18, 48
          %s233 = sadd.s32 %s20, %s232
          %s234 = smul.addr %s233, 4
          %s235 = scalar_lea.vmem %s1, %s234
          // Predicated region
          $region25: #{ste_encoder_forward.18} parent=23 // pred_check
            _
          $region26: #{ste_encoder_forward.18} parent=23 // pred_check_branch
            %237 = sbr.rel (0) target = $region28
          $region27: #{ste_encoder_forward.18} parent=23 // pred_region
            // Predicated region
            $region29: #{ste_encoder_forward.18} parent=27 // pred_check
              _
            $region30: #{ste_encoder_forward.18} parent=27 // pred_check_branch
              %239 = sbr.rel target = $region32
            $region31: #{ste_encoder_forward.18} parent=27 // pred_region
              // Predicated region
              $region44: #{ste_encoder_forward.18} parent=31 // pred_check
                _
              $region45: #{ste_encoder_forward.18} parent=31 // pred_check_branch
                %285 = sbr.rel (0) target = $region47
              $region46: #{ste_encoder_forward.18} parent=31 // pred_region
                loop: start=0, step=1, limit=1
                $region48: #{ste_encoder_forward.18} parent=46 // loop_pre_header
                  _
                $region49: #{ste_encoder_forward.18} parent=46 // loop_header
                  %s287 = sphi 0, %s291
                  %p288 = scmp.ge.s32.totalorder %s287, 1
                  %s292 = sphi %s235, %s235
                  %s293 = sphi %s231, %s231
                $region50: #{ste_encoder_forward.18} parent=46 // loop_header_branch
                  %290 = sbr.rel (%p288) target = $region54
                $region51: #{ste_encoder_forward.18} parent=46 // loop_body
                  _
                $region52: #{ste_encoder_forward.18} parent=46 // loop_footer
                  %s291 = sadd.s32 1, %s287
                $region53: #{ste_encoder_forward.18} parent=46 // loop_footer_branch
                  %286 = sbr.rel target = $region49
                $region54: #{ste_encoder_forward.18} parent=46 // loop_exit
                  _
                %s295 = ssub.s32 16, 1
                loop: start=0, step=1, limit=1
                $region55: #{ste_encoder_forward.18} parent=46 // loop_pre_header
                  _
                $region56: #{ste_encoder_forward.18} parent=46 // loop_header
                  %s297 = sphi 0, %s301
                  %p298 = scmp.ge.s32.totalorder %s297, 1
                  %s302 = sphi %s235, %s235
                  %s303 = sphi %s231, %s231
                $region57: #{ste_encoder_forward.18} parent=46 // loop_header_branch
                  %300 = sbr.rel (%p298) target = $region61
                $region58: #{ste_encoder_forward.18} parent=46 // loop_body
                  %v304 = vld [vmem:[%s302] sm:%s295]
                  %305 = vst [vmem:[%s303] sm:%s295] %v304
                  %v306 = vld [vmem:[%s302 + $0xc] sm:%s295]
                  %307 = vst [vmem:[%s303 + $0x4] sm:%s295] %v306
                  %v308 = vld [vmem:[%s302 + $0x18] sm:%s295]
                  %309 = vst [vmem:[%s303 + $0x8] sm:%s295] %v308
                  %v310 = vld [vmem:[%s302 + $0x24] sm:%s295]
                  %311 = vst [vmem:[%s303 + $0xc] sm:%s295] %v310
                  %v312 = vld [vmem:[%s302 + $0x30] sm:%s295]
                  %313 = vst [vmem:[%s303 + $0x10] sm:%s295] %v312
                  %v314 = vld [vmem:[%s302 + $0x3c] sm:%s295]
                  %315 = vst [vmem:[%s303 + $0x14] sm:%s295] %v314
                  %v316 = vld [vmem:[%s302 + $0x48] sm:%s295]
                  %317 = vst [vmem:[%s303 + $0x18] sm:%s295] %v316
                  %v318 = vld [vmem:[%s302 + $0x54] sm:%s295]
                  %319 = vst [vmem:[%s303 + $0x1c] sm:%s295] %v318
                  %v320 = vld [vmem:[%s302 + $0x60] sm:%s295]
                  %321 = vst [vmem:[%s303 + $0x20] sm:%s295] %v320
                  %v322 = vld [vmem:[%s302 + $0x6c] sm:%s295]
                  %323 = vst [vmem:[%s303 + $0x24] sm:%s295] %v322
                  %v324 = vld [vmem:[%s302 + $0x78] sm:%s295]
                  %325 = vst [vmem:[%s303 + $0x28] sm:%s295] %v324
                  %v326 = vld [vmem:[%s302 + $0x84] sm:%s295]
                  %327 = vst [vmem:[%s303 + $0x2c] sm:%s295] %v326
                  %v328 = vld [vmem:[%s302 + $0x90] sm:%s295]
                  %329 = vst [vmem:[%s303 + $0x30] sm:%s295] %v328
                  %v330 = vld [vmem:[%s302 + $0x9c] sm:%s295]
                  %331 = vst [vmem:[%s303 + $0x34] sm:%s295] %v330
                  %v332 = vld [vmem:[%s302 + $0xa8] sm:%s295]
                  %333 = vst [vmem:[%s303 + $0x38] sm:%s295] %v332
                  %v334 = vld [vmem:[%s302 + $0xb4] sm:%s295]
                  %335 = vst [vmem:[%s303 + $0x3c] sm:%s295] %v334
                $region59: #{ste_encoder_forward.18} parent=46 // loop_footer
                  %s301 = sadd.s32 1, %s297
                $region60: #{ste_encoder_forward.18} parent=46 // loop_footer_branch
                  %296 = sbr.rel target = $region56
                $region61: #{ste_encoder_forward.18} parent=46 // loop_exit
                  _
              $region47: #{ste_encoder_forward.18} parent=31 // pred_fallthru
                _
            $region32: #{ste_encoder_forward.18} parent=27 // pred_fallthru
              _
            // Predicated region
            $region33: #{ste_encoder_forward.18} parent=27 // pred_check
              _
            $region34: #{ste_encoder_forward.18} parent=27 // pred_check_branch
              %241 = sbr.rel (0) target = $region36
            $region35: #{ste_encoder_forward.18} parent=27 // pred_region
              %s243 = ssub.s32 16, 1
              loop: start=0, step=1, limit=1
              $region37: #{ste_encoder_forward.18} parent=35 // loop_pre_header
                _
              $region38: #{ste_encoder_forward.18} parent=35 // loop_header
                %s245 = sphi 0, %s249
                %p246 = scmp.ge.s32.totalorder %s245, 1
                %s250 = sphi %s235, %s235
                %s251 = sphi %s231, %s231
              $region39: #{ste_encoder_forward.18} parent=35 // loop_header_branch
                %248 = sbr.rel (%p246) target = $region43
              $region40: #{ste_encoder_forward.18} parent=35 // loop_body
                %v252 = vld [vmem:[%s250] sm:%s243]
                %253 = vst [vmem:[%s251] sm:%s243] %v252
                %v254 = vld [vmem:[%s250 + $0xc] sm:%s243]
                %255 = vst [vmem:[%s251 + $0x4] sm:%s243] %v254
                %v256 = vld [vmem:[%s250 + $0x18] sm:%s243]
                %257 = vst [vmem:[%s251 + $0x8] sm:%s243] %v256
                %v258 = vld [vmem:[%s250 + $0x24] sm:%s243]
                %259 = vst [vmem:[%s251 + $0xc] sm:%s243] %v258
                %v260 = vld [vmem:[%s250 + $0x30] sm:%s243]
                %261 = vst [vmem:[%s251 + $0x10] sm:%s243] %v260
                %v262 = vld [vmem:[%s250 + $0x3c] sm:%s243]
                %263 = vst [vmem:[%s251 + $0x14] sm:%s243] %v262
                %v264 = vld [vmem:[%s250 + $0x48] sm:%s243]
                %265 = vst [vmem:[%s251 + $0x18] sm:%s243] %v264
                %v266 = vld [vmem:[%s250 + $0x54] sm:%s243]
                %267 = vst [vmem:[%s251 + $0x1c] sm:%s243] %v266
                %v268 = vld [vmem:[%s250 + $0x60] sm:%s243]
                %269 = vst [vmem:[%s251 + $0x20] sm:%s243] %v268
                %v270 = vld [vmem:[%s250 + $0x6c] sm:%s243]
                %271 = vst [vmem:[%s251 + $0x24] sm:%s243] %v270
                %v272 = vld [vmem:[%s250 + $0x78] sm:%s243]
                %273 = vst [vmem:[%s251 + $0x28] sm:%s243] %v272
                %v274 = vld [vmem:[%s250 + $0x84] sm:%s243]
                %275 = vst [vmem:[%s251 + $0x2c] sm:%s243] %v274
                %v276 = vld [vmem:[%s250 + $0x90] sm:%s243]
                %277 = vst [vmem:[%s251 + $0x30] sm:%s243] %v276
                %v278 = vld [vmem:[%s250 + $0x9c] sm:%s243]
                %279 = vst [vmem:[%s251 + $0x34] sm:%s243] %v278
                %v280 = vld [vmem:[%s250 + $0xa8] sm:%s243]
                %281 = vst [vmem:[%s251 + $0x38] sm:%s243] %v280
                %v282 = vld [vmem:[%s250 + $0xb4] sm:%s243]
                %283 = vst [vmem:[%s251 + $0x3c] sm:%s243] %v282
              $region41: #{ste_encoder_forward.18} parent=35 // loop_footer
                %s249 = sadd.s32 1, %s245
              $region42: #{ste_encoder_forward.18} parent=35 // loop_footer_branch
                %244 = sbr.rel target = $region38
              $region43: #{ste_encoder_forward.18} parent=35 // loop_exit
                _
            $region36: #{ste_encoder_forward.18} parent=27 // pred_fallthru
              _
          $region28: #{ste_encoder_forward.18} parent=23 // pred_fallthru
            _
          %336 = vnop
        $region24: #{ste_encoder_forward.18} parent=15 // pred_fallthru
          _
        // Predicated region
        $region62: #{ste_encoder_forward.18} parent=15 // pred_check
          %p337 = pneg %p106
        $region63: #{ste_encoder_forward.18} parent=15 // pred_check_branch
          %339 = sbr.rel (%p337) target = $region65
        $region64: #{ste_encoder_forward.18} parent=15 // pred_region
          %p340 = scmp.lt.s32.totalorder %s18, 1
          %s341 = scalar_select %p340, %s18, 1
          %s342 = scalar_lea.vmem %s2, %s341
        $region65: #{ste_encoder_forward.18} parent=15 // pred_fallthru
          _
        // Predicated region
        $region66: #{ste_encoder_forward.18} parent=15 // pred_check
          %p343 = pneg %p132
        $region67: #{ste_encoder_forward.18} parent=15 // pred_check_branch
          %345 = sbr.rel (%p343) target = $region69
        $region68: #{ste_encoder_forward.18} parent=15 // pred_region
          %p346 = scmp.lt.s32.totalorder %s18, 1
          %s347 = scalar_select %p346, %s18, 1
          %s348 = scalar_lea.vmem %s3, %s347
        $region69: #{ste_encoder_forward.18} parent=15 // pred_fallthru
          _
        // Predicated region
        $region70: #{ste_encoder_forward.18} parent=15 // pred_check
          %p349 = pneg %p160
        $region71: #{ste_encoder_forward.18} parent=15 // pred_check_branch
          %351 = sbr.rel (%p349) target = $region73
        $region72: #{ste_encoder_forward.18} parent=15 // pred_region
          %p352 = scmp.lt.s32.totalorder %s18, 1
          %s353 = scalar_select %p352, %s18, 1
          %p354 = scmp.lt.s32.totalorder %s20, 2
          %s355 = scalar_select %p354, %s20, 2
          %s356 = smul.addr %s353, 3
          %s357 = sadd.s32 %s355, %s356
          %s358 = scalar_lea.vmem %s4, %s357
        $region73: #{ste_encoder_forward.18} parent=15 // pred_fallthru
          _
      $region16: #{ste_encoder_forward.18} parent=5 // pred_fallthru
        _
      %p359 = scmp.le.s32.totalorder 1, %s11
      %p360 = scmp.lt.s32.totalorder %s11, 7
      %p361 = pnand %p359, %p360
      %p362 = pneg %p361
      // Predicated region
      $region74: #{ste_encoder_forward.18} parent=5 // pred_check
        _
      $region75: #{ste_encoder_forward.18} parent=5 // pred_check_branch
        %364 = sbr.rel (%p361) target = $region77
      $region76: #{ste_encoder_forward.18} parent=5 // pred_region
        %s365 = ssub.s32 %s11, 1
        %s366 = sand.u32 %s73, 1
        %s367 = sand.u32 %s73, 1
        %s368 = smul.addr %s367, 64
        %s369 = scalar_lea.vmem [#allocation3], %s368
        // Predicated region
        $region78: #{ste_encoder_forward.18} parent=76 // pred_check
          %p370 = pneg %p86
        $region79: #{ste_encoder_forward.18} parent=76 // pred_check_branch
          %372 = sbr.rel (%p370) target = $region81
        $region80: #{ste_encoder_forward.18} parent=76 // pred_region
          _
        $region81: #{ste_encoder_forward.18} parent=76 // pred_fallthru
          _
        %p373 = scmp.lt.s32.totalorder %s21, 1
        %s374 = scalar_select %p373, %s21, 1
        %p375 = scmp.lt.s32.totalorder %s22, 0
        %s376 = scalar_select %p375, %s22, 0
        %s377 = sadd.s32 %s376, %s374
        %s378 = smul.addr %s377, 4
        %s379 = scalar_lea.vmem %s0, %s378
        %p380 = pneg %p58
        %p381 = pneg %p55
        %s382 = sand.u32 %s73, 1
        %s383 = sand.u32 %s73, 1
        %s384 = smul.addr %s383, 64
        %s385 = scalar_lea.vmem [#allocation3], %s384
        %p386 = pneg %p86
        %p387 = pneg %p83
        %p388 = scmp.lt.s32.totalorder %s21, 1
        %s389 = scalar_select %p388, %s21, 1
        %s390 = scalar_lea.vmem %s2, %s389
        %p391 = pneg %p112
        %p392 = pneg %p109
        %p393 = scmp.lt.s32.totalorder %s21, 1
        %s394 = scalar_select %p393, %s21, 1
        %s395 = scalar_lea.vmem %s3, %s394
        %p396 = pneg %p138
        %p397 = pneg %p135
        %p398 = scmp.lt.s32.totalorder %s21, 1
        %s399 = scalar_select %p398, %s21, 1
        %p400 = scmp.lt.s32.totalorder %s23, 2
        %s401 = scalar_select %p400, %s23, 2
        %s402 = smul.addr %s399, 3
        %s403 = sadd.s32 %s401, %s402
        %s404 = scalar_lea.vmem %s4, %s403
        %p405 = pneg %p166
        %p406 = pneg %p163
        %p407 = pneg %p196
        %p408 = pneg %p193
        %p409 = scmp.lt.s32.totalorder %s21, 1
        %s410 = scalar_select %p409, %s21, 1
        %p411 = scmp.lt.s32.totalorder %s22, 0
        %s412 = scalar_select %p411, %s22, 0
        %p413 = scmp.lt.s32.totalorder %s23, 2
        %s414 = scalar_select %p413, %s23, 2
        %s415 = smul.addr %s412, 3
        %s416 = sadd.s32 %s414, %s415
        %s417 = smul.addr %s410, 3
        %s418 = sadd.s32 %s416, %s417
        %s419 = smul.addr %s418, 4
        %s420 = scalar_lea.vmem %s5, %s419
        %p421 = scmp.lt.s32.totalorder %s21, 1
        %s422 = scalar_select %p421, %s21, 1
        %p423 = scmp.lt.s32.totalorder %s22, 0
        %s424 = scalar_select %p423, %s22, 0
        %s425 = sadd.s32 %s424, %s422
        %s426 = smul.addr %s425, 4
        %s427 = scalar_lea.vmem %s0, %s426
        %p428 = scmp.lt.s32.totalorder %s21, 1
        %s429 = scalar_select %p428, %s21, 1
        %s430 = scalar_lea.vmem %s2, %s429
        %p431 = scmp.lt.s32.totalorder %s21, 1
        %s432 = scalar_select %p431, %s21, 1
        %s433 = scalar_lea.vmem %s3, %s432
        %p434 = scmp.lt.s32.totalorder %s21, 1
        %s435 = scalar_select %p434, %s21, 1
        %p436 = scmp.lt.s32.totalorder %s23, 2
        %s437 = scalar_select %p436, %s23, 2
        %s438 = smul.addr %s435, 3
        %s439 = sadd.s32 %s437, %s438
        %s440 = scalar_lea.vmem %s4, %s439
        %p441 = scmp.lt.s32.totalorder %s21, 1
        %s442 = scalar_select %p441, %s21, 1
        %p443 = scmp.lt.s32.totalorder %s22, 0
        %s444 = scalar_select %p443, %s22, 0
        %p445 = scmp.lt.s32.totalorder %s23, 2
        %s446 = scalar_select %p445, %s23, 2
        %s447 = smul.addr %s444, 3
        %s448 = sadd.s32 %s446, %s447
        %s449 = smul.addr %s442, 3
        %s450 = sadd.s32 %s448, %s449
        %s451 = smul.addr %s450, 4
        %s452 = scalar_lea.vmem %s5, %s451
        %p454 = scmp.eq.s32.totalorder %s23, 0
        // Predicated region
        $region82: #{ste_encoder_forward.18} parent=76 // pred_check
          %p455 = pneg %p454
        $region83: #{ste_encoder_forward.18} parent=76 // pred_check_branch
          %457 = sbr.rel (%p455) target = $region85
        $region84: #{ste_encoder_forward.18} parent=76 // pred_region
          %v458 = vld [vmem:[%s427] sm:$0xf]
          %v459 = vunpack.c.l.bf16 %v458
          %460 = vadd.xlane.f32.xlu0 %v459
          %v461 = vpop.xlane.xlu0 %460
          %v462 = vrcp.pop 128.0
          %v463 = vmul.f32 %v461, %v462
          %v464 = vsub.f32 %v459, %v463
          %v465 = vmul.f32 %v464, %v464
          %466 = vadd.xlane.f32.xlu0 %v465
          %v467 = vpop.xlane.xlu0 %466
          %v468 = vmul.f32 %v467, %v462
          %v469 = vadd.f32 %v468, 1e-05
          %v470 = vrsqrt.pop %v469
          %v471 = vmul.f32 %v464, %v470
          %v472 = vld [vmem:[%s430] sm:$0x1]
          %v474 = vlaneseq
          %v475 = vshrl.u32 %v474, 7
          %v476 = vsub.s32 0, %v475
          %v477 = vrot.slane %v472, %v476
          %v479 = vmul.f32 %v471, %v477
          %v480 = vld [vmem:[%s433] sm:$0x1]
          %v482 = vlaneseq
          %v483 = vshrl.u32 %v482, 7
          %v484 = vsub.s32 0, %v483
          %v485 = vrot.slane %v480, %v484
          %v487 = vadd.f32 %v479, %v485
          %v488 = vpack.c.bf16 %v487, %v487
          %489 = vst [vmem:[#allocation2] sm:$0xf] %v488
        $region85: #{ste_encoder_forward.18} parent=76 // pred_fallthru
          _
        %v490 = vld [vmem:[#allocation2] sm:$0xf]
        %v491 = vld [vmem:[%s369] sm:$0xf]
        %v492 = vld [vmem:[%s369 + $0x4] sm:$0xf]
        %v493 = vld [vmem:[%s369 + $0x8] sm:$0xf]
        %v494 = vld [vmem:[%s369 + $0xc] sm:$0xf]
        %v495 = vld [vmem:[%s369 + $0x10] sm:$0xf]
        %v496 = vld [vmem:[%s369 + $0x14] sm:$0xf]
        %v497 = vld [vmem:[%s369 + $0x18] sm:$0xf]
        %v498 = vld [vmem:[%s369 + $0x1c] sm:$0xf]
        %v499 = vld [vmem:[%s369 + $0x20] sm:$0xf]
        %v500 = vld [vmem:[%s369 + $0x24] sm:$0xf]
        %v501 = vld [vmem:[%s369 + $0x28] sm:$0xf]
        %v502 = vld [vmem:[%s369 + $0x2c] sm:$0xf]
        %v503 = vld [vmem:[%s369 + $0x30] sm:$0xf]
        %v504 = vld [vmem:[%s369 + $0x34] sm:$0xf]
        %v505 = vld [vmem:[%s369 + $0x38] sm:$0xf]
        %v506 = vld [vmem:[%s369 + $0x3c] sm:$0xf]
        %v507 = vld [vmem:[%s440] sm:$0x1]
        %v509 = vlaneseq
        %v510 = vshrl.u32 %v509, 7
        %v511 = vsub.s32 0, %v510
        %v512 = vrot.slane %v507, %v511
        %v530 = vunpack.c.l.b16 %v491
        %v531 = vunpack.c.l.b16 %v492
        %v532 = vunpack.c.l.b16 %v493
        %v533 = vunpack.c.l.b16 %v494
        %v534 = vunpack.c.l.b16 %v495
        %v535 = vunpack.c.l.b16 %v496
        %v536 = vunpack.c.l.b16 %v497
        %v537 = vunpack.c.l.b16 %v498
        %v538 = vunpack.c.l.b16 %v499
        %v539 = vunpack.c.l.b16 %v500
        %v540 = vunpack.c.l.b16 %v501
        %v541 = vunpack.c.l.b16 %v502
        %v542 = vunpack.c.l.b16 %v503
        %v543 = vunpack.c.l.b16 %v504
        %v544 = vunpack.c.l.b16 %v505
        %v545 = vunpack.c.l.b16 %v506
        %v546 = vpack.c.b16 %v531, %v530
        %v547 = vpack.c.b16 %v533, %v532
        %v548 = vpack.c.b16 %v535, %v534
        %v549 = vpack.c.b16 %v537, %v536
        %v550 = vpack.c.b16 %v539, %v538
        %v551 = vpack.c.b16 %v541, %v540
        %v552 = vpack.c.b16 %v543, %v542
        %v553 = vpack.c.b16 %v545, %v544
        %562 = vmatprep.subr.bf16.mxu0 0
        %563 = vmatpush1.bf16.msra.mxu0 %v553
        %564 = vmatprep.subr.bf16.mxu0 0
        %565 = vmatpush1.bf16.msra.mxu0 %v552
        %566 = vmatprep.subr.bf16.mxu0 0
        %567 = vmatpush1.bf16.msra.mxu0 %v551
        %568 = vmatprep.subr.bf16.mxu0 0
        %569 = vmatpush1.bf16.msra.mxu0 %v550
        %570 = vmatprep.subr.bf16.mxu0 0
        %571 = vmatpush1.bf16.msra.mxu0 %v549
        %572 = vmatprep.subr.bf16.mxu0 0
        %573 = vmatpush1.bf16.msra.mxu0 %v548
        %574 = vmatprep.subr.bf16.mxu0 0
        %575 = vmatpush1.bf16.msra.mxu0 %v547
        %576 = vmatprep.subr.bf16.mxu0 0
        %577 = vmatpush1.bf16.msra.mxu0 %v546
        %578 = vmatprep.subr.bf16.mxu0 0
        %579 = vmatpush2.bf16.msra.mxu0 0
        %580 = vmatprep.subr.bf16.mxu0 0
        %581 = vmatpush2.bf16.msra.mxu0 0
        %582 = vmatprep.subr.bf16.mxu0 0
        %583 = vmatpush2.bf16.msra.mxu0 0
        %584 = vmatprep.subr.bf16.mxu0 0
        %585 = vmatpush2.bf16.msra.mxu0 0
        %586 = vmatprep.subr.bf16.mxu0 0
        %587 = vmatpush2.bf16.msra.mxu0 0
        %588 = vmatprep.subr.bf16.mxu0 0
        %589 = vmatpush2.bf16.msra.mxu0 0
        %590 = vmatprep.subr.bf16.mxu0 0
        %591 = vmatpush2.bf16.msra.mxu0 0
        %592 = vmatprep.subr.bf16.mxu0 0
        %593 = vmatpush2.bf16.msra.mxu0 0
        %594 = vmatprep.mubr.bf16.mxu0 0
        %595 = vmatmul.mubr.bf16.gmra.mxu0 %v490
        %v596 = vpop.f32.mrf.mxu0
        %v597 = vadd.f32 %v512, %v596
        %v598 = vpop.f32.mrf.mxu0
        %v599 = vpop.f32.mrf.mxu0
        %v600 = vpop.f32.mrf.mxu0
        %601 = vdwg.mxu0
        %v602 = vmul.f32 %v597, %v597
        %v603 = vmul.f32 %v597, %v602
        %v604 = vmul.f32 %v603, 0.044715
        %v605 = vadd.f32 %v597, %v604
        %v606 = vmul.f32 %v605, 0.7978846
        %v607 = vtanh.pop %v606
        %v608 = vadd.f32 %v607, 1.0
        %v609 = vmul.f32 %v608, 0.5
        %v610 = vmul.f32 %v597, %v609
        %v611 = vpack.c.bf16 %v610, %v610
        %612 = vst [vmem:[%s452] sm:$0xf] %v611
        %p613 = scmp.lt.s32.totalorder %s21, 1
        %s614 = scalar_select %p613, %s21, 1
        %p615 = scmp.lt.s32.totalorder %s22, 0
        %s616 = scalar_select %p615, %s22, 0
        %p617 = scmp.lt.s32.totalorder %s23, 2
        %s618 = scalar_select %p617, %s23, 2
        %s619 = smul.addr %s616, 3
        %s620 = sadd.s32 %s618, %s619
        %s621 = smul.addr %s614, 3
        %s622 = sadd.s32 %s620, %s621
        %s623 = smul.addr %s622, 4
        %s624 = scalar_lea.vmem %s5, %s623
        // Predicated region
        $region86: #{ste_encoder_forward.18} parent=76 // pred_check
          %p625 = pneg %p193
        $region87: #{ste_encoder_forward.18} parent=76 // pred_check_branch
          %627 = sbr.rel (%p625) target = $region89
        $region88: #{ste_encoder_forward.18} parent=76 // pred_region
          _
        $region89: #{ste_encoder_forward.18} parent=76 // pred_fallthru
          _
      $region77: #{ste_encoder_forward.18} parent=5 // pred_fallthru
        _
      %p628 = scmp.le.s32.totalorder 2, %s11
      // Predicated region
      $region90: #{ste_encoder_forward.18} parent=5 // pred_check
        %p629 = pneg %p628
      $region91: #{ste_encoder_forward.18} parent=5 // pred_check_branch
        %631 = sbr.rel (%p629) target = $region93
      $region92: #{ste_encoder_forward.18} parent=5 // pred_region
        %s632 = ssub.s32 %s11, 2
        // Predicated region
        $region94: #{ste_encoder_forward.18} parent=92 // pred_check
          %p633 = pneg %p199
        $region95: #{ste_encoder_forward.18} parent=92 // pred_check_branch
          %635 = sbr.rel (%p633) target = $region97
        $region96: #{ste_encoder_forward.18} parent=92 // pred_region
          %p636 = scmp.lt.s32.totalorder %s24, 1
          %s637 = scalar_select %p636, %s24, 1
          %p638 = scmp.lt.s32.totalorder %s25, 0
          %s639 = scalar_select %p638, %s25, 0
          %p640 = scmp.lt.s32.totalorder %s26, 2
          %s641 = scalar_select %p640, %s26, 2
          %s642 = smul.addr %s639, 3
          %s643 = sadd.s32 %s641, %s642
          %s644 = smul.addr %s637, 3
          %s645 = sadd.s32 %s643, %s644
          %s646 = smul.addr %s645, 4
          %s647 = scalar_lea.vmem %s5, %s646
        $region97: #{ste_encoder_forward.18} parent=92 // pred_fallthru
          _
      $region93: #{ste_encoder_forward.18} parent=5 // pred_fallthru
        _
    $region6: #{ste_encoder_forward.18} parent=1 // loop_footer
      %s15 = sadd.s32 1, %s11
    $region7: #{ste_encoder_forward.18} parent=1 // loop_footer_branch
      %10 = sbr.rel target = $region3
    $region8: #{ste_encoder_forward.18} parent=1 // loop_exit
      _

// kernel: ste_encoder_forward.19
$region0: #{ste_encoder_forward.19}
  #allocation0 [shape = 'u32[]', space=smem, size = 0x4, offset = 0x4, fixed_abs, tag = 'smem constant byte address 0x4 - core index']
  #allocation1 [shape = 'u32[144,128]{1,0:T(1,128)}', space=vmem, size = 0x12000, scoped, tag = 'internal scratch']
  %s0 = inlined_call_operand.vmem [shape: bf16[2,8,384], index: 0, kind: input, shape index: {}]
  %s1 = inlined_call_operand.vmem [shape: bf16[2,384,128], index: 1, kind: input, shape index: {}]
  %s2 = inlined_call_operand.vmem [shape: f32[2,1,128], index: 2, kind: input, shape index: {}]
  %s3 = inlined_call_operand.vmem [shape: bf16[2,8,128], index: 3, kind: input, shape index: {}]
  %s4 = inlined_call_operand.vmem [shape: bf16[2,8,128], index: 4, kind: output, shape index: {}]
  %s5 = sld [smem:[#allocation0]]
  $region49: #{ste_encoder_forward.19} parent=0
    _
  %s7 = ssub.s32 1, %s5
  %s8 = scalar_select 0, %s7, %s5
  loop: start=0, step=1, limit=4
  $region2: #{ste_encoder_forward.19} parent=0 // loop_pre_header
    _
  $region3: #{ste_encoder_forward.19} parent=0 // loop_header
    %s10 = sphi 0, %s14
    %p11 = scmp.ge.s32.totalorder %s10, 4
    %s17 = sphi 0, %s36
    %s18 = sphi 0, %s32
    %s19 = sphi 0, %s28
    %s20 = sphi 0, %s17
    %s21 = sphi 0, %s18
    %s22 = sphi 0, %s19
    %s23 = sphi 0, %s20
    %s24 = sphi 0, %s21
    %s25 = sphi 0, %s22
    %s41 = sphi 0, %s43
    %s44 = sphi 0, %s41
    %s45 = sphi 0, %s44
    %s61 = sphi 0, %s45
    %s69 = sphi 0, %s71
    %s72 = sphi 0, %s69
    %s73 = sphi 0, %s72
    %s89 = sphi 0, %s73
    %s97 = sphi 0, %s99
    %s100 = sphi 0, %s97
    %s101 = sphi 0, %s100
    %s117 = sphi 0, %s101
    %s127 = sphi 0, %s129
    %s130 = sphi 0, %s127
    %s131 = sphi 0, %s130
    %s147 = sphi 0, %s131
    %s157 = sphi 0, %s159
    %s160 = sphi 0, %s157
    %s161 = sphi 0, %s160
    %s177 = sphi 0, %s161
  $region4: #{ste_encoder_forward.19} parent=0 // loop_header_branch
    %13 = sbr.rel (%p11) target = $region8
  $region5: #{ste_encoder_forward.19} parent=0 // loop_body
    %s15 = ssub.s32 %s10, 1
    %s16 = ssub.s32 %s10, 2
    %s26 = sadd.s32 1, %s19
    %p27 = scmp.ge.s32.totalorder %s26, 1
    %s28 = scalar_select %p27, 0, %s26
    %s29 = sadd.s32 1, %s18
    %s30 = scalar_select %p27, %s29, %s18
    %p31 = scmp.ge.s32.totalorder %s30, 1
    %s32 = scalar_select %p31, 0, %s30
    %s33 = sadd.s32 1, %s17
    %s34 = scalar_select %p31, %s33, %s17
    %p35 = scmp.ge.s32.totalorder %s34, 2
    %s36 = scalar_select %p35, 0, %s34
    %s37 = ssub.s32 %s17, %s36
    %s38 = ssub.s32 %s18, %s32
    %s39 = sor.u32 %s37, %s38
    %p40 = scmp.eq.s32.totalorder %s39, 0
    %s42 = sadd.s32 %s41, 1
    %s43 = scalar_select %p40, %s41, %s42
    %p46 = pneg %p40
    %p47 = scmp.eq.s32.totalorder %s10, 1
    %p48 = por %p46, %p47
    %p49 = scmp.ne.s32.totalorder %s41, %s44
    %p50 = scmp.eq.s32.totalorder %s10, 0
    %p51 = por %p49, %p50
    %p52 = scmp.ne.s32.totalorder %s41, %s44
    %p53 = scmp.eq.s32.totalorder %s15, 1
    %p54 = por %p52, %p53
    %p55 = scmp.ne.s32.totalorder %s44, %s45
    %p56 = scmp.eq.s32.totalorder %s15, 0
    %p57 = por %p55, %p56
    %p58 = scmp.ne.s32.totalorder %s44, %s45
    %p59 = scmp.eq.s32.totalorder %s16, 1
    %p60 = por %p58, %p59
    %p62 = scmp.ne.s32.totalorder %s45, %s61
    %p63 = scmp.eq.s32.totalorder %s16, 0
    %p64 = por %p62, %p63
    %s65 = ssub.s32 %s17, %s36
    %s66 = ssub.s32 %s19, %s28
    %s67 = sor.u32 %s65, %s66
    %p68 = scmp.eq.s32.totalorder %s67, 0
    %s70 = sadd.s32 %s69, 1
    %s71 = scalar_select %p68, %s69, %s70
    %p74 = pneg %p68
    %p75 = scmp.eq.s32.totalorder %s10, 1
    %p76 = por %p74, %p75
    %p77 = scmp.ne.s32.totalorder %s69, %s72
    %p78 = scmp.eq.s32.totalorder %s10, 0
    %p79 = por %p77, %p78
    %p80 = scmp.ne.s32.totalorder %s69, %s72
    %p81 = scmp.eq.s32.totalorder %s15, 1
    %p82 = por %p80, %p81
    %p83 = scmp.ne.s32.totalorder %s72, %s73
    %p84 = scmp.eq.s32.totalorder %s15, 0
    %p85 = por %p83, %p84
    %p86 = scmp.ne.s32.totalorder %s72, %s73
    %p87 = scmp.eq.s32.totalorder %s16, 1
    %p88 = por %p86, %p87
    %p90 = scmp.ne.s32.totalorder %s73, %s89
    %p91 = scmp.eq.s32.totalorder %s16, 0
    %p92 = por %p90, %p91
    %s93 = ssub.s32 %s17, %s36
    %s94 = ssub.s32 %s19, %s28
    %s95 = sor.u32 %s93, %s94
    %p96 = scmp.eq.s32.totalorder %s95, 0
    %s98 = sadd.s32 %s97, 1
    %s99 = scalar_select %p96, %s97, %s98
    %p102 = pneg %p96
    %p103 = scmp.eq.s32.totalorder %s10, 1
    %p104 = por %p102, %p103
    %p105 = scmp.ne.s32.totalorder %s97, %s100
    %p106 = scmp.eq.s32.totalorder %s10, 0
    %p107 = por %p105, %p106
    %p108 = scmp.ne.s32.totalorder %s97, %s100
    %p109 = scmp.eq.s32.totalorder %s15, 1
    %p110 = por %p108, %p109
    %p111 = scmp.ne.s32.totalorder %s100, %s101
    %p112 = scmp.eq.s32.totalorder %s15, 0
    %p113 = por %p111, %p112
    %p114 = scmp.ne.s32.totalorder %s100, %s101
    %p115 = scmp.eq.s32.totalorder %s16, 1
    %p116 = por %p114, %p115
    %p118 = scmp.ne.s32.totalorder %s101, %s117
    %p119 = scmp.eq.s32.totalorder %s16, 0
    %p120 = por %p118, %p119
    %s121 = ssub.s32 %s17, %s36
    %s122 = ssub.s32 %s18, %s32
    %s123 = sor.u32 %s121, %s122
    %s124 = ssub.s32 %s19, %s28
    %s125 = sor.u32 %s123, %s124
    %p126 = scmp.eq.s32.totalorder %s125, 0
    %s128 = sadd.s32 %s127, 1
    %s129 = scalar_select %p126, %s127, %s128
    %p132 = pneg %p126
    %p133 = scmp.eq.s32.totalorder %s10, 1
    %p134 = por %p132, %p133
    %p135 = scmp.ne.s32.totalorder %s127, %s130
    %p136 = scmp.eq.s32.totalorder %s10, 0
    %p137 = por %p135, %p136
    %p138 = scmp.ne.s32.totalorder %s127, %s130
    %p139 = scmp.eq.s32.totalorder %s15, 1
    %p140 = por %p138, %p139
    %p141 = scmp.ne.s32.totalorder %s130, %s131
    %p142 = scmp.eq.s32.totalorder %s15, 0
    %p143 = por %p141, %p142
    %p144 = scmp.ne.s32.totalorder %s130, %s131
    %p145 = scmp.eq.s32.totalorder %s16, 1
    %p146 = por %p144, %p145
    %p148 = scmp.ne.s32.totalorder %s131, %s147
    %p149 = scmp.eq.s32.totalorder %s16, 0
    %p150 = por %p148, %p149
    %s151 = ssub.s32 %s17, %s36
    %s152 = ssub.s32 %s18, %s32
    %s153 = sor.u32 %s151, %s152
    %s154 = ssub.s32 %s19, %s28
    %s155 = sor.u32 %s153, %s154
    %p156 = scmp.eq.s32.totalorder %s155, 0
    %s158 = sadd.s32 %s157, 1
    %s159 = scalar_select %p156, %s157, %s158
    %p162 = pneg %p156
    %p163 = scmp.eq.s32.totalorder %s10, 1
    %p164 = por %p162, %p163
    %p165 = scmp.ne.s32.totalorder %s157, %s160
    %p166 = scmp.eq.s32.totalorder %s10, 0
    %p167 = por %p165, %p166
    %p168 = scmp.ne.s32.totalorder %s157, %s160
    %p169 = scmp.eq.s32.totalorder %s15, 1
    %p170 = por %p168, %p169
    %p171 = scmp.ne.s32.totalorder %s160, %s161
    %p172 = scmp.eq.s32.totalorder %s15, 0
    %p173 = por %p171, %p172
    %p174 = scmp.ne.s32.totalorder %s160, %s161
    %p175 = scmp.eq.s32.totalorder %s16, 1
    %p176 = por %p174, %p175
    %p178 = scmp.ne.s32.totalorder %s161, %s177
    %p179 = scmp.eq.s32.totalorder %s16, 0
    %p180 = por %p178, %p179
    %p181 = scmp.le.s32.totalorder 1, %s10
    %p182 = scmp.lt.s32.totalorder %s10, 3
    %p183 = pnand %p181, %p182
    %p184 = pneg %p183
    // Predicated region
    $region9: #{ste_encoder_forward.19} parent=5 // pred_check
      _
    $region10: #{ste_encoder_forward.19} parent=5 // pred_check_branch
      %186 = sbr.rel (%p183) target = $region12
    $region11: #{ste_encoder_forward.19} parent=5 // pred_region
      %s187 = ssub.s32 %s10, 1
    $region12: #{ste_encoder_forward.19} parent=5 // pred_fallthru
      _
    %p188 = scmp.lt.s32.totalorder %s10, 2
    // Predicated region
    $region13: #{ste_encoder_forward.19} parent=5 // pred_check
      %p189 = pneg %p188
    $region14: #{ste_encoder_forward.19} parent=5 // pred_check_branch
      %191 = sbr.rel (%p189) target = $region16
    $region15: #{ste_encoder_forward.19} parent=5 // pred_region
      // Predicated region
      $region17: #{ste_encoder_forward.19} parent=15 // pred_check
        %p192 = pneg %p51
      $region18: #{ste_encoder_forward.19} parent=15 // pred_check_branch
        %194 = sbr.rel (%p192) target = $region20
      $region19: #{ste_encoder_forward.19} parent=15 // pred_region
        %p195 = scmp.lt.s32.totalorder %s17, 1
        %s196 = scalar_select %p195, %s17, 1
        %p197 = scmp.lt.s32.totalorder %s18, 0
        %s198 = scalar_select %p197, %s18, 0
        %s199 = smul.addr %s198, 3
        %s200 = smul.addr %s196, 3
        %s201 = sadd.s32 %s199, %s200
        %s202 = smul.addr %s201, 4
        %s203 = scalar_lea.vmem %s0, %s202
      $region20: #{ste_encoder_forward.19} parent=15 // pred_fallthru
        _
      // Predicated region
      $region21: #{ste_encoder_forward.19} parent=15 // pred_check
        %p204 = pneg %p79
      $region22: #{ste_encoder_forward.19} parent=15 // pred_check_branch
        %206 = sbr.rel (%p204) target = $region24
      $region23: #{ste_encoder_forward.19} parent=15 // pred_region
        %p207 = scmp.lt.s32.totalorder %s17, 1
        %s208 = scalar_select %p207, %s17, 1
        %p209 = scmp.lt.s32.totalorder %s19, 0
        %s210 = scalar_select %p209, %s19, 0
        %s211 = smul.addr %s208, 48
        %s212 = sadd.s32 %s210, %s211
        %s213 = smul.addr %s212, 4
        %s214 = scalar_lea.vmem %s1, %s213
      $region24: #{ste_encoder_forward.19} parent=15 // pred_fallthru
        _
      // Predicated region
      $region25: #{ste_encoder_forward.19} parent=15 // pred_check
        %p215 = pneg %p107
      $region26: #{ste_encoder_forward.19} parent=15 // pred_check_branch
        %217 = sbr.rel (%p215) target = $region28
      $region27: #{ste_encoder_forward.19} parent=15 // pred_region
        %p218 = scmp.lt.s32.totalorder %s17, 1
        %s219 = scalar_select %p218, %s17, 1
        %p220 = scmp.lt.s32.totalorder %s19, 0
        %s221 = scalar_select %p220, %s19, 0
        %s222 = sadd.s32 %s221, %s219
        %s223 = scalar_lea.vmem %s2, %s222
      $region28: #{ste_encoder_forward.19} parent=15 // pred_fallthru
        _
      // Predicated region
      $region29: #{ste_encoder_forward.19} parent=15 // pred_check
        %p224 = pneg %p137
      $region30: #{ste_encoder_forward.19} parent=15 // pred_check_branch
        %226 = sbr.rel (%p224) target = $region32
      $region31: #{ste_encoder_forward.19} parent=15 // pred_region
        %p227 = scmp.lt.s32.totalorder %s17, 1
        %s228 = scalar_select %p227, %s17, 1
        %p229 = scmp.lt.s32.totalorder %s18, 0
        %s230 = scalar_select %p229, %s18, 0
        %p231 = scmp.lt.s32.totalorder %s19, 0
        %s232 = scalar_select %p231, %s19, 0
        %s233 = sadd.s32 %s232, %s230
        %s234 = sadd.s32 %s233, %s228
        %s235 = smul.addr %s234, 4
        %s236 = scalar_lea.vmem %s3, %s235
      $region32: #{ste_encoder_forward.19} parent=15 // pred_fallthru
        _
    $region16: #{ste_encoder_forward.19} parent=5 // pred_fallthru
      _
    %p237 = scmp.le.s32.totalorder 1, %s10
    %p238 = scmp.lt.s32.totalorder %s10, 3
    %p239 = pnand %p237, %p238
    %p240 = pneg %p239
    // Predicated region
    $region33: #{ste_encoder_forward.19} parent=5 // pred_check
      _
    $region34: #{ste_encoder_forward.19} parent=5 // pred_check_branch
      %242 = sbr.rel (%p239) target = $region36
    $region35: #{ste_encoder_forward.19} parent=5 // pred_region
      %s243 = ssub.s32 %s10, 1
      %p244 = scmp.lt.s32.totalorder %s20, 1
      %s245 = scalar_select %p244, %s20, 1
      %p246 = scmp.lt.s32.totalorder %s21, 0
      %s247 = scalar_select %p246, %s21, 0
      %s248 = smul.addr %s247, 3
      %s249 = smul.addr %s245, 3
      %s250 = sadd.s32 %s248, %s249
      %s251 = smul.addr %s250, 4
      %s252 = scalar_lea.vmem %s0, %s251
      %p253 = pneg %p57
      %p254 = pneg %p54
      %p255 = scmp.lt.s32.totalorder %s20, 1
      %s256 = scalar_select %p255, %s20, 1
      %p257 = scmp.lt.s32.totalorder %s22, 0
      %s258 = scalar_select %p257, %s22, 0
      %s259 = smul.addr %s256, 48
      %s260 = sadd.s32 %s258, %s259
      %s261 = smul.addr %s260, 4
      %s262 = scalar_lea.vmem %s1, %s261
      %p263 = pneg %p85
      %p264 = pneg %p82
      %p265 = scmp.lt.s32.totalorder %s20, 1
      %s266 = scalar_select %p265, %s20, 1
      %p267 = scmp.lt.s32.totalorder %s22, 0
      %s268 = scalar_select %p267, %s22, 0
      %s269 = sadd.s32 %s268, %s266
      %s270 = scalar_lea.vmem %s2, %s269
      %p271 = pneg %p113
      %p272 = pneg %p110
      %p273 = scmp.lt.s32.totalorder %s20, 1
      %s274 = scalar_select %p273, %s20, 1
      %p275 = scmp.lt.s32.totalorder %s21, 0
      %s276 = scalar_select %p275, %s21, 0
      %p277 = scmp.lt.s32.totalorder %s22, 0
      %s278 = scalar_select %p277, %s22, 0
      %s279 = sadd.s32 %s278, %s276
      %s280 = sadd.s32 %s279, %s274
      %s281 = smul.addr %s280, 4
      %s282 = scalar_lea.vmem %s3, %s281
      %p283 = pneg %p143
      %p284 = pneg %p140
      %p285 = pneg %p173
      %p286 = pneg %p170
      %p287 = scmp.lt.s32.totalorder %s20, 1
      %s288 = scalar_select %p287, %s20, 1
      %p289 = scmp.lt.s32.totalorder %s21, 0
      %s290 = scalar_select %p289, %s21, 0
      %p291 = scmp.lt.s32.totalorder %s22, 0
      %s292 = scalar_select %p291, %s22, 0
      %s293 = sadd.s32 %s292, %s290
      %s294 = sadd.s32 %s293, %s288
      %s295 = smul.addr %s294, 4
      %s296 = scalar_lea.vmem %s4, %s295
      %p297 = scmp.lt.s32.totalorder %s20, 1
      %s298 = scalar_select %p297, %s20, 1
      %p299 = scmp.lt.s32.totalorder %s21, 0
      %s300 = scalar_select %p299, %s21, 0
      %s301 = smul.addr %s300, 3
      %s302 = smul.addr %s298, 3
      %s303 = sadd.s32 %s301, %s302
      %s304 = smul.addr %s303, 4
      %s305 = scalar_lea.vmem %s0, %s304
      %p306 = scmp.lt.s32.totalorder %s20, 1
      %s307 = scalar_select %p306, %s20, 1
      %p308 = scmp.lt.s32.totalorder %s22, 0
      %s309 = scalar_select %p308, %s22, 0
      %s310 = smul.addr %s307, 48
      %s311 = sadd.s32 %s309, %s310
      %s312 = smul.addr %s311, 4
      %s313 = scalar_lea.vmem %s1, %s312
      %p314 = scmp.lt.s32.totalorder %s20, 1
      %s315 = scalar_select %p314, %s20, 1
      %p316 = scmp.lt.s32.totalorder %s22, 0
      %s317 = scalar_select %p316, %s22, 0
      %s318 = sadd.s32 %s317, %s315
      %s319 = scalar_lea.vmem %s2, %s318
      %p320 = scmp.lt.s32.totalorder %s20, 1
      %s321 = scalar_select %p320, %s20, 1
      %p322 = scmp.lt.s32.totalorder %s21, 0
      %s323 = scalar_select %p322, %s21, 0
      %p324 = scmp.lt.s32.totalorder %s22, 0
      %s325 = scalar_select %p324, %s22, 0
      %s326 = sadd.s32 %s325, %s323
      %s327 = sadd.s32 %s326, %s321
      %s328 = smul.addr %s327, 4
      %s329 = scalar_lea.vmem %s3, %s328
      %p330 = scmp.lt.s32.totalorder %s20, 1
      %s331 = scalar_select %p330, %s20, 1
      %p332 = scmp.lt.s32.totalorder %s21, 0
      %s333 = scalar_select %p332, %s21, 0
      %p334 = scmp.lt.s32.totalorder %s22, 0
      %s335 = scalar_select %p334, %s22, 0
      %s336 = sadd.s32 %s335, %s333
      %s337 = sadd.s32 %s336, %s331
      %s338 = smul.addr %s337, 4
      %s339 = scalar_lea.vmem %s4, %s338
      %v341 = vld [vmem:[%s305] sm:$0xff]
      %v342 = vld [vmem:[%s305 + $0x8] sm:$0xf]
      %v343 = vld [vmem:[%s313] sm:$0xf]
      %v344 = vld [vmem:[%s313 + $0x4] sm:$0xf]
      %v345 = vld [vmem:[%s313 + $0x8] sm:$0xf]
      %v346 = vld [vmem:[%s313 + $0xc] sm:$0xf]
      %v347 = vld [vmem:[%s313 + $0x10] sm:$0xf]
      %v348 = vld [vmem:[%s313 + $0x14] sm:$0xf]
      %v349 = vld [vmem:[%s313 + $0x18] sm:$0xf]
      %v350 = vld [vmem:[%s313 + $0x1c] sm:$0xf]
      %v351 = vld [vmem:[%s313 + $0x20] sm:$0xf]
      %v352 = vld [vmem:[%s313 + $0x24] sm:$0xf]
      %v353 = vld [vmem:[%s313 + $0x28] sm:$0xf]
      %v354 = vld [vmem:[%s313 + $0x2c] sm:$0xf]
      %v355 = vld [vmem:[%s313 + $0x30] sm:$0xf]
      %v356 = vld [vmem:[%s313 + $0x34] sm:$0xf]
      %v357 = vld [vmem:[%s313 + $0x38] sm:$0xf]
      %v358 = vld [vmem:[%s313 + $0x3c] sm:$0xf]
      %v359 = vld [vmem:[%s313 + $0x40] sm:$0xf]
      %v360 = vld [vmem:[%s313 + $0x44] sm:$0xf]
      %v361 = vld [vmem:[%s313 + $0x48] sm:$0xf]
      %v362 = vld [vmem:[%s313 + $0x4c] sm:$0xf]
      %v363 = vld [vmem:[%s313 + $0x50] sm:$0xf]
      %v364 = vld [vmem:[%s313 + $0x54] sm:$0xf]
      %v365 = vld [vmem:[%s313 + $0x58] sm:$0xf]
      %v366 = vld [vmem:[%s313 + $0x5c] sm:$0xf]
      %v367 = vld [vmem:[%s313 + $0x60] sm:$0xf]
      %v368 = vld [vmem:[%s313 + $0x64] sm:$0xf]
      %v369 = vld [vmem:[%s313 + $0x68] sm:$0xf]
      %v370 = vld [vmem:[%s313 + $0x6c] sm:$0xf]
      %v371 = vld [vmem:[%s313 + $0x70] sm:$0xf]
      %v372 = vld [vmem:[%s313 + $0x74] sm:$0xf]
      %v373 = vld [vmem:[%s313 + $0x78] sm:$0xf]
      %v374 = vld [vmem:[%s313 + $0x7c] sm:$0xf]
      %v375 = vld [vmem:[%s313 + $0x80] sm:$0xf]
      %v376 = vld [vmem:[%s313 + $0x84] sm:$0xf]
      %v377 = vld [vmem:[%s313 + $0x88] sm:$0xf]
      %v378 = vld [vmem:[%s313 + $0x8c] sm:$0xf]
      %v379 = vld [vmem:[%s313 + $0x90] sm:$0xf]
      %v380 = vld [vmem:[%s313 + $0x94] sm:$0xf]
      %v381 = vld [vmem:[%s313 + $0x98] sm:$0xf]
      %v382 = vld [vmem:[%s313 + $0x9c] sm:$0xf]
      %v383 = vld [vmem:[%s313 + $0xa0] sm:$0xf]
      %v384 = vld [vmem:[%s313 + $0xa4] sm:$0xf]
      %v385 = vld [vmem:[%s313 + $0xa8] sm:$0xf]
      %v386 = vld [vmem:[%s313 + $0xac] sm:$0xf]
      %v387 = vld [vmem:[%s313 + $0xb0] sm:$0xf]
      %v388 = vld [vmem:[%s313 + $0xb4] sm:$0xf]
      %v389 = vld [vmem:[%s313 + $0xb8] sm:$0xf]
      %v390 = vld [vmem:[%s313 + $0xbc] sm:$0xf]
      %v391 = vld [vmem:[%s319] sm:$0x1]
      %v393 = vlaneseq
      %v394 = vshrl.u32 %v393, 7
      %v395 = vsub.s32 0, %v394
      %v396 = vrot.slane %v391, %v395
      %v400 = vunpack.c.l.b16 %v341
      %v401 = vunpack.c.h.b16 %v341
      %v402 = vunpack.c.l.b16 %v342
      %v403 = vpack.c.b16 %v400, %v400
      %v404 = vpack.c.b16 %v401, %v401
      %v405 = vpack.c.b16 %v402, %v402
      %v457 = vunpack.c.l.b16 %v343
      %v458 = vunpack.c.l.b16 %v344
      %v459 = vunpack.c.l.b16 %v345
      %v460 = vunpack.c.l.b16 %v346
      %v461 = vunpack.c.l.b16 %v347
      %v462 = vunpack.c.l.b16 %v348
      %v463 = vunpack.c.l.b16 %v349
      %v464 = vunpack.c.l.b16 %v350
      %v465 = vunpack.c.l.b16 %v351
      %v466 = vunpack.c.l.b16 %v352
      %v467 = vunpack.c.l.b16 %v353
      %v468 = vunpack.c.l.b16 %v354
      %v469 = vunpack.c.l.b16 %v355
      %v470 = vunpack.c.l.b16 %v356
      %v471 = vunpack.c.l.b16 %v357
      %v472 = vunpack.c.l.b16 %v358
      %v473 = vunpack.c.l.b16 %v359
      %v474 = vunpack.c.l.b16 %v360
      %v475 = vunpack.c.l.b16 %v361
      %v476 = vunpack.c.l.b16 %v362
      %v477 = vunpack.c.l.b16 %v363
      %v478 = vunpack.c.l.b16 %v364
      %v479 = vunpack.c.l.b16 %v365
      %v480 = vunpack.c.l.b16 %v366
      %v481 = vunpack.c.l.b16 %v367
      %v482 = vunpack.c.l.b16 %v368
      %v483 = vunpack.c.l.b16 %v369
      %v484 = vunpack.c.l.b16 %v370
      %v485 = vunpack.c.l.b16 %v371
      %v486 = vunpack.c.l.b16 %v372
      %v487 = vunpack.c.l.b16 %v373
      %v488 = vunpack.c.l.b16 %v374
      %v489 = vunpack.c.l.b16 %v375
      %v490 = vunpack.c.l.b16 %v376
      %v491 = vunpack.c.l.b16 %v377
      %v492 = vunpack.c.l.b16 %v378
      %v493 = vunpack.c.l.b16 %v379
      %v494 = vunpack.c.l.b16 %v380
      %v495 = vunpack.c.l.b16 %v381
      %v496 = vunpack.c.l.b16 %v382
      %v497 = vunpack.c.l.b16 %v383
      %v498 = vunpack.c.l.b16 %v384
      %v499 = vunpack.c.l.b16 %v385
      %v500 = vunpack.c.l.b16 %v386
      %v501 = vunpack.c.l.b16 %v387
      %v502 = vunpack.c.l.b16 %v388
      %v503 = vunpack.c.l.b16 %v389
      %v504 = vunpack.c.l.b16 %v390
      %v505 = vpack.c.b16 %v458, %v457
      %v506 = vpack.c.b16 %v460, %v459
      %v507 = vpack.c.b16 %v462, %v461
      %v508 = vpack.c.b16 %v464, %v463
      %v509 = vpack.c.b16 %v466, %v465
      %v510 = vpack.c.b16 %v468, %v467
      %v511 = vpack.c.b16 %v470, %v469
      %v512 = vpack.c.b16 %v472, %v471
      %v513 = vpack.c.b16 %v474, %v473
      %v514 = vpack.c.b16 %v476, %v475
      %v515 = vpack.c.b16 %v478, %v477
      %v516 = vpack.c.b16 %v480, %v479
      %v517 = vpack.c.b16 %v482, %v481
      %v518 = vpack.c.b16 %v484, %v483
      %v519 = vpack.c.b16 %v486, %v485
      %v520 = vpack.c.b16 %v488, %v487
      %v521 = vpack.c.b16 %v490, %v489
      %v522 = vpack.c.b16 %v492, %v491
      %v523 = vpack.c.b16 %v494, %v493
      %v524 = vpack.c.b16 %v496, %v495
      %v525 = vpack.c.b16 %v498, %v497
      %v526 = vpack.c.b16 %v500, %v499
      %v527 = vpack.c.b16 %v502, %v501
      %v528 = vpack.c.b16 %v504, %v503
      %553 = vmatprep.subr.bf16.mxu0 0
      %554 = vmatpush1.bf16.msra.mxu0 %v512
      %555 = vmatprep.subr.bf16.mxu0 0
      %556 = vmatpush1.bf16.msra.mxu0 %v511
      %557 = vmatprep.subr.bf16.mxu0 0
      %558 = vmatpush1.bf16.msra.mxu0 %v510
      %559 = vmatprep.subr.bf16.mxu0 0
      %560 = vmatpush1.bf16.msra.mxu0 %v509
      %561 = vmatprep.subr.bf16.mxu0 0
      %562 = vmatpush1.bf16.msra.mxu0 %v508
      %563 = vmatprep.subr.bf16.mxu0 0
      %564 = vmatpush1.bf16.msra.mxu0 %v507
      %565 = vmatprep.subr.bf16.mxu0 0
      %566 = vmatpush1.bf16.msra.mxu0 %v506
      %567 = vmatprep.subr.bf16.mxu0 0
      %568 = vmatpush1.bf16.msra.mxu0 %v505
      %569 = vmatprep.subr.bf16.mxu0 0
      %570 = vmatpush2.bf16.msra.mxu0 %v520
      %571 = vmatprep.subr.bf16.mxu0 0
      %572 = vmatpush2.bf16.msra.mxu0 %v519
      %573 = vmatprep.subr.bf16.mxu0 0
      %574 = vmatpush2.bf16.msra.mxu0 %v518
      %575 = vmatprep.subr.bf16.mxu0 0
      %576 = vmatpush2.bf16.msra.mxu0 %v517
      %577 = vmatprep.subr.bf16.mxu0 0
      %578 = vmatpush2.bf16.msra.mxu0 %v516
      %579 = vmatprep.subr.bf16.mxu0 0
      %580 = vmatpush2.bf16.msra.mxu0 %v515
      %581 = vmatprep.subr.bf16.mxu0 0
      %582 = vmatpush2.bf16.msra.mxu0 %v514
      %583 = vmatprep.subr.bf16.mxu0 0
      %584 = vmatpush2.bf16.msra.mxu0 %v513
      %585 = vmatprep.mubr.bf16.mxu0 %v404
      %586 = vmatmul.mubr.bf16.gmra.mxu0 %v403
      %v587 = vpop.f32.mrf.mxu0
      %v588 = vadd.f32 %v396, %v587
      %v589 = vpop.f32.mrf.mxu0
      %v590 = vpop.f32.mrf.mxu0
      %v591 = vpop.f32.mrf.mxu0
      %592 = vdwg.mxu0
      %593 = vmatprep.subr.bf16.mxu0 0
      %594 = vmatpush1.bf16.msra.mxu0 %v528
      %595 = vmatprep.subr.bf16.mxu0 0
      %596 = vmatpush1.bf16.msra.mxu0 %v527
      %597 = vmatprep.subr.bf16.mxu0 0
      %598 = vmatpush1.bf16.msra.mxu0 %v526
      %599 = vmatprep.subr.bf16.mxu0 0
      %600 = vmatpush1.bf16.msra.mxu0 %v525
      %601 = vmatprep.subr.bf16.mxu0 0
      %602 = vmatpush1.bf16.msra.mxu0 %v524
      %603 = vmatprep.subr.bf16.mxu0 0
      %604 = vmatpush1.bf16.msra.mxu0 %v523
      %605 = vmatprep.subr.bf16.mxu0 0
      %606 = vmatpush1.bf16.msra.mxu0 %v522
      %607 = vmatprep.subr.bf16.mxu0 0
      %608 = vmatpush1.bf16.msra.mxu0 %v521
      %609 = vmatprep.subr.bf16.mxu0 0
      %610 = vmatpush2.bf16.msra.mxu0 0
      %611 = vmatprep.subr.bf16.mxu0 0
      %612 = vmatpush2.bf16.msra.mxu0 0
      %613 = vmatprep.subr.bf16.mxu0 0
      %614 = vmatpush2.bf16.msra.mxu0 0
      %615 = vmatprep.subr.bf16.mxu0 0
      %616 = vmatpush2.bf16.msra.mxu0 0
      %617 = vmatprep.subr.bf16.mxu0 0
      %618 = vmatpush2.bf16.msra.mxu0 0
      %619 = vmatprep.subr.bf16.mxu0 0
      %620 = vmatpush2.bf16.msra.mxu0 0
      %621 = vmatprep.subr.bf16.mxu0 0
      %622 = vmatpush2.bf16.msra.mxu0 0
      %623 = vmatprep.subr.bf16.mxu0 0
      %624 = vmatpush2.bf16.msra.mxu0 0
      %625 = vmatprep.mubr.bf16.mxu0 0
      %626 = vmatmul.mubr.bf16.gmra.mxu0 %v405
      %v627 = vpop.f32.mrf.mxu0
      %v628 = vadd.f32 %v588, %v627
      %v629 = vpop.f32.mrf.mxu0
      %v630 = vpop.f32.mrf.mxu0
      %v631 = vpop.f32.mrf.mxu0
      %632 = vdwg.mxu0
      %v633 = vld [vmem:[%s329] sm:$0xf]
      %v634 = vunpack.c.l.bf16 %v633
      %v635 = vadd.f32 %v628, %v634
      %v636 = vpack.c.bf16 %v635, %v635
      %637 = vst [vmem:[%s339] sm:$0xf] %v636
      %p638 = scmp.lt.s32.totalorder %s20, 1
      %s639 = scalar_select %p638, %s20, 1
      %p640 = scmp.lt.s32.totalorder %s21, 0
      %s641 = scalar_select %p640, %s21, 0
      %p642 = scmp.lt.s32.totalorder %s22, 0
      %s643 = scalar_select %p642, %s22, 0
      %s644 = sadd.s32 %s643, %s641
      %s645 = sadd.s32 %s644, %s639
      %s646 = smul.addr %s645, 4
      %s647 = scalar_lea.vmem %s4, %s646
      // Predicated region
      $region37: #{ste_encoder_forward.19} parent=35 // pred_check
        %p648 = pneg %p170
      $region38: #{ste_encoder_forward.19} parent=35 // pred_check_branch
        %650 = sbr.rel (%p648) target = $region40
      $region39: #{ste_encoder_forward.19} parent=35 // pred_region
        _
      $region40: #{ste_encoder_forward.19} parent=35 // pred_fallthru
        _
    $region36: #{ste_encoder_forward.19} parent=5 // pred_fallthru
      _
    %p651 = scmp.le.s32.totalorder 2, %s10
    // Predicated region
    $region41: #{ste_encoder_forward.19} parent=5 // pred_check
      %p652 = pneg %p651
    $region42: #{ste_encoder_forward.19} parent=5 // pred_check_branch
      %654 = sbr.rel (%p652) target = $region44
    $region43: #{ste_encoder_forward.19} parent=5 // pred_region
      %s655 = ssub.s32 %s10, 2
      // Predicated region
      $region45: #{ste_encoder_forward.19} parent=43 // pred_check
        %p656 = pneg %p176
      $region46: #{ste_encoder_forward.19} parent=43 // pred_check_branch
        %658 = sbr.rel (%p656) target = $region48
      $region47: #{ste_encoder_forward.19} parent=43 // pred_region
        %p659 = scmp.lt.s32.totalorder %s23, 1
        %s660 = scalar_select %p659, %s23, 1
        %p661 = scmp.lt.s32.totalorder %s24, 0
        %s662 = scalar_select %p661, %s24, 0
        %p663 = scmp.lt.s32.totalorder %s25, 0
        %s664 = scalar_select %p663, %s25, 0
        %s665 = sadd.s32 %s664, %s662
        %s666 = sadd.s32 %s665, %s660
        %s667 = smul.addr %s666, 4
        %s668 = scalar_lea.vmem %s4, %s667
      $region48: #{ste_encoder_forward.19} parent=43 // pred_fallthru
        _
    $region44: #{ste_encoder_forward.19} parent=5 // pred_fallthru
      _
  $region6: #{ste_encoder_forward.19} parent=0 // loop_footer
    %s14 = sadd.s32 1, %s10
  $region7: #{ste_encoder_forward.19} parent=0 // loop_footer_branch
    %9 = sbr.rel target = $region3
  $region8: #{ste_encoder_forward.19} parent=0 // loop_exit
    _

// kernel: ste_encoder_forward.25
$region0: #{ste_encoder_forward.25}
  #allocation0 [shape = 'u32[]', space=smem, size = 0x4, offset = 0x4, fixed_abs, tag = 'smem constant byte address 0x4 - core index']
  #allocation1 [shape = 'u32[144,128]{1,0:T(1,128)}', space=vmem, size = 0x12000, scoped, tag = 'internal scratch']
  %s0 = inlined_call_operand.vmem [shape: bf16[2,8,128], index: 0, kind: input, shape index: {}]
  %s1 = inlined_call_operand.vmem [shape: f32[2,1,128], index: 1, kind: input, shape index: {}]
  %s2 = inlined_call_operand.vmem [shape: f32[2,1,128], index: 2, kind: input, shape index: {}]
  %s3 = inlined_call_operand.vmem [shape: f32[2,8,128], index: 3, kind: output, shape index: {}]
  %s4 = sld [smem:[#allocation0]]
  $region45: #{ste_encoder_forward.25} parent=0
    _
  %s6 = ssub.s32 1, %s4
  %s7 = scalar_select 0, %s6, %s4
  loop: start=0, step=1, limit=4
  $region2: #{ste_encoder_forward.25} parent=0 // loop_pre_header
    _
  $region3: #{ste_encoder_forward.25} parent=0 // loop_header
    %s9 = sphi 0, %s13
    %p10 = scmp.ge.s32.totalorder %s9, 4
    %s16 = sphi 0, %s28
    %s17 = sphi 0, %s24
    %s18 = sphi 0, %s16
    %s19 = sphi 0, %s17
    %s20 = sphi 0, %s18
    %s21 = sphi 0, %s19
    %s33 = sphi 0, %s35
    %s36 = sphi 0, %s33
    %s37 = sphi 0, %s36
    %s53 = sphi 0, %s37
    %s59 = sphi 0, %s61
    %s62 = sphi 0, %s59
    %s63 = sphi 0, %s62
    %s79 = sphi 0, %s63
    %s85 = sphi 0, %s87
    %s88 = sphi 0, %s85
    %s89 = sphi 0, %s88
    %s105 = sphi 0, %s89
    %s113 = sphi 0, %s115
    %s116 = sphi 0, %s113
    %s117 = sphi 0, %s116
    %s133 = sphi 0, %s117
  $region4: #{ste_encoder_forward.25} parent=0 // loop_header_branch
    %12 = sbr.rel (%p10) target = $region8
  $region5: #{ste_encoder_forward.25} parent=0 // loop_body
    %s14 = ssub.s32 %s9, 1
    %s15 = ssub.s32 %s9, 2
    %s22 = sadd.s32 1, %s17
    %p23 = scmp.ge.s32.totalorder %s22, 1
    %s24 = scalar_select %p23, 0, %s22
    %s25 = sadd.s32 1, %s16
    %s26 = scalar_select %p23, %s25, %s16
    %p27 = scmp.ge.s32.totalorder %s26, 2
    %s28 = scalar_select %p27, 0, %s26
    %s29 = ssub.s32 %s16, %s28
    %s30 = ssub.s32 %s17, %s24
    %s31 = sor.u32 %s29, %s30
    %p32 = scmp.eq.s32.totalorder %s31, 0
    %s34 = sadd.s32 %s33, 1
    %s35 = scalar_select %p32, %s33, %s34
    %p38 = pneg %p32
    %p39 = scmp.eq.s32.totalorder %s9, 1
    %p40 = por %p38, %p39
    %p41 = scmp.ne.s32.totalorder %s33, %s36
    %p42 = scmp.eq.s32.totalorder %s9, 0
    %p43 = por %p41, %p42
    %p44 = scmp.ne.s32.totalorder %s33, %s36
    %p45 = scmp.eq.s32.totalorder %s14, 1
    %p46 = por %p44, %p45
    %p47 = scmp.ne.s32.totalorder %s36, %s37
    %p48 = scmp.eq.s32.totalorder %s14, 0
    %p49 = por %p47, %p48
    %p50 = scmp.ne.s32.totalorder %s36, %s37
    %p51 = scmp.eq.s32.totalorder %s15, 1
    %p52 = por %p50, %p51
    %p54 = scmp.ne.s32.totalorder %s37, %s53
    %p55 = scmp.eq.s32.totalorder %s15, 0
    %p56 = por %p54, %p55
    %s57 = ssub.s32 %s16, %s28
    %p58 = scmp.eq.s32.totalorder %s57, 0
    %s60 = sadd.s32 %s59, 1
    %s61 = scalar_select %p58, %s59, %s60
    %p64 = pneg %p58
    %p65 = scmp.eq.s32.totalorder %s9, 1
    %p66 = por %p64, %p65
    %p67 = scmp.ne.s32.totalorder %s59, %s62
    %p68 = scmp.eq.s32.totalorder %s9, 0
    %p69 = por %p67, %p68
    %p70 = scmp.ne.s32.totalorder %s59, %s62
    %p71 = scmp.eq.s32.totalorder %s14, 1
    %p72 = por %p70, %p71
    %p73 = scmp.ne.s32.totalorder %s62, %s63
    %p74 = scmp.eq.s32.totalorder %s14, 0
    %p75 = por %p73, %p74
    %p76 = scmp.ne.s32.totalorder %s62, %s63
    %p77 = scmp.eq.s32.totalorder %s15, 1
    %p78 = por %p76, %p77
    %p80 = scmp.ne.s32.totalorder %s63, %s79
    %p81 = scmp.eq.s32.totalorder %s15, 0
    %p82 = por %p80, %p81
    %s83 = ssub.s32 %s16, %s28
    %p84 = scmp.eq.s32.totalorder %s83, 0
    %s86 = sadd.s32 %s85, 1
    %s87 = scalar_select %p84, %s85, %s86
    %p90 = pneg %p84
    %p91 = scmp.eq.s32.totalorder %s9, 1
    %p92 = por %p90, %p91
    %p93 = scmp.ne.s32.totalorder %s85, %s88
    %p94 = scmp.eq.s32.totalorder %s9, 0
    %p95 = por %p93, %p94
    %p96 = scmp.ne.s32.totalorder %s85, %s88
    %p97 = scmp.eq.s32.totalorder %s14, 1
    %p98 = por %p96, %p97
    %p99 = scmp.ne.s32.totalorder %s88, %s89
    %p100 = scmp.eq.s32.totalorder %s14, 0
    %p101 = por %p99, %p100
    %p102 = scmp.ne.s32.totalorder %s88, %s89
    %p103 = scmp.eq.s32.totalorder %s15, 1
    %p104 = por %p102, %p103
    %p106 = scmp.ne.s32.totalorder %s89, %s105
    %p107 = scmp.eq.s32.totalorder %s15, 0
    %p108 = por %p106, %p107
    %s109 = ssub.s32 %s16, %s28
    %s110 = ssub.s32 %s17, %s24
    %s111 = sor.u32 %s109, %s110
    %p112 = scmp.eq.s32.totalorder %s111, 0
    %s114 = sadd.s32 %s113, 1
    %s115 = scalar_select %p112, %s113, %s114
    %p118 = pneg %p112
    %p119 = scmp.eq.s32.totalorder %s9, 1
    %p120 = por %p118, %p119
    %p121 = scmp.ne.s32.totalorder %s113, %s116
    %p122 = scmp.eq.s32.totalorder %s9, 0
    %p123 = por %p121, %p122
    %p124 = scmp.ne.s32.totalorder %s113, %s116
    %p125 = scmp.eq.s32.totalorder %s14, 1
    %p126 = por %p124, %p125
    %p127 = scmp.ne.s32.totalorder %s116, %s117
    %p128 = scmp.eq.s32.totalorder %s14, 0
    %p129 = por %p127, %p128
    %p130 = scmp.ne.s32.totalorder %s116, %s117
    %p131 = scmp.eq.s32.totalorder %s15, 1
    %p132 = por %p130, %p131
    %p134 = scmp.ne.s32.totalorder %s117, %s133
    %p135 = scmp.eq.s32.totalorder %s15, 0
    %p136 = por %p134, %p135
    %p137 = scmp.le.s32.totalorder 1, %s9
    %p138 = scmp.lt.s32.totalorder %s9, 3
    %p139 = pnand %p137, %p138
    %p140 = pneg %p139
    // Predicated region
    $region9: #{ste_encoder_forward.25} parent=5 // pred_check
      _
    $region10: #{ste_encoder_forward.25} parent=5 // pred_check_branch
      %142 = sbr.rel (%p139) target = $region12
    $region11: #{ste_encoder_forward.25} parent=5 // pred_region
      %s143 = ssub.s32 %s9, 1
    $region12: #{ste_encoder_forward.25} parent=5 // pred_fallthru
      _
    %p144 = scmp.lt.s32.totalorder %s9, 2
    // Predicated region
    $region13: #{ste_encoder_forward.25} parent=5 // pred_check
      %p145 = pneg %p144
    $region14: #{ste_encoder_forward.25} parent=5 // pred_check_branch
      %147 = sbr.rel (%p145) target = $region16
    $region15: #{ste_encoder_forward.25} parent=5 // pred_region
      // Predicated region
      $region17: #{ste_encoder_forward.25} parent=15 // pred_check
        %p148 = pneg %p43
      $region18: #{ste_encoder_forward.25} parent=15 // pred_check_branch
        %150 = sbr.rel (%p148) target = $region20
      $region19: #{ste_encoder_forward.25} parent=15 // pred_region
        %p151 = scmp.lt.s32.totalorder %s16, 1
        %s152 = scalar_select %p151, %s16, 1
        %p153 = scmp.lt.s32.totalorder %s17, 0
        %s154 = scalar_select %p153, %s17, 0
        %s155 = sadd.s32 %s154, %s152
        %s156 = smul.addr %s155, 4
        %s157 = scalar_lea.vmem %s0, %s156
      $region20: #{ste_encoder_forward.25} parent=15 // pred_fallthru
        _
      // Predicated region
      $region21: #{ste_encoder_forward.25} parent=15 // pred_check
        %p158 = pneg %p69
      $region22: #{ste_encoder_forward.25} parent=15 // pred_check_branch
        %160 = sbr.rel (%p158) target = $region24
      $region23: #{ste_encoder_forward.25} parent=15 // pred_region
        %p161 = scmp.lt.s32.totalorder %s16, 1
        %s162 = scalar_select %p161, %s16, 1
        %s163 = scalar_lea.vmem %s1, %s162
      $region24: #{ste_encoder_forward.25} parent=15 // pred_fallthru
        _
      // Predicated region
      $region25: #{ste_encoder_forward.25} parent=15 // pred_check
        %p164 = pneg %p95
      $region26: #{ste_encoder_forward.25} parent=15 // pred_check_branch
        %166 = sbr.rel (%p164) target = $region28
      $region27: #{ste_encoder_forward.25} parent=15 // pred_region
        %p167 = scmp.lt.s32.totalorder %s16, 1
        %s168 = scalar_select %p167, %s16, 1
        %s169 = scalar_lea.vmem %s2, %s168
      $region28: #{ste_encoder_forward.25} parent=15 // pred_fallthru
        _
    $region16: #{ste_encoder_forward.25} parent=5 // pred_fallthru
      _
    %p170 = scmp.le.s32.totalorder 1, %s9
    %p171 = scmp.lt.s32.totalorder %s9, 3
    %p172 = pnand %p170, %p171
    %p173 = pneg %p172
    // Predicated region
    $region29: #{ste_encoder_forward.25} parent=5 // pred_check
      _
    $region30: #{ste_encoder_forward.25} parent=5 // pred_check_branch
      %175 = sbr.rel (%p172) target = $region32
    $region31: #{ste_encoder_forward.25} parent=5 // pred_region
      %s176 = ssub.s32 %s9, 1
      %p177 = scmp.lt.s32.totalorder %s18, 1
      %s178 = scalar_select %p177, %s18, 1
      %p179 = scmp.lt.s32.totalorder %s19, 0
      %s180 = scalar_select %p179, %s19, 0
      %s181 = sadd.s32 %s180, %s178
      %s182 = smul.addr %s181, 4
      %s183 = scalar_lea.vmem %s0, %s182
      %p184 = pneg %p49
      %p185 = pneg %p46
      %p186 = scmp.lt.s32.totalorder %s18, 1
      %s187 = scalar_select %p186, %s18, 1
      %s188 = scalar_lea.vmem %s1, %s187
      %p189 = pneg %p75
      %p190 = pneg %p72
      %p191 = scmp.lt.s32.totalorder %s18, 1
      %s192 = scalar_select %p191, %s18, 1
      %s193 = scalar_lea.vmem %s2, %s192
      %p194 = pneg %p101
      %p195 = pneg %p98
      %p196 = pneg %p129
      %p197 = pneg %p126
      %p198 = scmp.lt.s32.totalorder %s18, 1
      %s199 = scalar_select %p198, %s18, 1
      %p200 = scmp.lt.s32.totalorder %s19, 0
      %s201 = scalar_select %p200, %s19, 0
      %s202 = sadd.s32 %s201, %s199
      %s203 = smul.addr %s202, 8
      %s204 = scalar_lea.vmem %s3, %s203
      %p205 = scmp.lt.s32.totalorder %s18, 1
      %s206 = scalar_select %p205, %s18, 1
      %p207 = scmp.lt.s32.totalorder %s19, 0
      %s208 = scalar_select %p207, %s19, 0
      %s209 = sadd.s32 %s208, %s206
      %s210 = smul.addr %s209, 4
      %s211 = scalar_lea.vmem %s0, %s210
      %p212 = scmp.lt.s32.totalorder %s18, 1
      %s213 = scalar_select %p212, %s18, 1
      %s214 = scalar_lea.vmem %s1, %s213
      %p215 = scmp.lt.s32.totalorder %s18, 1
      %s216 = scalar_select %p215, %s18, 1
      %s217 = scalar_lea.vmem %s2, %s216
      %p218 = scmp.lt.s32.totalorder %s18, 1
      %s219 = scalar_select %p218, %s18, 1
      %p220 = scmp.lt.s32.totalorder %s19, 0
      %s221 = scalar_select %p220, %s19, 0
      %s222 = sadd.s32 %s221, %s219
      %s223 = smul.addr %s222, 8
      %s224 = scalar_lea.vmem %s3, %s223
      %v225 = vld [vmem:[%s211] sm:$0xf]
      %v226 = vunpack.c.l.bf16 %v225
      %227 = vadd.xlane.f32.xlu0 %v226
      %v228 = vpop.xlane.xlu0 %227
      %v229 = vrcp.pop 128.0
      %v230 = vmul.f32 %v228, %v229
      %v231 = vsub.f32 %v226, %v230
      %v232 = vmul.f32 %v231, %v231
      %233 = vadd.xlane.f32.xlu0 %v232
      %v234 = vpop.xlane.xlu0 %233
      %v235 = vmul.f32 %v234, %v229
      %v236 = vadd.f32 %v235, 1e-05
      %v237 = vrsqrt.pop %v236
      %v238 = vmul.f32 %v231, %v237
      %v239 = vld [vmem:[%s214] sm:$0x1]
      %v241 = vlaneseq
      %v242 = vshrl.u32 %v241, 7
      %v243 = vsub.s32 0, %v242
      %v244 = vrot.slane %v239, %v243
      %v246 = vmul.f32 %v238, %v244
      %v247 = vld [vmem:[%s217] sm:$0x1]
      %v249 = vlaneseq
      %v250 = vshrl.u32 %v249, 7
      %v251 = vsub.s32 0, %v250
      %v252 = vrot.slane %v247, %v251
      %v254 = vadd.f32 %v246, %v252
      %255 = vst [vmem:[%s224] sm:$0xff] %v254
      %p256 = scmp.lt.s32.totalorder %s18, 1
      %s257 = scalar_select %p256, %s18, 1
      %p258 = scmp.lt.s32.totalorder %s19, 0
      %s259 = scalar_select %p258, %s19, 0
      %s260 = sadd.s32 %s259, %s257
      %s261 = smul.addr %s260, 8
      %s262 = scalar_lea.vmem %s3, %s261
      // Predicated region
      $region33: #{ste_encoder_forward.25} parent=31 // pred_check
        %p263 = pneg %p126
      $region34: #{ste_encoder_forward.25} parent=31 // pred_check_branch
        %265 = sbr.rel (%p263) target = $region36
      $region35: #{ste_encoder_forward.25} parent=31 // pred_region
        _
      $region36: #{ste_encoder_forward.25} parent=31 // pred_fallthru
        _
    $region32: #{ste_encoder_forward.25} parent=5 // pred_fallthru
      _
    %p266 = scmp.le.s32.totalorder 2, %s9
    // Predicated region
    $region37: #{ste_encoder_forward.25} parent=5 // pred_check
      %p267 = pneg %p266
    $region38: #{ste_encoder_forward.25} parent=5 // pred_check_branch
      %269 = sbr.rel (%p267) target = $region40
    $region39: #{ste_encoder_forward.25} parent=5 // pred_region
      %s270 = ssub.s32 %s9, 2
      // Predicated region
      $region41: #{ste_encoder_forward.25} parent=39 // pred_check
        %p271 = pneg %p132
      $region42: #{ste_encoder_forward.25} parent=39 // pred_check_branch
        %273 = sbr.rel (%p271) target = $region44
      $region43: #{ste_encoder_forward.25} parent=39 // pred_region
        %p274 = scmp.lt.s32.totalorder %s20, 1
        %s275 = scalar_select %p274, %s20, 1
        %p276 = scmp.lt.s32.totalorder %s21, 0
        %s277 = scalar_select %p276, %s21, 0
        %s278 = sadd.s32 %s277, %s275
        %s279 = smul.addr %s278, 8
        %s280 = scalar_lea.vmem %s3, %s279
      $region44: #{ste_encoder_forward.25} parent=39 // pred_fallthru
        _
    $region40: #{ste_encoder_forward.25} parent=5 // pred_fallthru
      _
  $region6: #{ste_encoder_forward.25} parent=0 // loop_footer
    %s13 = sadd.s32 1, %s9
  $region7: #{ste_encoder_forward.25} parent=0 // loop_footer_branch
    %8 = sbr.rel target = $region3
  $region8: #{ste_encoder_forward.25} parent=0 // loop_exit
    _

</llo_original>
